<compile_context>
chip_gen: v7x
topology: tpu7x:2x2x1
jax: 0.10.0
libtpu: 0.0.40
codegen_flags: <defaults>
</compile_context>

<pallas_src>
import functools

import jax
import jax.numpy as jnp
import numpy as np
from jax.experimental import pallas as pl
from jax.experimental.pallas import tpu as pltpu

EPS = 1e-5
LANES = 128  # pad the channel (lane) dim to a full vreg width


def _shift_rows(a, d):
    """b[i] = a[i + d] along axis 0 (wrap-around rows are masked out by the caller)."""
    if d == 0:
        return a
    return jnp.concatenate([a[d:], a[:d]], axis=0)


def _im2col(a, mask_ref, width):
    """Build the (M, 9*C) im2col patch in bf16 from a flattened (M, C) activation.

    Tap order (dy outer, dx inner) matches the (3, 3, Cin, Cout) -> (9*Cp, Cp)
    weight reshape done in the wrapper.  Out-of-image taps are zeroed with the
    precomputed per-row masks — this implements the conv's 'SAME' zero padding
    in-kernel without materializing a padded tensor.
    """
    taps = []
    t = 0
    for dy in (-1, 0, 1):
        for dx in (-1, 0, 1):
            shifted = _shift_rows(a, dy * width + dx)
            taps.append((shifted * mask_ref[t]).astype(jnp.bfloat16))
            t += 1
    # each tap is exactly 128 lanes wide -> vreg-aligned lane concat
    return jnp.concatenate(taps, axis=-1)


def basic_block_kernel(x_ref, mask_ref, w1_ref, g1_ref, b1_ref,
                       w2_ref, g2_ref, b2_ref, out_ref, *, width):
    M, _ = x_ref.shape
    inv_m = 1.0 / M

    x = x_ref[...]  # (M, Cp) f32, flattened NHWC (kept f32 for the exact residual)

    # ---- conv1: one MXU matmul, K = 9*Cp, bf16 operands, f32 accumulate ----
    p1 = _im2col(x, mask_ref, width)
    acc1 = jnp.dot(p1, w1_ref[...], preferred_element_type=jnp.float32)

    # ---- bn1 (training-mode batch stats, single pass: sum & sum-of-squares) + relu
    s1 = jnp.sum(acc1, axis=0, keepdims=True)
    q1 = jnp.sum(acc1 * acc1, axis=0, keepdims=True)
    mean1 = s1 * inv_m
    var1 = q1 * inv_m - mean1 * mean1
    h = (acc1 - mean1) * jax.lax.rsqrt(var1 + EPS) * g1_ref[...] + b1_ref[...]
    h = jnp.maximum(h, 0.0)

    # ---- conv2 ----
    p2 = _im2col(h, mask_ref, width)
    acc2 = jnp.dot(p2, w2_ref[...], preferred_element_type=jnp.float32)

    # ---- bn2 + residual add + relu ----
    s2 = jnp.sum(acc2, axis=0, keepdims=True)
    q2 = jnp.sum(acc2 * acc2, axis=0, keepdims=True)
    mean2 = s2 * inv_m
    var2 = q2 * inv_m - mean2 * mean2
    o = (acc2 - mean2) * jax.lax.rsqrt(var2 + EPS) * g2_ref[...] + b2_ref[...]
    o = jnp.maximum(o + x, 0.0)

    out_ref[...] = o.astype(out_ref.dtype)


@jax.jit
def basic_block_forward(x_nchw, w1, g1, b1, w2, g2, b2):
    """x_nchw: (N, C, H, W) f32.  w1/w2 in PyTorch layout (Cout, Cin, 3, 3)."""
    N, C, H, W = x_nchw.shape
    Cout = w1.shape[0]
    Cp = -(-max(C, Cout) // LANES) * LANES
    M = N * H * W

    # NCHW -> NHWC -> flatten to (M, Cp) with the channel dim zero-padded to 128 lanes.
    x = jnp.transpose(x_nchw, (0, 2, 3, 1))
    x = jnp.pad(x, ((0, 0), (0, 0), (0, 0), (0, Cp - C))).reshape(M, Cp)

    def fold_weights(w, cin, cout):
        # (Cout, Cin, 3, 3) -> (3, 3, Cin, Cout) -> zero-pad channels -> (9*Cp, Cp) bf16
        w = jnp.transpose(w, (2, 3, 1, 0))
        w = jnp.pad(w, ((0, 0), (0, 0), (0, Cp - cin), (0, Cp - cout)))
        return w.reshape(9 * Cp, Cp).astype(jnp.bfloat16)

    w1k = fold_weights(w1, C, Cout)
    w2k = fold_weights(w2, Cout, Cout)

    def pad_vec(v, fill):
        return jnp.pad(v, (0, Cp - v.shape[0]), constant_values=fill).reshape(1, Cp)

    g1k, b1k = pad_vec(g1, 1.0), pad_vec(b1, 0.0)
    g2k, b2k = pad_vec(g2, 1.0), pad_vec(b2, 0.0)

    # Per-row tap-validity masks: tap (dy, dx) at flattened row i is valid iff
    # (y+dy, x+dx) stays inside the image (zero 'SAME' padding, handled in-kernel).
    yy = np.repeat(np.arange(H), W)
    xx = np.tile(np.arange(W), H)
    mask_list = []
    for dy in (-1, 0, 1):
        for dx in (-1, 0, 1):
            ok = ((yy + dy >= 0) & (yy + dy < H) & (xx + dx >= 0) & (xx + dx < W))
            mask_list.append(np.tile(ok.astype(np.float32), N))
    masks = jnp.asarray(np.stack(mask_list)[..., None])  # (9, M, 1) f32

    vmem = pl.BlockSpec(memory_space=pltpu.MemorySpace.VMEM)
    out_flat = pl.pallas_call(
        functools.partial(basic_block_kernel, width=W),
        out_shape=jax.ShapeDtypeStruct((M, Cp), jnp.float32),
        in_specs=[vmem] * 8,
        out_specs=vmem,
    )(x, masks, w1k, g1k, b1k, w2k, g2k, b2k)

    out = out_flat.reshape(N, H, W, Cp)[..., :Cout]
    return jnp.transpose(out, (0, 3, 1, 2))  # NHWC -> NCHW


def basic_block_reference(x_nchw, w1, g1, b1, w2, g2, b2):
    """Pure-JAX reference (for validation)."""
    x = jnp.transpose(x_nchw, (0, 2, 3, 1))
    wa = jnp.transpose(w1, (2, 3, 1, 0))
    wb = jnp.transpose(w2, (2, 3, 1, 0))

    def conv(a, w):
        return jax.lax.conv_general_dilated(
            a, w, (1, 1), 'SAME', dimension_numbers=('NHWC', 'HWIO', 'NHWC'))

    def bn(a, g, b):
        m = jnp.mean(a, axis=(0, 1, 2), keepdims=True)
        v = jnp.mean((a - m) ** 2, axis=(0, 1, 2), keepdims=True)
        return (a - m) * jax.lax.rsqrt(v + EPS) * g + b

    h = jnp.maximum(bn(conv(x, wa), g1, b1), 0.0)
    o = jnp.maximum(bn(conv(h, wb), g2, b2) + x, 0.0)
    return jnp.transpose(o, (0, 3, 1, 2))


if __name__ == "__main__":
    N, C, H, W = 2, 4, 16, 16      # inplanes = planes = 4, stride = 1
    planes = C

    key = jax.random.PRNGKey(0)
    k1, k2, k3 = jax.random.split(key, 3)
    x = jax.random.normal(k1, (N, C, H, W), jnp.float32)

    # Deterministic conv weights (Kaiming-like scale); BN params match
    # PyTorch's default init (gamma=1, beta=0).
    w1 = jax.random.normal(k2, (planes, C, 3, 3), jnp.float32) * (2.0 / (C * 9)) ** 0.5
    w2 = jax.random.normal(k3, (planes, planes, 3, 3), jnp.float32) * (2.0 / (planes * 9)) ** 0.5
    g1 = jnp.ones((planes,), jnp.float32)
    b1 = jnp.zeros((planes,), jnp.float32)
    g2 = jnp.ones((planes,), jnp.float32)
    b2 = jnp.zeros((planes,), jnp.float32)

    out = basic_block_forward(x, w1, g1, b1, w2, g2, b2)
    out = jax.block_until_ready(out)

    ref = basic_block_reference(x, w1, g1, b1, w2, g2, b2)
    assert out.shape == (N, planes, H, W)
    # bf16 MXU operands -> looser tolerance than the f32-everywhere version.
    np.testing.assert_allclose(np.asarray(out), np.asarray(ref), rtol=2e-2, atol=2e-2)

    print("KERNEL_OK")
</pallas_src>

<mosaic_0001>
module attributes {stable_mosaic.version = 11 : i64} {
  func.func @basic_block_kernel(%arg0: memref<512x128xf32, #tpu.memory_space<vmem>>, %arg1: memref<9x512x1xf32, #tpu.memory_space<vmem>>, %arg2: memref<1152x128xbf16, #tpu.memory_space<vmem>>, %arg3: memref<1x128xf32, #tpu.memory_space<vmem>>, %arg4: memref<1x128xf32, #tpu.memory_space<vmem>>, %arg5: memref<1152x128xbf16, #tpu.memory_space<vmem>>, %arg6: memref<1x128xf32, #tpu.memory_space<vmem>>, %arg7: memref<1x128xf32, #tpu.memory_space<vmem>>, %arg8: memref<512x128xf32, #tpu.memory_space<vmem>>) attributes {dimension_semantics = [], scalar_prefetch = 0 : i64, scratch_operands = 0 : i64, tpu.core_type = #tpu.core_type<tc>} {
    %c0 = arith.constant 0 : index
    %c0_0 = arith.constant 0 : index
    %0 = vector.load %arg0[%c0, %c0_0] : memref<512x128xf32, #tpu.memory_space<vmem>>, vector<512x128xf32>
    %1 = vector.extract_strided_slice %0 {offsets = [495, 0], sizes = [17, 128], strides = [1, 1]} : vector<512x128xf32> to vector<17x128xf32>
    %2 = vector.extract_strided_slice %0 {offsets = [0, 0], sizes = [495, 128], strides = [1, 1]} : vector<512x128xf32> to vector<495x128xf32>
    %3 = tpu.concatenate %1, %2 in 0 : vector<17x128xf32>, vector<495x128xf32> -> vector<512x128xf32>
    %c0_1 = arith.constant 0 : index
    %c0_2 = arith.constant 0 : index
    %c0_3 = arith.constant 0 : index
    %4 = vector.load %arg1[%c0_1, %c0_2, %c0_3] : memref<9x512x1xf32, #tpu.memory_space<vmem>>, vector<1x512x1xf32>
    %5 = vector.shape_cast %4 : vector<1x512x1xf32> to vector<512x1xf32>
    %6 = vector.broadcast %5 : vector<512x1xf32> to vector<512x128xf32>
    %7 = arith.mulf %3, %6 : vector<512x128xf32>
    %8 = arith.truncf %7 : vector<512x128xf32> to vector<512x128xbf16>
    %9 = vector.extract_strided_slice %0 {offsets = [496, 0], sizes = [16, 128], strides = [1, 1]} : vector<512x128xf32> to vector<16x128xf32>
    %10 = vector.extract_strided_slice %0 {offsets = [0, 0], sizes = [496, 128], strides = [1, 1]} : vector<512x128xf32> to vector<496x128xf32>
    %11 = tpu.concatenate %9, %10 in 0 : vector<16x128xf32>, vector<496x128xf32> -> vector<512x128xf32>
    %c1 = arith.constant 1 : index
    %c0_4 = arith.constant 0 : index
    %c0_5 = arith.constant 0 : index
    %12 = vector.load %arg1[%c1, %c0_4, %c0_5] : memref<9x512x1xf32, #tpu.memory_space<vmem>>, vector<1x512x1xf32>
    %13 = vector.shape_cast %12 : vector<1x512x1xf32> to vector<512x1xf32>
    %14 = vector.broadcast %13 : vector<512x1xf32> to vector<512x128xf32>
    %15 = arith.mulf %11, %14 : vector<512x128xf32>
    %16 = arith.truncf %15 : vector<512x128xf32> to vector<512x128xbf16>
    %17 = vector.extract_strided_slice %0 {offsets = [497, 0], sizes = [15, 128], strides = [1, 1]} : vector<512x128xf32> to vector<15x128xf32>
    %18 = vector.extract_strided_slice %0 {offsets = [0, 0], sizes = [497, 128], strides = [1, 1]} : vector<512x128xf32> to vector<497x128xf32>
    %19 = tpu.concatenate %17, %18 in 0 : vector<15x128xf32>, vector<497x128xf32> -> vector<512x128xf32>
    %c2 = arith.constant 2 : index
    %c0_6 = arith.constant 0 : index
    %c0_7 = arith.constant 0 : index
    %20 = vector.load %arg1[%c2, %c0_6, %c0_7] : memref<9x512x1xf32, #tpu.memory_space<vmem>>, vector<1x512x1xf32>
    %21 = vector.shape_cast %20 : vector<1x512x1xf32> to vector<512x1xf32>
    %22 = vector.broadcast %21 : vector<512x1xf32> to vector<512x128xf32>
    %23 = arith.mulf %19, %22 : vector<512x128xf32>
    %24 = arith.truncf %23 : vector<512x128xf32> to vector<512x128xbf16>
    %25 = vector.extract_strided_slice %0 {offsets = [511, 0], sizes = [1, 128], strides = [1, 1]} : vector<512x128xf32> to vector<1x128xf32>
    %26 = vector.extract_strided_slice %0 {offsets = [0, 0], sizes = [511, 128], strides = [1, 1]} : vector<512x128xf32> to vector<511x128xf32>
    %27 = tpu.concatenate %25, %26 in 0 : vector<1x128xf32>, vector<511x128xf32> -> vector<512x128xf32>
    %c3 = arith.constant 3 : index
    %c0_8 = arith.constant 0 : index
    %c0_9 = arith.constant 0 : index
    %28 = vector.load %arg1[%c3, %c0_8, %c0_9] : memref<9x512x1xf32, #tpu.memory_space<vmem>>, vector<1x512x1xf32>
    %29 = vector.shape_cast %28 : vector<1x512x1xf32> to vector<512x1xf32>
    %30 = vector.broadcast %29 : vector<512x1xf32> to vector<512x128xf32>
    %31 = arith.mulf %27, %30 : vector<512x128xf32>
    %32 = arith.truncf %31 : vector<512x128xf32> to vector<512x128xbf16>
    %c4 = arith.constant 4 : index
    %c0_10 = arith.constant 0 : index
    %c0_11 = arith.constant 0 : index
    %33 = vector.load %arg1[%c4, %c0_10, %c0_11] : memref<9x512x1xf32, #tpu.memory_space<vmem>>, vector<1x512x1xf32>
    %34 = vector.shape_cast %33 : vector<1x512x1xf32> to vector<512x1xf32>
    %35 = vector.broadcast %34 : vector<512x1xf32> to vector<512x128xf32>
    %36 = arith.mulf %0, %35 : vector<512x128xf32>
    %37 = arith.truncf %36 : vector<512x128xf32> to vector<512x128xbf16>
    %38 = vector.extract_strided_slice %0 {offsets = [1, 0], sizes = [511, 128], strides = [1, 1]} : vector<512x128xf32> to vector<511x128xf32>
    %39 = vector.extract_strided_slice %0 {offsets = [0, 0], sizes = [1, 128], strides = [1, 1]} : vector<512x128xf32> to vector<1x128xf32>
    %40 = tpu.concatenate %38, %39 in 0 : vector<511x128xf32>, vector<1x128xf32> -> vector<512x128xf32>
    %c5 = arith.constant 5 : index
    %c0_12 = arith.constant 0 : index
    %c0_13 = arith.constant 0 : index
    %41 = vector.load %arg1[%c5, %c0_12, %c0_13] : memref<9x512x1xf32, #tpu.memory_space<vmem>>, vector<1x512x1xf32>
    %42 = vector.shape_cast %41 : vector<1x512x1xf32> to vector<512x1xf32>
    %43 = vector.broadcast %42 : vector<512x1xf32> to vector<512x128xf32>
    %44 = arith.mulf %40, %43 : vector<512x128xf32>
    %45 = arith.truncf %44 : vector<512x128xf32> to vector<512x128xbf16>
    %46 = vector.extract_strided_slice %0 {offsets = [15, 0], sizes = [497, 128], strides = [1, 1]} : vector<512x128xf32> to vector<497x128xf32>
    %47 = vector.extract_strided_slice %0 {offsets = [0, 0], sizes = [15, 128], strides = [1, 1]} : vector<512x128xf32> to vector<15x128xf32>
    %48 = tpu.concatenate %46, %47 in 0 : vector<497x128xf32>, vector<15x128xf32> -> vector<512x128xf32>
    %c6 = arith.constant 6 : index
    %c0_14 = arith.constant 0 : index
    %c0_15 = arith.constant 0 : index
    %49 = vector.load %arg1[%c6, %c0_14, %c0_15] : memref<9x512x1xf32, #tpu.memory_space<vmem>>, vector<1x512x1xf32>
    %50 = vector.shape_cast %49 : vector<1x512x1xf32> to vector<512x1xf32>
    %51 = vector.broadcast %50 : vector<512x1xf32> to vector<512x128xf32>
    %52 = arith.mulf %48, %51 : vector<512x128xf32>
    %53 = arith.truncf %52 : vector<512x128xf32> to vector<512x128xbf16>
    %54 = vector.extract_strided_slice %0 {offsets = [16, 0], sizes = [496, 128], strides = [1, 1]} : vector<512x128xf32> to vector<496x128xf32>
    %55 = vector.extract_strided_slice %0 {offsets = [0, 0], sizes = [16, 128], strides = [1, 1]} : vector<512x128xf32> to vector<16x128xf32>
    %56 = tpu.concatenate %54, %55 in 0 : vector<496x128xf32>, vector<16x128xf32> -> vector<512x128xf32>
    %c7 = arith.constant 7 : index
    %c0_16 = arith.constant 0 : index
    %c0_17 = arith.constant 0 : index
    %57 = vector.load %arg1[%c7, %c0_16, %c0_17] : memref<9x512x1xf32, #tpu.memory_space<vmem>>, vector<1x512x1xf32>
    %58 = vector.shape_cast %57 : vector<1x512x1xf32> to vector<512x1xf32>
    %59 = vector.broadcast %58 : vector<512x1xf32> to vector<512x128xf32>
    %60 = arith.mulf %56, %59 : vector<512x128xf32>
    %61 = arith.truncf %60 : vector<512x128xf32> to vector<512x128xbf16>
    %62 = vector.extract_strided_slice %0 {offsets = [17, 0], sizes = [495, 128], strides = [1, 1]} : vector<512x128xf32> to vector<495x128xf32>
    %63 = vector.extract_strided_slice %0 {offsets = [0, 0], sizes = [17, 128], strides = [1, 1]} : vector<512x128xf32> to vector<17x128xf32>
    %64 = tpu.concatenate %62, %63 in 0 : vector<495x128xf32>, vector<17x128xf32> -> vector<512x128xf32>
    %c8 = arith.constant 8 : index
    %c0_18 = arith.constant 0 : index
    %c0_19 = arith.constant 0 : index
    %65 = vector.load %arg1[%c8, %c0_18, %c0_19] : memref<9x512x1xf32, #tpu.memory_space<vmem>>, vector<1x512x1xf32>
    %66 = vector.shape_cast %65 : vector<1x512x1xf32> to vector<512x1xf32>
    %67 = vector.broadcast %66 : vector<512x1xf32> to vector<512x128xf32>
    %68 = arith.mulf %64, %67 : vector<512x128xf32>
    %69 = arith.truncf %68 : vector<512x128xf32> to vector<512x128xbf16>
    %70 = tpu.concatenate %8, %16, %24, %32, %37, %45, %53, %61, %69 in 1 : vector<512x128xbf16>, vector<512x128xbf16>, vector<512x128xbf16>, vector<512x128xbf16>, vector<512x128xbf16>, vector<512x128xbf16>, vector<512x128xbf16>, vector<512x128xbf16>, vector<512x128xbf16> -> vector<512x1152xbf16>
    %c0_20 = arith.constant 0 : index
    %c0_21 = arith.constant 0 : index
    %71 = vector.load %arg2[%c0_20, %c0_21] : memref<1152x128xbf16, #tpu.memory_space<vmem>>, vector<1152x128xbf16>
    %cst = arith.constant dense<0.000000e+00> : vector<512x128xf32>
    %72 = tpu.matmul %70, %71, %cst {dimension_numbers = #tpu.dot_dimension_numbers<[1], [0], [0], [1], [0, 0, 1, 1], [], []>} : vector<512x1152xbf16>, vector<1152x128xbf16>, vector<512x128xf32> -> vector<512x128xf32>
    %cst_22 = arith.constant dense<0.000000e+00> : vector<128xf32>
    %73 = vector.multi_reduction <add>, %72, %cst_22 [0] : vector<512x128xf32> to vector<128xf32>
    %74 = vector.shape_cast %73 : vector<128xf32> to vector<1x128xf32>
    %75 = arith.mulf %72, %72 : vector<512x128xf32>
    %cst_23 = arith.constant dense<0.000000e+00> : vector<128xf32>
    %76 = vector.multi_reduction <add>, %75, %cst_23 [0] : vector<512x128xf32> to vector<128xf32>
    %77 = vector.shape_cast %76 : vector<128xf32> to vector<1x128xf32>
    %cst_24 = arith.constant 0.001953125 : f32
    %78 = vector.broadcast %cst_24 : f32 to vector<1x128xf32>
    %79 = arith.mulf %74, %78 : vector<1x128xf32>
    %cst_25 = arith.constant 0.001953125 : f32
    %80 = vector.broadcast %cst_25 : f32 to vector<1x128xf32>
    %81 = arith.mulf %77, %80 : vector<1x128xf32>
    %82 = arith.mulf %79, %79 : vector<1x128xf32>
    %83 = arith.subf %81, %82 : vector<1x128xf32>
    %84 = vector.broadcast %79 : vector<1x128xf32> to vector<512x128xf32>
    %85 = arith.subf %72, %84 : vector<512x128xf32>
    %cst_26 = arith.constant 9.99999974E-6 : f32
    %86 = vector.broadcast %cst_26 : f32 to vector<1x128xf32>
    %87 = arith.addf %83, %86 : vector<1x128xf32>
    %88 = math.rsqrt %87 : vector<1x128xf32>
    %89 = vector.broadcast %88 : vector<1x128xf32> to vector<512x128xf32>
    %90 = arith.mulf %85, %89 : vector<512x128xf32>
    %c0_27 = arith.constant 0 : index
    %c0_28 = arith.constant 0 : index
    %91 = vector.load %arg3[%c0_27, %c0_28] : memref<1x128xf32, #tpu.memory_space<vmem>>, vector<1x128xf32>
    %92 = vector.broadcast %91 : vector<1x128xf32> to vector<512x128xf32>
    %93 = arith.mulf %90, %92 : vector<512x128xf32>
    %c0_29 = arith.constant 0 : index
    %c0_30 = arith.constant 0 : index
    %94 = vector.load %arg4[%c0_29, %c0_30] : memref<1x128xf32, #tpu.memory_space<vmem>>, vector<1x128xf32>
    %95 = vector.broadcast %94 : vector<1x128xf32> to vector<512x128xf32>
    %96 = arith.addf %93, %95 : vector<512x128xf32>
    %cst_31 = arith.constant 0.000000e+00 : f32
    %97 = vector.broadcast %cst_31 : f32 to vector<512x128xf32>
    %98 = arith.maximumf %96, %97 : vector<512x128xf32>
    %99 = vector.extract_strided_slice %98 {offsets = [495, 0], sizes = [17, 128], strides = [1, 1]} : vector<512x128xf32> to vector<17x128xf32>
    %100 = vector.extract_strided_slice %98 {offsets = [0, 0], sizes = [495, 128], strides = [1, 1]} : vector<512x128xf32> to vector<495x128xf32>
    %101 = tpu.concatenate %99, %100 in 0 : vector<17x128xf32>, vector<495x128xf32> -> vector<512x128xf32>
    %c0_32 = arith.constant 0 : index
    %c0_33 = arith.constant 0 : index
    %c0_34 = arith.constant 0 : index
    %102 = vector.load %arg1[%c0_32, %c0_33, %c0_34] : memref<9x512x1xf32, #tpu.memory_space<vmem>>, vector<1x512x1xf32>
    %103 = vector.shape_cast %102 : vector<1x512x1xf32> to vector<512x1xf32>
    %104 = vector.broadcast %103 : vector<512x1xf32> to vector<512x128xf32>
    %105 = arith.mulf %101, %104 : vector<512x128xf32>
    %106 = arith.truncf %105 : vector<512x128xf32> to vector<512x128xbf16>
    %107 = vector.extract_strided_slice %98 {offsets = [496, 0], sizes = [16, 128], strides = [1, 1]} : vector<512x128xf32> to vector<16x128xf32>
    %108 = vector.extract_strided_slice %98 {offsets = [0, 0], sizes = [496, 128], strides = [1, 1]} : vector<512x128xf32> to vector<496x128xf32>
    %109 = tpu.concatenate %107, %108 in 0 : vector<16x128xf32>, vector<496x128xf32> -> vector<512x128xf32>
    %c1_35 = arith.constant 1 : index
    %c0_36 = arith.constant 0 : index
    %c0_37 = arith.constant 0 : index
    %110 = vector.load %arg1[%c1_35, %c0_36, %c0_37] : memref<9x512x1xf32, #tpu.memory_space<vmem>>, vector<1x512x1xf32>
    %111 = vector.shape_cast %110 : vector<1x512x1xf32> to vector<512x1xf32>
    %112 = vector.broadcast %111 : vector<512x1xf32> to vector<512x128xf32>
    %113 = arith.mulf %109, %112 : vector<512x128xf32>
    %114 = arith.truncf %113 : vector<512x128xf32> to vector<512x128xbf16>
    %115 = vector.extract_strided_slice %98 {offsets = [497, 0], sizes = [15, 128], strides = [1, 1]} : vector<512x128xf32> to vector<15x128xf32>
    %116 = vector.extract_strided_slice %98 {offsets = [0, 0], sizes = [497, 128], strides = [1, 1]} : vector<512x128xf32> to vector<497x128xf32>
    %117 = tpu.concatenate %115, %116 in 0 : vector<15x128xf32>, vector<497x128xf32> -> vector<512x128xf32>
    %c2_38 = arith.constant 2 : index
    %c0_39 = arith.constant 0 : index
    %c0_40 = arith.constant 0 : index
    %118 = vector.load %arg1[%c2_38, %c0_39, %c0_40] : memref<9x512x1xf32, #tpu.memory_space<vmem>>, vector<1x512x1xf32>
    %119 = vector.shape_cast %118 : vector<1x512x1xf32> to vector<512x1xf32>
    %120 = vector.broadcast %119 : vector<512x1xf32> to vector<512x128xf32>
    %121 = arith.mulf %117, %120 : vector<512x128xf32>
    %122 = arith.truncf %121 : vector<512x128xf32> to vector<512x128xbf16>
    %123 = vector.extract_strided_slice %98 {offsets = [511, 0], sizes = [1, 128], strides = [1, 1]} : vector<512x128xf32> to vector<1x128xf32>
    %124 = vector.extract_strided_slice %98 {offsets = [0, 0], sizes = [511, 128], strides = [1, 1]} : vector<512x128xf32> to vector<511x128xf32>
    %125 = tpu.concatenate %123, %124 in 0 : vector<1x128xf32>, vector<511x128xf32> -> vector<512x128xf32>
    %c3_41 = arith.constant 3 : index
    %c0_42 = arith.constant 0 : index
    %c0_43 = arith.constant 0 : index
    %126 = vector.load %arg1[%c3_41, %c0_42, %c0_43] : memref<9x512x1xf32, #tpu.memory_space<vmem>>, vector<1x512x1xf32>
    %127 = vector.shape_cast %126 : vector<1x512x1xf32> to vector<512x1xf32>
    %128 = vector.broadcast %127 : vector<512x1xf32> to vector<512x128xf32>
    %129 = arith.mulf %125, %128 : vector<512x128xf32>
    %130 = arith.truncf %129 : vector<512x128xf32> to vector<512x128xbf16>
    %c4_44 = arith.constant 4 : index
    %c0_45 = arith.constant 0 : index
    %c0_46 = arith.constant 0 : index
    %131 = vector.load %arg1[%c4_44, %c0_45, %c0_46] : memref<9x512x1xf32, #tpu.memory_space<vmem>>, vector<1x512x1xf32>
    %132 = vector.shape_cast %131 : vector<1x512x1xf32> to vector<512x1xf32>
    %133 = vector.broadcast %132 : vector<512x1xf32> to vector<512x128xf32>
    %134 = arith.mulf %98, %133 : vector<512x128xf32>
    %135 = arith.truncf %134 : vector<512x128xf32> to vector<512x128xbf16>
    %136 = vector.extract_strided_slice %98 {offsets = [1, 0], sizes = [511, 128], strides = [1, 1]} : vector<512x128xf32> to vector<511x128xf32>
    %137 = vector.extract_strided_slice %98 {offsets = [0, 0], sizes = [1, 128], strides = [1, 1]} : vector<512x128xf32> to vector<1x128xf32>
    %138 = tpu.concatenate %136, %137 in 0 : vector<511x128xf32>, vector<1x128xf32> -> vector<512x128xf32>
    %c5_47 = arith.constant 5 : index
    %c0_48 = arith.constant 0 : index
    %c0_49 = arith.constant 0 : index
    %139 = vector.load %arg1[%c5_47, %c0_48, %c0_49] : memref<9x512x1xf32, #tpu.memory_space<vmem>>, vector<1x512x1xf32>
    %140 = vector.shape_cast %139 : vector<1x512x1xf32> to vector<512x1xf32>
    %141 = vector.broadcast %140 : vector<512x1xf32> to vector<512x128xf32>
    %142 = arith.mulf %138, %141 : vector<512x128xf32>
    %143 = arith.truncf %142 : vector<512x128xf32> to vector<512x128xbf16>
    %144 = vector.extract_strided_slice %98 {offsets = [15, 0], sizes = [497, 128], strides = [1, 1]} : vector<512x128xf32> to vector<497x128xf32>
    %145 = vector.extract_strided_slice %98 {offsets = [0, 0], sizes = [15, 128], strides = [1, 1]} : vector<512x128xf32> to vector<15x128xf32>
    %146 = tpu.concatenate %144, %145 in 0 : vector<497x128xf32>, vector<15x128xf32> -> vector<512x128xf32>
    %c6_50 = arith.constant 6 : index
    %c0_51 = arith.constant 0 : index
    %c0_52 = arith.constant 0 : index
    %147 = vector.load %arg1[%c6_50, %c0_51, %c0_52] : memref<9x512x1xf32, #tpu.memory_space<vmem>>, vector<1x512x1xf32>
    %148 = vector.shape_cast %147 : vector<1x512x1xf32> to vector<512x1xf32>
    %149 = vector.broadcast %148 : vector<512x1xf32> to vector<512x128xf32>
    %150 = arith.mulf %146, %149 : vector<512x128xf32>
    %151 = arith.truncf %150 : vector<512x128xf32> to vector<512x128xbf16>
    %152 = vector.extract_strided_slice %98 {offsets = [16, 0], sizes = [496, 128], strides = [1, 1]} : vector<512x128xf32> to vector<496x128xf32>
    %153 = vector.extract_strided_slice %98 {offsets = [0, 0], sizes = [16, 128], strides = [1, 1]} : vector<512x128xf32> to vector<16x128xf32>
    %154 = tpu.concatenate %152, %153 in 0 : vector<496x128xf32>, vector<16x128xf32> -> vector<512x128xf32>
    %c7_53 = arith.constant 7 : index
    %c0_54 = arith.constant 0 : index
    %c0_55 = arith.constant 0 : index
    %155 = vector.load %arg1[%c7_53, %c0_54, %c0_55] : memref<9x512x1xf32, #tpu.memory_space<vmem>>, vector<1x512x1xf32>
    %156 = vector.shape_cast %155 : vector<1x512x1xf32> to vector<512x1xf32>
    %157 = vector.broadcast %156 : vector<512x1xf32> to vector<512x128xf32>
    %158 = arith.mulf %154, %157 : vector<512x128xf32>
    %159 = arith.truncf %158 : vector<512x128xf32> to vector<512x128xbf16>
    %160 = vector.extract_strided_slice %98 {offsets = [17, 0], sizes = [495, 128], strides = [1, 1]} : vector<512x128xf32> to vector<495x128xf32>
    %161 = vector.extract_strided_slice %98 {offsets = [0, 0], sizes = [17, 128], strides = [1, 1]} : vector<512x128xf32> to vector<17x128xf32>
    %162 = tpu.concatenate %160, %161 in 0 : vector<495x128xf32>, vector<17x128xf32> -> vector<512x128xf32>
    %c8_56 = arith.constant 8 : index
    %c0_57 = arith.constant 0 : index
    %c0_58 = arith.constant 0 : index
    %163 = vector.load %arg1[%c8_56, %c0_57, %c0_58] : memref<9x512x1xf32, #tpu.memory_space<vmem>>, vector<1x512x1xf32>
    %164 = vector.shape_cast %163 : vector<1x512x1xf32> to vector<512x1xf32>
    %165 = vector.broadcast %164 : vector<512x1xf32> to vector<512x128xf32>
    %166 = arith.mulf %162, %165 : vector<512x128xf32>
    %167 = arith.truncf %166 : vector<512x128xf32> to vector<512x128xbf16>
    %168 = tpu.concatenate %106, %114, %122, %130, %135, %143, %151, %159, %167 in 1 : vector<512x128xbf16>, vector<512x128xbf16>, vector<512x128xbf16>, vector<512x128xbf16>, vector<512x128xbf16>, vector<512x128xbf16>, vector<512x128xbf16>, vector<512x128xbf16>, vector<512x128xbf16> -> vector<512x1152xbf16>
    %c0_59 = arith.constant 0 : index
    %c0_60 = arith.constant 0 : index
    %169 = vector.load %arg5[%c0_59, %c0_60] : memref<1152x128xbf16, #tpu.memory_space<vmem>>, vector<1152x128xbf16>
    %cst_61 = arith.constant dense<0.000000e+00> : vector<512x128xf32>
    %170 = tpu.matmul %168, %169, %cst_61 {dimension_numbers = #tpu.dot_dimension_numbers<[1], [0], [0], [1], [0, 0, 1, 1], [], []>} : vector<512x1152xbf16>, vector<1152x128xbf16>, vector<512x128xf32> -> vector<512x128xf32>
    %cst_62 = arith.constant dense<0.000000e+00> : vector<128xf32>
    %171 = vector.multi_reduction <add>, %170, %cst_62 [0] : vector<512x128xf32> to vector<128xf32>
    %172 = vector.shape_cast %171 : vector<128xf32> to vector<1x128xf32>
    %173 = arith.mulf %170, %170 : vector<512x128xf32>
    %cst_63 = arith.constant dense<0.000000e+00> : vector<128xf32>
    %174 = vector.multi_reduction <add>, %173, %cst_63 [0] : vector<512x128xf32> to vector<128xf32>
    %175 = vector.shape_cast %174 : vector<128xf32> to vector<1x128xf32>
    %cst_64 = arith.constant 0.001953125 : f32
    %176 = vector.broadcast %cst_64 : f32 to vector<1x128xf32>
    %177 = arith.mulf %172, %176 : vector<1x128xf32>
    %cst_65 = arith.constant 0.001953125 : f32
    %178 = vector.broadcast %cst_65 : f32 to vector<1x128xf32>
    %179 = arith.mulf %175, %178 : vector<1x128xf32>
    %180 = arith.mulf %177, %177 : vector<1x128xf32>
    %181 = arith.subf %179, %180 : vector<1x128xf32>
    %182 = vector.broadcast %177 : vector<1x128xf32> to vector<512x128xf32>
    %183 = arith.subf %170, %182 : vector<512x128xf32>
    %cst_66 = arith.constant 9.99999974E-6 : f32
    %184 = vector.broadcast %cst_66 : f32 to vector<1x128xf32>
    %185 = arith.addf %181, %184 : vector<1x128xf32>
    %186 = math.rsqrt %185 : vector<1x128xf32>
    %187 = vector.broadcast %186 : vector<1x128xf32> to vector<512x128xf32>
    %188 = arith.mulf %183, %187 : vector<512x128xf32>
    %c0_67 = arith.constant 0 : index
    %c0_68 = arith.constant 0 : index
    %189 = vector.load %arg6[%c0_67, %c0_68] : memref<1x128xf32, #tpu.memory_space<vmem>>, vector<1x128xf32>
    %190 = vector.broadcast %189 : vector<1x128xf32> to vector<512x128xf32>
    %191 = arith.mulf %188, %190 : vector<512x128xf32>
    %c0_69 = arith.constant 0 : index
    %c0_70 = arith.constant 0 : index
    %192 = vector.load %arg7[%c0_69, %c0_70] : memref<1x128xf32, #tpu.memory_space<vmem>>, vector<1x128xf32>
    %193 = vector.broadcast %192 : vector<1x128xf32> to vector<512x128xf32>
    %194 = arith.addf %191, %193 : vector<512x128xf32>
    %195 = arith.addf %194, %0 : vector<512x128xf32>
    %cst_71 = arith.constant 0.000000e+00 : f32
    %196 = vector.broadcast %cst_71 : f32 to vector<512x128xf32>
    %197 = arith.maximumf %195, %196 : vector<512x128xf32>
    %c0_72 = arith.constant 0 : index
    %c0_73 = arith.constant 0 : index
    %198 = vector.load %arg8[%c0_72, %c0_73] : memref<512x128xf32, #tpu.memory_space<vmem>>, vector<512x128xf32>
    tpu.vector_store %arg8[%c0_72, %c0_73], %197 {strides = array<i32>} : memref<512x128xf32, #tpu.memory_space<vmem>>, vector<512x128xf32>,
    return
  }
}

</mosaic_0001>

<llo_original>
// kernel: basic_block_forward.1
$region0: #{basic_block_forward.1}
  #allocation0 [shape = 'u32[]', space=smem, size = 0x4, offset = 0x4, fixed_abs, tag = 'smem constant byte address 0x4 - core index']
  #allocation1 [shape = 'u32[144,128]{1,0:T(1,128)}', space=vmem, size = 0x12000, scoped, tag = 'internal scratch']
  %s0 = inlined_call_operand.vmem [shape: f32[512,128], index: 0, kind: input, shape index: {}]
  %s1 = inlined_call_operand.hbm [shape: f32[9,512,1], index: 1, kind: input, shape index: {}]
  %s2 = inlined_call_operand.vmem [shape: bf16[1152,128], index: 2, kind: input, shape index: {}]
  %s3 = inlined_call_operand.vmem [shape: f32[1,128], index: 3, kind: input, shape index: {}]
  %s4 = inlined_call_operand.vmem [shape: f32[1,128], index: 4, kind: input, shape index: {}]
  %s5 = inlined_call_operand.vmem [shape: bf16[1152,128], index: 5, kind: input, shape index: {}]
  %s6 = inlined_call_operand.vmem [shape: f32[1,128], index: 6, kind: input, shape index: {}]
  %s7 = inlined_call_operand.vmem [shape: f32[1,128], index: 7, kind: input, shape index: {}]
  %s8 = inlined_call_operand.vmem [shape: f32[512,128], index: 8, kind: output, shape index: {}]
  %s9 = sld [smem:[#allocation0]]
  $region46: #{basic_block_forward.1} parent=0
    _
  %s11 = ssub.s32 1, %s9
  %s12 = scalar_select 0, %s11, %s9
  $region1: #{basic_block_forward.1} parent=0
    #allocation2 [shape = 'u8[2359296]{0}', space=vmem, size = 0x240000, scoped, tag = 'input window, operand 1, single buffered']
    #allocation3 [shape = 's32[1]{0}', space=sflag, size = 0x4, scoped, tag = 'scoped memory for basic_block_forward.1']
    %13 = vsyncpa [#allocation3], 0
    // Predicated region
    $region2: #{basic_block_forward.1} parent=1 // pred_check
      _
    $region3: #{basic_block_forward.1} parent=1 // pred_check_branch
      %15 = sbr.rel (0) target = $region5
    $region4: #{basic_block_forward.1} parent=1 // pred_region
      _
    $region5: #{basic_block_forward.1} parent=1 // pred_fallthru
      _
    // Predicated region
    $region6: #{basic_block_forward.1} parent=1 // pred_check
      _
    $region7: #{basic_block_forward.1} parent=1 // pred_check_branch
      %17 = sbr.rel (0) target = $region9
    $region8: #{basic_block_forward.1} parent=1 // pred_region
      %s19 = ssub.s32 73728, 73728
      %20 = vsyncadd [#allocation3], %s19
      %s21 = sshll.u32 [#allocation2], 4
      %s22 = int_to_ptr.vmem [resolvable:$true] %s21
      %27 = dma.hbm_to_vmem [thread:$0]  %s1, 73728, %s22, [#allocation3], 128, 128, 8
    $region9: #{basic_block_forward.1} parent=1 // pred_fallthru
      _
    // Predicated region
    $region10: #{basic_block_forward.1} parent=1 // pred_check
      _
    $region11: #{basic_block_forward.1} parent=1 // pred_check_branch
      %29 = sbr.rel (0) target = $region13
    $region12: #{basic_block_forward.1} parent=1 // pred_region
      _
    $region13: #{basic_block_forward.1} parent=1 // pred_fallthru
      _
    // Predicated region
    $region14: #{basic_block_forward.1} parent=1 // pred_check
      _
    $region15: #{basic_block_forward.1} parent=1 // pred_check_branch
      %31 = sbr.rel (0) target = $region17
    $region16: #{basic_block_forward.1} parent=1 // pred_region
      _
    $region17: #{basic_block_forward.1} parent=1 // pred_fallthru
      _
    // Predicated region
    $region18: #{basic_block_forward.1} parent=1 // pred_check
      _
    $region19: #{basic_block_forward.1} parent=1 // pred_check_branch
      %33 = sbr.rel (0) target = $region21
    $region20: #{basic_block_forward.1} parent=1 // pred_region
      _
    $region21: #{basic_block_forward.1} parent=1 // pred_fallthru
      _
    // Predicated region
    $region22: #{basic_block_forward.1} parent=1 // pred_check
      _
    $region23: #{basic_block_forward.1} parent=1 // pred_check_branch
      %35 = sbr.rel (0) target = $region25
    $region24: #{basic_block_forward.1} parent=1 // pred_region
      _
    $region25: #{basic_block_forward.1} parent=1 // pred_fallthru
      _
    // Predicated region
    $region26: #{basic_block_forward.1} parent=1 // pred_check
      _
    $region27: #{basic_block_forward.1} parent=1 // pred_check_branch
      %37 = sbr.rel (0) target = $region29
    $region28: #{basic_block_forward.1} parent=1 // pred_region
      _
    $region29: #{basic_block_forward.1} parent=1 // pred_fallthru
      _
    // Predicated region
    $region30: #{basic_block_forward.1} parent=1 // pred_check
      _
    $region31: #{basic_block_forward.1} parent=1 // pred_check_branch
      %39 = sbr.rel (0) target = $region33
    $region32: #{basic_block_forward.1} parent=1 // pred_region
      _
    $region33: #{basic_block_forward.1} parent=1 // pred_fallthru
      _
    // Predicated region
    $region34: #{basic_block_forward.1} parent=1 // pred_check
      _
    $region35: #{basic_block_forward.1} parent=1 // pred_check_branch
      %41 = sbr.rel (0) target = $region37
    $region36: #{basic_block_forward.1} parent=1 // pred_region
      %42 = dma.done [#allocation3], 73728
    $region37: #{basic_block_forward.1} parent=1 // pred_fallthru
      _
    %v44 = vld [vmem:[%s0] sm:$0xff]
    %v45 = vld [vmem:[%s0 + $0x8] sm:$0xff]
    %v46 = vld [vmem:[%s0 + $0x10] sm:$0xff]
    %v47 = vld [vmem:[%s0 + $0x18] sm:$0xff]
    %v48 = vld [vmem:[%s0 + $0x20] sm:$0xff]
    %v49 = vld [vmem:[%s0 + $0x28] sm:$0xff]
    %v50 = vld [vmem:[%s0 + $0x30] sm:$0xff]
    %v51 = vld [vmem:[%s0 + $0x38] sm:$0xff]
    %v52 = vld [vmem:[%s0 + $0x40] sm:$0xff]
    %v53 = vld [vmem:[%s0 + $0x48] sm:$0xff]
    %v54 = vld [vmem:[%s0 + $0x50] sm:$0xff]
    %v55 = vld [vmem:[%s0 + $0x58] sm:$0xff]
    %v56 = vld [vmem:[%s0 + $0x60] sm:$0xff]
    %v57 = vld [vmem:[%s0 + $0x68] sm:$0xff]
    %v58 = vld [vmem:[%s0 + $0x70] sm:$0xff]
    %v59 = vld [vmem:[%s0 + $0x78] sm:$0xff]
    %v60 = vld [vmem:[%s0 + $0x80] sm:$0xff]
    %v61 = vld [vmem:[%s0 + $0x88] sm:$0xff]
    %v62 = vld [vmem:[%s0 + $0x90] sm:$0xff]
    %v63 = vld [vmem:[%s0 + $0x98] sm:$0xff]
    %v64 = vld [vmem:[%s0 + $0xa0] sm:$0xff]
    %v65 = vld [vmem:[%s0 + $0xa8] sm:$0xff]
    %v66 = vld [vmem:[%s0 + $0xb0] sm:$0xff]
    %v67 = vld [vmem:[%s0 + $0xb8] sm:$0xff]
    %v68 = vld [vmem:[%s0 + $0xc0] sm:$0xff]
    %v69 = vld [vmem:[%s0 + $0xc8] sm:$0xff]
    %v70 = vld [vmem:[%s0 + $0xd0] sm:$0xff]
    %v71 = vld [vmem:[%s0 + $0xd8] sm:$0xff]
    %v72 = vld [vmem:[%s0 + $0xe0] sm:$0xff]
    %v73 = vld [vmem:[%s0 + $0xe8] sm:$0xff]
    %v74 = vld [vmem:[%s0 + $0xf0] sm:$0xff]
    %v75 = vld [vmem:[%s0 + $0xf8] sm:$0xff]
    %v76 = vld [vmem:[%s0 + $0x100] sm:$0xff]
    %v77 = vld [vmem:[%s0 + $0x108] sm:$0xff]
    %v78 = vld [vmem:[%s0 + $0x110] sm:$0xff]
    %v79 = vld [vmem:[%s0 + $0x118] sm:$0xff]
    %v80 = vld [vmem:[%s0 + $0x120] sm:$0xff]
    %v81 = vld [vmem:[%s0 + $0x128] sm:$0xff]
    %v82 = vld [vmem:[%s0 + $0x130] sm:$0xff]
    %v83 = vld [vmem:[%s0 + $0x138] sm:$0xff]
    %v84 = vld [vmem:[%s0 + $0x140] sm:$0xff]
    %v85 = vld [vmem:[%s0 + $0x148] sm:$0xff]
    %v86 = vld [vmem:[%s0 + $0x150] sm:$0xff]
    %v87 = vld [vmem:[%s0 + $0x158] sm:$0xff]
    %v88 = vld [vmem:[%s0 + $0x160] sm:$0xff]
    %v89 = vld [vmem:[%s0 + $0x168] sm:$0xff]
    %v90 = vld [vmem:[%s0 + $0x170] sm:$0xff]
    %v91 = vld [vmem:[%s0 + $0x178] sm:$0xff]
    %v92 = vld [vmem:[%s0 + $0x180] sm:$0xff]
    %v93 = vld [vmem:[%s0 + $0x188] sm:$0xff]
    %v94 = vld [vmem:[%s0 + $0x190] sm:$0xff]
    %v95 = vld [vmem:[%s0 + $0x198] sm:$0xff]
    %v96 = vld [vmem:[%s0 + $0x1a0] sm:$0xff]
    %v97 = vld [vmem:[%s0 + $0x1a8] sm:$0xff]
    %v98 = vld [vmem:[%s0 + $0x1b0] sm:$0xff]
    %v99 = vld [vmem:[%s0 + $0x1b8] sm:$0xff]
    %v100 = vld [vmem:[%s0 + $0x1c0] sm:$0xff]
    %v101 = vld [vmem:[%s0 + $0x1c8] sm:$0xff]
    %v102 = vld [vmem:[%s0 + $0x1d0] sm:$0xff]
    %v103 = vld [vmem:[%s0 + $0x1d8] sm:$0xff]
    %v104 = vld [vmem:[%s0 + $0x1e0] sm:$0xff]
    %v105 = vld [vmem:[%s0 + $0x1e8] sm:$0xff]
    %v106 = vld [vmem:[%s0 + $0x1f0] sm:$0xff]
    %v107 = vld [vmem:[%s0 + $0x1f8] sm:$0xff]
    %vm111 = vcmask 1040384
    %v112 = vrot.slane %v105, 7
    %v113 = vrot.slane %v106, 7
    %v114 = vsel %vm111, %v112, %v113
    %v115 = vrot.slane %v107, 7
    %v116 = vsel %vm111, %v113, %v115
    %v181 = vrot.slane %v44, 7
    %v182 = vrot.slane %v45, 7
    %v183 = vsel %vm111, %v181, %v182
    %v184 = vrot.slane %v46, 7
    %v185 = vsel %vm111, %v182, %v184
    %v186 = vrot.slane %v47, 7
    %v187 = vsel %vm111, %v184, %v186
    %v188 = vrot.slane %v48, 7
    %v189 = vsel %vm111, %v186, %v188
    %v190 = vrot.slane %v49, 7
    %v191 = vsel %vm111, %v188, %v190
    %v192 = vrot.slane %v50, 7
    %v193 = vsel %vm111, %v190, %v192
    %v194 = vrot.slane %v51, 7
    %v195 = vsel %vm111, %v192, %v194
    %v196 = vrot.slane %v52, 7
    %v197 = vsel %vm111, %v194, %v196
    %v198 = vrot.slane %v53, 7
    %v199 = vsel %vm111, %v196, %v198
    %v200 = vrot.slane %v54, 7
    %v201 = vsel %vm111, %v198, %v200
    %v202 = vrot.slane %v55, 7
    %v203 = vsel %vm111, %v200, %v202
    %v204 = vrot.slane %v56, 7
    %v205 = vsel %vm111, %v202, %v204
    %v206 = vrot.slane %v57, 7
    %v207 = vsel %vm111, %v204, %v206
    %v208 = vrot.slane %v58, 7
    %v209 = vsel %vm111, %v206, %v208
    %v210 = vrot.slane %v59, 7
    %v211 = vsel %vm111, %v208, %v210
    %v212 = vrot.slane %v60, 7
    %v213 = vsel %vm111, %v210, %v212
    %v214 = vrot.slane %v61, 7
    %v215 = vsel %vm111, %v212, %v214
    %v216 = vrot.slane %v62, 7
    %v217 = vsel %vm111, %v214, %v216
    %v218 = vrot.slane %v63, 7
    %v219 = vsel %vm111, %v216, %v218
    %v220 = vrot.slane %v64, 7
    %v221 = vsel %vm111, %v218, %v220
    %v222 = vrot.slane %v65, 7
    %v223 = vsel %vm111, %v220, %v222
    %v224 = vrot.slane %v66, 7
    %v225 = vsel %vm111, %v222, %v224
    %v226 = vrot.slane %v67, 7
    %v227 = vsel %vm111, %v224, %v226
    %v228 = vrot.slane %v68, 7
    %v229 = vsel %vm111, %v226, %v228
    %v230 = vrot.slane %v69, 7
    %v231 = vsel %vm111, %v228, %v230
    %v232 = vrot.slane %v70, 7
    %v233 = vsel %vm111, %v230, %v232
    %v234 = vrot.slane %v71, 7
    %v235 = vsel %vm111, %v232, %v234
    %v236 = vrot.slane %v72, 7
    %v237 = vsel %vm111, %v234, %v236
    %v238 = vrot.slane %v73, 7
    %v239 = vsel %vm111, %v236, %v238
    %v240 = vrot.slane %v74, 7
    %v241 = vsel %vm111, %v238, %v240
    %v242 = vrot.slane %v75, 7
    %v243 = vsel %vm111, %v240, %v242
    %v244 = vrot.slane %v76, 7
    %v245 = vsel %vm111, %v242, %v244
    %v246 = vrot.slane %v77, 7
    %v247 = vsel %vm111, %v244, %v246
    %v248 = vrot.slane %v78, 7
    %v249 = vsel %vm111, %v246, %v248
    %v250 = vrot.slane %v79, 7
    %v251 = vsel %vm111, %v248, %v250
    %v252 = vrot.slane %v80, 7
    %v253 = vsel %vm111, %v250, %v252
    %v254 = vrot.slane %v81, 7
    %v255 = vsel %vm111, %v252, %v254
    %v256 = vrot.slane %v82, 7
    %v257 = vsel %vm111, %v254, %v256
    %v258 = vrot.slane %v83, 7
    %v259 = vsel %vm111, %v256, %v258
    %v260 = vrot.slane %v84, 7
    %v261 = vsel %vm111, %v258, %v260
    %v262 = vrot.slane %v85, 7
    %v263 = vsel %vm111, %v260, %v262
    %v264 = vrot.slane %v86, 7
    %v265 = vsel %vm111, %v262, %v264
    %v266 = vrot.slane %v87, 7
    %v267 = vsel %vm111, %v264, %v266
    %v268 = vrot.slane %v88, 7
    %v269 = vsel %vm111, %v266, %v268
    %v270 = vrot.slane %v89, 7
    %v271 = vsel %vm111, %v268, %v270
    %v272 = vrot.slane %v90, 7
    %v273 = vsel %vm111, %v270, %v272
    %v274 = vrot.slane %v91, 7
    %v275 = vsel %vm111, %v272, %v274
    %v276 = vrot.slane %v92, 7
    %v277 = vsel %vm111, %v274, %v276
    %v278 = vrot.slane %v93, 7
    %v279 = vsel %vm111, %v276, %v278
    %v280 = vrot.slane %v94, 7
    %v281 = vsel %vm111, %v278, %v280
    %v282 = vrot.slane %v95, 7
    %v283 = vsel %vm111, %v280, %v282
    %v284 = vrot.slane %v96, 7
    %v285 = vsel %vm111, %v282, %v284
    %v286 = vrot.slane %v97, 7
    %v287 = vsel %vm111, %v284, %v286
    %v288 = vrot.slane %v98, 7
    %v289 = vsel %vm111, %v286, %v288
    %v290 = vrot.slane %v99, 7
    %v291 = vsel %vm111, %v288, %v290
    %v292 = vrot.slane %v100, 7
    %v293 = vsel %vm111, %v290, %v292
    %v294 = vrot.slane %v101, 7
    %v295 = vsel %vm111, %v292, %v294
    %v296 = vrot.slane %v102, 7
    %v297 = vsel %vm111, %v294, %v296
    %v298 = vrot.slane %v103, 7
    %v299 = vsel %vm111, %v296, %v298
    %v300 = vrot.slane %v104, 7
    %v301 = vsel %vm111, %v298, %v300
    %v302 = vsel %vm111, %v300, %v112
    %v365 = vsel %vm111, %v115, %v181
    %v366 = vld [vmem:[#allocation2] sm:$0xff]
    %v367 = vld [vmem:[#allocation2 + $0x8] sm:$0xff]
    %v368 = vld [vmem:[#allocation2 + $0x10] sm:$0xff]
    %v369 = vld [vmem:[#allocation2 + $0x18] sm:$0xff]
    %v370 = vld [vmem:[#allocation2 + $0x20] sm:$0xff]
    %v371 = vld [vmem:[#allocation2 + $0x28] sm:$0xff]
    %v372 = vld [vmem:[#allocation2 + $0x30] sm:$0xff]
    %v373 = vld [vmem:[#allocation2 + $0x38] sm:$0xff]
    %v374 = vld [vmem:[#allocation2 + $0x40] sm:$0xff]
    %v375 = vld [vmem:[#allocation2 + $0x48] sm:$0xff]
    %v376 = vld [vmem:[#allocation2 + $0x50] sm:$0xff]
    %v377 = vld [vmem:[#allocation2 + $0x58] sm:$0xff]
    %v378 = vld [vmem:[#allocation2 + $0x60] sm:$0xff]
    %v379 = vld [vmem:[#allocation2 + $0x68] sm:$0xff]
    %v380 = vld [vmem:[#allocation2 + $0x70] sm:$0xff]
    %v381 = vld [vmem:[#allocation2 + $0x78] sm:$0xff]
    %v382 = vld [vmem:[#allocation2 + $0x80] sm:$0xff]
    %v383 = vld [vmem:[#allocation2 + $0x88] sm:$0xff]
    %v384 = vld [vmem:[#allocation2 + $0x90] sm:$0xff]
    %v385 = vld [vmem:[#allocation2 + $0x98] sm:$0xff]
    %v386 = vld [vmem:[#allocation2 + $0xa0] sm:$0xff]
    %v387 = vld [vmem:[#allocation2 + $0xa8] sm:$0xff]
    %v388 = vld [vmem:[#allocation2 + $0xb0] sm:$0xff]
    %v389 = vld [vmem:[#allocation2 + $0xb8] sm:$0xff]
    %v390 = vld [vmem:[#allocation2 + $0xc0] sm:$0xff]
    %v391 = vld [vmem:[#allocation2 + $0xc8] sm:$0xff]
    %v392 = vld [vmem:[#allocation2 + $0xd0] sm:$0xff]
    %v393 = vld [vmem:[#allocation2 + $0xd8] sm:$0xff]
    %v394 = vld [vmem:[#allocation2 + $0xe0] sm:$0xff]
    %v395 = vld [vmem:[#allocation2 + $0xe8] sm:$0xff]
    %v396 = vld [vmem:[#allocation2 + $0xf0] sm:$0xff]
    %v397 = vld [vmem:[#allocation2 + $0xf8] sm:$0xff]
    %v398 = vld [vmem:[#allocation2 + $0x100] sm:$0xff]
    %v399 = vld [vmem:[#allocation2 + $0x108] sm:$0xff]
    %v400 = vld [vmem:[#allocation2 + $0x110] sm:$0xff]
    %v401 = vld [vmem:[#allocation2 + $0x118] sm:$0xff]
    %v402 = vld [vmem:[#allocation2 + $0x120] sm:$0xff]
    %v403 = vld [vmem:[#allocation2 + $0x128] sm:$0xff]
    %v404 = vld [vmem:[#allocation2 + $0x130] sm:$0xff]
    %v405 = vld [vmem:[#allocation2 + $0x138] sm:$0xff]
    %v406 = vld [vmem:[#allocation2 + $0x140] sm:$0xff]
    %v407 = vld [vmem:[#allocation2 + $0x148] sm:$0xff]
    %v408 = vld [vmem:[#allocation2 + $0x150] sm:$0xff]
    %v409 = vld [vmem:[#allocation2 + $0x158] sm:$0xff]
    %v410 = vld [vmem:[#allocation2 + $0x160] sm:$0xff]
    %v411 = vld [vmem:[#allocation2 + $0x168] sm:$0xff]
    %v412 = vld [vmem:[#allocation2 + $0x170] sm:$0xff]
    %v413 = vld [vmem:[#allocation2 + $0x178] sm:$0xff]
    %v414 = vld [vmem:[#allocation2 + $0x180] sm:$0xff]
    %v415 = vld [vmem:[#allocation2 + $0x188] sm:$0xff]
    %v416 = vld [vmem:[#allocation2 + $0x190] sm:$0xff]
    %v417 = vld [vmem:[#allocation2 + $0x198] sm:$0xff]
    %v418 = vld [vmem:[#allocation2 + $0x1a0] sm:$0xff]
    %v419 = vld [vmem:[#allocation2 + $0x1a8] sm:$0xff]
    %v420 = vld [vmem:[#allocation2 + $0x1b0] sm:$0xff]
    %v421 = vld [vmem:[#allocation2 + $0x1b8] sm:$0xff]
    %v422 = vld [vmem:[#allocation2 + $0x1c0] sm:$0xff]
    %v423 = vld [vmem:[#allocation2 + $0x1c8] sm:$0xff]
    %v424 = vld [vmem:[#allocation2 + $0x1d0] sm:$0xff]
    %v425 = vld [vmem:[#allocation2 + $0x1d8] sm:$0xff]
    %v426 = vld [vmem:[#allocation2 + $0x1e0] sm:$0xff]
    %v427 = vld [vmem:[#allocation2 + $0x1e8] sm:$0xff]
    %v428 = vld [vmem:[#allocation2 + $0x1f0] sm:$0xff]
    %v429 = vld [vmem:[#allocation2 + $0x1f8] sm:$0xff]
    %431 = vset.pattern.permute.xlu0 0
    %432 = vperm.xlu0 %431, %v366
    %v433 = vpop.permute.xlu0 %432
    %436 = vset.pattern.permute.xlu0 0
    %437 = vperm.xlu0 %436, %v367
    %v438 = vpop.permute.xlu0 %437
    %441 = vset.pattern.permute.xlu0 0
    %442 = vperm.xlu0 %441, %v368
    %v443 = vpop.permute.xlu0 %442
    %446 = vset.pattern.permute.xlu0 0
    %447 = vperm.xlu0 %446, %v369
    %v448 = vpop.permute.xlu0 %447
    %451 = vset.pattern.permute.xlu0 0
    %452 = vperm.xlu0 %451, %v370
    %v453 = vpop.permute.xlu0 %452
    %456 = vset.pattern.permute.xlu0 0
    %457 = vperm.xlu0 %456, %v371
    %v458 = vpop.permute.xlu0 %457
    %461 = vset.pattern.permute.xlu0 0
    %462 = vperm.xlu0 %461, %v372
    %v463 = vpop.permute.xlu0 %462
    %466 = vset.pattern.permute.xlu0 0
    %467 = vperm.xlu0 %466, %v373
    %v468 = vpop.permute.xlu0 %467
    %471 = vset.pattern.permute.xlu0 0
    %472 = vperm.xlu0 %471, %v374
    %v473 = vpop.permute.xlu0 %472
    %476 = vset.pattern.permute.xlu0 0
    %477 = vperm.xlu0 %476, %v375
    %v478 = vpop.permute.xlu0 %477
    %481 = vset.pattern.permute.xlu0 0
    %482 = vperm.xlu0 %481, %v376
    %v483 = vpop.permute.xlu0 %482
    %486 = vset.pattern.permute.xlu0 0
    %487 = vperm.xlu0 %486, %v377
    %v488 = vpop.permute.xlu0 %487
    %491 = vset.pattern.permute.xlu0 0
    %492 = vperm.xlu0 %491, %v378
    %v493 = vpop.permute.xlu0 %492
    %496 = vset.pattern.permute.xlu0 0
    %497 = vperm.xlu0 %496, %v379
    %v498 = vpop.permute.xlu0 %497
    %501 = vset.pattern.permute.xlu0 0
    %502 = vperm.xlu0 %501, %v380
    %v503 = vpop.permute.xlu0 %502
    %506 = vset.pattern.permute.xlu0 0
    %507 = vperm.xlu0 %506, %v381
    %v508 = vpop.permute.xlu0 %507
    %511 = vset.pattern.permute.xlu0 0
    %512 = vperm.xlu0 %511, %v382
    %v513 = vpop.permute.xlu0 %512
    %516 = vset.pattern.permute.xlu0 0
    %517 = vperm.xlu0 %516, %v383
    %v518 = vpop.permute.xlu0 %517
    %521 = vset.pattern.permute.xlu0 0
    %522 = vperm.xlu0 %521, %v384
    %v523 = vpop.permute.xlu0 %522
    %526 = vset.pattern.permute.xlu0 0
    %527 = vperm.xlu0 %526, %v385
    %v528 = vpop.permute.xlu0 %527
    %531 = vset.pattern.permute.xlu0 0
    %532 = vperm.xlu0 %531, %v386
    %v533 = vpop.permute.xlu0 %532
    %536 = vset.pattern.permute.xlu0 0
    %537 = vperm.xlu0 %536, %v387
    %v538 = vpop.permute.xlu0 %537
    %541 = vset.pattern.permute.xlu0 0
    %542 = vperm.xlu0 %541, %v388
    %v543 = vpop.permute.xlu0 %542
    %546 = vset.pattern.permute.xlu0 0
    %547 = vperm.xlu0 %546, %v389
    %v548 = vpop.permute.xlu0 %547
    %551 = vset.pattern.permute.xlu0 0
    %552 = vperm.xlu0 %551, %v390
    %v553 = vpop.permute.xlu0 %552
    %556 = vset.pattern.permute.xlu0 0
    %557 = vperm.xlu0 %556, %v391
    %v558 = vpop.permute.xlu0 %557
    %561 = vset.pattern.permute.xlu0 0
    %562 = vperm.xlu0 %561, %v392
    %v563 = vpop.permute.xlu0 %562
    %566 = vset.pattern.permute.xlu0 0
    %567 = vperm.xlu0 %566, %v393
    %v568 = vpop.permute.xlu0 %567
    %571 = vset.pattern.permute.xlu0 0
    %572 = vperm.xlu0 %571, %v394
    %v573 = vpop.permute.xlu0 %572
    %576 = vset.pattern.permute.xlu0 0
    %577 = vperm.xlu0 %576, %v395
    %v578 = vpop.permute.xlu0 %577
    %581 = vset.pattern.permute.xlu0 0
    %582 = vperm.xlu0 %581, %v396
    %v583 = vpop.permute.xlu0 %582
    %586 = vset.pattern.permute.xlu0 0
    %587 = vperm.xlu0 %586, %v397
    %v588 = vpop.permute.xlu0 %587
    %591 = vset.pattern.permute.xlu0 0
    %592 = vperm.xlu0 %591, %v398
    %v593 = vpop.permute.xlu0 %592
    %596 = vset.pattern.permute.xlu0 0
    %597 = vperm.xlu0 %596, %v399
    %v598 = vpop.permute.xlu0 %597
    %601 = vset.pattern.permute.xlu0 0
    %602 = vperm.xlu0 %601, %v400
    %v603 = vpop.permute.xlu0 %602
    %606 = vset.pattern.permute.xlu0 0
    %607 = vperm.xlu0 %606, %v401
    %v608 = vpop.permute.xlu0 %607
    %611 = vset.pattern.permute.xlu0 0
    %612 = vperm.xlu0 %611, %v402
    %v613 = vpop.permute.xlu0 %612
    %616 = vset.pattern.permute.xlu0 0
    %617 = vperm.xlu0 %616, %v403
    %v618 = vpop.permute.xlu0 %617
    %621 = vset.pattern.permute.xlu0 0
    %622 = vperm.xlu0 %621, %v404
    %v623 = vpop.permute.xlu0 %622
    %626 = vset.pattern.permute.xlu0 0
    %627 = vperm.xlu0 %626, %v405
    %v628 = vpop.permute.xlu0 %627
    %631 = vset.pattern.permute.xlu0 0
    %632 = vperm.xlu0 %631, %v406
    %v633 = vpop.permute.xlu0 %632
    %636 = vset.pattern.permute.xlu0 0
    %637 = vperm.xlu0 %636, %v407
    %v638 = vpop.permute.xlu0 %637
    %641 = vset.pattern.permute.xlu0 0
    %642 = vperm.xlu0 %641, %v408
    %v643 = vpop.permute.xlu0 %642
    %646 = vset.pattern.permute.xlu0 0
    %647 = vperm.xlu0 %646, %v409
    %v648 = vpop.permute.xlu0 %647
    %651 = vset.pattern.permute.xlu0 0
    %652 = vperm.xlu0 %651, %v410
    %v653 = vpop.permute.xlu0 %652
    %656 = vset.pattern.permute.xlu0 0
    %657 = vperm.xlu0 %656, %v411
    %v658 = vpop.permute.xlu0 %657
    %661 = vset.pattern.permute.xlu0 0
    %662 = vperm.xlu0 %661, %v412
    %v663 = vpop.permute.xlu0 %662
    %666 = vset.pattern.permute.xlu0 0
    %667 = vperm.xlu0 %666, %v413
    %v668 = vpop.permute.xlu0 %667
    %671 = vset.pattern.permute.xlu0 0
    %672 = vperm.xlu0 %671, %v414
    %v673 = vpop.permute.xlu0 %672
    %676 = vset.pattern.permute.xlu0 0
    %677 = vperm.xlu0 %676, %v415
    %v678 = vpop.permute.xlu0 %677
    %681 = vset.pattern.permute.xlu0 0
    %682 = vperm.xlu0 %681, %v416
    %v683 = vpop.permute.xlu0 %682
    %686 = vset.pattern.permute.xlu0 0
    %687 = vperm.xlu0 %686, %v417
    %v688 = vpop.permute.xlu0 %687
    %691 = vset.pattern.permute.xlu0 0
    %692 = vperm.xlu0 %691, %v418
    %v693 = vpop.permute.xlu0 %692
    %696 = vset.pattern.permute.xlu0 0
    %697 = vperm.xlu0 %696, %v419
    %v698 = vpop.permute.xlu0 %697
    %701 = vset.pattern.permute.xlu0 0
    %702 = vperm.xlu0 %701, %v420
    %v703 = vpop.permute.xlu0 %702
    %706 = vset.pattern.permute.xlu0 0
    %707 = vperm.xlu0 %706, %v421
    %v708 = vpop.permute.xlu0 %707
    %711 = vset.pattern.permute.xlu0 0
    %712 = vperm.xlu0 %711, %v422
    %v713 = vpop.permute.xlu0 %712
    %716 = vset.pattern.permute.xlu0 0
    %717 = vperm.xlu0 %716, %v423
    %v718 = vpop.permute.xlu0 %717
    %721 = vset.pattern.permute.xlu0 0
    %722 = vperm.xlu0 %721, %v424
    %v723 = vpop.permute.xlu0 %722
    %726 = vset.pattern.permute.xlu0 0
    %727 = vperm.xlu0 %726, %v425
    %v728 = vpop.permute.xlu0 %727
    %731 = vset.pattern.permute.xlu0 0
    %732 = vperm.xlu0 %731, %v426
    %v733 = vpop.permute.xlu0 %732
    %736 = vset.pattern.permute.xlu0 0
    %737 = vperm.xlu0 %736, %v427
    %v738 = vpop.permute.xlu0 %737
    %741 = vset.pattern.permute.xlu0 0
    %742 = vperm.xlu0 %741, %v428
    %v743 = vpop.permute.xlu0 %742
    %746 = vset.pattern.permute.xlu0 0
    %747 = vperm.xlu0 %746, %v429
    %v748 = vpop.permute.xlu0 %747
    %v750 = vmul.f32 %v114, %v433
    %v751 = vmul.f32 %v116, %v438
    %v752 = vmul.f32 %v365, %v443
    %v753 = vmul.f32 %v183, %v448
    %v754 = vmul.f32 %v185, %v453
    %v755 = vmul.f32 %v187, %v458
    %v756 = vmul.f32 %v189, %v463
    %v757 = vmul.f32 %v191, %v468
    %v758 = vmul.f32 %v193, %v473
    %v759 = vmul.f32 %v195, %v478
    %v760 = vmul.f32 %v197, %v483
    %v761 = vmul.f32 %v199, %v488
    %v762 = vmul.f32 %v201, %v493
    %v763 = vmul.f32 %v203, %v498
    %v764 = vmul.f32 %v205, %v503
    %v765 = vmul.f32 %v207, %v508
    %v766 = vmul.f32 %v209, %v513
    %v767 = vmul.f32 %v211, %v518
    %v768 = vmul.f32 %v213, %v523
    %v769 = vmul.f32 %v215, %v528
    %v770 = vmul.f32 %v217, %v533
    %v771 = vmul.f32 %v219, %v538
    %v772 = vmul.f32 %v221, %v543
    %v773 = vmul.f32 %v223, %v548
    %v774 = vmul.f32 %v225, %v553
    %v775 = vmul.f32 %v227, %v558
    %v776 = vmul.f32 %v229, %v563
    %v777 = vmul.f32 %v231, %v568
    %v778 = vmul.f32 %v233, %v573
    %v779 = vmul.f32 %v235, %v578
    %v780 = vmul.f32 %v237, %v583
    %v781 = vmul.f32 %v239, %v588
    %v782 = vmul.f32 %v241, %v593
    %v783 = vmul.f32 %v243, %v598
    %v784 = vmul.f32 %v245, %v603
    %v785 = vmul.f32 %v247, %v608
    %v786 = vmul.f32 %v249, %v613
    %v787 = vmul.f32 %v251, %v618
    %v788 = vmul.f32 %v253, %v623
    %v789 = vmul.f32 %v255, %v628
    %v790 = vmul.f32 %v257, %v633
    %v791 = vmul.f32 %v259, %v638
    %v792 = vmul.f32 %v261, %v643
    %v793 = vmul.f32 %v263, %v648
    %v794 = vmul.f32 %v265, %v653
    %v795 = vmul.f32 %v267, %v658
    %v796 = vmul.f32 %v269, %v663
    %v797 = vmul.f32 %v271, %v668
    %v798 = vmul.f32 %v273, %v673
    %v799 = vmul.f32 %v275, %v678
    %v800 = vmul.f32 %v277, %v683
    %v801 = vmul.f32 %v279, %v688
    %v802 = vmul.f32 %v281, %v693
    %v803 = vmul.f32 %v283, %v698
    %v804 = vmul.f32 %v285, %v703
    %v805 = vmul.f32 %v287, %v708
    %v806 = vmul.f32 %v289, %v713
    %v807 = vmul.f32 %v291, %v718
    %v808 = vmul.f32 %v293, %v723
    %v809 = vmul.f32 %v295, %v728
    %v810 = vmul.f32 %v297, %v733
    %v811 = vmul.f32 %v299, %v738
    %v812 = vmul.f32 %v301, %v743
    %v813 = vmul.f32 %v302, %v748
    %v814 = vpack.c.bf16 %v751, %v750
    %v815 = vpack.c.bf16 %v753, %v752
    %v816 = vpack.c.bf16 %v755, %v754
    %v817 = vpack.c.bf16 %v757, %v756
    %v818 = vpack.c.bf16 %v759, %v758
    %v819 = vpack.c.bf16 %v761, %v760
    %v820 = vpack.c.bf16 %v763, %v762
    %v821 = vpack.c.bf16 %v765, %v764
    %v822 = vpack.c.bf16 %v767, %v766
    %v823 = vpack.c.bf16 %v769, %v768
    %v824 = vpack.c.bf16 %v771, %v770
    %v825 = vpack.c.bf16 %v773, %v772
    %v826 = vpack.c.bf16 %v775, %v774
    %v827 = vpack.c.bf16 %v777, %v776
    %v828 = vpack.c.bf16 %v779, %v778
    %v829 = vpack.c.bf16 %v781, %v780
    %v830 = vpack.c.bf16 %v783, %v782
    %v831 = vpack.c.bf16 %v785, %v784
    %v832 = vpack.c.bf16 %v787, %v786
    %v833 = vpack.c.bf16 %v789, %v788
    %v834 = vpack.c.bf16 %v791, %v790
    %v835 = vpack.c.bf16 %v793, %v792
    %v836 = vpack.c.bf16 %v795, %v794
    %v837 = vpack.c.bf16 %v797, %v796
    %v838 = vpack.c.bf16 %v799, %v798
    %v839 = vpack.c.bf16 %v801, %v800
    %v840 = vpack.c.bf16 %v803, %v802
    %v841 = vpack.c.bf16 %v805, %v804
    %v842 = vpack.c.bf16 %v807, %v806
    %v843 = vpack.c.bf16 %v809, %v808
    %v844 = vpack.c.bf16 %v811, %v810
    %v845 = vpack.c.bf16 %v813, %v812
    %s846 = scalar_lea.vmem [#allocation2], 512
    %v847 = vld [vmem:[%s846] sm:$0xff]
    %v848 = vld [vmem:[%s846 + $0x8] sm:$0xff]
    %v849 = vld [vmem:[%s846 + $0x10] sm:$0xff]
    %v850 = vld [vmem:[%s846 + $0x18] sm:$0xff]
    %v851 = vld [vmem:[%s846 + $0x20] sm:$0xff]
    %v852 = vld [vmem:[%s846 + $0x28] sm:$0xff]
    %v853 = vld [vmem:[%s846 + $0x30] sm:$0xff]
    %v854 = vld [vmem:[%s846 + $0x38] sm:$0xff]
    %v855 = vld [vmem:[%s846 + $0x40] sm:$0xff]
    %v856 = vld [vmem:[%s846 + $0x48] sm:$0xff]
    %v857 = vld [vmem:[%s846 + $0x50] sm:$0xff]
    %v858 = vld [vmem:[%s846 + $0x58] sm:$0xff]
    %v859 = vld [vmem:[%s846 + $0x60] sm:$0xff]
    %v860 = vld [vmem:[%s846 + $0x68] sm:$0xff]
    %v861 = vld [vmem:[%s846 + $0x70] sm:$0xff]
    %v862 = vld [vmem:[%s846 + $0x78] sm:$0xff]
    %v863 = vld [vmem:[%s846 + $0x80] sm:$0xff]
    %v864 = vld [vmem:[%s846 + $0x88] sm:$0xff]
    %v865 = vld [vmem:[%s846 + $0x90] sm:$0xff]
    %v866 = vld [vmem:[%s846 + $0x98] sm:$0xff]
    %v867 = vld [vmem:[%s846 + $0xa0] sm:$0xff]
    %v868 = vld [vmem:[%s846 + $0xa8] sm:$0xff]
    %v869 = vld [vmem:[%s846 + $0xb0] sm:$0xff]
    %v870 = vld [vmem:[%s846 + $0xb8] sm:$0xff]
    %v871 = vld [vmem:[%s846 + $0xc0] sm:$0xff]
    %v872 = vld [vmem:[%s846 + $0xc8] sm:$0xff]
    %v873 = vld [vmem:[%s846 + $0xd0] sm:$0xff]
    %v874 = vld [vmem:[%s846 + $0xd8] sm:$0xff]
    %v875 = vld [vmem:[%s846 + $0xe0] sm:$0xff]
    %v876 = vld [vmem:[%s846 + $0xe8] sm:$0xff]
    %v877 = vld [vmem:[%s846 + $0xf0] sm:$0xff]
    %v878 = vld [vmem:[%s846 + $0xf8] sm:$0xff]
    %v879 = vld [vmem:[%s846 + $0x100] sm:$0xff]
    %v880 = vld [vmem:[%s846 + $0x108] sm:$0xff]
    %v881 = vld [vmem:[%s846 + $0x110] sm:$0xff]
    %v882 = vld [vmem:[%s846 + $0x118] sm:$0xff]
    %v883 = vld [vmem:[%s846 + $0x120] sm:$0xff]
    %v884 = vld [vmem:[%s846 + $0x128] sm:$0xff]
    %v885 = vld [vmem:[%s846 + $0x130] sm:$0xff]
    %v886 = vld [vmem:[%s846 + $0x138] sm:$0xff]
    %v887 = vld [vmem:[%s846 + $0x140] sm:$0xff]
    %v888 = vld [vmem:[%s846 + $0x148] sm:$0xff]
    %v889 = vld [vmem:[%s846 + $0x150] sm:$0xff]
    %v890 = vld [vmem:[%s846 + $0x158] sm:$0xff]
    %v891 = vld [vmem:[%s846 + $0x160] sm:$0xff]
    %v892 = vld [vmem:[%s846 + $0x168] sm:$0xff]
    %v893 = vld [vmem:[%s846 + $0x170] sm:$0xff]
    %v894 = vld [vmem:[%s846 + $0x178] sm:$0xff]
    %v895 = vld [vmem:[%s846 + $0x180] sm:$0xff]
    %v896 = vld [vmem:[%s846 + $0x188] sm:$0xff]
    %v897 = vld [vmem:[%s846 + $0x190] sm:$0xff]
    %v898 = vld [vmem:[%s846 + $0x198] sm:$0xff]
    %v899 = vld [vmem:[%s846 + $0x1a0] sm:$0xff]
    %v900 = vld [vmem:[%s846 + $0x1a8] sm:$0xff]
    %v901 = vld [vmem:[%s846 + $0x1b0] sm:$0xff]
    %v902 = vld [vmem:[%s846 + $0x1b8] sm:$0xff]
    %v903 = vld [vmem:[%s846 + $0x1c0] sm:$0xff]
    %v904 = vld [vmem:[%s846 + $0x1c8] sm:$0xff]
    %v905 = vld [vmem:[%s846 + $0x1d0] sm:$0xff]
    %v906 = vld [vmem:[%s846 + $0x1d8] sm:$0xff]
    %v907 = vld [vmem:[%s846 + $0x1e0] sm:$0xff]
    %v908 = vld [vmem:[%s846 + $0x1e8] sm:$0xff]
    %v909 = vld [vmem:[%s846 + $0x1f0] sm:$0xff]
    %v910 = vld [vmem:[%s846 + $0x1f8] sm:$0xff]
    %912 = vset.pattern.permute.xlu0 0
    %913 = vperm.xlu0 %912, %v847
    %v914 = vpop.permute.xlu0 %913
    %917 = vset.pattern.permute.xlu0 0
    %918 = vperm.xlu0 %917, %v848
    %v919 = vpop.permute.xlu0 %918
    %922 = vset.pattern.permute.xlu0 0
    %923 = vperm.xlu0 %922, %v849
    %v924 = vpop.permute.xlu0 %923
    %927 = vset.pattern.permute.xlu0 0
    %928 = vperm.xlu0 %927, %v850
    %v929 = vpop.permute.xlu0 %928
    %932 = vset.pattern.permute.xlu0 0
    %933 = vperm.xlu0 %932, %v851
    %v934 = vpop.permute.xlu0 %933
    %937 = vset.pattern.permute.xlu0 0
    %938 = vperm.xlu0 %937, %v852
    %v939 = vpop.permute.xlu0 %938
    %942 = vset.pattern.permute.xlu0 0
    %943 = vperm.xlu0 %942, %v853
    %v944 = vpop.permute.xlu0 %943
    %947 = vset.pattern.permute.xlu0 0
    %948 = vperm.xlu0 %947, %v854
    %v949 = vpop.permute.xlu0 %948
    %952 = vset.pattern.permute.xlu0 0
    %953 = vperm.xlu0 %952, %v855
    %v954 = vpop.permute.xlu0 %953
    %957 = vset.pattern.permute.xlu0 0
    %958 = vperm.xlu0 %957, %v856
    %v959 = vpop.permute.xlu0 %958
    %962 = vset.pattern.permute.xlu0 0
    %963 = vperm.xlu0 %962, %v857
    %v964 = vpop.permute.xlu0 %963
    %967 = vset.pattern.permute.xlu0 0
    %968 = vperm.xlu0 %967, %v858
    %v969 = vpop.permute.xlu0 %968
    %972 = vset.pattern.permute.xlu0 0
    %973 = vperm.xlu0 %972, %v859
    %v974 = vpop.permute.xlu0 %973
    %977 = vset.pattern.permute.xlu0 0
    %978 = vperm.xlu0 %977, %v860
    %v979 = vpop.permute.xlu0 %978
    %982 = vset.pattern.permute.xlu0 0
    %983 = vperm.xlu0 %982, %v861
    %v984 = vpop.permute.xlu0 %983
    %987 = vset.pattern.permute.xlu0 0
    %988 = vperm.xlu0 %987, %v862
    %v989 = vpop.permute.xlu0 %988
    %992 = vset.pattern.permute.xlu0 0
    %993 = vperm.xlu0 %992, %v863
    %v994 = vpop.permute.xlu0 %993
    %997 = vset.pattern.permute.xlu0 0
    %998 = vperm.xlu0 %997, %v864
    %v999 = vpop.permute.xlu0 %998
    %1002 = vset.pattern.permute.xlu0 0
    %1003 = vperm.xlu0 %1002, %v865
    %v1004 = vpop.permute.xlu0 %1003
    %1007 = vset.pattern.permute.xlu0 0
    %1008 = vperm.xlu0 %1007, %v866
    %v1009 = vpop.permute.xlu0 %1008
    %1012 = vset.pattern.permute.xlu0 0
    %1013 = vperm.xlu0 %1012, %v867
    %v1014 = vpop.permute.xlu0 %1013
    %1017 = vset.pattern.permute.xlu0 0
    %1018 = vperm.xlu0 %1017, %v868
    %v1019 = vpop.permute.xlu0 %1018
    %1022 = vset.pattern.permute.xlu0 0
    %1023 = vperm.xlu0 %1022, %v869
    %v1024 = vpop.permute.xlu0 %1023
    %1027 = vset.pattern.permute.xlu0 0
    %1028 = vperm.xlu0 %1027, %v870
    %v1029 = vpop.permute.xlu0 %1028
    %1032 = vset.pattern.permute.xlu0 0
    %1033 = vperm.xlu0 %1032, %v871
    %v1034 = vpop.permute.xlu0 %1033
    %1037 = vset.pattern.permute.xlu0 0
    %1038 = vperm.xlu0 %1037, %v872
    %v1039 = vpop.permute.xlu0 %1038
    %1042 = vset.pattern.permute.xlu0 0
    %1043 = vperm.xlu0 %1042, %v873
    %v1044 = vpop.permute.xlu0 %1043
    %1047 = vset.pattern.permute.xlu0 0
    %1048 = vperm.xlu0 %1047, %v874
    %v1049 = vpop.permute.xlu0 %1048
    %1052 = vset.pattern.permute.xlu0 0
    %1053 = vperm.xlu0 %1052, %v875
    %v1054 = vpop.permute.xlu0 %1053
    %1057 = vset.pattern.permute.xlu0 0
    %1058 = vperm.xlu0 %1057, %v876
    %v1059 = vpop.permute.xlu0 %1058
    %1062 = vset.pattern.permute.xlu0 0
    %1063 = vperm.xlu0 %1062, %v877
    %v1064 = vpop.permute.xlu0 %1063
    %1067 = vset.pattern.permute.xlu0 0
    %1068 = vperm.xlu0 %1067, %v878
    %v1069 = vpop.permute.xlu0 %1068
    %1072 = vset.pattern.permute.xlu0 0
    %1073 = vperm.xlu0 %1072, %v879
    %v1074 = vpop.permute.xlu0 %1073
    %1077 = vset.pattern.permute.xlu0 0
    %1078 = vperm.xlu0 %1077, %v880
    %v1079 = vpop.permute.xlu0 %1078
    %1082 = vset.pattern.permute.xlu0 0
    %1083 = vperm.xlu0 %1082, %v881
    %v1084 = vpop.permute.xlu0 %1083
    %1087 = vset.pattern.permute.xlu0 0
    %1088 = vperm.xlu0 %1087, %v882
    %v1089 = vpop.permute.xlu0 %1088
    %1092 = vset.pattern.permute.xlu0 0
    %1093 = vperm.xlu0 %1092, %v883
    %v1094 = vpop.permute.xlu0 %1093
    %1097 = vset.pattern.permute.xlu0 0
    %1098 = vperm.xlu0 %1097, %v884
    %v1099 = vpop.permute.xlu0 %1098
    %1102 = vset.pattern.permute.xlu0 0
    %1103 = vperm.xlu0 %1102, %v885
    %v1104 = vpop.permute.xlu0 %1103
    %1107 = vset.pattern.permute.xlu0 0
    %1108 = vperm.xlu0 %1107, %v886
    %v1109 = vpop.permute.xlu0 %1108
    %1112 = vset.pattern.permute.xlu0 0
    %1113 = vperm.xlu0 %1112, %v887
    %v1114 = vpop.permute.xlu0 %1113
    %1117 = vset.pattern.permute.xlu0 0
    %1118 = vperm.xlu0 %1117, %v888
    %v1119 = vpop.permute.xlu0 %1118
    %1122 = vset.pattern.permute.xlu0 0
    %1123 = vperm.xlu0 %1122, %v889
    %v1124 = vpop.permute.xlu0 %1123
    %1127 = vset.pattern.permute.xlu0 0
    %1128 = vperm.xlu0 %1127, %v890
    %v1129 = vpop.permute.xlu0 %1128
    %1132 = vset.pattern.permute.xlu0 0
    %1133 = vperm.xlu0 %1132, %v891
    %v1134 = vpop.permute.xlu0 %1133
    %1137 = vset.pattern.permute.xlu0 0
    %1138 = vperm.xlu0 %1137, %v892
    %v1139 = vpop.permute.xlu0 %1138
    %1142 = vset.pattern.permute.xlu0 0
    %1143 = vperm.xlu0 %1142, %v893
    %v1144 = vpop.permute.xlu0 %1143
    %1147 = vset.pattern.permute.xlu0 0
    %1148 = vperm.xlu0 %1147, %v894
    %v1149 = vpop.permute.xlu0 %1148
    %1152 = vset.pattern.permute.xlu0 0
    %1153 = vperm.xlu0 %1152, %v895
    %v1154 = vpop.permute.xlu0 %1153
    %1157 = vset.pattern.permute.xlu0 0
    %1158 = vperm.xlu0 %1157, %v896
    %v1159 = vpop.permute.xlu0 %1158
    %1162 = vset.pattern.permute.xlu0 0
    %1163 = vperm.xlu0 %1162, %v897
    %v1164 = vpop.permute.xlu0 %1163
    %1167 = vset.pattern.permute.xlu0 0
    %1168 = vperm.xlu0 %1167, %v898
    %v1169 = vpop.permute.xlu0 %1168
    %1172 = vset.pattern.permute.xlu0 0
    %1173 = vperm.xlu0 %1172, %v899
    %v1174 = vpop.permute.xlu0 %1173
    %1177 = vset.pattern.permute.xlu0 0
    %1178 = vperm.xlu0 %1177, %v900
    %v1179 = vpop.permute.xlu0 %1178
    %1182 = vset.pattern.permute.xlu0 0
    %1183 = vperm.xlu0 %1182, %v901
    %v1184 = vpop.permute.xlu0 %1183
    %1187 = vset.pattern.permute.xlu0 0
    %1188 = vperm.xlu0 %1187, %v902
    %v1189 = vpop.permute.xlu0 %1188
    %1192 = vset.pattern.permute.xlu0 0
    %1193 = vperm.xlu0 %1192, %v903
    %v1194 = vpop.permute.xlu0 %1193
    %1197 = vset.pattern.permute.xlu0 0
    %1198 = vperm.xlu0 %1197, %v904
    %v1199 = vpop.permute.xlu0 %1198
    %1202 = vset.pattern.permute.xlu0 0
    %1203 = vperm.xlu0 %1202, %v905
    %v1204 = vpop.permute.xlu0 %1203
    %1207 = vset.pattern.permute.xlu0 0
    %1208 = vperm.xlu0 %1207, %v906
    %v1209 = vpop.permute.xlu0 %1208
    %1212 = vset.pattern.permute.xlu0 0
    %1213 = vperm.xlu0 %1212, %v907
    %v1214 = vpop.permute.xlu0 %1213
    %1217 = vset.pattern.permute.xlu0 0
    %1218 = vperm.xlu0 %1217, %v908
    %v1219 = vpop.permute.xlu0 %1218
    %1222 = vset.pattern.permute.xlu0 0
    %1223 = vperm.xlu0 %1222, %v909
    %v1224 = vpop.permute.xlu0 %1223
    %1227 = vset.pattern.permute.xlu0 0
    %1228 = vperm.xlu0 %1227, %v910
    %v1229 = vpop.permute.xlu0 %1228
    %v1231 = vmul.f32 %v106, %v914
    %v1232 = vmul.f32 %v107, %v919
    %v1233 = vmul.f32 %v44, %v924
    %v1234 = vmul.f32 %v45, %v929
    %v1235 = vmul.f32 %v46, %v934
    %v1236 = vmul.f32 %v47, %v939
    %v1237 = vmul.f32 %v48, %v944
    %v1238 = vmul.f32 %v49, %v949
    %v1239 = vmul.f32 %v50, %v954
    %v1240 = vmul.f32 %v51, %v959
    %v1241 = vmul.f32 %v52, %v964
    %v1242 = vmul.f32 %v53, %v969
    %v1243 = vmul.f32 %v54, %v974
    %v1244 = vmul.f32 %v55, %v979
    %v1245 = vmul.f32 %v56, %v984
    %v1246 = vmul.f32 %v57, %v989
    %v1247 = vmul.f32 %v58, %v994
    %v1248 = vmul.f32 %v59, %v999
    %v1249 = vmul.f32 %v60, %v1004
    %v1250 = vmul.f32 %v61, %v1009
    %v1251 = vmul.f32 %v62, %v1014
    %v1252 = vmul.f32 %v63, %v1019
    %v1253 = vmul.f32 %v64, %v1024
    %v1254 = vmul.f32 %v65, %v1029
    %v1255 = vmul.f32 %v66, %v1034
    %v1256 = vmul.f32 %v67, %v1039
    %v1257 = vmul.f32 %v68, %v1044
    %v1258 = vmul.f32 %v69, %v1049
    %v1259 = vmul.f32 %v70, %v1054
    %v1260 = vmul.f32 %v71, %v1059
    %v1261 = vmul.f32 %v72, %v1064
    %v1262 = vmul.f32 %v73, %v1069
    %v1263 = vmul.f32 %v74, %v1074
    %v1264 = vmul.f32 %v75, %v1079
    %v1265 = vmul.f32 %v76, %v1084
    %v1266 = vmul.f32 %v77, %v1089
    %v1267 = vmul.f32 %v78, %v1094
    %v1268 = vmul.f32 %v79, %v1099
    %v1269 = vmul.f32 %v80, %v1104
    %v1270 = vmul.f32 %v81, %v1109
    %v1271 = vmul.f32 %v82, %v1114
    %v1272 = vmul.f32 %v83, %v1119
    %v1273 = vmul.f32 %v84, %v1124
    %v1274 = vmul.f32 %v85, %v1129
    %v1275 = vmul.f32 %v86, %v1134
    %v1276 = vmul.f32 %v87, %v1139
    %v1277 = vmul.f32 %v88, %v1144
    %v1278 = vmul.f32 %v89, %v1149
    %v1279 = vmul.f32 %v90, %v1154
    %v1280 = vmul.f32 %v91, %v1159
    %v1281 = vmul.f32 %v92, %v1164
    %v1282 = vmul.f32 %v93, %v1169
    %v1283 = vmul.f32 %v94, %v1174
    %v1284 = vmul.f32 %v95, %v1179
    %v1285 = vmul.f32 %v96, %v1184
    %v1286 = vmul.f32 %v97, %v1189
    %v1287 = vmul.f32 %v98, %v1194
    %v1288 = vmul.f32 %v99, %v1199
    %v1289 = vmul.f32 %v100, %v1204
    %v1290 = vmul.f32 %v101, %v1209
    %v1291 = vmul.f32 %v102, %v1214
    %v1292 = vmul.f32 %v103, %v1219
    %v1293 = vmul.f32 %v104, %v1224
    %v1294 = vmul.f32 %v105, %v1229
    %v1295 = vpack.c.bf16 %v1232, %v1231
    %v1296 = vpack.c.bf16 %v1234, %v1233
    %v1297 = vpack.c.bf16 %v1236, %v1235
    %v1298 = vpack.c.bf16 %v1238, %v1237
    %v1299 = vpack.c.bf16 %v1240, %v1239
    %v1300 = vpack.c.bf16 %v1242, %v1241
    %v1301 = vpack.c.bf16 %v1244, %v1243
    %v1302 = vpack.c.bf16 %v1246, %v1245
    %v1303 = vpack.c.bf16 %v1248, %v1247
    %v1304 = vpack.c.bf16 %v1250, %v1249
    %v1305 = vpack.c.bf16 %v1252, %v1251
    %v1306 = vpack.c.bf16 %v1254, %v1253
    %v1307 = vpack.c.bf16 %v1256, %v1255
    %v1308 = vpack.c.bf16 %v1258, %v1257
    %v1309 = vpack.c.bf16 %v1260, %v1259
    %v1310 = vpack.c.bf16 %v1262, %v1261
    %v1311 = vpack.c.bf16 %v1264, %v1263
    %v1312 = vpack.c.bf16 %v1266, %v1265
    %v1313 = vpack.c.bf16 %v1268, %v1267
    %v1314 = vpack.c.bf16 %v1270, %v1269
    %v1315 = vpack.c.bf16 %v1272, %v1271
    %v1316 = vpack.c.bf16 %v1274, %v1273
    %v1317 = vpack.c.bf16 %v1276, %v1275
    %v1318 = vpack.c.bf16 %v1278, %v1277
    %v1319 = vpack.c.bf16 %v1280, %v1279
    %v1320 = vpack.c.bf16 %v1282, %v1281
    %v1321 = vpack.c.bf16 %v1284, %v1283
    %v1322 = vpack.c.bf16 %v1286, %v1285
    %v1323 = vpack.c.bf16 %v1288, %v1287
    %v1324 = vpack.c.bf16 %v1290, %v1289
    %v1325 = vpack.c.bf16 %v1292, %v1291
    %v1326 = vpack.c.bf16 %v1294, %v1293
    %vm1327 = vcmask 1046528
    %v1328 = vrot.slane %v106, 1
    %v1329 = vrot.slane %v107, 1
    %v1330 = vsel %vm1327, %v1328, %v1329
    %v1333 = vrot.slane %v44, 1
    %v1334 = vrot.slane %v45, 1
    %v1335 = vsel %vm1327, %v1333, %v1334
    %v1336 = vrot.slane %v46, 1
    %v1337 = vsel %vm1327, %v1334, %v1336
    %v1338 = vrot.slane %v47, 1
    %v1339 = vsel %vm1327, %v1336, %v1338
    %v1340 = vrot.slane %v48, 1
    %v1341 = vsel %vm1327, %v1338, %v1340
    %v1342 = vrot.slane %v49, 1
    %v1343 = vsel %vm1327, %v1340, %v1342
    %v1344 = vrot.slane %v50, 1
    %v1345 = vsel %vm1327, %v1342, %v1344
    %v1346 = vrot.slane %v51, 1
    %v1347 = vsel %vm1327, %v1344, %v1346
    %v1348 = vrot.slane %v52, 1
    %v1349 = vsel %vm1327, %v1346, %v1348
    %v1350 = vrot.slane %v53, 1
    %v1351 = vsel %vm1327, %v1348, %v1350
    %v1352 = vrot.slane %v54, 1
    %v1353 = vsel %vm1327, %v1350, %v1352
    %v1354 = vrot.slane %v55, 1
    %v1355 = vsel %vm1327, %v1352, %v1354
    %v1356 = vrot.slane %v56, 1
    %v1357 = vsel %vm1327, %v1354, %v1356
    %v1358 = vrot.slane %v57, 1
    %v1359 = vsel %vm1327, %v1356, %v1358
    %v1360 = vrot.slane %v58, 1
    %v1361 = vsel %vm1327, %v1358, %v1360
    %v1362 = vrot.slane %v59, 1
    %v1363 = vsel %vm1327, %v1360, %v1362
    %v1364 = vrot.slane %v60, 1
    %v1365 = vsel %vm1327, %v1362, %v1364
    %v1366 = vrot.slane %v61, 1
    %v1367 = vsel %vm1327, %v1364, %v1366
    %v1368 = vrot.slane %v62, 1
    %v1369 = vsel %vm1327, %v1366, %v1368
    %v1370 = vrot.slane %v63, 1
    %v1371 = vsel %vm1327, %v1368, %v1370
    %v1372 = vrot.slane %v64, 1
    %v1373 = vsel %vm1327, %v1370, %v1372
    %v1374 = vrot.slane %v65, 1
    %v1375 = vsel %vm1327, %v1372, %v1374
    %v1376 = vrot.slane %v66, 1
    %v1377 = vsel %vm1327, %v1374, %v1376
    %v1378 = vrot.slane %v67, 1
    %v1379 = vsel %vm1327, %v1376, %v1378
    %v1380 = vrot.slane %v68, 1
    %v1381 = vsel %vm1327, %v1378, %v1380
    %v1382 = vrot.slane %v69, 1
    %v1383 = vsel %vm1327, %v1380, %v1382
    %v1384 = vrot.slane %v70, 1
    %v1385 = vsel %vm1327, %v1382, %v1384
    %v1386 = vrot.slane %v71, 1
    %v1387 = vsel %vm1327, %v1384, %v1386
    %v1388 = vrot.slane %v72, 1
    %v1389 = vsel %vm1327, %v1386, %v1388
    %v1390 = vrot.slane %v73, 1
    %v1391 = vsel %vm1327, %v1388, %v1390
    %v1392 = vrot.slane %v74, 1
    %v1393 = vsel %vm1327, %v1390, %v1392
    %v1394 = vrot.slane %v75, 1
    %v1395 = vsel %vm1327, %v1392, %v1394
    %v1396 = vrot.slane %v76, 1
    %v1397 = vsel %vm1327, %v1394, %v1396
    %v1398 = vrot.slane %v77, 1
    %v1399 = vsel %vm1327, %v1396, %v1398
    %v1400 = vrot.slane %v78, 1
    %v1401 = vsel %vm1327, %v1398, %v1400
    %v1402 = vrot.slane %v79, 1
    %v1403 = vsel %vm1327, %v1400, %v1402
    %v1404 = vrot.slane %v80, 1
    %v1405 = vsel %vm1327, %v1402, %v1404
    %v1406 = vrot.slane %v81, 1
    %v1407 = vsel %vm1327, %v1404, %v1406
    %v1408 = vrot.slane %v82, 1
    %v1409 = vsel %vm1327, %v1406, %v1408
    %v1410 = vrot.slane %v83, 1
    %v1411 = vsel %vm1327, %v1408, %v1410
    %v1412 = vrot.slane %v84, 1
    %v1413 = vsel %vm1327, %v1410, %v1412
    %v1414 = vrot.slane %v85, 1
    %v1415 = vsel %vm1327, %v1412, %v1414
    %v1416 = vrot.slane %v86, 1
    %v1417 = vsel %vm1327, %v1414, %v1416
    %v1418 = vrot.slane %v87, 1
    %v1419 = vsel %vm1327, %v1416, %v1418
    %v1420 = vrot.slane %v88, 1
    %v1421 = vsel %vm1327, %v1418, %v1420
    %v1422 = vrot.slane %v89, 1
    %v1423 = vsel %vm1327, %v1420, %v1422
    %v1424 = vrot.slane %v90, 1
    %v1425 = vsel %vm1327, %v1422, %v1424
    %v1426 = vrot.slane %v91, 1
    %v1427 = vsel %vm1327, %v1424, %v1426
    %v1428 = vrot.slane %v92, 1
    %v1429 = vsel %vm1327, %v1426, %v1428
    %v1430 = vrot.slane %v93, 1
    %v1431 = vsel %vm1327, %v1428, %v1430
    %v1432 = vrot.slane %v94, 1
    %v1433 = vsel %vm1327, %v1430, %v1432
    %v1434 = vrot.slane %v95, 1
    %v1435 = vsel %vm1327, %v1432, %v1434
    %v1436 = vrot.slane %v96, 1
    %v1437 = vsel %vm1327, %v1434, %v1436
    %v1438 = vrot.slane %v97, 1
    %v1439 = vsel %vm1327, %v1436, %v1438
    %v1440 = vrot.slane %v98, 1
    %v1441 = vsel %vm1327, %v1438, %v1440
    %v1442 = vrot.slane %v99, 1
    %v1443 = vsel %vm1327, %v1440, %v1442
    %v1444 = vrot.slane %v100, 1
    %v1445 = vsel %vm1327, %v1442, %v1444
    %v1446 = vrot.slane %v101, 1
    %v1447 = vsel %vm1327, %v1444, %v1446
    %v1448 = vrot.slane %v102, 1
    %v1449 = vsel %vm1327, %v1446, %v1448
    %v1450 = vrot.slane %v103, 1
    %v1451 = vsel %vm1327, %v1448, %v1450
    %v1452 = vrot.slane %v104, 1
    %v1453 = vsel %vm1327, %v1450, %v1452
    %v1454 = vrot.slane %v105, 1
    %v1455 = vsel %vm1327, %v1452, %v1454
    %v1456 = vsel %vm1327, %v1454, %v1328
    %v1520 = vsel %vm1327, %v1329, %v1333
    %s1521 = scalar_lea.vmem [#allocation2], 1024
    %v1522 = vld [vmem:[%s1521] sm:$0xff]
    %v1523 = vld [vmem:[%s1521 + $0x8] sm:$0xff]
    %v1524 = vld [vmem:[%s1521 + $0x10] sm:$0xff]
    %v1525 = vld [vmem:[%s1521 + $0x18] sm:$0xff]
    %v1526 = vld [vmem:[%s1521 + $0x20] sm:$0xff]
    %v1527 = vld [vmem:[%s1521 + $0x28] sm:$0xff]
    %v1528 = vld [vmem:[%s1521 + $0x30] sm:$0xff]
    %v1529 = vld [vmem:[%s1521 + $0x38] sm:$0xff]
    %v1530 = vld [vmem:[%s1521 + $0x40] sm:$0xff]
    %v1531 = vld [vmem:[%s1521 + $0x48] sm:$0xff]
    %v1532 = vld [vmem:[%s1521 + $0x50] sm:$0xff]
    %v1533 = vld [vmem:[%s1521 + $0x58] sm:$0xff]
    %v1534 = vld [vmem:[%s1521 + $0x60] sm:$0xff]
    %v1535 = vld [vmem:[%s1521 + $0x68] sm:$0xff]
    %v1536 = vld [vmem:[%s1521 + $0x70] sm:$0xff]
    %v1537 = vld [vmem:[%s1521 + $0x78] sm:$0xff]
    %v1538 = vld [vmem:[%s1521 + $0x80] sm:$0xff]
    %v1539 = vld [vmem:[%s1521 + $0x88] sm:$0xff]
    %v1540 = vld [vmem:[%s1521 + $0x90] sm:$0xff]
    %v1541 = vld [vmem:[%s1521 + $0x98] sm:$0xff]
    %v1542 = vld [vmem:[%s1521 + $0xa0] sm:$0xff]
    %v1543 = vld [vmem:[%s1521 + $0xa8] sm:$0xff]
    %v1544 = vld [vmem:[%s1521 + $0xb0] sm:$0xff]
    %v1545 = vld [vmem:[%s1521 + $0xb8] sm:$0xff]
    %v1546 = vld [vmem:[%s1521 + $0xc0] sm:$0xff]
    %v1547 = vld [vmem:[%s1521 + $0xc8] sm:$0xff]
    %v1548 = vld [vmem:[%s1521 + $0xd0] sm:$0xff]
    %v1549 = vld [vmem:[%s1521 + $0xd8] sm:$0xff]
    %v1550 = vld [vmem:[%s1521 + $0xe0] sm:$0xff]
    %v1551 = vld [vmem:[%s1521 + $0xe8] sm:$0xff]
    %v1552 = vld [vmem:[%s1521 + $0xf0] sm:$0xff]
    %v1553 = vld [vmem:[%s1521 + $0xf8] sm:$0xff]
    %v1554 = vld [vmem:[%s1521 + $0x100] sm:$0xff]
    %v1555 = vld [vmem:[%s1521 + $0x108] sm:$0xff]
    %v1556 = vld [vmem:[%s1521 + $0x110] sm:$0xff]
    %v1557 = vld [vmem:[%s1521 + $0x118] sm:$0xff]
    %v1558 = vld [vmem:[%s1521 + $0x120] sm:$0xff]
    %v1559 = vld [vmem:[%s1521 + $0x128] sm:$0xff]
    %v1560 = vld [vmem:[%s1521 + $0x130] sm:$0xff]
    %v1561 = vld [vmem:[%s1521 + $0x138] sm:$0xff]
    %v1562 = vld [vmem:[%s1521 + $0x140] sm:$0xff]
    %v1563 = vld [vmem:[%s1521 + $0x148] sm:$0xff]
    %v1564 = vld [vmem:[%s1521 + $0x150] sm:$0xff]
    %v1565 = vld [vmem:[%s1521 + $0x158] sm:$0xff]
    %v1566 = vld [vmem:[%s1521 + $0x160] sm:$0xff]
    %v1567 = vld [vmem:[%s1521 + $0x168] sm:$0xff]
    %v1568 = vld [vmem:[%s1521 + $0x170] sm:$0xff]
    %v1569 = vld [vmem:[%s1521 + $0x178] sm:$0xff]
    %v1570 = vld [vmem:[%s1521 + $0x180] sm:$0xff]
    %v1571 = vld [vmem:[%s1521 + $0x188] sm:$0xff]
    %v1572 = vld [vmem:[%s1521 + $0x190] sm:$0xff]
    %v1573 = vld [vmem:[%s1521 + $0x198] sm:$0xff]
    %v1574 = vld [vmem:[%s1521 + $0x1a0] sm:$0xff]
    %v1575 = vld [vmem:[%s1521 + $0x1a8] sm:$0xff]
    %v1576 = vld [vmem:[%s1521 + $0x1b0] sm:$0xff]
    %v1577 = vld [vmem:[%s1521 + $0x1b8] sm:$0xff]
    %v1578 = vld [vmem:[%s1521 + $0x1c0] sm:$0xff]
    %v1579 = vld [vmem:[%s1521 + $0x1c8] sm:$0xff]
    %v1580 = vld [vmem:[%s1521 + $0x1d0] sm:$0xff]
    %v1581 = vld [vmem:[%s1521 + $0x1d8] sm:$0xff]
    %v1582 = vld [vmem:[%s1521 + $0x1e0] sm:$0xff]
    %v1583 = vld [vmem:[%s1521 + $0x1e8] sm:$0xff]
    %v1584 = vld [vmem:[%s1521 + $0x1f0] sm:$0xff]
    %v1585 = vld [vmem:[%s1521 + $0x1f8] sm:$0xff]
    %1587 = vset.pattern.permute.xlu0 0
    %1588 = vperm.xlu0 %1587, %v1522
    %v1589 = vpop.permute.xlu0 %1588
    %1592 = vset.pattern.permute.xlu0 0
    %1593 = vperm.xlu0 %1592, %v1523
    %v1594 = vpop.permute.xlu0 %1593
    %1597 = vset.pattern.permute.xlu0 0
    %1598 = vperm.xlu0 %1597, %v1524
    %v1599 = vpop.permute.xlu0 %1598
    %1602 = vset.pattern.permute.xlu0 0
    %1603 = vperm.xlu0 %1602, %v1525
    %v1604 = vpop.permute.xlu0 %1603
    %1607 = vset.pattern.permute.xlu0 0
    %1608 = vperm.xlu0 %1607, %v1526
    %v1609 = vpop.permute.xlu0 %1608
    %1612 = vset.pattern.permute.xlu0 0
    %1613 = vperm.xlu0 %1612, %v1527
    %v1614 = vpop.permute.xlu0 %1613
    %1617 = vset.pattern.permute.xlu0 0
    %1618 = vperm.xlu0 %1617, %v1528
    %v1619 = vpop.permute.xlu0 %1618
    %1622 = vset.pattern.permute.xlu0 0
    %1623 = vperm.xlu0 %1622, %v1529
    %v1624 = vpop.permute.xlu0 %1623
    %1627 = vset.pattern.permute.xlu0 0
    %1628 = vperm.xlu0 %1627, %v1530
    %v1629 = vpop.permute.xlu0 %1628
    %1632 = vset.pattern.permute.xlu0 0
    %1633 = vperm.xlu0 %1632, %v1531
    %v1634 = vpop.permute.xlu0 %1633
    %1637 = vset.pattern.permute.xlu0 0
    %1638 = vperm.xlu0 %1637, %v1532
    %v1639 = vpop.permute.xlu0 %1638
    %1642 = vset.pattern.permute.xlu0 0
    %1643 = vperm.xlu0 %1642, %v1533
    %v1644 = vpop.permute.xlu0 %1643
    %1647 = vset.pattern.permute.xlu0 0
    %1648 = vperm.xlu0 %1647, %v1534
    %v1649 = vpop.permute.xlu0 %1648
    %1652 = vset.pattern.permute.xlu0 0
    %1653 = vperm.xlu0 %1652, %v1535
    %v1654 = vpop.permute.xlu0 %1653
    %1657 = vset.pattern.permute.xlu0 0
    %1658 = vperm.xlu0 %1657, %v1536
    %v1659 = vpop.permute.xlu0 %1658
    %1662 = vset.pattern.permute.xlu0 0
    %1663 = vperm.xlu0 %1662, %v1537
    %v1664 = vpop.permute.xlu0 %1663
    %1667 = vset.pattern.permute.xlu0 0
    %1668 = vperm.xlu0 %1667, %v1538
    %v1669 = vpop.permute.xlu0 %1668
    %1672 = vset.pattern.permute.xlu0 0
    %1673 = vperm.xlu0 %1672, %v1539
    %v1674 = vpop.permute.xlu0 %1673
    %1677 = vset.pattern.permute.xlu0 0
    %1678 = vperm.xlu0 %1677, %v1540
    %v1679 = vpop.permute.xlu0 %1678
    %1682 = vset.pattern.permute.xlu0 0
    %1683 = vperm.xlu0 %1682, %v1541
    %v1684 = vpop.permute.xlu0 %1683
    %1687 = vset.pattern.permute.xlu0 0
    %1688 = vperm.xlu0 %1687, %v1542
    %v1689 = vpop.permute.xlu0 %1688
    %1692 = vset.pattern.permute.xlu0 0
    %1693 = vperm.xlu0 %1692, %v1543
    %v1694 = vpop.permute.xlu0 %1693
    %1697 = vset.pattern.permute.xlu0 0
    %1698 = vperm.xlu0 %1697, %v1544
    %v1699 = vpop.permute.xlu0 %1698
    %1702 = vset.pattern.permute.xlu0 0
    %1703 = vperm.xlu0 %1702, %v1545
    %v1704 = vpop.permute.xlu0 %1703
    %1707 = vset.pattern.permute.xlu0 0
    %1708 = vperm.xlu0 %1707, %v1546
    %v1709 = vpop.permute.xlu0 %1708
    %1712 = vset.pattern.permute.xlu0 0
    %1713 = vperm.xlu0 %1712, %v1547
    %v1714 = vpop.permute.xlu0 %1713
    %1717 = vset.pattern.permute.xlu0 0
    %1718 = vperm.xlu0 %1717, %v1548
    %v1719 = vpop.permute.xlu0 %1718
    %1722 = vset.pattern.permute.xlu0 0
    %1723 = vperm.xlu0 %1722, %v1549
    %v1724 = vpop.permute.xlu0 %1723
    %1727 = vset.pattern.permute.xlu0 0
    %1728 = vperm.xlu0 %1727, %v1550
    %v1729 = vpop.permute.xlu0 %1728
    %1732 = vset.pattern.permute.xlu0 0
    %1733 = vperm.xlu0 %1732, %v1551
    %v1734 = vpop.permute.xlu0 %1733
    %1737 = vset.pattern.permute.xlu0 0
    %1738 = vperm.xlu0 %1737, %v1552
    %v1739 = vpop.permute.xlu0 %1738
    %1742 = vset.pattern.permute.xlu0 0
    %1743 = vperm.xlu0 %1742, %v1553
    %v1744 = vpop.permute.xlu0 %1743
    %1747 = vset.pattern.permute.xlu0 0
    %1748 = vperm.xlu0 %1747, %v1554
    %v1749 = vpop.permute.xlu0 %1748
    %1752 = vset.pattern.permute.xlu0 0
    %1753 = vperm.xlu0 %1752, %v1555
    %v1754 = vpop.permute.xlu0 %1753
    %1757 = vset.pattern.permute.xlu0 0
    %1758 = vperm.xlu0 %1757, %v1556
    %v1759 = vpop.permute.xlu0 %1758
    %1762 = vset.pattern.permute.xlu0 0
    %1763 = vperm.xlu0 %1762, %v1557
    %v1764 = vpop.permute.xlu0 %1763
    %1767 = vset.pattern.permute.xlu0 0
    %1768 = vperm.xlu0 %1767, %v1558
    %v1769 = vpop.permute.xlu0 %1768
    %1772 = vset.pattern.permute.xlu0 0
    %1773 = vperm.xlu0 %1772, %v1559
    %v1774 = vpop.permute.xlu0 %1773
    %1777 = vset.pattern.permute.xlu0 0
    %1778 = vperm.xlu0 %1777, %v1560
    %v1779 = vpop.permute.xlu0 %1778
    %1782 = vset.pattern.permute.xlu0 0
    %1783 = vperm.xlu0 %1782, %v1561
    %v1784 = vpop.permute.xlu0 %1783
    %1787 = vset.pattern.permute.xlu0 0
    %1788 = vperm.xlu0 %1787, %v1562
    %v1789 = vpop.permute.xlu0 %1788
    %1792 = vset.pattern.permute.xlu0 0
    %1793 = vperm.xlu0 %1792, %v1563
    %v1794 = vpop.permute.xlu0 %1793
    %1797 = vset.pattern.permute.xlu0 0
    %1798 = vperm.xlu0 %1797, %v1564
    %v1799 = vpop.permute.xlu0 %1798
    %1802 = vset.pattern.permute.xlu0 0
    %1803 = vperm.xlu0 %1802, %v1565
    %v1804 = vpop.permute.xlu0 %1803
    %1807 = vset.pattern.permute.xlu0 0
    %1808 = vperm.xlu0 %1807, %v1566
    %v1809 = vpop.permute.xlu0 %1808
    %1812 = vset.pattern.permute.xlu0 0
    %1813 = vperm.xlu0 %1812, %v1567
    %v1814 = vpop.permute.xlu0 %1813
    %1817 = vset.pattern.permute.xlu0 0
    %1818 = vperm.xlu0 %1817, %v1568
    %v1819 = vpop.permute.xlu0 %1818
    %1822 = vset.pattern.permute.xlu0 0
    %1823 = vperm.xlu0 %1822, %v1569
    %v1824 = vpop.permute.xlu0 %1823
    %1827 = vset.pattern.permute.xlu0 0
    %1828 = vperm.xlu0 %1827, %v1570
    %v1829 = vpop.permute.xlu0 %1828
    %1832 = vset.pattern.permute.xlu0 0
    %1833 = vperm.xlu0 %1832, %v1571
    %v1834 = vpop.permute.xlu0 %1833
    %1837 = vset.pattern.permute.xlu0 0
    %1838 = vperm.xlu0 %1837, %v1572
    %v1839 = vpop.permute.xlu0 %1838
    %1842 = vset.pattern.permute.xlu0 0
    %1843 = vperm.xlu0 %1842, %v1573
    %v1844 = vpop.permute.xlu0 %1843
    %1847 = vset.pattern.permute.xlu0 0
    %1848 = vperm.xlu0 %1847, %v1574
    %v1849 = vpop.permute.xlu0 %1848
    %1852 = vset.pattern.permute.xlu0 0
    %1853 = vperm.xlu0 %1852, %v1575
    %v1854 = vpop.permute.xlu0 %1853
    %1857 = vset.pattern.permute.xlu0 0
    %1858 = vperm.xlu0 %1857, %v1576
    %v1859 = vpop.permute.xlu0 %1858
    %1862 = vset.pattern.permute.xlu0 0
    %1863 = vperm.xlu0 %1862, %v1577
    %v1864 = vpop.permute.xlu0 %1863
    %1867 = vset.pattern.permute.xlu0 0
    %1868 = vperm.xlu0 %1867, %v1578
    %v1869 = vpop.permute.xlu0 %1868
    %1872 = vset.pattern.permute.xlu0 0
    %1873 = vperm.xlu0 %1872, %v1579
    %v1874 = vpop.permute.xlu0 %1873
    %1877 = vset.pattern.permute.xlu0 0
    %1878 = vperm.xlu0 %1877, %v1580
    %v1879 = vpop.permute.xlu0 %1878
    %1882 = vset.pattern.permute.xlu0 0
    %1883 = vperm.xlu0 %1882, %v1581
    %v1884 = vpop.permute.xlu0 %1883
    %1887 = vset.pattern.permute.xlu0 0
    %1888 = vperm.xlu0 %1887, %v1582
    %v1889 = vpop.permute.xlu0 %1888
    %1892 = vset.pattern.permute.xlu0 0
    %1893 = vperm.xlu0 %1892, %v1583
    %v1894 = vpop.permute.xlu0 %1893
    %1897 = vset.pattern.permute.xlu0 0
    %1898 = vperm.xlu0 %1897, %v1584
    %v1899 = vpop.permute.xlu0 %1898
    %1902 = vset.pattern.permute.xlu0 0
    %1903 = vperm.xlu0 %1902, %v1585
    %v1904 = vpop.permute.xlu0 %1903
    %v1906 = vmul.f32 %v1330, %v1589
    %v1907 = vmul.f32 %v1520, %v1594
    %v1908 = vmul.f32 %v1335, %v1599
    %v1909 = vmul.f32 %v1337, %v1604
    %v1910 = vmul.f32 %v1339, %v1609
    %v1911 = vmul.f32 %v1341, %v1614
    %v1912 = vmul.f32 %v1343, %v1619
    %v1913 = vmul.f32 %v1345, %v1624
    %v1914 = vmul.f32 %v1347, %v1629
    %v1915 = vmul.f32 %v1349, %v1634
    %v1916 = vmul.f32 %v1351, %v1639
    %v1917 = vmul.f32 %v1353, %v1644
    %v1918 = vmul.f32 %v1355, %v1649
    %v1919 = vmul.f32 %v1357, %v1654
    %v1920 = vmul.f32 %v1359, %v1659
    %v1921 = vmul.f32 %v1361, %v1664
    %v1922 = vmul.f32 %v1363, %v1669
    %v1923 = vmul.f32 %v1365, %v1674
    %v1924 = vmul.f32 %v1367, %v1679
    %v1925 = vmul.f32 %v1369, %v1684
    %v1926 = vmul.f32 %v1371, %v1689
    %v1927 = vmul.f32 %v1373, %v1694
    %v1928 = vmul.f32 %v1375, %v1699
    %v1929 = vmul.f32 %v1377, %v1704
    %v1930 = vmul.f32 %v1379, %v1709
    %v1931 = vmul.f32 %v1381, %v1714
    %v1932 = vmul.f32 %v1383, %v1719
    %v1933 = vmul.f32 %v1385, %v1724
    %v1934 = vmul.f32 %v1387, %v1729
    %v1935 = vmul.f32 %v1389, %v1734
    %v1936 = vmul.f32 %v1391, %v1739
    %v1937 = vmul.f32 %v1393, %v1744
    %v1938 = vmul.f32 %v1395, %v1749
    %v1939 = vmul.f32 %v1397, %v1754
    %v1940 = vmul.f32 %v1399, %v1759
    %v1941 = vmul.f32 %v1401, %v1764
    %v1942 = vmul.f32 %v1403, %v1769
    %v1943 = vmul.f32 %v1405, %v1774
    %v1944 = vmul.f32 %v1407, %v1779
    %v1945 = vmul.f32 %v1409, %v1784
    %v1946 = vmul.f32 %v1411, %v1789
    %v1947 = vmul.f32 %v1413, %v1794
    %v1948 = vmul.f32 %v1415, %v1799
    %v1949 = vmul.f32 %v1417, %v1804
    %v1950 = vmul.f32 %v1419, %v1809
    %v1951 = vmul.f32 %v1421, %v1814
    %v1952 = vmul.f32 %v1423, %v1819
    %v1953 = vmul.f32 %v1425, %v1824
    %v1954 = vmul.f32 %v1427, %v1829
    %v1955 = vmul.f32 %v1429, %v1834
    %v1956 = vmul.f32 %v1431, %v1839
    %v1957 = vmul.f32 %v1433, %v1844
    %v1958 = vmul.f32 %v1435, %v1849
    %v1959 = vmul.f32 %v1437, %v1854
    %v1960 = vmul.f32 %v1439, %v1859
    %v1961 = vmul.f32 %v1441, %v1864
    %v1962 = vmul.f32 %v1443, %v1869
    %v1963 = vmul.f32 %v1445, %v1874
    %v1964 = vmul.f32 %v1447, %v1879
    %v1965 = vmul.f32 %v1449, %v1884
    %v1966 = vmul.f32 %v1451, %v1889
    %v1967 = vmul.f32 %v1453, %v1894
    %v1968 = vmul.f32 %v1455, %v1899
    %v1969 = vmul.f32 %v1456, %v1904
    %v1970 = vpack.c.bf16 %v1907, %v1906
    %v1971 = vpack.c.bf16 %v1909, %v1908
    %v1972 = vpack.c.bf16 %v1911, %v1910
    %v1973 = vpack.c.bf16 %v1913, %v1912
    %v1974 = vpack.c.bf16 %v1915, %v1914
    %v1975 = vpack.c.bf16 %v1917, %v1916
    %v1976 = vpack.c.bf16 %v1919, %v1918
    %v1977 = vpack.c.bf16 %v1921, %v1920
    %v1978 = vpack.c.bf16 %v1923, %v1922
    %v1979 = vpack.c.bf16 %v1925, %v1924
    %v1980 = vpack.c.bf16 %v1927, %v1926
    %v1981 = vpack.c.bf16 %v1929, %v1928
    %v1982 = vpack.c.bf16 %v1931, %v1930
    %v1983 = vpack.c.bf16 %v1933, %v1932
    %v1984 = vpack.c.bf16 %v1935, %v1934
    %v1985 = vpack.c.bf16 %v1937, %v1936
    %v1986 = vpack.c.bf16 %v1939, %v1938
    %v1987 = vpack.c.bf16 %v1941, %v1940
    %v1988 = vpack.c.bf16 %v1943, %v1942
    %v1989 = vpack.c.bf16 %v1945, %v1944
    %v1990 = vpack.c.bf16 %v1947, %v1946
    %v1991 = vpack.c.bf16 %v1949, %v1948
    %v1992 = vpack.c.bf16 %v1951, %v1950
    %v1993 = vpack.c.bf16 %v1953, %v1952
    %v1994 = vpack.c.bf16 %v1955, %v1954
    %v1995 = vpack.c.bf16 %v1957, %v1956
    %v1996 = vpack.c.bf16 %v1959, %v1958
    %v1997 = vpack.c.bf16 %v1961, %v1960
    %v1998 = vpack.c.bf16 %v1963, %v1962
    %v1999 = vpack.c.bf16 %v1965, %v1964
    %v2000 = vpack.c.bf16 %v1967, %v1966
    %v2001 = vpack.c.bf16 %v1969, %v1968
    %s2002 = scalar_lea.vmem [#allocation2], 1536
    %v2003 = vld [vmem:[%s2002] sm:$0xff]
    %v2004 = vld [vmem:[%s2002 + $0x8] sm:$0xff]
    %v2005 = vld [vmem:[%s2002 + $0x10] sm:$0xff]
    %v2006 = vld [vmem:[%s2002 + $0x18] sm:$0xff]
    %v2007 = vld [vmem:[%s2002 + $0x20] sm:$0xff]
    %v2008 = vld [vmem:[%s2002 + $0x28] sm:$0xff]
    %v2009 = vld [vmem:[%s2002 + $0x30] sm:$0xff]
    %v2010 = vld [vmem:[%s2002 + $0x38] sm:$0xff]
    %v2011 = vld [vmem:[%s2002 + $0x40] sm:$0xff]
    %v2012 = vld [vmem:[%s2002 + $0x48] sm:$0xff]
    %v2013 = vld [vmem:[%s2002 + $0x50] sm:$0xff]
    %v2014 = vld [vmem:[%s2002 + $0x58] sm:$0xff]
    %v2015 = vld [vmem:[%s2002 + $0x60] sm:$0xff]
    %v2016 = vld [vmem:[%s2002 + $0x68] sm:$0xff]
    %v2017 = vld [vmem:[%s2002 + $0x70] sm:$0xff]
    %v2018 = vld [vmem:[%s2002 + $0x78] sm:$0xff]
    %v2019 = vld [vmem:[%s2002 + $0x80] sm:$0xff]
    %v2020 = vld [vmem:[%s2002 + $0x88] sm:$0xff]
    %v2021 = vld [vmem:[%s2002 + $0x90] sm:$0xff]
    %v2022 = vld [vmem:[%s2002 + $0x98] sm:$0xff]
    %v2023 = vld [vmem:[%s2002 + $0xa0] sm:$0xff]
    %v2024 = vld [vmem:[%s2002 + $0xa8] sm:$0xff]
    %v2025 = vld [vmem:[%s2002 + $0xb0] sm:$0xff]
    %v2026 = vld [vmem:[%s2002 + $0xb8] sm:$0xff]
    %v2027 = vld [vmem:[%s2002 + $0xc0] sm:$0xff]
    %v2028 = vld [vmem:[%s2002 + $0xc8] sm:$0xff]
    %v2029 = vld [vmem:[%s2002 + $0xd0] sm:$0xff]
    %v2030 = vld [vmem:[%s2002 + $0xd8] sm:$0xff]
    %v2031 = vld [vmem:[%s2002 + $0xe0] sm:$0xff]
    %v2032 = vld [vmem:[%s2002 + $0xe8] sm:$0xff]
    %v2033 = vld [vmem:[%s2002 + $0xf0] sm:$0xff]
    %v2034 = vld [vmem:[%s2002 + $0xf8] sm:$0xff]
    %v2035 = vld [vmem:[%s2002 + $0x100] sm:$0xff]
    %v2036 = vld [vmem:[%s2002 + $0x108] sm:$0xff]
    %v2037 = vld [vmem:[%s2002 + $0x110] sm:$0xff]
    %v2038 = vld [vmem:[%s2002 + $0x118] sm:$0xff]
    %v2039 = vld [vmem:[%s2002 + $0x120] sm:$0xff]
    %v2040 = vld [vmem:[%s2002 + $0x128] sm:$0xff]
    %v2041 = vld [vmem:[%s2002 + $0x130] sm:$0xff]
    %v2042 = vld [vmem:[%s2002 + $0x138] sm:$0xff]
    %v2043 = vld [vmem:[%s2002 + $0x140] sm:$0xff]
    %v2044 = vld [vmem:[%s2002 + $0x148] sm:$0xff]
    %v2045 = vld [vmem:[%s2002 + $0x150] sm:$0xff]
    %v2046 = vld [vmem:[%s2002 + $0x158] sm:$0xff]
    %v2047 = vld [vmem:[%s2002 + $0x160] sm:$0xff]
    %v2048 = vld [vmem:[%s2002 + $0x168] sm:$0xff]
    %v2049 = vld [vmem:[%s2002 + $0x170] sm:$0xff]
    %v2050 = vld [vmem:[%s2002 + $0x178] sm:$0xff]
    %v2051 = vld [vmem:[%s2002 + $0x180] sm:$0xff]
    %v2052 = vld [vmem:[%s2002 + $0x188] sm:$0xff]
    %v2053 = vld [vmem:[%s2002 + $0x190] sm:$0xff]
    %v2054 = vld [vmem:[%s2002 + $0x198] sm:$0xff]
    %v2055 = vld [vmem:[%s2002 + $0x1a0] sm:$0xff]
    %v2056 = vld [vmem:[%s2002 + $0x1a8] sm:$0xff]
    %v2057 = vld [vmem:[%s2002 + $0x1b0] sm:$0xff]
    %v2058 = vld [vmem:[%s2002 + $0x1b8] sm:$0xff]
    %v2059 = vld [vmem:[%s2002 + $0x1c0] sm:$0xff]
    %v2060 = vld [vmem:[%s2002 + $0x1c8] sm:$0xff]
    %v2061 = vld [vmem:[%s2002 + $0x1d0] sm:$0xff]
    %v2062 = vld [vmem:[%s2002 + $0x1d8] sm:$0xff]
    %v2063 = vld [vmem:[%s2002 + $0x1e0] sm:$0xff]
    %v2064 = vld [vmem:[%s2002 + $0x1e8] sm:$0xff]
    %v2065 = vld [vmem:[%s2002 + $0x1f0] sm:$0xff]
    %v2066 = vld [vmem:[%s2002 + $0x1f8] sm:$0xff]
    %2068 = vset.pattern.permute.xlu0 0
    %2069 = vperm.xlu0 %2068, %v2003
    %v2070 = vpop.permute.xlu0 %2069
    %2073 = vset.pattern.permute.xlu0 0
    %2074 = vperm.xlu0 %2073, %v2004
    %v2075 = vpop.permute.xlu0 %2074
    %2078 = vset.pattern.permute.xlu0 0
    %2079 = vperm.xlu0 %2078, %v2005
    %v2080 = vpop.permute.xlu0 %2079
    %2083 = vset.pattern.permute.xlu0 0
    %2084 = vperm.xlu0 %2083, %v2006
    %v2085 = vpop.permute.xlu0 %2084
    %2088 = vset.pattern.permute.xlu0 0
    %2089 = vperm.xlu0 %2088, %v2007
    %v2090 = vpop.permute.xlu0 %2089
    %2093 = vset.pattern.permute.xlu0 0
    %2094 = vperm.xlu0 %2093, %v2008
    %v2095 = vpop.permute.xlu0 %2094
    %2098 = vset.pattern.permute.xlu0 0
    %2099 = vperm.xlu0 %2098, %v2009
    %v2100 = vpop.permute.xlu0 %2099
    %2103 = vset.pattern.permute.xlu0 0
    %2104 = vperm.xlu0 %2103, %v2010
    %v2105 = vpop.permute.xlu0 %2104
    %2108 = vset.pattern.permute.xlu0 0
    %2109 = vperm.xlu0 %2108, %v2011
    %v2110 = vpop.permute.xlu0 %2109
    %2113 = vset.pattern.permute.xlu0 0
    %2114 = vperm.xlu0 %2113, %v2012
    %v2115 = vpop.permute.xlu0 %2114
    %2118 = vset.pattern.permute.xlu0 0
    %2119 = vperm.xlu0 %2118, %v2013
    %v2120 = vpop.permute.xlu0 %2119
    %2123 = vset.pattern.permute.xlu0 0
    %2124 = vperm.xlu0 %2123, %v2014
    %v2125 = vpop.permute.xlu0 %2124
    %2128 = vset.pattern.permute.xlu0 0
    %2129 = vperm.xlu0 %2128, %v2015
    %v2130 = vpop.permute.xlu0 %2129
    %2133 = vset.pattern.permute.xlu0 0
    %2134 = vperm.xlu0 %2133, %v2016
    %v2135 = vpop.permute.xlu0 %2134
    %2138 = vset.pattern.permute.xlu0 0
    %2139 = vperm.xlu0 %2138, %v2017
    %v2140 = vpop.permute.xlu0 %2139
    %2143 = vset.pattern.permute.xlu0 0
    %2144 = vperm.xlu0 %2143, %v2018
    %v2145 = vpop.permute.xlu0 %2144
    %2148 = vset.pattern.permute.xlu0 0
    %2149 = vperm.xlu0 %2148, %v2019
    %v2150 = vpop.permute.xlu0 %2149
    %2153 = vset.pattern.permute.xlu0 0
    %2154 = vperm.xlu0 %2153, %v2020
    %v2155 = vpop.permute.xlu0 %2154
    %2158 = vset.pattern.permute.xlu0 0
    %2159 = vperm.xlu0 %2158, %v2021
    %v2160 = vpop.permute.xlu0 %2159
    %2163 = vset.pattern.permute.xlu0 0
    %2164 = vperm.xlu0 %2163, %v2022
    %v2165 = vpop.permute.xlu0 %2164
    %2168 = vset.pattern.permute.xlu0 0
    %2169 = vperm.xlu0 %2168, %v2023
    %v2170 = vpop.permute.xlu0 %2169
    %2173 = vset.pattern.permute.xlu0 0
    %2174 = vperm.xlu0 %2173, %v2024
    %v2175 = vpop.permute.xlu0 %2174
    %2178 = vset.pattern.permute.xlu0 0
    %2179 = vperm.xlu0 %2178, %v2025
    %v2180 = vpop.permute.xlu0 %2179
    %2183 = vset.pattern.permute.xlu0 0
    %2184 = vperm.xlu0 %2183, %v2026
    %v2185 = vpop.permute.xlu0 %2184
    %2188 = vset.pattern.permute.xlu0 0
    %2189 = vperm.xlu0 %2188, %v2027
    %v2190 = vpop.permute.xlu0 %2189
    %2193 = vset.pattern.permute.xlu0 0
    %2194 = vperm.xlu0 %2193, %v2028
    %v2195 = vpop.permute.xlu0 %2194
    %2198 = vset.pattern.permute.xlu0 0
    %2199 = vperm.xlu0 %2198, %v2029
    %v2200 = vpop.permute.xlu0 %2199
    %2203 = vset.pattern.permute.xlu0 0
    %2204 = vperm.xlu0 %2203, %v2030
    %v2205 = vpop.permute.xlu0 %2204
    %2208 = vset.pattern.permute.xlu0 0
    %2209 = vperm.xlu0 %2208, %v2031
    %v2210 = vpop.permute.xlu0 %2209
    %2213 = vset.pattern.permute.xlu0 0
    %2214 = vperm.xlu0 %2213, %v2032
    %v2215 = vpop.permute.xlu0 %2214
    %2218 = vset.pattern.permute.xlu0 0
    %2219 = vperm.xlu0 %2218, %v2033
    %v2220 = vpop.permute.xlu0 %2219
    %2223 = vset.pattern.permute.xlu0 0
    %2224 = vperm.xlu0 %2223, %v2034
    %v2225 = vpop.permute.xlu0 %2224
    %2228 = vset.pattern.permute.xlu0 0
    %2229 = vperm.xlu0 %2228, %v2035
    %v2230 = vpop.permute.xlu0 %2229
    %2233 = vset.pattern.permute.xlu0 0
    %2234 = vperm.xlu0 %2233, %v2036
    %v2235 = vpop.permute.xlu0 %2234
    %2238 = vset.pattern.permute.xlu0 0
    %2239 = vperm.xlu0 %2238, %v2037
    %v2240 = vpop.permute.xlu0 %2239
    %2243 = vset.pattern.permute.xlu0 0
    %2244 = vperm.xlu0 %2243, %v2038
    %v2245 = vpop.permute.xlu0 %2244
    %2248 = vset.pattern.permute.xlu0 0
    %2249 = vperm.xlu0 %2248, %v2039
    %v2250 = vpop.permute.xlu0 %2249
    %2253 = vset.pattern.permute.xlu0 0
    %2254 = vperm.xlu0 %2253, %v2040
    %v2255 = vpop.permute.xlu0 %2254
    %2258 = vset.pattern.permute.xlu0 0
    %2259 = vperm.xlu0 %2258, %v2041
    %v2260 = vpop.permute.xlu0 %2259
    %2263 = vset.pattern.permute.xlu0 0
    %2264 = vperm.xlu0 %2263, %v2042
    %v2265 = vpop.permute.xlu0 %2264
    %2268 = vset.pattern.permute.xlu0 0
    %2269 = vperm.xlu0 %2268, %v2043
    %v2270 = vpop.permute.xlu0 %2269
    %2273 = vset.pattern.permute.xlu0 0
    %2274 = vperm.xlu0 %2273, %v2044
    %v2275 = vpop.permute.xlu0 %2274
    %2278 = vset.pattern.permute.xlu0 0
    %2279 = vperm.xlu0 %2278, %v2045
    %v2280 = vpop.permute.xlu0 %2279
    %2283 = vset.pattern.permute.xlu0 0
    %2284 = vperm.xlu0 %2283, %v2046
    %v2285 = vpop.permute.xlu0 %2284
    %2288 = vset.pattern.permute.xlu0 0
    %2289 = vperm.xlu0 %2288, %v2047
    %v2290 = vpop.permute.xlu0 %2289
    %2293 = vset.pattern.permute.xlu0 0
    %2294 = vperm.xlu0 %2293, %v2048
    %v2295 = vpop.permute.xlu0 %2294
    %2298 = vset.pattern.permute.xlu0 0
    %2299 = vperm.xlu0 %2298, %v2049
    %v2300 = vpop.permute.xlu0 %2299
    %2303 = vset.pattern.permute.xlu0 0
    %2304 = vperm.xlu0 %2303, %v2050
    %v2305 = vpop.permute.xlu0 %2304
    %2308 = vset.pattern.permute.xlu0 0
    %2309 = vperm.xlu0 %2308, %v2051
    %v2310 = vpop.permute.xlu0 %2309
    %2313 = vset.pattern.permute.xlu0 0
    %2314 = vperm.xlu0 %2313, %v2052
    %v2315 = vpop.permute.xlu0 %2314
    %2318 = vset.pattern.permute.xlu0 0
    %2319 = vperm.xlu0 %2318, %v2053
    %v2320 = vpop.permute.xlu0 %2319
    %2323 = vset.pattern.permute.xlu0 0
    %2324 = vperm.xlu0 %2323, %v2054
    %v2325 = vpop.permute.xlu0 %2324
    %2328 = vset.pattern.permute.xlu0 0
    %2329 = vperm.xlu0 %2328, %v2055
    %v2330 = vpop.permute.xlu0 %2329
    %2333 = vset.pattern.permute.xlu0 0
    %2334 = vperm.xlu0 %2333, %v2056
    %v2335 = vpop.permute.xlu0 %2334
    %2338 = vset.pattern.permute.xlu0 0
    %2339 = vperm.xlu0 %2338, %v2057
    %v2340 = vpop.permute.xlu0 %2339
    %2343 = vset.pattern.permute.xlu0 0
    %2344 = vperm.xlu0 %2343, %v2058
    %v2345 = vpop.permute.xlu0 %2344
    %2348 = vset.pattern.permute.xlu0 0
    %2349 = vperm.xlu0 %2348, %v2059
    %v2350 = vpop.permute.xlu0 %2349
    %2353 = vset.pattern.permute.xlu0 0
    %2354 = vperm.xlu0 %2353, %v2060
    %v2355 = vpop.permute.xlu0 %2354
    %2358 = vset.pattern.permute.xlu0 0
    %2359 = vperm.xlu0 %2358, %v2061
    %v2360 = vpop.permute.xlu0 %2359
    %2363 = vset.pattern.permute.xlu0 0
    %2364 = vperm.xlu0 %2363, %v2062
    %v2365 = vpop.permute.xlu0 %2364
    %2368 = vset.pattern.permute.xlu0 0
    %2369 = vperm.xlu0 %2368, %v2063
    %v2370 = vpop.permute.xlu0 %2369
    %2373 = vset.pattern.permute.xlu0 0
    %2374 = vperm.xlu0 %2373, %v2064
    %v2375 = vpop.permute.xlu0 %2374
    %2378 = vset.pattern.permute.xlu0 0
    %2379 = vperm.xlu0 %2378, %v2065
    %v2380 = vpop.permute.xlu0 %2379
    %2383 = vset.pattern.permute.xlu0 0
    %2384 = vperm.xlu0 %2383, %v2066
    %v2385 = vpop.permute.xlu0 %2384
    %v2387 = vmul.f32 %v365, %v2070
    %v2388 = vmul.f32 %v183, %v2075
    %v2389 = vmul.f32 %v185, %v2080
    %v2390 = vmul.f32 %v187, %v2085
    %v2391 = vmul.f32 %v189, %v2090
    %v2392 = vmul.f32 %v191, %v2095
    %v2393 = vmul.f32 %v193, %v2100
    %v2394 = vmul.f32 %v195, %v2105
    %v2395 = vmul.f32 %v197, %v2110
    %v2396 = vmul.f32 %v199, %v2115
    %v2397 = vmul.f32 %v201, %v2120
    %v2398 = vmul.f32 %v203, %v2125
    %v2399 = vmul.f32 %v205, %v2130
    %v2400 = vmul.f32 %v207, %v2135
    %v2401 = vmul.f32 %v209, %v2140
    %v2402 = vmul.f32 %v211, %v2145
    %v2403 = vmul.f32 %v213, %v2150
    %v2404 = vmul.f32 %v215, %v2155
    %v2405 = vmul.f32 %v217, %v2160
    %v2406 = vmul.f32 %v219, %v2165
    %v2407 = vmul.f32 %v221, %v2170
    %v2408 = vmul.f32 %v223, %v2175
    %v2409 = vmul.f32 %v225, %v2180
    %v2410 = vmul.f32 %v227, %v2185
    %v2411 = vmul.f32 %v229, %v2190
    %v2412 = vmul.f32 %v231, %v2195
    %v2413 = vmul.f32 %v233, %v2200
    %v2414 = vmul.f32 %v235, %v2205
    %v2415 = vmul.f32 %v237, %v2210
    %v2416 = vmul.f32 %v239, %v2215
    %v2417 = vmul.f32 %v241, %v2220
    %v2418 = vmul.f32 %v243, %v2225
    %v2419 = vmul.f32 %v245, %v2230
    %v2420 = vmul.f32 %v247, %v2235
    %v2421 = vmul.f32 %v249, %v2240
    %v2422 = vmul.f32 %v251, %v2245
    %v2423 = vmul.f32 %v253, %v2250
    %v2424 = vmul.f32 %v255, %v2255
    %v2425 = vmul.f32 %v257, %v2260
    %v2426 = vmul.f32 %v259, %v2265
    %v2427 = vmul.f32 %v261, %v2270
    %v2428 = vmul.f32 %v263, %v2275
    %v2429 = vmul.f32 %v265, %v2280
    %v2430 = vmul.f32 %v267, %v2285
    %v2431 = vmul.f32 %v269, %v2290
    %v2432 = vmul.f32 %v271, %v2295
    %v2433 = vmul.f32 %v273, %v2300
    %v2434 = vmul.f32 %v275, %v2305
    %v2435 = vmul.f32 %v277, %v2310
    %v2436 = vmul.f32 %v279, %v2315
    %v2437 = vmul.f32 %v281, %v2320
    %v2438 = vmul.f32 %v283, %v2325
    %v2439 = vmul.f32 %v285, %v2330
    %v2440 = vmul.f32 %v287, %v2335
    %v2441 = vmul.f32 %v289, %v2340
    %v2442 = vmul.f32 %v291, %v2345
    %v2443 = vmul.f32 %v293, %v2350
    %v2444 = vmul.f32 %v295, %v2355
    %v2445 = vmul.f32 %v297, %v2360
    %v2446 = vmul.f32 %v299, %v2365
    %v2447 = vmul.f32 %v301, %v2370
    %v2448 = vmul.f32 %v302, %v2375
    %v2449 = vmul.f32 %v114, %v2380
    %v2450 = vmul.f32 %v116, %v2385
    %v2451 = vpack.c.bf16 %v2388, %v2387
    %v2452 = vpack.c.bf16 %v2390, %v2389
    %v2453 = vpack.c.bf16 %v2392, %v2391
    %v2454 = vpack.c.bf16 %v2394, %v2393
    %v2455 = vpack.c.bf16 %v2396, %v2395
    %v2456 = vpack.c.bf16 %v2398, %v2397
    %v2457 = vpack.c.bf16 %v2400, %v2399
    %v2458 = vpack.c.bf16 %v2402, %v2401
    %v2459 = vpack.c.bf16 %v2404, %v2403
    %v2460 = vpack.c.bf16 %v2406, %v2405
    %v2461 = vpack.c.bf16 %v2408, %v2407
    %v2462 = vpack.c.bf16 %v2410, %v2409
    %v2463 = vpack.c.bf16 %v2412, %v2411
    %v2464 = vpack.c.bf16 %v2414, %v2413
    %v2465 = vpack.c.bf16 %v2416, %v2415
    %v2466 = vpack.c.bf16 %v2418, %v2417
    %v2467 = vpack.c.bf16 %v2420, %v2419
    %v2468 = vpack.c.bf16 %v2422, %v2421
    %v2469 = vpack.c.bf16 %v2424, %v2423
    %v2470 = vpack.c.bf16 %v2426, %v2425
    %v2471 = vpack.c.bf16 %v2428, %v2427
    %v2472 = vpack.c.bf16 %v2430, %v2429
    %v2473 = vpack.c.bf16 %v2432, %v2431
    %v2474 = vpack.c.bf16 %v2434, %v2433
    %v2475 = vpack.c.bf16 %v2436, %v2435
    %v2476 = vpack.c.bf16 %v2438, %v2437
    %v2477 = vpack.c.bf16 %v2440, %v2439
    %v2478 = vpack.c.bf16 %v2442, %v2441
    %v2479 = vpack.c.bf16 %v2444, %v2443
    %v2480 = vpack.c.bf16 %v2446, %v2445
    %v2481 = vpack.c.bf16 %v2448, %v2447
    %v2482 = vpack.c.bf16 %v2450, %v2449
    %s2483 = scalar_lea.vmem [#allocation2], 2048
    %v2484 = vld [vmem:[%s2483] sm:$0xff]
    %v2485 = vld [vmem:[%s2483 + $0x8] sm:$0xff]
    %v2486 = vld [vmem:[%s2483 + $0x10] sm:$0xff]
    %v2487 = vld [vmem:[%s2483 + $0x18] sm:$0xff]
    %v2488 = vld [vmem:[%s2483 + $0x20] sm:$0xff]
    %v2489 = vld [vmem:[%s2483 + $0x28] sm:$0xff]
    %v2490 = vld [vmem:[%s2483 + $0x30] sm:$0xff]
    %v2491 = vld [vmem:[%s2483 + $0x38] sm:$0xff]
    %v2492 = vld [vmem:[%s2483 + $0x40] sm:$0xff]
    %v2493 = vld [vmem:[%s2483 + $0x48] sm:$0xff]
    %v2494 = vld [vmem:[%s2483 + $0x50] sm:$0xff]
    %v2495 = vld [vmem:[%s2483 + $0x58] sm:$0xff]
    %v2496 = vld [vmem:[%s2483 + $0x60] sm:$0xff]
    %v2497 = vld [vmem:[%s2483 + $0x68] sm:$0xff]
    %v2498 = vld [vmem:[%s2483 + $0x70] sm:$0xff]
    %v2499 = vld [vmem:[%s2483 + $0x78] sm:$0xff]
    %v2500 = vld [vmem:[%s2483 + $0x80] sm:$0xff]
    %v2501 = vld [vmem:[%s2483 + $0x88] sm:$0xff]
    %v2502 = vld [vmem:[%s2483 + $0x90] sm:$0xff]
    %v2503 = vld [vmem:[%s2483 + $0x98] sm:$0xff]
    %v2504 = vld [vmem:[%s2483 + $0xa0] sm:$0xff]
    %v2505 = vld [vmem:[%s2483 + $0xa8] sm:$0xff]
    %v2506 = vld [vmem:[%s2483 + $0xb0] sm:$0xff]
    %v2507 = vld [vmem:[%s2483 + $0xb8] sm:$0xff]
    %v2508 = vld [vmem:[%s2483 + $0xc0] sm:$0xff]
    %v2509 = vld [vmem:[%s2483 + $0xc8] sm:$0xff]
    %v2510 = vld [vmem:[%s2483 + $0xd0] sm:$0xff]
    %v2511 = vld [vmem:[%s2483 + $0xd8] sm:$0xff]
    %v2512 = vld [vmem:[%s2483 + $0xe0] sm:$0xff]
    %v2513 = vld [vmem:[%s2483 + $0xe8] sm:$0xff]
    %v2514 = vld [vmem:[%s2483 + $0xf0] sm:$0xff]
    %v2515 = vld [vmem:[%s2483 + $0xf8] sm:$0xff]
    %v2516 = vld [vmem:[%s2483 + $0x100] sm:$0xff]
    %v2517 = vld [vmem:[%s2483 + $0x108] sm:$0xff]
    %v2518 = vld [vmem:[%s2483 + $0x110] sm:$0xff]
    %v2519 = vld [vmem:[%s2483 + $0x118] sm:$0xff]
    %v2520 = vld [vmem:[%s2483 + $0x120] sm:$0xff]
    %v2521 = vld [vmem:[%s2483 + $0x128] sm:$0xff]
    %v2522 = vld [vmem:[%s2483 + $0x130] sm:$0xff]
    %v2523 = vld [vmem:[%s2483 + $0x138] sm:$0xff]
    %v2524 = vld [vmem:[%s2483 + $0x140] sm:$0xff]
    %v2525 = vld [vmem:[%s2483 + $0x148] sm:$0xff]
    %v2526 = vld [vmem:[%s2483 + $0x150] sm:$0xff]
    %v2527 = vld [vmem:[%s2483 + $0x158] sm:$0xff]
    %v2528 = vld [vmem:[%s2483 + $0x160] sm:$0xff]
    %v2529 = vld [vmem:[%s2483 + $0x168] sm:$0xff]
    %v2530 = vld [vmem:[%s2483 + $0x170] sm:$0xff]
    %v2531 = vld [vmem:[%s2483 + $0x178] sm:$0xff]
    %v2532 = vld [vmem:[%s2483 + $0x180] sm:$0xff]
    %v2533 = vld [vmem:[%s2483 + $0x188] sm:$0xff]
    %v2534 = vld [vmem:[%s2483 + $0x190] sm:$0xff]
    %v2535 = vld [vmem:[%s2483 + $0x198] sm:$0xff]
    %v2536 = vld [vmem:[%s2483 + $0x1a0] sm:$0xff]
    %v2537 = vld [vmem:[%s2483 + $0x1a8] sm:$0xff]
    %v2538 = vld [vmem:[%s2483 + $0x1b0] sm:$0xff]
    %v2539 = vld [vmem:[%s2483 + $0x1b8] sm:$0xff]
    %v2540 = vld [vmem:[%s2483 + $0x1c0] sm:$0xff]
    %v2541 = vld [vmem:[%s2483 + $0x1c8] sm:$0xff]
    %v2542 = vld [vmem:[%s2483 + $0x1d0] sm:$0xff]
    %v2543 = vld [vmem:[%s2483 + $0x1d8] sm:$0xff]
    %v2544 = vld [vmem:[%s2483 + $0x1e0] sm:$0xff]
    %v2545 = vld [vmem:[%s2483 + $0x1e8] sm:$0xff]
    %v2546 = vld [vmem:[%s2483 + $0x1f0] sm:$0xff]
    %v2547 = vld [vmem:[%s2483 + $0x1f8] sm:$0xff]
    %2549 = vset.pattern.permute.xlu0 0
    %2550 = vperm.xlu0 %2549, %v2484
    %v2551 = vpop.permute.xlu0 %2550
    %2554 = vset.pattern.permute.xlu0 0
    %2555 = vperm.xlu0 %2554, %v2485
    %v2556 = vpop.permute.xlu0 %2555
    %2559 = vset.pattern.permute.xlu0 0
    %2560 = vperm.xlu0 %2559, %v2486
    %v2561 = vpop.permute.xlu0 %2560
    %2564 = vset.pattern.permute.xlu0 0
    %2565 = vperm.xlu0 %2564, %v2487
    %v2566 = vpop.permute.xlu0 %2565
    %2569 = vset.pattern.permute.xlu0 0
    %2570 = vperm.xlu0 %2569, %v2488
    %v2571 = vpop.permute.xlu0 %2570
    %2574 = vset.pattern.permute.xlu0 0
    %2575 = vperm.xlu0 %2574, %v2489
    %v2576 = vpop.permute.xlu0 %2575
    %2579 = vset.pattern.permute.xlu0 0
    %2580 = vperm.xlu0 %2579, %v2490
    %v2581 = vpop.permute.xlu0 %2580
    %2584 = vset.pattern.permute.xlu0 0
    %2585 = vperm.xlu0 %2584, %v2491
    %v2586 = vpop.permute.xlu0 %2585
    %2589 = vset.pattern.permute.xlu0 0
    %2590 = vperm.xlu0 %2589, %v2492
    %v2591 = vpop.permute.xlu0 %2590
    %2594 = vset.pattern.permute.xlu0 0
    %2595 = vperm.xlu0 %2594, %v2493
    %v2596 = vpop.permute.xlu0 %2595
    %2599 = vset.pattern.permute.xlu0 0
    %2600 = vperm.xlu0 %2599, %v2494
    %v2601 = vpop.permute.xlu0 %2600
    %2604 = vset.pattern.permute.xlu0 0
    %2605 = vperm.xlu0 %2604, %v2495
    %v2606 = vpop.permute.xlu0 %2605
    %2609 = vset.pattern.permute.xlu0 0
    %2610 = vperm.xlu0 %2609, %v2496
    %v2611 = vpop.permute.xlu0 %2610
    %2614 = vset.pattern.permute.xlu0 0
    %2615 = vperm.xlu0 %2614, %v2497
    %v2616 = vpop.permute.xlu0 %2615
    %2619 = vset.pattern.permute.xlu0 0
    %2620 = vperm.xlu0 %2619, %v2498
    %v2621 = vpop.permute.xlu0 %2620
    %2624 = vset.pattern.permute.xlu0 0
    %2625 = vperm.xlu0 %2624, %v2499
    %v2626 = vpop.permute.xlu0 %2625
    %2629 = vset.pattern.permute.xlu0 0
    %2630 = vperm.xlu0 %2629, %v2500
    %v2631 = vpop.permute.xlu0 %2630
    %2634 = vset.pattern.permute.xlu0 0
    %2635 = vperm.xlu0 %2634, %v2501
    %v2636 = vpop.permute.xlu0 %2635
    %2639 = vset.pattern.permute.xlu0 0
    %2640 = vperm.xlu0 %2639, %v2502
    %v2641 = vpop.permute.xlu0 %2640
    %2644 = vset.pattern.permute.xlu0 0
    %2645 = vperm.xlu0 %2644, %v2503
    %v2646 = vpop.permute.xlu0 %2645
    %2649 = vset.pattern.permute.xlu0 0
    %2650 = vperm.xlu0 %2649, %v2504
    %v2651 = vpop.permute.xlu0 %2650
    %2654 = vset.pattern.permute.xlu0 0
    %2655 = vperm.xlu0 %2654, %v2505
    %v2656 = vpop.permute.xlu0 %2655
    %2659 = vset.pattern.permute.xlu0 0
    %2660 = vperm.xlu0 %2659, %v2506
    %v2661 = vpop.permute.xlu0 %2660
    %2664 = vset.pattern.permute.xlu0 0
    %2665 = vperm.xlu0 %2664, %v2507
    %v2666 = vpop.permute.xlu0 %2665
    %2669 = vset.pattern.permute.xlu0 0
    %2670 = vperm.xlu0 %2669, %v2508
    %v2671 = vpop.permute.xlu0 %2670
    %2674 = vset.pattern.permute.xlu0 0
    %2675 = vperm.xlu0 %2674, %v2509
    %v2676 = vpop.permute.xlu0 %2675
    %2679 = vset.pattern.permute.xlu0 0
    %2680 = vperm.xlu0 %2679, %v2510
    %v2681 = vpop.permute.xlu0 %2680
    %2684 = vset.pattern.permute.xlu0 0
    %2685 = vperm.xlu0 %2684, %v2511
    %v2686 = vpop.permute.xlu0 %2685
    %2689 = vset.pattern.permute.xlu0 0
    %2690 = vperm.xlu0 %2689, %v2512
    %v2691 = vpop.permute.xlu0 %2690
    %2694 = vset.pattern.permute.xlu0 0
    %2695 = vperm.xlu0 %2694, %v2513
    %v2696 = vpop.permute.xlu0 %2695
    %2699 = vset.pattern.permute.xlu0 0
    %2700 = vperm.xlu0 %2699, %v2514
    %v2701 = vpop.permute.xlu0 %2700
    %2704 = vset.pattern.permute.xlu0 0
    %2705 = vperm.xlu0 %2704, %v2515
    %v2706 = vpop.permute.xlu0 %2705
    %2709 = vset.pattern.permute.xlu0 0
    %2710 = vperm.xlu0 %2709, %v2516
    %v2711 = vpop.permute.xlu0 %2710
    %2714 = vset.pattern.permute.xlu0 0
    %2715 = vperm.xlu0 %2714, %v2517
    %v2716 = vpop.permute.xlu0 %2715
    %2719 = vset.pattern.permute.xlu0 0
    %2720 = vperm.xlu0 %2719, %v2518
    %v2721 = vpop.permute.xlu0 %2720
    %2724 = vset.pattern.permute.xlu0 0
    %2725 = vperm.xlu0 %2724, %v2519
    %v2726 = vpop.permute.xlu0 %2725
    %2729 = vset.pattern.permute.xlu0 0
    %2730 = vperm.xlu0 %2729, %v2520
    %v2731 = vpop.permute.xlu0 %2730
    %2734 = vset.pattern.permute.xlu0 0
    %2735 = vperm.xlu0 %2734, %v2521
    %v2736 = vpop.permute.xlu0 %2735
    %2739 = vset.pattern.permute.xlu0 0
    %2740 = vperm.xlu0 %2739, %v2522
    %v2741 = vpop.permute.xlu0 %2740
    %2744 = vset.pattern.permute.xlu0 0
    %2745 = vperm.xlu0 %2744, %v2523
    %v2746 = vpop.permute.xlu0 %2745
    %2749 = vset.pattern.permute.xlu0 0
    %2750 = vperm.xlu0 %2749, %v2524
    %v2751 = vpop.permute.xlu0 %2750
    %2754 = vset.pattern.permute.xlu0 0
    %2755 = vperm.xlu0 %2754, %v2525
    %v2756 = vpop.permute.xlu0 %2755
    %2759 = vset.pattern.permute.xlu0 0
    %2760 = vperm.xlu0 %2759, %v2526
    %v2761 = vpop.permute.xlu0 %2760
    %2764 = vset.pattern.permute.xlu0 0
    %2765 = vperm.xlu0 %2764, %v2527
    %v2766 = vpop.permute.xlu0 %2765
    %2769 = vset.pattern.permute.xlu0 0
    %2770 = vperm.xlu0 %2769, %v2528
    %v2771 = vpop.permute.xlu0 %2770
    %2774 = vset.pattern.permute.xlu0 0
    %2775 = vperm.xlu0 %2774, %v2529
    %v2776 = vpop.permute.xlu0 %2775
    %2779 = vset.pattern.permute.xlu0 0
    %2780 = vperm.xlu0 %2779, %v2530
    %v2781 = vpop.permute.xlu0 %2780
    %2784 = vset.pattern.permute.xlu0 0
    %2785 = vperm.xlu0 %2784, %v2531
    %v2786 = vpop.permute.xlu0 %2785
    %2789 = vset.pattern.permute.xlu0 0
    %2790 = vperm.xlu0 %2789, %v2532
    %v2791 = vpop.permute.xlu0 %2790
    %2794 = vset.pattern.permute.xlu0 0
    %2795 = vperm.xlu0 %2794, %v2533
    %v2796 = vpop.permute.xlu0 %2795
    %2799 = vset.pattern.permute.xlu0 0
    %2800 = vperm.xlu0 %2799, %v2534
    %v2801 = vpop.permute.xlu0 %2800
    %2804 = vset.pattern.permute.xlu0 0
    %2805 = vperm.xlu0 %2804, %v2535
    %v2806 = vpop.permute.xlu0 %2805
    %2809 = vset.pattern.permute.xlu0 0
    %2810 = vperm.xlu0 %2809, %v2536
    %v2811 = vpop.permute.xlu0 %2810
    %2814 = vset.pattern.permute.xlu0 0
    %2815 = vperm.xlu0 %2814, %v2537
    %v2816 = vpop.permute.xlu0 %2815
    %2819 = vset.pattern.permute.xlu0 0
    %2820 = vperm.xlu0 %2819, %v2538
    %v2821 = vpop.permute.xlu0 %2820
    %2824 = vset.pattern.permute.xlu0 0
    %2825 = vperm.xlu0 %2824, %v2539
    %v2826 = vpop.permute.xlu0 %2825
    %2829 = vset.pattern.permute.xlu0 0
    %2830 = vperm.xlu0 %2829, %v2540
    %v2831 = vpop.permute.xlu0 %2830
    %2834 = vset.pattern.permute.xlu0 0
    %2835 = vperm.xlu0 %2834, %v2541
    %v2836 = vpop.permute.xlu0 %2835
    %2839 = vset.pattern.permute.xlu0 0
    %2840 = vperm.xlu0 %2839, %v2542
    %v2841 = vpop.permute.xlu0 %2840
    %2844 = vset.pattern.permute.xlu0 0
    %2845 = vperm.xlu0 %2844, %v2543
    %v2846 = vpop.permute.xlu0 %2845
    %2849 = vset.pattern.permute.xlu0 0
    %2850 = vperm.xlu0 %2849, %v2544
    %v2851 = vpop.permute.xlu0 %2850
    %2854 = vset.pattern.permute.xlu0 0
    %2855 = vperm.xlu0 %2854, %v2545
    %v2856 = vpop.permute.xlu0 %2855
    %2859 = vset.pattern.permute.xlu0 0
    %2860 = vperm.xlu0 %2859, %v2546
    %v2861 = vpop.permute.xlu0 %2860
    %2864 = vset.pattern.permute.xlu0 0
    %2865 = vperm.xlu0 %2864, %v2547
    %v2866 = vpop.permute.xlu0 %2865
    %v2868 = vmul.f32 %v44, %v2551
    %v2869 = vmul.f32 %v45, %v2556
    %v2870 = vmul.f32 %v46, %v2561
    %v2871 = vmul.f32 %v47, %v2566
    %v2872 = vmul.f32 %v48, %v2571
    %v2873 = vmul.f32 %v49, %v2576
    %v2874 = vmul.f32 %v50, %v2581
    %v2875 = vmul.f32 %v51, %v2586
    %v2876 = vmul.f32 %v52, %v2591
    %v2877 = vmul.f32 %v53, %v2596
    %v2878 = vmul.f32 %v54, %v2601
    %v2879 = vmul.f32 %v55, %v2606
    %v2880 = vmul.f32 %v56, %v2611
    %v2881 = vmul.f32 %v57, %v2616
    %v2882 = vmul.f32 %v58, %v2621
    %v2883 = vmul.f32 %v59, %v2626
    %v2884 = vmul.f32 %v60, %v2631
    %v2885 = vmul.f32 %v61, %v2636
    %v2886 = vmul.f32 %v62, %v2641
    %v2887 = vmul.f32 %v63, %v2646
    %v2888 = vmul.f32 %v64, %v2651
    %v2889 = vmul.f32 %v65, %v2656
    %v2890 = vmul.f32 %v66, %v2661
    %v2891 = vmul.f32 %v67, %v2666
    %v2892 = vmul.f32 %v68, %v2671
    %v2893 = vmul.f32 %v69, %v2676
    %v2894 = vmul.f32 %v70, %v2681
    %v2895 = vmul.f32 %v71, %v2686
    %v2896 = vmul.f32 %v72, %v2691
    %v2897 = vmul.f32 %v73, %v2696
    %v2898 = vmul.f32 %v74, %v2701
    %v2899 = vmul.f32 %v75, %v2706
    %v2900 = vmul.f32 %v76, %v2711
    %v2901 = vmul.f32 %v77, %v2716
    %v2902 = vmul.f32 %v78, %v2721
    %v2903 = vmul.f32 %v79, %v2726
    %v2904 = vmul.f32 %v80, %v2731
    %v2905 = vmul.f32 %v81, %v2736
    %v2906 = vmul.f32 %v82, %v2741
    %v2907 = vmul.f32 %v83, %v2746
    %v2908 = vmul.f32 %v84, %v2751
    %v2909 = vmul.f32 %v85, %v2756
    %v2910 = vmul.f32 %v86, %v2761
    %v2911 = vmul.f32 %v87, %v2766
    %v2912 = vmul.f32 %v88, %v2771
    %v2913 = vmul.f32 %v89, %v2776
    %v2914 = vmul.f32 %v90, %v2781
    %v2915 = vmul.f32 %v91, %v2786
    %v2916 = vmul.f32 %v92, %v2791
    %v2917 = vmul.f32 %v93, %v2796
    %v2918 = vmul.f32 %v94, %v2801
    %v2919 = vmul.f32 %v95, %v2806
    %v2920 = vmul.f32 %v96, %v2811
    %v2921 = vmul.f32 %v97, %v2816
    %v2922 = vmul.f32 %v98, %v2821
    %v2923 = vmul.f32 %v99, %v2826
    %v2924 = vmul.f32 %v100, %v2831
    %v2925 = vmul.f32 %v101, %v2836
    %v2926 = vmul.f32 %v102, %v2841
    %v2927 = vmul.f32 %v103, %v2846
    %v2928 = vmul.f32 %v104, %v2851
    %v2929 = vmul.f32 %v105, %v2856
    %v2930 = vmul.f32 %v106, %v2861
    %v2931 = vmul.f32 %v107, %v2866
    %v2932 = vpack.c.bf16 %v2869, %v2868
    %v2933 = vpack.c.bf16 %v2871, %v2870
    %v2934 = vpack.c.bf16 %v2873, %v2872
    %v2935 = vpack.c.bf16 %v2875, %v2874
    %v2936 = vpack.c.bf16 %v2877, %v2876
    %v2937 = vpack.c.bf16 %v2879, %v2878
    %v2938 = vpack.c.bf16 %v2881, %v2880
    %v2939 = vpack.c.bf16 %v2883, %v2882
    %v2940 = vpack.c.bf16 %v2885, %v2884
    %v2941 = vpack.c.bf16 %v2887, %v2886
    %v2942 = vpack.c.bf16 %v2889, %v2888
    %v2943 = vpack.c.bf16 %v2891, %v2890
    %v2944 = vpack.c.bf16 %v2893, %v2892
    %v2945 = vpack.c.bf16 %v2895, %v2894
    %v2946 = vpack.c.bf16 %v2897, %v2896
    %v2947 = vpack.c.bf16 %v2899, %v2898
    %v2948 = vpack.c.bf16 %v2901, %v2900
    %v2949 = vpack.c.bf16 %v2903, %v2902
    %v2950 = vpack.c.bf16 %v2905, %v2904
    %v2951 = vpack.c.bf16 %v2907, %v2906
    %v2952 = vpack.c.bf16 %v2909, %v2908
    %v2953 = vpack.c.bf16 %v2911, %v2910
    %v2954 = vpack.c.bf16 %v2913, %v2912
    %v2955 = vpack.c.bf16 %v2915, %v2914
    %v2956 = vpack.c.bf16 %v2917, %v2916
    %v2957 = vpack.c.bf16 %v2919, %v2918
    %v2958 = vpack.c.bf16 %v2921, %v2920
    %v2959 = vpack.c.bf16 %v2923, %v2922
    %v2960 = vpack.c.bf16 %v2925, %v2924
    %v2961 = vpack.c.bf16 %v2927, %v2926
    %v2962 = vpack.c.bf16 %v2929, %v2928
    %v2963 = vpack.c.bf16 %v2931, %v2930
    %s2964 = scalar_lea.vmem [#allocation2], 2560
    %v2965 = vld [vmem:[%s2964] sm:$0xff]
    %v2966 = vld [vmem:[%s2964 + $0x8] sm:$0xff]
    %v2967 = vld [vmem:[%s2964 + $0x10] sm:$0xff]
    %v2968 = vld [vmem:[%s2964 + $0x18] sm:$0xff]
    %v2969 = vld [vmem:[%s2964 + $0x20] sm:$0xff]
    %v2970 = vld [vmem:[%s2964 + $0x28] sm:$0xff]
    %v2971 = vld [vmem:[%s2964 + $0x30] sm:$0xff]
    %v2972 = vld [vmem:[%s2964 + $0x38] sm:$0xff]
    %v2973 = vld [vmem:[%s2964 + $0x40] sm:$0xff]
    %v2974 = vld [vmem:[%s2964 + $0x48] sm:$0xff]
    %v2975 = vld [vmem:[%s2964 + $0x50] sm:$0xff]
    %v2976 = vld [vmem:[%s2964 + $0x58] sm:$0xff]
    %v2977 = vld [vmem:[%s2964 + $0x60] sm:$0xff]
    %v2978 = vld [vmem:[%s2964 + $0x68] sm:$0xff]
    %v2979 = vld [vmem:[%s2964 + $0x70] sm:$0xff]
    %v2980 = vld [vmem:[%s2964 + $0x78] sm:$0xff]
    %v2981 = vld [vmem:[%s2964 + $0x80] sm:$0xff]
    %v2982 = vld [vmem:[%s2964 + $0x88] sm:$0xff]
    %v2983 = vld [vmem:[%s2964 + $0x90] sm:$0xff]
    %v2984 = vld [vmem:[%s2964 + $0x98] sm:$0xff]
    %v2985 = vld [vmem:[%s2964 + $0xa0] sm:$0xff]
    %v2986 = vld [vmem:[%s2964 + $0xa8] sm:$0xff]
    %v2987 = vld [vmem:[%s2964 + $0xb0] sm:$0xff]
    %v2988 = vld [vmem:[%s2964 + $0xb8] sm:$0xff]
    %v2989 = vld [vmem:[%s2964 + $0xc0] sm:$0xff]
    %v2990 = vld [vmem:[%s2964 + $0xc8] sm:$0xff]
    %v2991 = vld [vmem:[%s2964 + $0xd0] sm:$0xff]
    %v2992 = vld [vmem:[%s2964 + $0xd8] sm:$0xff]
    %v2993 = vld [vmem:[%s2964 + $0xe0] sm:$0xff]
    %v2994 = vld [vmem:[%s2964 + $0xe8] sm:$0xff]
    %v2995 = vld [vmem:[%s2964 + $0xf0] sm:$0xff]
    %v2996 = vld [vmem:[%s2964 + $0xf8] sm:$0xff]
    %v2997 = vld [vmem:[%s2964 + $0x100] sm:$0xff]
    %v2998 = vld [vmem:[%s2964 + $0x108] sm:$0xff]
    %v2999 = vld [vmem:[%s2964 + $0x110] sm:$0xff]
    %v3000 = vld [vmem:[%s2964 + $0x118] sm:$0xff]
    %v3001 = vld [vmem:[%s2964 + $0x120] sm:$0xff]
    %v3002 = vld [vmem:[%s2964 + $0x128] sm:$0xff]
    %v3003 = vld [vmem:[%s2964 + $0x130] sm:$0xff]
    %v3004 = vld [vmem:[%s2964 + $0x138] sm:$0xff]
    %v3005 = vld [vmem:[%s2964 + $0x140] sm:$0xff]
    %v3006 = vld [vmem:[%s2964 + $0x148] sm:$0xff]
    %v3007 = vld [vmem:[%s2964 + $0x150] sm:$0xff]
    %v3008 = vld [vmem:[%s2964 + $0x158] sm:$0xff]
    %v3009 = vld [vmem:[%s2964 + $0x160] sm:$0xff]
    %v3010 = vld [vmem:[%s2964 + $0x168] sm:$0xff]
    %v3011 = vld [vmem:[%s2964 + $0x170] sm:$0xff]
    %v3012 = vld [vmem:[%s2964 + $0x178] sm:$0xff]
    %v3013 = vld [vmem:[%s2964 + $0x180] sm:$0xff]
    %v3014 = vld [vmem:[%s2964 + $0x188] sm:$0xff]
    %v3015 = vld [vmem:[%s2964 + $0x190] sm:$0xff]
    %v3016 = vld [vmem:[%s2964 + $0x198] sm:$0xff]
    %v3017 = vld [vmem:[%s2964 + $0x1a0] sm:$0xff]
    %v3018 = vld [vmem:[%s2964 + $0x1a8] sm:$0xff]
    %v3019 = vld [vmem:[%s2964 + $0x1b0] sm:$0xff]
    %v3020 = vld [vmem:[%s2964 + $0x1b8] sm:$0xff]
    %v3021 = vld [vmem:[%s2964 + $0x1c0] sm:$0xff]
    %v3022 = vld [vmem:[%s2964 + $0x1c8] sm:$0xff]
    %v3023 = vld [vmem:[%s2964 + $0x1d0] sm:$0xff]
    %v3024 = vld [vmem:[%s2964 + $0x1d8] sm:$0xff]
    %v3025 = vld [vmem:[%s2964 + $0x1e0] sm:$0xff]
    %v3026 = vld [vmem:[%s2964 + $0x1e8] sm:$0xff]
    %v3027 = vld [vmem:[%s2964 + $0x1f0] sm:$0xff]
    %v3028 = vld [vmem:[%s2964 + $0x1f8] sm:$0xff]
    %3030 = vset.pattern.permute.xlu0 0
    %3031 = vperm.xlu0 %3030, %v2965
    %v3032 = vpop.permute.xlu0 %3031
    %3035 = vset.pattern.permute.xlu0 0
    %3036 = vperm.xlu0 %3035, %v2966
    %v3037 = vpop.permute.xlu0 %3036
    %3040 = vset.pattern.permute.xlu0 0
    %3041 = vperm.xlu0 %3040, %v2967
    %v3042 = vpop.permute.xlu0 %3041
    %3045 = vset.pattern.permute.xlu0 0
    %3046 = vperm.xlu0 %3045, %v2968
    %v3047 = vpop.permute.xlu0 %3046
    %3050 = vset.pattern.permute.xlu0 0
    %3051 = vperm.xlu0 %3050, %v2969
    %v3052 = vpop.permute.xlu0 %3051
    %3055 = vset.pattern.permute.xlu0 0
    %3056 = vperm.xlu0 %3055, %v2970
    %v3057 = vpop.permute.xlu0 %3056
    %3060 = vset.pattern.permute.xlu0 0
    %3061 = vperm.xlu0 %3060, %v2971
    %v3062 = vpop.permute.xlu0 %3061
    %3065 = vset.pattern.permute.xlu0 0
    %3066 = vperm.xlu0 %3065, %v2972
    %v3067 = vpop.permute.xlu0 %3066
    %3070 = vset.pattern.permute.xlu0 0
    %3071 = vperm.xlu0 %3070, %v2973
    %v3072 = vpop.permute.xlu0 %3071
    %3075 = vset.pattern.permute.xlu0 0
    %3076 = vperm.xlu0 %3075, %v2974
    %v3077 = vpop.permute.xlu0 %3076
    %3080 = vset.pattern.permute.xlu0 0
    %3081 = vperm.xlu0 %3080, %v2975
    %v3082 = vpop.permute.xlu0 %3081
    %3085 = vset.pattern.permute.xlu0 0
    %3086 = vperm.xlu0 %3085, %v2976
    %v3087 = vpop.permute.xlu0 %3086
    %3090 = vset.pattern.permute.xlu0 0
    %3091 = vperm.xlu0 %3090, %v2977
    %v3092 = vpop.permute.xlu0 %3091
    %3095 = vset.pattern.permute.xlu0 0
    %3096 = vperm.xlu0 %3095, %v2978
    %v3097 = vpop.permute.xlu0 %3096
    %3100 = vset.pattern.permute.xlu0 0
    %3101 = vperm.xlu0 %3100, %v2979
    %v3102 = vpop.permute.xlu0 %3101
    %3105 = vset.pattern.permute.xlu0 0
    %3106 = vperm.xlu0 %3105, %v2980
    %v3107 = vpop.permute.xlu0 %3106
    %3110 = vset.pattern.permute.xlu0 0
    %3111 = vperm.xlu0 %3110, %v2981
    %v3112 = vpop.permute.xlu0 %3111
    %3115 = vset.pattern.permute.xlu0 0
    %3116 = vperm.xlu0 %3115, %v2982
    %v3117 = vpop.permute.xlu0 %3116
    %3120 = vset.pattern.permute.xlu0 0
    %3121 = vperm.xlu0 %3120, %v2983
    %v3122 = vpop.permute.xlu0 %3121
    %3125 = vset.pattern.permute.xlu0 0
    %3126 = vperm.xlu0 %3125, %v2984
    %v3127 = vpop.permute.xlu0 %3126
    %3130 = vset.pattern.permute.xlu0 0
    %3131 = vperm.xlu0 %3130, %v2985
    %v3132 = vpop.permute.xlu0 %3131
    %3135 = vset.pattern.permute.xlu0 0
    %3136 = vperm.xlu0 %3135, %v2986
    %v3137 = vpop.permute.xlu0 %3136
    %3140 = vset.pattern.permute.xlu0 0
    %3141 = vperm.xlu0 %3140, %v2987
    %v3142 = vpop.permute.xlu0 %3141
    %3145 = vset.pattern.permute.xlu0 0
    %3146 = vperm.xlu0 %3145, %v2988
    %v3147 = vpop.permute.xlu0 %3146
    %3150 = vset.pattern.permute.xlu0 0
    %3151 = vperm.xlu0 %3150, %v2989
    %v3152 = vpop.permute.xlu0 %3151
    %3155 = vset.pattern.permute.xlu0 0
    %3156 = vperm.xlu0 %3155, %v2990
    %v3157 = vpop.permute.xlu0 %3156
    %3160 = vset.pattern.permute.xlu0 0
    %3161 = vperm.xlu0 %3160, %v2991
    %v3162 = vpop.permute.xlu0 %3161
    %3165 = vset.pattern.permute.xlu0 0
    %3166 = vperm.xlu0 %3165, %v2992
    %v3167 = vpop.permute.xlu0 %3166
    %3170 = vset.pattern.permute.xlu0 0
    %3171 = vperm.xlu0 %3170, %v2993
    %v3172 = vpop.permute.xlu0 %3171
    %3175 = vset.pattern.permute.xlu0 0
    %3176 = vperm.xlu0 %3175, %v2994
    %v3177 = vpop.permute.xlu0 %3176
    %3180 = vset.pattern.permute.xlu0 0
    %3181 = vperm.xlu0 %3180, %v2995
    %v3182 = vpop.permute.xlu0 %3181
    %3185 = vset.pattern.permute.xlu0 0
    %3186 = vperm.xlu0 %3185, %v2996
    %v3187 = vpop.permute.xlu0 %3186
    %3190 = vset.pattern.permute.xlu0 0
    %3191 = vperm.xlu0 %3190, %v2997
    %v3192 = vpop.permute.xlu0 %3191
    %3195 = vset.pattern.permute.xlu0 0
    %3196 = vperm.xlu0 %3195, %v2998
    %v3197 = vpop.permute.xlu0 %3196
    %3200 = vset.pattern.permute.xlu0 0
    %3201 = vperm.xlu0 %3200, %v2999
    %v3202 = vpop.permute.xlu0 %3201
    %3205 = vset.pattern.permute.xlu0 0
    %3206 = vperm.xlu0 %3205, %v3000
    %v3207 = vpop.permute.xlu0 %3206
    %3210 = vset.pattern.permute.xlu0 0
    %3211 = vperm.xlu0 %3210, %v3001
    %v3212 = vpop.permute.xlu0 %3211
    %3215 = vset.pattern.permute.xlu0 0
    %3216 = vperm.xlu0 %3215, %v3002
    %v3217 = vpop.permute.xlu0 %3216
    %3220 = vset.pattern.permute.xlu0 0
    %3221 = vperm.xlu0 %3220, %v3003
    %v3222 = vpop.permute.xlu0 %3221
    %3225 = vset.pattern.permute.xlu0 0
    %3226 = vperm.xlu0 %3225, %v3004
    %v3227 = vpop.permute.xlu0 %3226
    %3230 = vset.pattern.permute.xlu0 0
    %3231 = vperm.xlu0 %3230, %v3005
    %v3232 = vpop.permute.xlu0 %3231
    %3235 = vset.pattern.permute.xlu0 0
    %3236 = vperm.xlu0 %3235, %v3006
    %v3237 = vpop.permute.xlu0 %3236
    %3240 = vset.pattern.permute.xlu0 0
    %3241 = vperm.xlu0 %3240, %v3007
    %v3242 = vpop.permute.xlu0 %3241
    %3245 = vset.pattern.permute.xlu0 0
    %3246 = vperm.xlu0 %3245, %v3008
    %v3247 = vpop.permute.xlu0 %3246
    %3250 = vset.pattern.permute.xlu0 0
    %3251 = vperm.xlu0 %3250, %v3009
    %v3252 = vpop.permute.xlu0 %3251
    %3255 = vset.pattern.permute.xlu0 0
    %3256 = vperm.xlu0 %3255, %v3010
    %v3257 = vpop.permute.xlu0 %3256
    %3260 = vset.pattern.permute.xlu0 0
    %3261 = vperm.xlu0 %3260, %v3011
    %v3262 = vpop.permute.xlu0 %3261
    %3265 = vset.pattern.permute.xlu0 0
    %3266 = vperm.xlu0 %3265, %v3012
    %v3267 = vpop.permute.xlu0 %3266
    %3270 = vset.pattern.permute.xlu0 0
    %3271 = vperm.xlu0 %3270, %v3013
    %v3272 = vpop.permute.xlu0 %3271
    %3275 = vset.pattern.permute.xlu0 0
    %3276 = vperm.xlu0 %3275, %v3014
    %v3277 = vpop.permute.xlu0 %3276
    %3280 = vset.pattern.permute.xlu0 0
    %3281 = vperm.xlu0 %3280, %v3015
    %v3282 = vpop.permute.xlu0 %3281
    %3285 = vset.pattern.permute.xlu0 0
    %3286 = vperm.xlu0 %3285, %v3016
    %v3287 = vpop.permute.xlu0 %3286
    %3290 = vset.pattern.permute.xlu0 0
    %3291 = vperm.xlu0 %3290, %v3017
    %v3292 = vpop.permute.xlu0 %3291
    %3295 = vset.pattern.permute.xlu0 0
    %3296 = vperm.xlu0 %3295, %v3018
    %v3297 = vpop.permute.xlu0 %3296
    %3300 = vset.pattern.permute.xlu0 0
    %3301 = vperm.xlu0 %3300, %v3019
    %v3302 = vpop.permute.xlu0 %3301
    %3305 = vset.pattern.permute.xlu0 0
    %3306 = vperm.xlu0 %3305, %v3020
    %v3307 = vpop.permute.xlu0 %3306
    %3310 = vset.pattern.permute.xlu0 0
    %3311 = vperm.xlu0 %3310, %v3021
    %v3312 = vpop.permute.xlu0 %3311
    %3315 = vset.pattern.permute.xlu0 0
    %3316 = vperm.xlu0 %3315, %v3022
    %v3317 = vpop.permute.xlu0 %3316
    %3320 = vset.pattern.permute.xlu0 0
    %3321 = vperm.xlu0 %3320, %v3023
    %v3322 = vpop.permute.xlu0 %3321
    %3325 = vset.pattern.permute.xlu0 0
    %3326 = vperm.xlu0 %3325, %v3024
    %v3327 = vpop.permute.xlu0 %3326
    %3330 = vset.pattern.permute.xlu0 0
    %3331 = vperm.xlu0 %3330, %v3025
    %v3332 = vpop.permute.xlu0 %3331
    %3335 = vset.pattern.permute.xlu0 0
    %3336 = vperm.xlu0 %3335, %v3026
    %v3337 = vpop.permute.xlu0 %3336
    %3340 = vset.pattern.permute.xlu0 0
    %3341 = vperm.xlu0 %3340, %v3027
    %v3342 = vpop.permute.xlu0 %3341
    %3345 = vset.pattern.permute.xlu0 0
    %3346 = vperm.xlu0 %3345, %v3028
    %v3347 = vpop.permute.xlu0 %3346
    %v3349 = vmul.f32 %v1335, %v3032
    %v3350 = vmul.f32 %v1337, %v3037
    %v3351 = vmul.f32 %v1339, %v3042
    %v3352 = vmul.f32 %v1341, %v3047
    %v3353 = vmul.f32 %v1343, %v3052
    %v3354 = vmul.f32 %v1345, %v3057
    %v3355 = vmul.f32 %v1347, %v3062
    %v3356 = vmul.f32 %v1349, %v3067
    %v3357 = vmul.f32 %v1351, %v3072
    %v3358 = vmul.f32 %v1353, %v3077
    %v3359 = vmul.f32 %v1355, %v3082
    %v3360 = vmul.f32 %v1357, %v3087
    %v3361 = vmul.f32 %v1359, %v3092
    %v3362 = vmul.f32 %v1361, %v3097
    %v3363 = vmul.f32 %v1363, %v3102
    %v3364 = vmul.f32 %v1365, %v3107
    %v3365 = vmul.f32 %v1367, %v3112
    %v3366 = vmul.f32 %v1369, %v3117
    %v3367 = vmul.f32 %v1371, %v3122
    %v3368 = vmul.f32 %v1373, %v3127
    %v3369 = vmul.f32 %v1375, %v3132
    %v3370 = vmul.f32 %v1377, %v3137
    %v3371 = vmul.f32 %v1379, %v3142
    %v3372 = vmul.f32 %v1381, %v3147
    %v3373 = vmul.f32 %v1383, %v3152
    %v3374 = vmul.f32 %v1385, %v3157
    %v3375 = vmul.f32 %v1387, %v3162
    %v3376 = vmul.f32 %v1389, %v3167
    %v3377 = vmul.f32 %v1391, %v3172
    %v3378 = vmul.f32 %v1393, %v3177
    %v3379 = vmul.f32 %v1395, %v3182
    %v3380 = vmul.f32 %v1397, %v3187
    %v3381 = vmul.f32 %v1399, %v3192
    %v3382 = vmul.f32 %v1401, %v3197
    %v3383 = vmul.f32 %v1403, %v3202
    %v3384 = vmul.f32 %v1405, %v3207
    %v3385 = vmul.f32 %v1407, %v3212
    %v3386 = vmul.f32 %v1409, %v3217
    %v3387 = vmul.f32 %v1411, %v3222
    %v3388 = vmul.f32 %v1413, %v3227
    %v3389 = vmul.f32 %v1415, %v3232
    %v3390 = vmul.f32 %v1417, %v3237
    %v3391 = vmul.f32 %v1419, %v3242
    %v3392 = vmul.f32 %v1421, %v3247
    %v3393 = vmul.f32 %v1423, %v3252
    %v3394 = vmul.f32 %v1425, %v3257
    %v3395 = vmul.f32 %v1427, %v3262
    %v3396 = vmul.f32 %v1429, %v3267
    %v3397 = vmul.f32 %v1431, %v3272
    %v3398 = vmul.f32 %v1433, %v3277
    %v3399 = vmul.f32 %v1435, %v3282
    %v3400 = vmul.f32 %v1437, %v3287
    %v3401 = vmul.f32 %v1439, %v3292
    %v3402 = vmul.f32 %v1441, %v3297
    %v3403 = vmul.f32 %v1443, %v3302
    %v3404 = vmul.f32 %v1445, %v3307
    %v3405 = vmul.f32 %v1447, %v3312
    %v3406 = vmul.f32 %v1449, %v3317
    %v3407 = vmul.f32 %v1451, %v3322
    %v3408 = vmul.f32 %v1453, %v3327
    %v3409 = vmul.f32 %v1455, %v3332
    %v3410 = vmul.f32 %v1456, %v3337
    %v3411 = vmul.f32 %v1330, %v3342
    %v3412 = vmul.f32 %v1520, %v3347
    %v3413 = vpack.c.bf16 %v3350, %v3349
    %v3414 = vpack.c.bf16 %v3352, %v3351
    %v3415 = vpack.c.bf16 %v3354, %v3353
    %v3416 = vpack.c.bf16 %v3356, %v3355
    %v3417 = vpack.c.bf16 %v3358, %v3357
    %v3418 = vpack.c.bf16 %v3360, %v3359
    %v3419 = vpack.c.bf16 %v3362, %v3361
    %v3420 = vpack.c.bf16 %v3364, %v3363
    %v3421 = vpack.c.bf16 %v3366, %v3365
    %v3422 = vpack.c.bf16 %v3368, %v3367
    %v3423 = vpack.c.bf16 %v3370, %v3369
    %v3424 = vpack.c.bf16 %v3372, %v3371
    %v3425 = vpack.c.bf16 %v3374, %v3373
    %v3426 = vpack.c.bf16 %v3376, %v3375
    %v3427 = vpack.c.bf16 %v3378, %v3377
    %v3428 = vpack.c.bf16 %v3380, %v3379
    %v3429 = vpack.c.bf16 %v3382, %v3381
    %v3430 = vpack.c.bf16 %v3384, %v3383
    %v3431 = vpack.c.bf16 %v3386, %v3385
    %v3432 = vpack.c.bf16 %v3388, %v3387
    %v3433 = vpack.c.bf16 %v3390, %v3389
    %v3434 = vpack.c.bf16 %v3392, %v3391
    %v3435 = vpack.c.bf16 %v3394, %v3393
    %v3436 = vpack.c.bf16 %v3396, %v3395
    %v3437 = vpack.c.bf16 %v3398, %v3397
    %v3438 = vpack.c.bf16 %v3400, %v3399
    %v3439 = vpack.c.bf16 %v3402, %v3401
    %v3440 = vpack.c.bf16 %v3404, %v3403
    %v3441 = vpack.c.bf16 %v3406, %v3405
    %v3442 = vpack.c.bf16 %v3408, %v3407
    %v3443 = vpack.c.bf16 %v3410, %v3409
    %v3444 = vpack.c.bf16 %v3412, %v3411
    %s3445 = scalar_lea.vmem [#allocation2], 3072
    %v3446 = vld [vmem:[%s3445] sm:$0xff]
    %v3447 = vld [vmem:[%s3445 + $0x8] sm:$0xff]
    %v3448 = vld [vmem:[%s3445 + $0x10] sm:$0xff]
    %v3449 = vld [vmem:[%s3445 + $0x18] sm:$0xff]
    %v3450 = vld [vmem:[%s3445 + $0x20] sm:$0xff]
    %v3451 = vld [vmem:[%s3445 + $0x28] sm:$0xff]
    %v3452 = vld [vmem:[%s3445 + $0x30] sm:$0xff]
    %v3453 = vld [vmem:[%s3445 + $0x38] sm:$0xff]
    %v3454 = vld [vmem:[%s3445 + $0x40] sm:$0xff]
    %v3455 = vld [vmem:[%s3445 + $0x48] sm:$0xff]
    %v3456 = vld [vmem:[%s3445 + $0x50] sm:$0xff]
    %v3457 = vld [vmem:[%s3445 + $0x58] sm:$0xff]
    %v3458 = vld [vmem:[%s3445 + $0x60] sm:$0xff]
    %v3459 = vld [vmem:[%s3445 + $0x68] sm:$0xff]
    %v3460 = vld [vmem:[%s3445 + $0x70] sm:$0xff]
    %v3461 = vld [vmem:[%s3445 + $0x78] sm:$0xff]
    %v3462 = vld [vmem:[%s3445 + $0x80] sm:$0xff]
    %v3463 = vld [vmem:[%s3445 + $0x88] sm:$0xff]
    %v3464 = vld [vmem:[%s3445 + $0x90] sm:$0xff]
    %v3465 = vld [vmem:[%s3445 + $0x98] sm:$0xff]
    %v3466 = vld [vmem:[%s3445 + $0xa0] sm:$0xff]
    %v3467 = vld [vmem:[%s3445 + $0xa8] sm:$0xff]
    %v3468 = vld [vmem:[%s3445 + $0xb0] sm:$0xff]
    %v3469 = vld [vmem:[%s3445 + $0xb8] sm:$0xff]
    %v3470 = vld [vmem:[%s3445 + $0xc0] sm:$0xff]
    %v3471 = vld [vmem:[%s3445 + $0xc8] sm:$0xff]
    %v3472 = vld [vmem:[%s3445 + $0xd0] sm:$0xff]
    %v3473 = vld [vmem:[%s3445 + $0xd8] sm:$0xff]
    %v3474 = vld [vmem:[%s3445 + $0xe0] sm:$0xff]
    %v3475 = vld [vmem:[%s3445 + $0xe8] sm:$0xff]
    %v3476 = vld [vmem:[%s3445 + $0xf0] sm:$0xff]
    %v3477 = vld [vmem:[%s3445 + $0xf8] sm:$0xff]
    %v3478 = vld [vmem:[%s3445 + $0x100] sm:$0xff]
    %v3479 = vld [vmem:[%s3445 + $0x108] sm:$0xff]
    %v3480 = vld [vmem:[%s3445 + $0x110] sm:$0xff]
    %v3481 = vld [vmem:[%s3445 + $0x118] sm:$0xff]
    %v3482 = vld [vmem:[%s3445 + $0x120] sm:$0xff]
    %v3483 = vld [vmem:[%s3445 + $0x128] sm:$0xff]
    %v3484 = vld [vmem:[%s3445 + $0x130] sm:$0xff]
    %v3485 = vld [vmem:[%s3445 + $0x138] sm:$0xff]
    %v3486 = vld [vmem:[%s3445 + $0x140] sm:$0xff]
    %v3487 = vld [vmem:[%s3445 + $0x148] sm:$0xff]
    %v3488 = vld [vmem:[%s3445 + $0x150] sm:$0xff]
    %v3489 = vld [vmem:[%s3445 + $0x158] sm:$0xff]
    %v3490 = vld [vmem:[%s3445 + $0x160] sm:$0xff]
    %v3491 = vld [vmem:[%s3445 + $0x168] sm:$0xff]
    %v3492 = vld [vmem:[%s3445 + $0x170] sm:$0xff]
    %v3493 = vld [vmem:[%s3445 + $0x178] sm:$0xff]
    %v3494 = vld [vmem:[%s3445 + $0x180] sm:$0xff]
    %v3495 = vld [vmem:[%s3445 + $0x188] sm:$0xff]
    %v3496 = vld [vmem:[%s3445 + $0x190] sm:$0xff]
    %v3497 = vld [vmem:[%s3445 + $0x198] sm:$0xff]
    %v3498 = vld [vmem:[%s3445 + $0x1a0] sm:$0xff]
    %v3499 = vld [vmem:[%s3445 + $0x1a8] sm:$0xff]
    %v3500 = vld [vmem:[%s3445 + $0x1b0] sm:$0xff]
    %v3501 = vld [vmem:[%s3445 + $0x1b8] sm:$0xff]
    %v3502 = vld [vmem:[%s3445 + $0x1c0] sm:$0xff]
    %v3503 = vld [vmem:[%s3445 + $0x1c8] sm:$0xff]
    %v3504 = vld [vmem:[%s3445 + $0x1d0] sm:$0xff]
    %v3505 = vld [vmem:[%s3445 + $0x1d8] sm:$0xff]
    %v3506 = vld [vmem:[%s3445 + $0x1e0] sm:$0xff]
    %v3507 = vld [vmem:[%s3445 + $0x1e8] sm:$0xff]
    %v3508 = vld [vmem:[%s3445 + $0x1f0] sm:$0xff]
    %v3509 = vld [vmem:[%s3445 + $0x1f8] sm:$0xff]
    %3511 = vset.pattern.permute.xlu0 0
    %3512 = vperm.xlu0 %3511, %v3446
    %v3513 = vpop.permute.xlu0 %3512
    %3516 = vset.pattern.permute.xlu0 0
    %3517 = vperm.xlu0 %3516, %v3447
    %v3518 = vpop.permute.xlu0 %3517
    %3521 = vset.pattern.permute.xlu0 0
    %3522 = vperm.xlu0 %3521, %v3448
    %v3523 = vpop.permute.xlu0 %3522
    %3526 = vset.pattern.permute.xlu0 0
    %3527 = vperm.xlu0 %3526, %v3449
    %v3528 = vpop.permute.xlu0 %3527
    %3531 = vset.pattern.permute.xlu0 0
    %3532 = vperm.xlu0 %3531, %v3450
    %v3533 = vpop.permute.xlu0 %3532
    %3536 = vset.pattern.permute.xlu0 0
    %3537 = vperm.xlu0 %3536, %v3451
    %v3538 = vpop.permute.xlu0 %3537
    %3541 = vset.pattern.permute.xlu0 0
    %3542 = vperm.xlu0 %3541, %v3452
    %v3543 = vpop.permute.xlu0 %3542
    %3546 = vset.pattern.permute.xlu0 0
    %3547 = vperm.xlu0 %3546, %v3453
    %v3548 = vpop.permute.xlu0 %3547
    %3551 = vset.pattern.permute.xlu0 0
    %3552 = vperm.xlu0 %3551, %v3454
    %v3553 = vpop.permute.xlu0 %3552
    %3556 = vset.pattern.permute.xlu0 0
    %3557 = vperm.xlu0 %3556, %v3455
    %v3558 = vpop.permute.xlu0 %3557
    %3561 = vset.pattern.permute.xlu0 0
    %3562 = vperm.xlu0 %3561, %v3456
    %v3563 = vpop.permute.xlu0 %3562
    %3566 = vset.pattern.permute.xlu0 0
    %3567 = vperm.xlu0 %3566, %v3457
    %v3568 = vpop.permute.xlu0 %3567
    %3571 = vset.pattern.permute.xlu0 0
    %3572 = vperm.xlu0 %3571, %v3458
    %v3573 = vpop.permute.xlu0 %3572
    %3576 = vset.pattern.permute.xlu0 0
    %3577 = vperm.xlu0 %3576, %v3459
    %v3578 = vpop.permute.xlu0 %3577
    %3581 = vset.pattern.permute.xlu0 0
    %3582 = vperm.xlu0 %3581, %v3460
    %v3583 = vpop.permute.xlu0 %3582
    %3586 = vset.pattern.permute.xlu0 0
    %3587 = vperm.xlu0 %3586, %v3461
    %v3588 = vpop.permute.xlu0 %3587
    %3591 = vset.pattern.permute.xlu0 0
    %3592 = vperm.xlu0 %3591, %v3462
    %v3593 = vpop.permute.xlu0 %3592
    %3596 = vset.pattern.permute.xlu0 0
    %3597 = vperm.xlu0 %3596, %v3463
    %v3598 = vpop.permute.xlu0 %3597
    %3601 = vset.pattern.permute.xlu0 0
    %3602 = vperm.xlu0 %3601, %v3464
    %v3603 = vpop.permute.xlu0 %3602
    %3606 = vset.pattern.permute.xlu0 0
    %3607 = vperm.xlu0 %3606, %v3465
    %v3608 = vpop.permute.xlu0 %3607
    %3611 = vset.pattern.permute.xlu0 0
    %3612 = vperm.xlu0 %3611, %v3466
    %v3613 = vpop.permute.xlu0 %3612
    %3616 = vset.pattern.permute.xlu0 0
    %3617 = vperm.xlu0 %3616, %v3467
    %v3618 = vpop.permute.xlu0 %3617
    %3621 = vset.pattern.permute.xlu0 0
    %3622 = vperm.xlu0 %3621, %v3468
    %v3623 = vpop.permute.xlu0 %3622
    %3626 = vset.pattern.permute.xlu0 0
    %3627 = vperm.xlu0 %3626, %v3469
    %v3628 = vpop.permute.xlu0 %3627
    %3631 = vset.pattern.permute.xlu0 0
    %3632 = vperm.xlu0 %3631, %v3470
    %v3633 = vpop.permute.xlu0 %3632
    %3636 = vset.pattern.permute.xlu0 0
    %3637 = vperm.xlu0 %3636, %v3471
    %v3638 = vpop.permute.xlu0 %3637
    %3641 = vset.pattern.permute.xlu0 0
    %3642 = vperm.xlu0 %3641, %v3472
    %v3643 = vpop.permute.xlu0 %3642
    %3646 = vset.pattern.permute.xlu0 0
    %3647 = vperm.xlu0 %3646, %v3473
    %v3648 = vpop.permute.xlu0 %3647
    %3651 = vset.pattern.permute.xlu0 0
    %3652 = vperm.xlu0 %3651, %v3474
    %v3653 = vpop.permute.xlu0 %3652
    %3656 = vset.pattern.permute.xlu0 0
    %3657 = vperm.xlu0 %3656, %v3475
    %v3658 = vpop.permute.xlu0 %3657
    %3661 = vset.pattern.permute.xlu0 0
    %3662 = vperm.xlu0 %3661, %v3476
    %v3663 = vpop.permute.xlu0 %3662
    %3666 = vset.pattern.permute.xlu0 0
    %3667 = vperm.xlu0 %3666, %v3477
    %v3668 = vpop.permute.xlu0 %3667
    %3671 = vset.pattern.permute.xlu0 0
    %3672 = vperm.xlu0 %3671, %v3478
    %v3673 = vpop.permute.xlu0 %3672
    %3676 = vset.pattern.permute.xlu0 0
    %3677 = vperm.xlu0 %3676, %v3479
    %v3678 = vpop.permute.xlu0 %3677
    %3681 = vset.pattern.permute.xlu0 0
    %3682 = vperm.xlu0 %3681, %v3480
    %v3683 = vpop.permute.xlu0 %3682
    %3686 = vset.pattern.permute.xlu0 0
    %3687 = vperm.xlu0 %3686, %v3481
    %v3688 = vpop.permute.xlu0 %3687
    %3691 = vset.pattern.permute.xlu0 0
    %3692 = vperm.xlu0 %3691, %v3482
    %v3693 = vpop.permute.xlu0 %3692
    %3696 = vset.pattern.permute.xlu0 0
    %3697 = vperm.xlu0 %3696, %v3483
    %v3698 = vpop.permute.xlu0 %3697
    %3701 = vset.pattern.permute.xlu0 0
    %3702 = vperm.xlu0 %3701, %v3484
    %v3703 = vpop.permute.xlu0 %3702
    %3706 = vset.pattern.permute.xlu0 0
    %3707 = vperm.xlu0 %3706, %v3485
    %v3708 = vpop.permute.xlu0 %3707
    %3711 = vset.pattern.permute.xlu0 0
    %3712 = vperm.xlu0 %3711, %v3486
    %v3713 = vpop.permute.xlu0 %3712
    %3716 = vset.pattern.permute.xlu0 0
    %3717 = vperm.xlu0 %3716, %v3487
    %v3718 = vpop.permute.xlu0 %3717
    %3721 = vset.pattern.permute.xlu0 0
    %3722 = vperm.xlu0 %3721, %v3488
    %v3723 = vpop.permute.xlu0 %3722
    %3726 = vset.pattern.permute.xlu0 0
    %3727 = vperm.xlu0 %3726, %v3489
    %v3728 = vpop.permute.xlu0 %3727
    %3731 = vset.pattern.permute.xlu0 0
    %3732 = vperm.xlu0 %3731, %v3490
    %v3733 = vpop.permute.xlu0 %3732
    %3736 = vset.pattern.permute.xlu0 0
    %3737 = vperm.xlu0 %3736, %v3491
    %v3738 = vpop.permute.xlu0 %3737
    %3741 = vset.pattern.permute.xlu0 0
    %3742 = vperm.xlu0 %3741, %v3492
    %v3743 = vpop.permute.xlu0 %3742
    %3746 = vset.pattern.permute.xlu0 0
    %3747 = vperm.xlu0 %3746, %v3493
    %v3748 = vpop.permute.xlu0 %3747
    %3751 = vset.pattern.permute.xlu0 0
    %3752 = vperm.xlu0 %3751, %v3494
    %v3753 = vpop.permute.xlu0 %3752
    %3756 = vset.pattern.permute.xlu0 0
    %3757 = vperm.xlu0 %3756, %v3495
    %v3758 = vpop.permute.xlu0 %3757
    %3761 = vset.pattern.permute.xlu0 0
    %3762 = vperm.xlu0 %3761, %v3496
    %v3763 = vpop.permute.xlu0 %3762
    %3766 = vset.pattern.permute.xlu0 0
    %3767 = vperm.xlu0 %3766, %v3497
    %v3768 = vpop.permute.xlu0 %3767
    %3771 = vset.pattern.permute.xlu0 0
    %3772 = vperm.xlu0 %3771, %v3498
    %v3773 = vpop.permute.xlu0 %3772
    %3776 = vset.pattern.permute.xlu0 0
    %3777 = vperm.xlu0 %3776, %v3499
    %v3778 = vpop.permute.xlu0 %3777
    %3781 = vset.pattern.permute.xlu0 0
    %3782 = vperm.xlu0 %3781, %v3500
    %v3783 = vpop.permute.xlu0 %3782
    %3786 = vset.pattern.permute.xlu0 0
    %3787 = vperm.xlu0 %3786, %v3501
    %v3788 = vpop.permute.xlu0 %3787
    %3791 = vset.pattern.permute.xlu0 0
    %3792 = vperm.xlu0 %3791, %v3502
    %v3793 = vpop.permute.xlu0 %3792
    %3796 = vset.pattern.permute.xlu0 0
    %3797 = vperm.xlu0 %3796, %v3503
    %v3798 = vpop.permute.xlu0 %3797
    %3801 = vset.pattern.permute.xlu0 0
    %3802 = vperm.xlu0 %3801, %v3504
    %v3803 = vpop.permute.xlu0 %3802
    %3806 = vset.pattern.permute.xlu0 0
    %3807 = vperm.xlu0 %3806, %v3505
    %v3808 = vpop.permute.xlu0 %3807
    %3811 = vset.pattern.permute.xlu0 0
    %3812 = vperm.xlu0 %3811, %v3506
    %v3813 = vpop.permute.xlu0 %3812
    %3816 = vset.pattern.permute.xlu0 0
    %3817 = vperm.xlu0 %3816, %v3507
    %v3818 = vpop.permute.xlu0 %3817
    %3821 = vset.pattern.permute.xlu0 0
    %3822 = vperm.xlu0 %3821, %v3508
    %v3823 = vpop.permute.xlu0 %3822
    %3826 = vset.pattern.permute.xlu0 0
    %3827 = vperm.xlu0 %3826, %v3509
    %v3828 = vpop.permute.xlu0 %3827
    %v3830 = vmul.f32 %v185, %v3513
    %v3831 = vmul.f32 %v187, %v3518
    %v3832 = vmul.f32 %v189, %v3523
    %v3833 = vmul.f32 %v191, %v3528
    %v3834 = vmul.f32 %v193, %v3533
    %v3835 = vmul.f32 %v195, %v3538
    %v3836 = vmul.f32 %v197, %v3543
    %v3837 = vmul.f32 %v199, %v3548
    %v3838 = vmul.f32 %v201, %v3553
    %v3839 = vmul.f32 %v203, %v3558
    %v3840 = vmul.f32 %v205, %v3563
    %v3841 = vmul.f32 %v207, %v3568
    %v3842 = vmul.f32 %v209, %v3573
    %v3843 = vmul.f32 %v211, %v3578
    %v3844 = vmul.f32 %v213, %v3583
    %v3845 = vmul.f32 %v215, %v3588
    %v3846 = vmul.f32 %v217, %v3593
    %v3847 = vmul.f32 %v219, %v3598
    %v3848 = vmul.f32 %v221, %v3603
    %v3849 = vmul.f32 %v223, %v3608
    %v3850 = vmul.f32 %v225, %v3613
    %v3851 = vmul.f32 %v227, %v3618
    %v3852 = vmul.f32 %v229, %v3623
    %v3853 = vmul.f32 %v231, %v3628
    %v3854 = vmul.f32 %v233, %v3633
    %v3855 = vmul.f32 %v235, %v3638
    %v3856 = vmul.f32 %v237, %v3643
    %v3857 = vmul.f32 %v239, %v3648
    %v3858 = vmul.f32 %v241, %v3653
    %v3859 = vmul.f32 %v243, %v3658
    %v3860 = vmul.f32 %v245, %v3663
    %v3861 = vmul.f32 %v247, %v3668
    %v3862 = vmul.f32 %v249, %v3673
    %v3863 = vmul.f32 %v251, %v3678
    %v3864 = vmul.f32 %v253, %v3683
    %v3865 = vmul.f32 %v255, %v3688
    %v3866 = vmul.f32 %v257, %v3693
    %v3867 = vmul.f32 %v259, %v3698
    %v3868 = vmul.f32 %v261, %v3703
    %v3869 = vmul.f32 %v263, %v3708
    %v3870 = vmul.f32 %v265, %v3713
    %v3871 = vmul.f32 %v267, %v3718
    %v3872 = vmul.f32 %v269, %v3723
    %v3873 = vmul.f32 %v271, %v3728
    %v3874 = vmul.f32 %v273, %v3733
    %v3875 = vmul.f32 %v275, %v3738
    %v3876 = vmul.f32 %v277, %v3743
    %v3877 = vmul.f32 %v279, %v3748
    %v3878 = vmul.f32 %v281, %v3753
    %v3879 = vmul.f32 %v283, %v3758
    %v3880 = vmul.f32 %v285, %v3763
    %v3881 = vmul.f32 %v287, %v3768
    %v3882 = vmul.f32 %v289, %v3773
    %v3883 = vmul.f32 %v291, %v3778
    %v3884 = vmul.f32 %v293, %v3783
    %v3885 = vmul.f32 %v295, %v3788
    %v3886 = vmul.f32 %v297, %v3793
    %v3887 = vmul.f32 %v299, %v3798
    %v3888 = vmul.f32 %v301, %v3803
    %v3889 = vmul.f32 %v302, %v3808
    %v3890 = vmul.f32 %v114, %v3813
    %v3891 = vmul.f32 %v116, %v3818
    %v3892 = vmul.f32 %v365, %v3823
    %v3893 = vmul.f32 %v183, %v3828
    %v3894 = vpack.c.bf16 %v3831, %v3830
    %v3895 = vpack.c.bf16 %v3833, %v3832
    %v3896 = vpack.c.bf16 %v3835, %v3834
    %v3897 = vpack.c.bf16 %v3837, %v3836
    %v3898 = vpack.c.bf16 %v3839, %v3838
    %v3899 = vpack.c.bf16 %v3841, %v3840
    %v3900 = vpack.c.bf16 %v3843, %v3842
    %v3901 = vpack.c.bf16 %v3845, %v3844
    %v3902 = vpack.c.bf16 %v3847, %v3846
    %v3903 = vpack.c.bf16 %v3849, %v3848
    %v3904 = vpack.c.bf16 %v3851, %v3850
    %v3905 = vpack.c.bf16 %v3853, %v3852
    %v3906 = vpack.c.bf16 %v3855, %v3854
    %v3907 = vpack.c.bf16 %v3857, %v3856
    %v3908 = vpack.c.bf16 %v3859, %v3858
    %v3909 = vpack.c.bf16 %v3861, %v3860
    %v3910 = vpack.c.bf16 %v3863, %v3862
    %v3911 = vpack.c.bf16 %v3865, %v3864
    %v3912 = vpack.c.bf16 %v3867, %v3866
    %v3913 = vpack.c.bf16 %v3869, %v3868
    %v3914 = vpack.c.bf16 %v3871, %v3870
    %v3915 = vpack.c.bf16 %v3873, %v3872
    %v3916 = vpack.c.bf16 %v3875, %v3874
    %v3917 = vpack.c.bf16 %v3877, %v3876
    %v3918 = vpack.c.bf16 %v3879, %v3878
    %v3919 = vpack.c.bf16 %v3881, %v3880
    %v3920 = vpack.c.bf16 %v3883, %v3882
    %v3921 = vpack.c.bf16 %v3885, %v3884
    %v3922 = vpack.c.bf16 %v3887, %v3886
    %v3923 = vpack.c.bf16 %v3889, %v3888
    %v3924 = vpack.c.bf16 %v3891, %v3890
    %v3925 = vpack.c.bf16 %v3893, %v3892
    %s3926 = scalar_lea.vmem [#allocation2], 3584
    %v3927 = vld [vmem:[%s3926] sm:$0xff]
    %v3928 = vld [vmem:[%s3926 + $0x8] sm:$0xff]
    %v3929 = vld [vmem:[%s3926 + $0x10] sm:$0xff]
    %v3930 = vld [vmem:[%s3926 + $0x18] sm:$0xff]
    %v3931 = vld [vmem:[%s3926 + $0x20] sm:$0xff]
    %v3932 = vld [vmem:[%s3926 + $0x28] sm:$0xff]
    %v3933 = vld [vmem:[%s3926 + $0x30] sm:$0xff]
    %v3934 = vld [vmem:[%s3926 + $0x38] sm:$0xff]
    %v3935 = vld [vmem:[%s3926 + $0x40] sm:$0xff]
    %v3936 = vld [vmem:[%s3926 + $0x48] sm:$0xff]
    %v3937 = vld [vmem:[%s3926 + $0x50] sm:$0xff]
    %v3938 = vld [vmem:[%s3926 + $0x58] sm:$0xff]
    %v3939 = vld [vmem:[%s3926 + $0x60] sm:$0xff]
    %v3940 = vld [vmem:[%s3926 + $0x68] sm:$0xff]
    %v3941 = vld [vmem:[%s3926 + $0x70] sm:$0xff]
    %v3942 = vld [vmem:[%s3926 + $0x78] sm:$0xff]
    %v3943 = vld [vmem:[%s3926 + $0x80] sm:$0xff]
    %v3944 = vld [vmem:[%s3926 + $0x88] sm:$0xff]
    %v3945 = vld [vmem:[%s3926 + $0x90] sm:$0xff]
    %v3946 = vld [vmem:[%s3926 + $0x98] sm:$0xff]
    %v3947 = vld [vmem:[%s3926 + $0xa0] sm:$0xff]
    %v3948 = vld [vmem:[%s3926 + $0xa8] sm:$0xff]
    %v3949 = vld [vmem:[%s3926 + $0xb0] sm:$0xff]
    %v3950 = vld [vmem:[%s3926 + $0xb8] sm:$0xff]
    %v3951 = vld [vmem:[%s3926 + $0xc0] sm:$0xff]
    %v3952 = vld [vmem:[%s3926 + $0xc8] sm:$0xff]
    %v3953 = vld [vmem:[%s3926 + $0xd0] sm:$0xff]
    %v3954 = vld [vmem:[%s3926 + $0xd8] sm:$0xff]
    %v3955 = vld [vmem:[%s3926 + $0xe0] sm:$0xff]
    %v3956 = vld [vmem:[%s3926 + $0xe8] sm:$0xff]
    %v3957 = vld [vmem:[%s3926 + $0xf0] sm:$0xff]
    %v3958 = vld [vmem:[%s3926 + $0xf8] sm:$0xff]
    %v3959 = vld [vmem:[%s3926 + $0x100] sm:$0xff]
    %v3960 = vld [vmem:[%s3926 + $0x108] sm:$0xff]
    %v3961 = vld [vmem:[%s3926 + $0x110] sm:$0xff]
    %v3962 = vld [vmem:[%s3926 + $0x118] sm:$0xff]
    %v3963 = vld [vmem:[%s3926 + $0x120] sm:$0xff]
    %v3964 = vld [vmem:[%s3926 + $0x128] sm:$0xff]
    %v3965 = vld [vmem:[%s3926 + $0x130] sm:$0xff]
    %v3966 = vld [vmem:[%s3926 + $0x138] sm:$0xff]
    %v3967 = vld [vmem:[%s3926 + $0x140] sm:$0xff]
    %v3968 = vld [vmem:[%s3926 + $0x148] sm:$0xff]
    %v3969 = vld [vmem:[%s3926 + $0x150] sm:$0xff]
    %v3970 = vld [vmem:[%s3926 + $0x158] sm:$0xff]
    %v3971 = vld [vmem:[%s3926 + $0x160] sm:$0xff]
    %v3972 = vld [vmem:[%s3926 + $0x168] sm:$0xff]
    %v3973 = vld [vmem:[%s3926 + $0x170] sm:$0xff]
    %v3974 = vld [vmem:[%s3926 + $0x178] sm:$0xff]
    %v3975 = vld [vmem:[%s3926 + $0x180] sm:$0xff]
    %v3976 = vld [vmem:[%s3926 + $0x188] sm:$0xff]
    %v3977 = vld [vmem:[%s3926 + $0x190] sm:$0xff]
    %v3978 = vld [vmem:[%s3926 + $0x198] sm:$0xff]
    %v3979 = vld [vmem:[%s3926 + $0x1a0] sm:$0xff]
    %v3980 = vld [vmem:[%s3926 + $0x1a8] sm:$0xff]
    %v3981 = vld [vmem:[%s3926 + $0x1b0] sm:$0xff]
    %v3982 = vld [vmem:[%s3926 + $0x1b8] sm:$0xff]
    %v3983 = vld [vmem:[%s3926 + $0x1c0] sm:$0xff]
    %v3984 = vld [vmem:[%s3926 + $0x1c8] sm:$0xff]
    %v3985 = vld [vmem:[%s3926 + $0x1d0] sm:$0xff]
    %v3986 = vld [vmem:[%s3926 + $0x1d8] sm:$0xff]
    %v3987 = vld [vmem:[%s3926 + $0x1e0] sm:$0xff]
    %v3988 = vld [vmem:[%s3926 + $0x1e8] sm:$0xff]
    %v3989 = vld [vmem:[%s3926 + $0x1f0] sm:$0xff]
    %v3990 = vld [vmem:[%s3926 + $0x1f8] sm:$0xff]
    %3992 = vset.pattern.permute.xlu0 0
    %3993 = vperm.xlu0 %3992, %v3927
    %v3994 = vpop.permute.xlu0 %3993
    %3997 = vset.pattern.permute.xlu0 0
    %3998 = vperm.xlu0 %3997, %v3928
    %v3999 = vpop.permute.xlu0 %3998
    %4002 = vset.pattern.permute.xlu0 0
    %4003 = vperm.xlu0 %4002, %v3929
    %v4004 = vpop.permute.xlu0 %4003
    %4007 = vset.pattern.permute.xlu0 0
    %4008 = vperm.xlu0 %4007, %v3930
    %v4009 = vpop.permute.xlu0 %4008
    %4012 = vset.pattern.permute.xlu0 0
    %4013 = vperm.xlu0 %4012, %v3931
    %v4014 = vpop.permute.xlu0 %4013
    %4017 = vset.pattern.permute.xlu0 0
    %4018 = vperm.xlu0 %4017, %v3932
    %v4019 = vpop.permute.xlu0 %4018
    %4022 = vset.pattern.permute.xlu0 0
    %4023 = vperm.xlu0 %4022, %v3933
    %v4024 = vpop.permute.xlu0 %4023
    %4027 = vset.pattern.permute.xlu0 0
    %4028 = vperm.xlu0 %4027, %v3934
    %v4029 = vpop.permute.xlu0 %4028
    %4032 = vset.pattern.permute.xlu0 0
    %4033 = vperm.xlu0 %4032, %v3935
    %v4034 = vpop.permute.xlu0 %4033
    %4037 = vset.pattern.permute.xlu0 0
    %4038 = vperm.xlu0 %4037, %v3936
    %v4039 = vpop.permute.xlu0 %4038
    %4042 = vset.pattern.permute.xlu0 0
    %4043 = vperm.xlu0 %4042, %v3937
    %v4044 = vpop.permute.xlu0 %4043
    %4047 = vset.pattern.permute.xlu0 0
    %4048 = vperm.xlu0 %4047, %v3938
    %v4049 = vpop.permute.xlu0 %4048
    %4052 = vset.pattern.permute.xlu0 0
    %4053 = vperm.xlu0 %4052, %v3939
    %v4054 = vpop.permute.xlu0 %4053
    %4057 = vset.pattern.permute.xlu0 0
    %4058 = vperm.xlu0 %4057, %v3940
    %v4059 = vpop.permute.xlu0 %4058
    %4062 = vset.pattern.permute.xlu0 0
    %4063 = vperm.xlu0 %4062, %v3941
    %v4064 = vpop.permute.xlu0 %4063
    %4067 = vset.pattern.permute.xlu0 0
    %4068 = vperm.xlu0 %4067, %v3942
    %v4069 = vpop.permute.xlu0 %4068
    %4072 = vset.pattern.permute.xlu0 0
    %4073 = vperm.xlu0 %4072, %v3943
    %v4074 = vpop.permute.xlu0 %4073
    %4077 = vset.pattern.permute.xlu0 0
    %4078 = vperm.xlu0 %4077, %v3944
    %v4079 = vpop.permute.xlu0 %4078
    %4082 = vset.pattern.permute.xlu0 0
    %4083 = vperm.xlu0 %4082, %v3945
    %v4084 = vpop.permute.xlu0 %4083
    %4087 = vset.pattern.permute.xlu0 0
    %4088 = vperm.xlu0 %4087, %v3946
    %v4089 = vpop.permute.xlu0 %4088
    %4092 = vset.pattern.permute.xlu0 0
    %4093 = vperm.xlu0 %4092, %v3947
    %v4094 = vpop.permute.xlu0 %4093
    %4097 = vset.pattern.permute.xlu0 0
    %4098 = vperm.xlu0 %4097, %v3948
    %v4099 = vpop.permute.xlu0 %4098
    %4102 = vset.pattern.permute.xlu0 0
    %4103 = vperm.xlu0 %4102, %v3949
    %v4104 = vpop.permute.xlu0 %4103
    %4107 = vset.pattern.permute.xlu0 0
    %4108 = vperm.xlu0 %4107, %v3950
    %v4109 = vpop.permute.xlu0 %4108
    %4112 = vset.pattern.permute.xlu0 0
    %4113 = vperm.xlu0 %4112, %v3951
    %v4114 = vpop.permute.xlu0 %4113
    %4117 = vset.pattern.permute.xlu0 0
    %4118 = vperm.xlu0 %4117, %v3952
    %v4119 = vpop.permute.xlu0 %4118
    %4122 = vset.pattern.permute.xlu0 0
    %4123 = vperm.xlu0 %4122, %v3953
    %v4124 = vpop.permute.xlu0 %4123
    %4127 = vset.pattern.permute.xlu0 0
    %4128 = vperm.xlu0 %4127, %v3954
    %v4129 = vpop.permute.xlu0 %4128
    %4132 = vset.pattern.permute.xlu0 0
    %4133 = vperm.xlu0 %4132, %v3955
    %v4134 = vpop.permute.xlu0 %4133
    %4137 = vset.pattern.permute.xlu0 0
    %4138 = vperm.xlu0 %4137, %v3956
    %v4139 = vpop.permute.xlu0 %4138
    %4142 = vset.pattern.permute.xlu0 0
    %4143 = vperm.xlu0 %4142, %v3957
    %v4144 = vpop.permute.xlu0 %4143
    %4147 = vset.pattern.permute.xlu0 0
    %4148 = vperm.xlu0 %4147, %v3958
    %v4149 = vpop.permute.xlu0 %4148
    %4152 = vset.pattern.permute.xlu0 0
    %4153 = vperm.xlu0 %4152, %v3959
    %v4154 = vpop.permute.xlu0 %4153
    %4157 = vset.pattern.permute.xlu0 0
    %4158 = vperm.xlu0 %4157, %v3960
    %v4159 = vpop.permute.xlu0 %4158
    %4162 = vset.pattern.permute.xlu0 0
    %4163 = vperm.xlu0 %4162, %v3961
    %v4164 = vpop.permute.xlu0 %4163
    %4167 = vset.pattern.permute.xlu0 0
    %4168 = vperm.xlu0 %4167, %v3962
    %v4169 = vpop.permute.xlu0 %4168
    %4172 = vset.pattern.permute.xlu0 0
    %4173 = vperm.xlu0 %4172, %v3963
    %v4174 = vpop.permute.xlu0 %4173
    %4177 = vset.pattern.permute.xlu0 0
    %4178 = vperm.xlu0 %4177, %v3964
    %v4179 = vpop.permute.xlu0 %4178
    %4182 = vset.pattern.permute.xlu0 0
    %4183 = vperm.xlu0 %4182, %v3965
    %v4184 = vpop.permute.xlu0 %4183
    %4187 = vset.pattern.permute.xlu0 0
    %4188 = vperm.xlu0 %4187, %v3966
    %v4189 = vpop.permute.xlu0 %4188
    %4192 = vset.pattern.permute.xlu0 0
    %4193 = vperm.xlu0 %4192, %v3967
    %v4194 = vpop.permute.xlu0 %4193
    %4197 = vset.pattern.permute.xlu0 0
    %4198 = vperm.xlu0 %4197, %v3968
    %v4199 = vpop.permute.xlu0 %4198
    %4202 = vset.pattern.permute.xlu0 0
    %4203 = vperm.xlu0 %4202, %v3969
    %v4204 = vpop.permute.xlu0 %4203
    %4207 = vset.pattern.permute.xlu0 0
    %4208 = vperm.xlu0 %4207, %v3970
    %v4209 = vpop.permute.xlu0 %4208
    %4212 = vset.pattern.permute.xlu0 0
    %4213 = vperm.xlu0 %4212, %v3971
    %v4214 = vpop.permute.xlu0 %4213
    %4217 = vset.pattern.permute.xlu0 0
    %4218 = vperm.xlu0 %4217, %v3972
    %v4219 = vpop.permute.xlu0 %4218
    %4222 = vset.pattern.permute.xlu0 0
    %4223 = vperm.xlu0 %4222, %v3973
    %v4224 = vpop.permute.xlu0 %4223
    %4227 = vset.pattern.permute.xlu0 0
    %4228 = vperm.xlu0 %4227, %v3974
    %v4229 = vpop.permute.xlu0 %4228
    %4232 = vset.pattern.permute.xlu0 0
    %4233 = vperm.xlu0 %4232, %v3975
    %v4234 = vpop.permute.xlu0 %4233
    %4237 = vset.pattern.permute.xlu0 0
    %4238 = vperm.xlu0 %4237, %v3976
    %v4239 = vpop.permute.xlu0 %4238
    %4242 = vset.pattern.permute.xlu0 0
    %4243 = vperm.xlu0 %4242, %v3977
    %v4244 = vpop.permute.xlu0 %4243
    %4247 = vset.pattern.permute.xlu0 0
    %4248 = vperm.xlu0 %4247, %v3978
    %v4249 = vpop.permute.xlu0 %4248
    %4252 = vset.pattern.permute.xlu0 0
    %4253 = vperm.xlu0 %4252, %v3979
    %v4254 = vpop.permute.xlu0 %4253
    %4257 = vset.pattern.permute.xlu0 0
    %4258 = vperm.xlu0 %4257, %v3980
    %v4259 = vpop.permute.xlu0 %4258
    %4262 = vset.pattern.permute.xlu0 0
    %4263 = vperm.xlu0 %4262, %v3981
    %v4264 = vpop.permute.xlu0 %4263
    %4267 = vset.pattern.permute.xlu0 0
    %4268 = vperm.xlu0 %4267, %v3982
    %v4269 = vpop.permute.xlu0 %4268
    %4272 = vset.pattern.permute.xlu0 0
    %4273 = vperm.xlu0 %4272, %v3983
    %v4274 = vpop.permute.xlu0 %4273
    %4277 = vset.pattern.permute.xlu0 0
    %4278 = vperm.xlu0 %4277, %v3984
    %v4279 = vpop.permute.xlu0 %4278
    %4282 = vset.pattern.permute.xlu0 0
    %4283 = vperm.xlu0 %4282, %v3985
    %v4284 = vpop.permute.xlu0 %4283
    %4287 = vset.pattern.permute.xlu0 0
    %4288 = vperm.xlu0 %4287, %v3986
    %v4289 = vpop.permute.xlu0 %4288
    %4292 = vset.pattern.permute.xlu0 0
    %4293 = vperm.xlu0 %4292, %v3987
    %v4294 = vpop.permute.xlu0 %4293
    %4297 = vset.pattern.permute.xlu0 0
    %4298 = vperm.xlu0 %4297, %v3988
    %v4299 = vpop.permute.xlu0 %4298
    %4302 = vset.pattern.permute.xlu0 0
    %4303 = vperm.xlu0 %4302, %v3989
    %v4304 = vpop.permute.xlu0 %4303
    %4307 = vset.pattern.permute.xlu0 0
    %4308 = vperm.xlu0 %4307, %v3990
    %v4309 = vpop.permute.xlu0 %4308
    %v4311 = vmul.f32 %v46, %v3994
    %v4312 = vmul.f32 %v47, %v3999
    %v4313 = vmul.f32 %v48, %v4004
    %v4314 = vmul.f32 %v49, %v4009
    %v4315 = vmul.f32 %v50, %v4014
    %v4316 = vmul.f32 %v51, %v4019
    %v4317 = vmul.f32 %v52, %v4024
    %v4318 = vmul.f32 %v53, %v4029
    %v4319 = vmul.f32 %v54, %v4034
    %v4320 = vmul.f32 %v55, %v4039
    %v4321 = vmul.f32 %v56, %v4044
    %v4322 = vmul.f32 %v57, %v4049
    %v4323 = vmul.f32 %v58, %v4054
    %v4324 = vmul.f32 %v59, %v4059
    %v4325 = vmul.f32 %v60, %v4064
    %v4326 = vmul.f32 %v61, %v4069
    %v4327 = vmul.f32 %v62, %v4074
    %v4328 = vmul.f32 %v63, %v4079
    %v4329 = vmul.f32 %v64, %v4084
    %v4330 = vmul.f32 %v65, %v4089
    %v4331 = vmul.f32 %v66, %v4094
    %v4332 = vmul.f32 %v67, %v4099
    %v4333 = vmul.f32 %v68, %v4104
    %v4334 = vmul.f32 %v69, %v4109
    %v4335 = vmul.f32 %v70, %v4114
    %v4336 = vmul.f32 %v71, %v4119
    %v4337 = vmul.f32 %v72, %v4124
    %v4338 = vmul.f32 %v73, %v4129
    %v4339 = vmul.f32 %v74, %v4134
    %v4340 = vmul.f32 %v75, %v4139
    %v4341 = vmul.f32 %v76, %v4144
    %v4342 = vmul.f32 %v77, %v4149
    %v4343 = vmul.f32 %v78, %v4154
    %v4344 = vmul.f32 %v79, %v4159
    %v4345 = vmul.f32 %v80, %v4164
    %v4346 = vmul.f32 %v81, %v4169
    %v4347 = vmul.f32 %v82, %v4174
    %v4348 = vmul.f32 %v83, %v4179
    %v4349 = vmul.f32 %v84, %v4184
    %v4350 = vmul.f32 %v85, %v4189
    %v4351 = vmul.f32 %v86, %v4194
    %v4352 = vmul.f32 %v87, %v4199
    %v4353 = vmul.f32 %v88, %v4204
    %v4354 = vmul.f32 %v89, %v4209
    %v4355 = vmul.f32 %v90, %v4214
    %v4356 = vmul.f32 %v91, %v4219
    %v4357 = vmul.f32 %v92, %v4224
    %v4358 = vmul.f32 %v93, %v4229
    %v4359 = vmul.f32 %v94, %v4234
    %v4360 = vmul.f32 %v95, %v4239
    %v4361 = vmul.f32 %v96, %v4244
    %v4362 = vmul.f32 %v97, %v4249
    %v4363 = vmul.f32 %v98, %v4254
    %v4364 = vmul.f32 %v99, %v4259
    %v4365 = vmul.f32 %v100, %v4264
    %v4366 = vmul.f32 %v101, %v4269
    %v4367 = vmul.f32 %v102, %v4274
    %v4368 = vmul.f32 %v103, %v4279
    %v4369 = vmul.f32 %v104, %v4284
    %v4370 = vmul.f32 %v105, %v4289
    %v4371 = vmul.f32 %v106, %v4294
    %v4372 = vmul.f32 %v107, %v4299
    %v4373 = vmul.f32 %v44, %v4304
    %v4374 = vmul.f32 %v45, %v4309
    %v4375 = vpack.c.bf16 %v4312, %v4311
    %v4376 = vpack.c.bf16 %v4314, %v4313
    %v4377 = vpack.c.bf16 %v4316, %v4315
    %v4378 = vpack.c.bf16 %v4318, %v4317
    %v4379 = vpack.c.bf16 %v4320, %v4319
    %v4380 = vpack.c.bf16 %v4322, %v4321
    %v4381 = vpack.c.bf16 %v4324, %v4323
    %v4382 = vpack.c.bf16 %v4326, %v4325
    %v4383 = vpack.c.bf16 %v4328, %v4327
    %v4384 = vpack.c.bf16 %v4330, %v4329
    %v4385 = vpack.c.bf16 %v4332, %v4331
    %v4386 = vpack.c.bf16 %v4334, %v4333
    %v4387 = vpack.c.bf16 %v4336, %v4335
    %v4388 = vpack.c.bf16 %v4338, %v4337
    %v4389 = vpack.c.bf16 %v4340, %v4339
    %v4390 = vpack.c.bf16 %v4342, %v4341
    %v4391 = vpack.c.bf16 %v4344, %v4343
    %v4392 = vpack.c.bf16 %v4346, %v4345
    %v4393 = vpack.c.bf16 %v4348, %v4347
    %v4394 = vpack.c.bf16 %v4350, %v4349
    %v4395 = vpack.c.bf16 %v4352, %v4351
    %v4396 = vpack.c.bf16 %v4354, %v4353
    %v4397 = vpack.c.bf16 %v4356, %v4355
    %v4398 = vpack.c.bf16 %v4358, %v4357
    %v4399 = vpack.c.bf16 %v4360, %v4359
    %v4400 = vpack.c.bf16 %v4362, %v4361
    %v4401 = vpack.c.bf16 %v4364, %v4363
    %v4402 = vpack.c.bf16 %v4366, %v4365
    %v4403 = vpack.c.bf16 %v4368, %v4367
    %v4404 = vpack.c.bf16 %v4370, %v4369
    %v4405 = vpack.c.bf16 %v4372, %v4371
    %v4406 = vpack.c.bf16 %v4374, %v4373
    %s4407 = scalar_lea.vmem [#allocation2], 4096
    %v4408 = vld [vmem:[%s4407] sm:$0xff]
    %v4409 = vld [vmem:[%s4407 + $0x8] sm:$0xff]
    %v4410 = vld [vmem:[%s4407 + $0x10] sm:$0xff]
    %v4411 = vld [vmem:[%s4407 + $0x18] sm:$0xff]
    %v4412 = vld [vmem:[%s4407 + $0x20] sm:$0xff]
    %v4413 = vld [vmem:[%s4407 + $0x28] sm:$0xff]
    %v4414 = vld [vmem:[%s4407 + $0x30] sm:$0xff]
    %v4415 = vld [vmem:[%s4407 + $0x38] sm:$0xff]
    %v4416 = vld [vmem:[%s4407 + $0x40] sm:$0xff]
    %v4417 = vld [vmem:[%s4407 + $0x48] sm:$0xff]
    %v4418 = vld [vmem:[%s4407 + $0x50] sm:$0xff]
    %v4419 = vld [vmem:[%s4407 + $0x58] sm:$0xff]
    %v4420 = vld [vmem:[%s4407 + $0x60] sm:$0xff]
    %v4421 = vld [vmem:[%s4407 + $0x68] sm:$0xff]
    %v4422 = vld [vmem:[%s4407 + $0x70] sm:$0xff]
    %v4423 = vld [vmem:[%s4407 + $0x78] sm:$0xff]
    %v4424 = vld [vmem:[%s4407 + $0x80] sm:$0xff]
    %v4425 = vld [vmem:[%s4407 + $0x88] sm:$0xff]
    %v4426 = vld [vmem:[%s4407 + $0x90] sm:$0xff]
    %v4427 = vld [vmem:[%s4407 + $0x98] sm:$0xff]
    %v4428 = vld [vmem:[%s4407 + $0xa0] sm:$0xff]
    %v4429 = vld [vmem:[%s4407 + $0xa8] sm:$0xff]
    %v4430 = vld [vmem:[%s4407 + $0xb0] sm:$0xff]
    %v4431 = vld [vmem:[%s4407 + $0xb8] sm:$0xff]
    %v4432 = vld [vmem:[%s4407 + $0xc0] sm:$0xff]
    %v4433 = vld [vmem:[%s4407 + $0xc8] sm:$0xff]
    %v4434 = vld [vmem:[%s4407 + $0xd0] sm:$0xff]
    %v4435 = vld [vmem:[%s4407 + $0xd8] sm:$0xff]
    %v4436 = vld [vmem:[%s4407 + $0xe0] sm:$0xff]
    %v4437 = vld [vmem:[%s4407 + $0xe8] sm:$0xff]
    %v4438 = vld [vmem:[%s4407 + $0xf0] sm:$0xff]
    %v4439 = vld [vmem:[%s4407 + $0xf8] sm:$0xff]
    %v4440 = vld [vmem:[%s4407 + $0x100] sm:$0xff]
    %v4441 = vld [vmem:[%s4407 + $0x108] sm:$0xff]
    %v4442 = vld [vmem:[%s4407 + $0x110] sm:$0xff]
    %v4443 = vld [vmem:[%s4407 + $0x118] sm:$0xff]
    %v4444 = vld [vmem:[%s4407 + $0x120] sm:$0xff]
    %v4445 = vld [vmem:[%s4407 + $0x128] sm:$0xff]
    %v4446 = vld [vmem:[%s4407 + $0x130] sm:$0xff]
    %v4447 = vld [vmem:[%s4407 + $0x138] sm:$0xff]
    %v4448 = vld [vmem:[%s4407 + $0x140] sm:$0xff]
    %v4449 = vld [vmem:[%s4407 + $0x148] sm:$0xff]
    %v4450 = vld [vmem:[%s4407 + $0x150] sm:$0xff]
    %v4451 = vld [vmem:[%s4407 + $0x158] sm:$0xff]
    %v4452 = vld [vmem:[%s4407 + $0x160] sm:$0xff]
    %v4453 = vld [vmem:[%s4407 + $0x168] sm:$0xff]
    %v4454 = vld [vmem:[%s4407 + $0x170] sm:$0xff]
    %v4455 = vld [vmem:[%s4407 + $0x178] sm:$0xff]
    %v4456 = vld [vmem:[%s4407 + $0x180] sm:$0xff]
    %v4457 = vld [vmem:[%s4407 + $0x188] sm:$0xff]
    %v4458 = vld [vmem:[%s4407 + $0x190] sm:$0xff]
    %v4459 = vld [vmem:[%s4407 + $0x198] sm:$0xff]
    %v4460 = vld [vmem:[%s4407 + $0x1a0] sm:$0xff]
    %v4461 = vld [vmem:[%s4407 + $0x1a8] sm:$0xff]
    %v4462 = vld [vmem:[%s4407 + $0x1b0] sm:$0xff]
    %v4463 = vld [vmem:[%s4407 + $0x1b8] sm:$0xff]
    %v4464 = vld [vmem:[%s4407 + $0x1c0] sm:$0xff]
    %v4465 = vld [vmem:[%s4407 + $0x1c8] sm:$0xff]
    %v4466 = vld [vmem:[%s4407 + $0x1d0] sm:$0xff]
    %v4467 = vld [vmem:[%s4407 + $0x1d8] sm:$0xff]
    %v4468 = vld [vmem:[%s4407 + $0x1e0] sm:$0xff]
    %v4469 = vld [vmem:[%s4407 + $0x1e8] sm:$0xff]
    %v4470 = vld [vmem:[%s4407 + $0x1f0] sm:$0xff]
    %v4471 = vld [vmem:[%s4407 + $0x1f8] sm:$0xff]
    %4473 = vset.pattern.permute.xlu0 0
    %4474 = vperm.xlu0 %4473, %v4408
    %v4475 = vpop.permute.xlu0 %4474
    %4478 = vset.pattern.permute.xlu0 0
    %4479 = vperm.xlu0 %4478, %v4409
    %v4480 = vpop.permute.xlu0 %4479
    %4483 = vset.pattern.permute.xlu0 0
    %4484 = vperm.xlu0 %4483, %v4410
    %v4485 = vpop.permute.xlu0 %4484
    %4488 = vset.pattern.permute.xlu0 0
    %4489 = vperm.xlu0 %4488, %v4411
    %v4490 = vpop.permute.xlu0 %4489
    %4493 = vset.pattern.permute.xlu0 0
    %4494 = vperm.xlu0 %4493, %v4412
    %v4495 = vpop.permute.xlu0 %4494
    %4498 = vset.pattern.permute.xlu0 0
    %4499 = vperm.xlu0 %4498, %v4413
    %v4500 = vpop.permute.xlu0 %4499
    %4503 = vset.pattern.permute.xlu0 0
    %4504 = vperm.xlu0 %4503, %v4414
    %v4505 = vpop.permute.xlu0 %4504
    %4508 = vset.pattern.permute.xlu0 0
    %4509 = vperm.xlu0 %4508, %v4415
    %v4510 = vpop.permute.xlu0 %4509
    %4513 = vset.pattern.permute.xlu0 0
    %4514 = vperm.xlu0 %4513, %v4416
    %v4515 = vpop.permute.xlu0 %4514
    %4518 = vset.pattern.permute.xlu0 0
    %4519 = vperm.xlu0 %4518, %v4417
    %v4520 = vpop.permute.xlu0 %4519
    %4523 = vset.pattern.permute.xlu0 0
    %4524 = vperm.xlu0 %4523, %v4418
    %v4525 = vpop.permute.xlu0 %4524
    %4528 = vset.pattern.permute.xlu0 0
    %4529 = vperm.xlu0 %4528, %v4419
    %v4530 = vpop.permute.xlu0 %4529
    %4533 = vset.pattern.permute.xlu0 0
    %4534 = vperm.xlu0 %4533, %v4420
    %v4535 = vpop.permute.xlu0 %4534
    %4538 = vset.pattern.permute.xlu0 0
    %4539 = vperm.xlu0 %4538, %v4421
    %v4540 = vpop.permute.xlu0 %4539
    %4543 = vset.pattern.permute.xlu0 0
    %4544 = vperm.xlu0 %4543, %v4422
    %v4545 = vpop.permute.xlu0 %4544
    %4548 = vset.pattern.permute.xlu0 0
    %4549 = vperm.xlu0 %4548, %v4423
    %v4550 = vpop.permute.xlu0 %4549
    %4553 = vset.pattern.permute.xlu0 0
    %4554 = vperm.xlu0 %4553, %v4424
    %v4555 = vpop.permute.xlu0 %4554
    %4558 = vset.pattern.permute.xlu0 0
    %4559 = vperm.xlu0 %4558, %v4425
    %v4560 = vpop.permute.xlu0 %4559
    %4563 = vset.pattern.permute.xlu0 0
    %4564 = vperm.xlu0 %4563, %v4426
    %v4565 = vpop.permute.xlu0 %4564
    %4568 = vset.pattern.permute.xlu0 0
    %4569 = vperm.xlu0 %4568, %v4427
    %v4570 = vpop.permute.xlu0 %4569
    %4573 = vset.pattern.permute.xlu0 0
    %4574 = vperm.xlu0 %4573, %v4428
    %v4575 = vpop.permute.xlu0 %4574
    %4578 = vset.pattern.permute.xlu0 0
    %4579 = vperm.xlu0 %4578, %v4429
    %v4580 = vpop.permute.xlu0 %4579
    %4583 = vset.pattern.permute.xlu0 0
    %4584 = vperm.xlu0 %4583, %v4430
    %v4585 = vpop.permute.xlu0 %4584
    %4588 = vset.pattern.permute.xlu0 0
    %4589 = vperm.xlu0 %4588, %v4431
    %v4590 = vpop.permute.xlu0 %4589
    %4593 = vset.pattern.permute.xlu0 0
    %4594 = vperm.xlu0 %4593, %v4432
    %v4595 = vpop.permute.xlu0 %4594
    %4598 = vset.pattern.permute.xlu0 0
    %4599 = vperm.xlu0 %4598, %v4433
    %v4600 = vpop.permute.xlu0 %4599
    %4603 = vset.pattern.permute.xlu0 0
    %4604 = vperm.xlu0 %4603, %v4434
    %v4605 = vpop.permute.xlu0 %4604
    %4608 = vset.pattern.permute.xlu0 0
    %4609 = vperm.xlu0 %4608, %v4435
    %v4610 = vpop.permute.xlu0 %4609
    %4613 = vset.pattern.permute.xlu0 0
    %4614 = vperm.xlu0 %4613, %v4436
    %v4615 = vpop.permute.xlu0 %4614
    %4618 = vset.pattern.permute.xlu0 0
    %4619 = vperm.xlu0 %4618, %v4437
    %v4620 = vpop.permute.xlu0 %4619
    %4623 = vset.pattern.permute.xlu0 0
    %4624 = vperm.xlu0 %4623, %v4438
    %v4625 = vpop.permute.xlu0 %4624
    %4628 = vset.pattern.permute.xlu0 0
    %4629 = vperm.xlu0 %4628, %v4439
    %v4630 = vpop.permute.xlu0 %4629
    %4633 = vset.pattern.permute.xlu0 0
    %4634 = vperm.xlu0 %4633, %v4440
    %v4635 = vpop.permute.xlu0 %4634
    %4638 = vset.pattern.permute.xlu0 0
    %4639 = vperm.xlu0 %4638, %v4441
    %v4640 = vpop.permute.xlu0 %4639
    %4643 = vset.pattern.permute.xlu0 0
    %4644 = vperm.xlu0 %4643, %v4442
    %v4645 = vpop.permute.xlu0 %4644
    %4648 = vset.pattern.permute.xlu0 0
    %4649 = vperm.xlu0 %4648, %v4443
    %v4650 = vpop.permute.xlu0 %4649
    %4653 = vset.pattern.permute.xlu0 0
    %4654 = vperm.xlu0 %4653, %v4444
    %v4655 = vpop.permute.xlu0 %4654
    %4658 = vset.pattern.permute.xlu0 0
    %4659 = vperm.xlu0 %4658, %v4445
    %v4660 = vpop.permute.xlu0 %4659
    %4663 = vset.pattern.permute.xlu0 0
    %4664 = vperm.xlu0 %4663, %v4446
    %v4665 = vpop.permute.xlu0 %4664
    %4668 = vset.pattern.permute.xlu0 0
    %4669 = vperm.xlu0 %4668, %v4447
    %v4670 = vpop.permute.xlu0 %4669
    %4673 = vset.pattern.permute.xlu0 0
    %4674 = vperm.xlu0 %4673, %v4448
    %v4675 = vpop.permute.xlu0 %4674
    %4678 = vset.pattern.permute.xlu0 0
    %4679 = vperm.xlu0 %4678, %v4449
    %v4680 = vpop.permute.xlu0 %4679
    %4683 = vset.pattern.permute.xlu0 0
    %4684 = vperm.xlu0 %4683, %v4450
    %v4685 = vpop.permute.xlu0 %4684
    %4688 = vset.pattern.permute.xlu0 0
    %4689 = vperm.xlu0 %4688, %v4451
    %v4690 = vpop.permute.xlu0 %4689
    %4693 = vset.pattern.permute.xlu0 0
    %4694 = vperm.xlu0 %4693, %v4452
    %v4695 = vpop.permute.xlu0 %4694
    %4698 = vset.pattern.permute.xlu0 0
    %4699 = vperm.xlu0 %4698, %v4453
    %v4700 = vpop.permute.xlu0 %4699
    %4703 = vset.pattern.permute.xlu0 0
    %4704 = vperm.xlu0 %4703, %v4454
    %v4705 = vpop.permute.xlu0 %4704
    %4708 = vset.pattern.permute.xlu0 0
    %4709 = vperm.xlu0 %4708, %v4455
    %v4710 = vpop.permute.xlu0 %4709
    %4713 = vset.pattern.permute.xlu0 0
    %4714 = vperm.xlu0 %4713, %v4456
    %v4715 = vpop.permute.xlu0 %4714
    %4718 = vset.pattern.permute.xlu0 0
    %4719 = vperm.xlu0 %4718, %v4457
    %v4720 = vpop.permute.xlu0 %4719
    %4723 = vset.pattern.permute.xlu0 0
    %4724 = vperm.xlu0 %4723, %v4458
    %v4725 = vpop.permute.xlu0 %4724
    %4728 = vset.pattern.permute.xlu0 0
    %4729 = vperm.xlu0 %4728, %v4459
    %v4730 = vpop.permute.xlu0 %4729
    %4733 = vset.pattern.permute.xlu0 0
    %4734 = vperm.xlu0 %4733, %v4460
    %v4735 = vpop.permute.xlu0 %4734
    %4738 = vset.pattern.permute.xlu0 0
    %4739 = vperm.xlu0 %4738, %v4461
    %v4740 = vpop.permute.xlu0 %4739
    %4743 = vset.pattern.permute.xlu0 0
    %4744 = vperm.xlu0 %4743, %v4462
    %v4745 = vpop.permute.xlu0 %4744
    %4748 = vset.pattern.permute.xlu0 0
    %4749 = vperm.xlu0 %4748, %v4463
    %v4750 = vpop.permute.xlu0 %4749
    %4753 = vset.pattern.permute.xlu0 0
    %4754 = vperm.xlu0 %4753, %v4464
    %v4755 = vpop.permute.xlu0 %4754
    %4758 = vset.pattern.permute.xlu0 0
    %4759 = vperm.xlu0 %4758, %v4465
    %v4760 = vpop.permute.xlu0 %4759
    %4763 = vset.pattern.permute.xlu0 0
    %4764 = vperm.xlu0 %4763, %v4466
    %v4765 = vpop.permute.xlu0 %4764
    %4768 = vset.pattern.permute.xlu0 0
    %4769 = vperm.xlu0 %4768, %v4467
    %v4770 = vpop.permute.xlu0 %4769
    %4773 = vset.pattern.permute.xlu0 0
    %4774 = vperm.xlu0 %4773, %v4468
    %v4775 = vpop.permute.xlu0 %4774
    %4778 = vset.pattern.permute.xlu0 0
    %4779 = vperm.xlu0 %4778, %v4469
    %v4780 = vpop.permute.xlu0 %4779
    %4783 = vset.pattern.permute.xlu0 0
    %4784 = vperm.xlu0 %4783, %v4470
    %v4785 = vpop.permute.xlu0 %4784
    %4788 = vset.pattern.permute.xlu0 0
    %4789 = vperm.xlu0 %4788, %v4471
    %v4790 = vpop.permute.xlu0 %4789
    %v4792 = vmul.f32 %v1339, %v4475
    %v4793 = vmul.f32 %v1341, %v4480
    %v4794 = vmul.f32 %v1343, %v4485
    %v4795 = vmul.f32 %v1345, %v4490
    %v4796 = vmul.f32 %v1347, %v4495
    %v4797 = vmul.f32 %v1349, %v4500
    %v4798 = vmul.f32 %v1351, %v4505
    %v4799 = vmul.f32 %v1353, %v4510
    %v4800 = vmul.f32 %v1355, %v4515
    %v4801 = vmul.f32 %v1357, %v4520
    %v4802 = vmul.f32 %v1359, %v4525
    %v4803 = vmul.f32 %v1361, %v4530
    %v4804 = vmul.f32 %v1363, %v4535
    %v4805 = vmul.f32 %v1365, %v4540
    %v4806 = vmul.f32 %v1367, %v4545
    %v4807 = vmul.f32 %v1369, %v4550
    %v4808 = vmul.f32 %v1371, %v4555
    %v4809 = vmul.f32 %v1373, %v4560
    %v4810 = vmul.f32 %v1375, %v4565
    %v4811 = vmul.f32 %v1377, %v4570
    %v4812 = vmul.f32 %v1379, %v4575
    %v4813 = vmul.f32 %v1381, %v4580
    %v4814 = vmul.f32 %v1383, %v4585
    %v4815 = vmul.f32 %v1385, %v4590
    %v4816 = vmul.f32 %v1387, %v4595
    %v4817 = vmul.f32 %v1389, %v4600
    %v4818 = vmul.f32 %v1391, %v4605
    %v4819 = vmul.f32 %v1393, %v4610
    %v4820 = vmul.f32 %v1395, %v4615
    %v4821 = vmul.f32 %v1397, %v4620
    %v4822 = vmul.f32 %v1399, %v4625
    %v4823 = vmul.f32 %v1401, %v4630
    %v4824 = vmul.f32 %v1403, %v4635
    %v4825 = vmul.f32 %v1405, %v4640
    %v4826 = vmul.f32 %v1407, %v4645
    %v4827 = vmul.f32 %v1409, %v4650
    %v4828 = vmul.f32 %v1411, %v4655
    %v4829 = vmul.f32 %v1413, %v4660
    %v4830 = vmul.f32 %v1415, %v4665
    %v4831 = vmul.f32 %v1417, %v4670
    %v4832 = vmul.f32 %v1419, %v4675
    %v4833 = vmul.f32 %v1421, %v4680
    %v4834 = vmul.f32 %v1423, %v4685
    %v4835 = vmul.f32 %v1425, %v4690
    %v4836 = vmul.f32 %v1427, %v4695
    %v4837 = vmul.f32 %v1429, %v4700
    %v4838 = vmul.f32 %v1431, %v4705
    %v4839 = vmul.f32 %v1433, %v4710
    %v4840 = vmul.f32 %v1435, %v4715
    %v4841 = vmul.f32 %v1437, %v4720
    %v4842 = vmul.f32 %v1439, %v4725
    %v4843 = vmul.f32 %v1441, %v4730
    %v4844 = vmul.f32 %v1443, %v4735
    %v4845 = vmul.f32 %v1445, %v4740
    %v4846 = vmul.f32 %v1447, %v4745
    %v4847 = vmul.f32 %v1449, %v4750
    %v4848 = vmul.f32 %v1451, %v4755
    %v4849 = vmul.f32 %v1453, %v4760
    %v4850 = vmul.f32 %v1455, %v4765
    %v4851 = vmul.f32 %v1456, %v4770
    %v4852 = vmul.f32 %v1330, %v4775
    %v4853 = vmul.f32 %v1520, %v4780
    %v4854 = vmul.f32 %v1335, %v4785
    %v4855 = vmul.f32 %v1337, %v4790
    %v4856 = vpack.c.bf16 %v4793, %v4792
    %v4857 = vpack.c.bf16 %v4795, %v4794
    %v4858 = vpack.c.bf16 %v4797, %v4796
    %v4859 = vpack.c.bf16 %v4799, %v4798
    %v4860 = vpack.c.bf16 %v4801, %v4800
    %v4861 = vpack.c.bf16 %v4803, %v4802
    %v4862 = vpack.c.bf16 %v4805, %v4804
    %v4863 = vpack.c.bf16 %v4807, %v4806
    %v4864 = vpack.c.bf16 %v4809, %v4808
    %v4865 = vpack.c.bf16 %v4811, %v4810
    %v4866 = vpack.c.bf16 %v4813, %v4812
    %v4867 = vpack.c.bf16 %v4815, %v4814
    %v4868 = vpack.c.bf16 %v4817, %v4816
    %v4869 = vpack.c.bf16 %v4819, %v4818
    %v4870 = vpack.c.bf16 %v4821, %v4820
    %v4871 = vpack.c.bf16 %v4823, %v4822
    %v4872 = vpack.c.bf16 %v4825, %v4824
    %v4873 = vpack.c.bf16 %v4827, %v4826
    %v4874 = vpack.c.bf16 %v4829, %v4828
    %v4875 = vpack.c.bf16 %v4831, %v4830
    %v4876 = vpack.c.bf16 %v4833, %v4832
    %v4877 = vpack.c.bf16 %v4835, %v4834
    %v4878 = vpack.c.bf16 %v4837, %v4836
    %v4879 = vpack.c.bf16 %v4839, %v4838
    %v4880 = vpack.c.bf16 %v4841, %v4840
    %v4881 = vpack.c.bf16 %v4843, %v4842
    %v4882 = vpack.c.bf16 %v4845, %v4844
    %v4883 = vpack.c.bf16 %v4847, %v4846
    %v4884 = vpack.c.bf16 %v4849, %v4848
    %v4885 = vpack.c.bf16 %v4851, %v4850
    %v4886 = vpack.c.bf16 %v4853, %v4852
    %v4887 = vpack.c.bf16 %v4855, %v4854
    %v4888 = vld [vmem:[%s2] sm:$0xf]
    %v4889 = vld [vmem:[%s2 + $0x4] sm:$0xf]
    %v4890 = vld [vmem:[%s2 + $0x8] sm:$0xf]
    %v4891 = vld [vmem:[%s2 + $0xc] sm:$0xf]
    %v4892 = vld [vmem:[%s2 + $0x10] sm:$0xf]
    %v4893 = vld [vmem:[%s2 + $0x14] sm:$0xf]
    %v4894 = vld [vmem:[%s2 + $0x18] sm:$0xf]
    %v4895 = vld [vmem:[%s2 + $0x1c] sm:$0xf]
    %v4896 = vld [vmem:[%s2 + $0x20] sm:$0xf]
    %v4897 = vld [vmem:[%s2 + $0x24] sm:$0xf]
    %v4898 = vld [vmem:[%s2 + $0x28] sm:$0xf]
    %v4899 = vld [vmem:[%s2 + $0x2c] sm:$0xf]
    %v4900 = vld [vmem:[%s2 + $0x30] sm:$0xf]
    %v4901 = vld [vmem:[%s2 + $0x34] sm:$0xf]
    %v4902 = vld [vmem:[%s2 + $0x38] sm:$0xf]
    %v4903 = vld [vmem:[%s2 + $0x3c] sm:$0xf]
    %v4904 = vld [vmem:[%s2 + $0x40] sm:$0xf]
    %v4905 = vld [vmem:[%s2 + $0x44] sm:$0xf]
    %v4906 = vld [vmem:[%s2 + $0x48] sm:$0xf]
    %v4907 = vld [vmem:[%s2 + $0x4c] sm:$0xf]
    %v4908 = vld [vmem:[%s2 + $0x50] sm:$0xf]
    %v4909 = vld [vmem:[%s2 + $0x54] sm:$0xf]
    %v4910 = vld [vmem:[%s2 + $0x58] sm:$0xf]
    %v4911 = vld [vmem:[%s2 + $0x5c] sm:$0xf]
    %v4912 = vld [vmem:[%s2 + $0x60] sm:$0xf]
    %v4913 = vld [vmem:[%s2 + $0x64] sm:$0xf]
    %v4914 = vld [vmem:[%s2 + $0x68] sm:$0xf]
    %v4915 = vld [vmem:[%s2 + $0x6c] sm:$0xf]
    %v4916 = vld [vmem:[%s2 + $0x70] sm:$0xf]
    %v4917 = vld [vmem:[%s2 + $0x74] sm:$0xf]
    %v4918 = vld [vmem:[%s2 + $0x78] sm:$0xf]
    %v4919 = vld [vmem:[%s2 + $0x7c] sm:$0xf]
    %v4920 = vld [vmem:[%s2 + $0x80] sm:$0xf]
    %v4921 = vld [vmem:[%s2 + $0x84] sm:$0xf]
    %v4922 = vld [vmem:[%s2 + $0x88] sm:$0xf]
    %v4923 = vld [vmem:[%s2 + $0x8c] sm:$0xf]
    %v4924 = vld [vmem:[%s2 + $0x90] sm:$0xf]
    %v4925 = vld [vmem:[%s2 + $0x94] sm:$0xf]
    %v4926 = vld [vmem:[%s2 + $0x98] sm:$0xf]
    %v4927 = vld [vmem:[%s2 + $0x9c] sm:$0xf]
    %v4928 = vld [vmem:[%s2 + $0xa0] sm:$0xf]
    %v4929 = vld [vmem:[%s2 + $0xa4] sm:$0xf]
    %v4930 = vld [vmem:[%s2 + $0xa8] sm:$0xf]
    %v4931 = vld [vmem:[%s2 + $0xac] sm:$0xf]
    %v4932 = vld [vmem:[%s2 + $0xb0] sm:$0xf]
    %v4933 = vld [vmem:[%s2 + $0xb4] sm:$0xf]
    %v4934 = vld [vmem:[%s2 + $0xb8] sm:$0xf]
    %v4935 = vld [vmem:[%s2 + $0xbc] sm:$0xf]
    %v4936 = vld [vmem:[%s2 + $0xc0] sm:$0xf]
    %v4937 = vld [vmem:[%s2 + $0xc4] sm:$0xf]
    %v4938 = vld [vmem:[%s2 + $0xc8] sm:$0xf]
    %v4939 = vld [vmem:[%s2 + $0xcc] sm:$0xf]
    %v4940 = vld [vmem:[%s2 + $0xd0] sm:$0xf]
    %v4941 = vld [vmem:[%s2 + $0xd4] sm:$0xf]
    %v4942 = vld [vmem:[%s2 + $0xd8] sm:$0xf]
    %v4943 = vld [vmem:[%s2 + $0xdc] sm:$0xf]
    %v4944 = vld [vmem:[%s2 + $0xe0] sm:$0xf]
    %v4945 = vld [vmem:[%s2 + $0xe4] sm:$0xf]
    %v4946 = vld [vmem:[%s2 + $0xe8] sm:$0xf]
    %v4947 = vld [vmem:[%s2 + $0xec] sm:$0xf]
    %v4948 = vld [vmem:[%s2 + $0xf0] sm:$0xf]
    %v4949 = vld [vmem:[%s2 + $0xf4] sm:$0xf]
    %v4950 = vld [vmem:[%s2 + $0xf8] sm:$0xf]
    %v4951 = vld [vmem:[%s2 + $0xfc] sm:$0xf]
    %v4952 = vld [vmem:[%s2 + $0x100] sm:$0xf]
    %v4953 = vld [vmem:[%s2 + $0x104] sm:$0xf]
    %v4954 = vld [vmem:[%s2 + $0x108] sm:$0xf]
    %v4955 = vld [vmem:[%s2 + $0x10c] sm:$0xf]
    %v4956 = vld [vmem:[%s2 + $0x110] sm:$0xf]
    %v4957 = vld [vmem:[%s2 + $0x114] sm:$0xf]
    %v4958 = vld [vmem:[%s2 + $0x118] sm:$0xf]
    %v4959 = vld [vmem:[%s2 + $0x11c] sm:$0xf]
    %v4960 = vld [vmem:[%s2 + $0x120] sm:$0xf]
    %v4961 = vld [vmem:[%s2 + $0x124] sm:$0xf]
    %v4962 = vld [vmem:[%s2 + $0x128] sm:$0xf]
    %v4963 = vld [vmem:[%s2 + $0x12c] sm:$0xf]
    %v4964 = vld [vmem:[%s2 + $0x130] sm:$0xf]
    %v4965 = vld [vmem:[%s2 + $0x134] sm:$0xf]
    %v4966 = vld [vmem:[%s2 + $0x138] sm:$0xf]
    %v4967 = vld [vmem:[%s2 + $0x13c] sm:$0xf]
    %v4968 = vld [vmem:[%s2 + $0x140] sm:$0xf]
    %v4969 = vld [vmem:[%s2 + $0x144] sm:$0xf]
    %v4970 = vld [vmem:[%s2 + $0x148] sm:$0xf]
    %v4971 = vld [vmem:[%s2 + $0x14c] sm:$0xf]
    %v4972 = vld [vmem:[%s2 + $0x150] sm:$0xf]
    %v4973 = vld [vmem:[%s2 + $0x154] sm:$0xf]
    %v4974 = vld [vmem:[%s2 + $0x158] sm:$0xf]
    %v4975 = vld [vmem:[%s2 + $0x15c] sm:$0xf]
    %v4976 = vld [vmem:[%s2 + $0x160] sm:$0xf]
    %v4977 = vld [vmem:[%s2 + $0x164] sm:$0xf]
    %v4978 = vld [vmem:[%s2 + $0x168] sm:$0xf]
    %v4979 = vld [vmem:[%s2 + $0x16c] sm:$0xf]
    %v4980 = vld [vmem:[%s2 + $0x170] sm:$0xf]
    %v4981 = vld [vmem:[%s2 + $0x174] sm:$0xf]
    %v4982 = vld [vmem:[%s2 + $0x178] sm:$0xf]
    %v4983 = vld [vmem:[%s2 + $0x17c] sm:$0xf]
    %v4984 = vld [vmem:[%s2 + $0x180] sm:$0xf]
    %v4985 = vld [vmem:[%s2 + $0x184] sm:$0xf]
    %v4986 = vld [vmem:[%s2 + $0x188] sm:$0xf]
    %v4987 = vld [vmem:[%s2 + $0x18c] sm:$0xf]
    %v4988 = vld [vmem:[%s2 + $0x190] sm:$0xf]
    %v4989 = vld [vmem:[%s2 + $0x194] sm:$0xf]
    %v4990 = vld [vmem:[%s2 + $0x198] sm:$0xf]
    %v4991 = vld [vmem:[%s2 + $0x19c] sm:$0xf]
    %v4992 = vld [vmem:[%s2 + $0x1a0] sm:$0xf]
    %v4993 = vld [vmem:[%s2 + $0x1a4] sm:$0xf]
    %v4994 = vld [vmem:[%s2 + $0x1a8] sm:$0xf]
    %v4995 = vld [vmem:[%s2 + $0x1ac] sm:$0xf]
    %v4996 = vld [vmem:[%s2 + $0x1b0] sm:$0xf]
    %v4997 = vld [vmem:[%s2 + $0x1b4] sm:$0xf]
    %v4998 = vld [vmem:[%s2 + $0x1b8] sm:$0xf]
    %v4999 = vld [vmem:[%s2 + $0x1bc] sm:$0xf]
    %v5000 = vld [vmem:[%s2 + $0x1c0] sm:$0xf]
    %v5001 = vld [vmem:[%s2 + $0x1c4] sm:$0xf]
    %v5002 = vld [vmem:[%s2 + $0x1c8] sm:$0xf]
    %v5003 = vld [vmem:[%s2 + $0x1cc] sm:$0xf]
    %v5004 = vld [vmem:[%s2 + $0x1d0] sm:$0xf]
    %v5005 = vld [vmem:[%s2 + $0x1d4] sm:$0xf]
    %v5006 = vld [vmem:[%s2 + $0x1d8] sm:$0xf]
    %v5007 = vld [vmem:[%s2 + $0x1dc] sm:$0xf]
    %v5008 = vld [vmem:[%s2 + $0x1e0] sm:$0xf]
    %v5009 = vld [vmem:[%s2 + $0x1e4] sm:$0xf]
    %v5010 = vld [vmem:[%s2 + $0x1e8] sm:$0xf]
    %v5011 = vld [vmem:[%s2 + $0x1ec] sm:$0xf]
    %v5012 = vld [vmem:[%s2 + $0x1f0] sm:$0xf]
    %v5013 = vld [vmem:[%s2 + $0x1f4] sm:$0xf]
    %v5014 = vld [vmem:[%s2 + $0x1f8] sm:$0xf]
    %v5015 = vld [vmem:[%s2 + $0x1fc] sm:$0xf]
    %v5016 = vld [vmem:[%s2 + $0x200] sm:$0xf]
    %v5017 = vld [vmem:[%s2 + $0x204] sm:$0xf]
    %v5018 = vld [vmem:[%s2 + $0x208] sm:$0xf]
    %v5019 = vld [vmem:[%s2 + $0x20c] sm:$0xf]
    %v5020 = vld [vmem:[%s2 + $0x210] sm:$0xf]
    %v5021 = vld [vmem:[%s2 + $0x214] sm:$0xf]
    %v5022 = vld [vmem:[%s2 + $0x218] sm:$0xf]
    %v5023 = vld [vmem:[%s2 + $0x21c] sm:$0xf]
    %v5024 = vld [vmem:[%s2 + $0x220] sm:$0xf]
    %v5025 = vld [vmem:[%s2 + $0x224] sm:$0xf]
    %v5026 = vld [vmem:[%s2 + $0x228] sm:$0xf]
    %v5027 = vld [vmem:[%s2 + $0x22c] sm:$0xf]
    %v5028 = vld [vmem:[%s2 + $0x230] sm:$0xf]
    %v5029 = vld [vmem:[%s2 + $0x234] sm:$0xf]
    %v5030 = vld [vmem:[%s2 + $0x238] sm:$0xf]
    %v5031 = vld [vmem:[%s2 + $0x23c] sm:$0xf]
    %v5176 = vunpack.c.l.b16 %v4888
    %v5177 = vunpack.c.l.b16 %v4889
    %v5178 = vunpack.c.l.b16 %v4890
    %v5179 = vunpack.c.l.b16 %v4891
    %v5180 = vunpack.c.l.b16 %v4892
    %v5181 = vunpack.c.l.b16 %v4893
    %v5182 = vunpack.c.l.b16 %v4894
    %v5183 = vunpack.c.l.b16 %v4895
    %v5184 = vunpack.c.l.b16 %v4896
    %v5185 = vunpack.c.l.b16 %v4897
    %v5186 = vunpack.c.l.b16 %v4898
    %v5187 = vunpack.c.l.b16 %v4899
    %v5188 = vunpack.c.l.b16 %v4900
    %v5189 = vunpack.c.l.b16 %v4901
    %v5190 = vunpack.c.l.b16 %v4902
    %v5191 = vunpack.c.l.b16 %v4903
    %v5192 = vunpack.c.l.b16 %v4904
    %v5193 = vunpack.c.l.b16 %v4905
    %v5194 = vunpack.c.l.b16 %v4906
    %v5195 = vunpack.c.l.b16 %v4907
    %v5196 = vunpack.c.l.b16 %v4908
    %v5197 = vunpack.c.l.b16 %v4909
    %v5198 = vunpack.c.l.b16 %v4910
    %v5199 = vunpack.c.l.b16 %v4911
    %v5200 = vunpack.c.l.b16 %v4912
    %v5201 = vunpack.c.l.b16 %v4913
    %v5202 = vunpack.c.l.b16 %v4914
    %v5203 = vunpack.c.l.b16 %v4915
    %v5204 = vunpack.c.l.b16 %v4916
    %v5205 = vunpack.c.l.b16 %v4917
    %v5206 = vunpack.c.l.b16 %v4918
    %v5207 = vunpack.c.l.b16 %v4919
    %v5208 = vunpack.c.l.b16 %v4920
    %v5209 = vunpack.c.l.b16 %v4921
    %v5210 = vunpack.c.l.b16 %v4922
    %v5211 = vunpack.c.l.b16 %v4923
    %v5212 = vunpack.c.l.b16 %v4924
    %v5213 = vunpack.c.l.b16 %v4925
    %v5214 = vunpack.c.l.b16 %v4926
    %v5215 = vunpack.c.l.b16 %v4927
    %v5216 = vunpack.c.l.b16 %v4928
    %v5217 = vunpack.c.l.b16 %v4929
    %v5218 = vunpack.c.l.b16 %v4930
    %v5219 = vunpack.c.l.b16 %v4931
    %v5220 = vunpack.c.l.b16 %v4932
    %v5221 = vunpack.c.l.b16 %v4933
    %v5222 = vunpack.c.l.b16 %v4934
    %v5223 = vunpack.c.l.b16 %v4935
    %v5224 = vunpack.c.l.b16 %v4936
    %v5225 = vunpack.c.l.b16 %v4937
    %v5226 = vunpack.c.l.b16 %v4938
    %v5227 = vunpack.c.l.b16 %v4939
    %v5228 = vunpack.c.l.b16 %v4940
    %v5229 = vunpack.c.l.b16 %v4941
    %v5230 = vunpack.c.l.b16 %v4942
    %v5231 = vunpack.c.l.b16 %v4943
    %v5232 = vunpack.c.l.b16 %v4944
    %v5233 = vunpack.c.l.b16 %v4945
    %v5234 = vunpack.c.l.b16 %v4946
    %v5235 = vunpack.c.l.b16 %v4947
    %v5236 = vunpack.c.l.b16 %v4948
    %v5237 = vunpack.c.l.b16 %v4949
    %v5238 = vunpack.c.l.b16 %v4950
    %v5239 = vunpack.c.l.b16 %v4951
    %v5240 = vunpack.c.l.b16 %v4952
    %v5241 = vunpack.c.l.b16 %v4953
    %v5242 = vunpack.c.l.b16 %v4954
    %v5243 = vunpack.c.l.b16 %v4955
    %v5244 = vunpack.c.l.b16 %v4956
    %v5245 = vunpack.c.l.b16 %v4957
    %v5246 = vunpack.c.l.b16 %v4958
    %v5247 = vunpack.c.l.b16 %v4959
    %v5248 = vunpack.c.l.b16 %v4960
    %v5249 = vunpack.c.l.b16 %v4961
    %v5250 = vunpack.c.l.b16 %v4962
    %v5251 = vunpack.c.l.b16 %v4963
    %v5252 = vunpack.c.l.b16 %v4964
    %v5253 = vunpack.c.l.b16 %v4965
    %v5254 = vunpack.c.l.b16 %v4966
    %v5255 = vunpack.c.l.b16 %v4967
    %v5256 = vunpack.c.l.b16 %v4968
    %v5257 = vunpack.c.l.b16 %v4969
    %v5258 = vunpack.c.l.b16 %v4970
    %v5259 = vunpack.c.l.b16 %v4971
    %v5260 = vunpack.c.l.b16 %v4972
    %v5261 = vunpack.c.l.b16 %v4973
    %v5262 = vunpack.c.l.b16 %v4974
    %v5263 = vunpack.c.l.b16 %v4975
    %v5264 = vunpack.c.l.b16 %v4976
    %v5265 = vunpack.c.l.b16 %v4977
    %v5266 = vunpack.c.l.b16 %v4978
    %v5267 = vunpack.c.l.b16 %v4979
    %v5268 = vunpack.c.l.b16 %v4980
    %v5269 = vunpack.c.l.b16 %v4981
    %v5270 = vunpack.c.l.b16 %v4982
    %v5271 = vunpack.c.l.b16 %v4983
    %v5272 = vunpack.c.l.b16 %v4984
    %v5273 = vunpack.c.l.b16 %v4985
    %v5274 = vunpack.c.l.b16 %v4986
    %v5275 = vunpack.c.l.b16 %v4987
    %v5276 = vunpack.c.l.b16 %v4988
    %v5277 = vunpack.c.l.b16 %v4989
    %v5278 = vunpack.c.l.b16 %v4990
    %v5279 = vunpack.c.l.b16 %v4991
    %v5280 = vunpack.c.l.b16 %v4992
    %v5281 = vunpack.c.l.b16 %v4993
    %v5282 = vunpack.c.l.b16 %v4994
    %v5283 = vunpack.c.l.b16 %v4995
    %v5284 = vunpack.c.l.b16 %v4996
    %v5285 = vunpack.c.l.b16 %v4997
    %v5286 = vunpack.c.l.b16 %v4998
    %v5287 = vunpack.c.l.b16 %v4999
    %v5288 = vunpack.c.l.b16 %v5000
    %v5289 = vunpack.c.l.b16 %v5001
    %v5290 = vunpack.c.l.b16 %v5002
    %v5291 = vunpack.c.l.b16 %v5003
    %v5292 = vunpack.c.l.b16 %v5004
    %v5293 = vunpack.c.l.b16 %v5005
    %v5294 = vunpack.c.l.b16 %v5006
    %v5295 = vunpack.c.l.b16 %v5007
    %v5296 = vunpack.c.l.b16 %v5008
    %v5297 = vunpack.c.l.b16 %v5009
    %v5298 = vunpack.c.l.b16 %v5010
    %v5299 = vunpack.c.l.b16 %v5011
    %v5300 = vunpack.c.l.b16 %v5012
    %v5301 = vunpack.c.l.b16 %v5013
    %v5302 = vunpack.c.l.b16 %v5014
    %v5303 = vunpack.c.l.b16 %v5015
    %v5304 = vunpack.c.l.b16 %v5016
    %v5305 = vunpack.c.l.b16 %v5017
    %v5306 = vunpack.c.l.b16 %v5018
    %v5307 = vunpack.c.l.b16 %v5019
    %v5308 = vunpack.c.l.b16 %v5020
    %v5309 = vunpack.c.l.b16 %v5021
    %v5310 = vunpack.c.l.b16 %v5022
    %v5311 = vunpack.c.l.b16 %v5023
    %v5312 = vunpack.c.l.b16 %v5024
    %v5313 = vunpack.c.l.b16 %v5025
    %v5314 = vunpack.c.l.b16 %v5026
    %v5315 = vunpack.c.l.b16 %v5027
    %v5316 = vunpack.c.l.b16 %v5028
    %v5317 = vunpack.c.l.b16 %v5029
    %v5318 = vunpack.c.l.b16 %v5030
    %v5319 = vunpack.c.l.b16 %v5031
    %v5320 = vpack.c.b16 %v5177, %v5176
    %v5321 = vpack.c.b16 %v5179, %v5178
    %v5322 = vpack.c.b16 %v5181, %v5180
    %v5323 = vpack.c.b16 %v5183, %v5182
    %v5324 = vpack.c.b16 %v5185, %v5184
    %v5325 = vpack.c.b16 %v5187, %v5186
    %v5326 = vpack.c.b16 %v5189, %v5188
    %v5327 = vpack.c.b16 %v5191, %v5190
    %v5328 = vpack.c.b16 %v5193, %v5192
    %v5329 = vpack.c.b16 %v5195, %v5194
    %v5330 = vpack.c.b16 %v5197, %v5196
    %v5331 = vpack.c.b16 %v5199, %v5198
    %v5332 = vpack.c.b16 %v5201, %v5200
    %v5333 = vpack.c.b16 %v5203, %v5202
    %v5334 = vpack.c.b16 %v5205, %v5204
    %v5335 = vpack.c.b16 %v5207, %v5206
    %v5336 = vpack.c.b16 %v5209, %v5208
    %v5337 = vpack.c.b16 %v5211, %v5210
    %v5338 = vpack.c.b16 %v5213, %v5212
    %v5339 = vpack.c.b16 %v5215, %v5214
    %v5340 = vpack.c.b16 %v5217, %v5216
    %v5341 = vpack.c.b16 %v5219, %v5218
    %v5342 = vpack.c.b16 %v5221, %v5220
    %v5343 = vpack.c.b16 %v5223, %v5222
    %v5344 = vpack.c.b16 %v5225, %v5224
    %v5345 = vpack.c.b16 %v5227, %v5226
    %v5346 = vpack.c.b16 %v5229, %v5228
    %v5347 = vpack.c.b16 %v5231, %v5230
    %v5348 = vpack.c.b16 %v5233, %v5232
    %v5349 = vpack.c.b16 %v5235, %v5234
    %v5350 = vpack.c.b16 %v5237, %v5236
    %v5351 = vpack.c.b16 %v5239, %v5238
    %v5352 = vpack.c.b16 %v5241, %v5240
    %v5353 = vpack.c.b16 %v5243, %v5242
    %v5354 = vpack.c.b16 %v5245, %v5244
    %v5355 = vpack.c.b16 %v5247, %v5246
    %v5356 = vpack.c.b16 %v5249, %v5248
    %v5357 = vpack.c.b16 %v5251, %v5250
    %v5358 = vpack.c.b16 %v5253, %v5252
    %v5359 = vpack.c.b16 %v5255, %v5254
    %v5360 = vpack.c.b16 %v5257, %v5256
    %v5361 = vpack.c.b16 %v5259, %v5258
    %v5362 = vpack.c.b16 %v5261, %v5260
    %v5363 = vpack.c.b16 %v5263, %v5262
    %v5364 = vpack.c.b16 %v5265, %v5264
    %v5365 = vpack.c.b16 %v5267, %v5266
    %v5366 = vpack.c.b16 %v5269, %v5268
    %v5367 = vpack.c.b16 %v5271, %v5270
    %v5368 = vpack.c.b16 %v5273, %v5272
    %v5369 = vpack.c.b16 %v5275, %v5274
    %v5370 = vpack.c.b16 %v5277, %v5276
    %v5371 = vpack.c.b16 %v5279, %v5278
    %v5372 = vpack.c.b16 %v5281, %v5280
    %v5373 = vpack.c.b16 %v5283, %v5282
    %v5374 = vpack.c.b16 %v5285, %v5284
    %v5375 = vpack.c.b16 %v5287, %v5286
    %v5376 = vpack.c.b16 %v5289, %v5288
    %v5377 = vpack.c.b16 %v5291, %v5290
    %v5378 = vpack.c.b16 %v5293, %v5292
    %v5379 = vpack.c.b16 %v5295, %v5294
    %v5380 = vpack.c.b16 %v5297, %v5296
    %v5381 = vpack.c.b16 %v5299, %v5298
    %v5382 = vpack.c.b16 %v5301, %v5300
    %v5383 = vpack.c.b16 %v5303, %v5302
    %v5384 = vpack.c.b16 %v5305, %v5304
    %v5385 = vpack.c.b16 %v5307, %v5306
    %v5386 = vpack.c.b16 %v5309, %v5308
    %v5387 = vpack.c.b16 %v5311, %v5310
    %v5388 = vpack.c.b16 %v5313, %v5312
    %v5389 = vpack.c.b16 %v5315, %v5314
    %v5390 = vpack.c.b16 %v5317, %v5316
    %v5391 = vpack.c.b16 %v5319, %v5318
    %5464 = vmatprep.subr.bf16.mxu0 0
    %5465 = vmatpush1.bf16.msra.mxu0 %v5320
    %5466 = vmatprep.subr.bf16.mxu0 0
    %5467 = vmatpush1.bf16.msra.mxu0 %v5321
    %5468 = vmatprep.subr.bf16.mxu0 0
    %5469 = vmatpush1.bf16.msra.mxu0 %v5322
    %5470 = vmatprep.subr.bf16.mxu0 0
    %5471 = vmatpush1.bf16.msra.mxu0 %v5323
    %5472 = vmatprep.subr.bf16.mxu0 0
    %5473 = vmatpush1.bf16.msra.mxu0 %v5324
    %5474 = vmatprep.subr.bf16.mxu0 0
    %5475 = vmatpush1.bf16.msra.mxu0 %v5325
    %5476 = vmatprep.subr.bf16.mxu0 0
    %5477 = vmatpush1.bf16.msra.mxu0 %v5326
    %5478 = vmatprep.subr.bf16.mxu0 0
    %5479 = vmatpush1.bf16.msra.mxu0 %v5327
    %5480 = vmatprep.subr.bf16.mxu0 0
    %5481 = vmatpush1.bf16.msra.mxu0 %v5328
    %5482 = vmatprep.subr.bf16.mxu0 0
    %5483 = vmatpush1.bf16.msra.mxu0 %v5329
    %5484 = vmatprep.subr.bf16.mxu0 0
    %5485 = vmatpush1.bf16.msra.mxu0 %v5330
    %5486 = vmatprep.subr.bf16.mxu0 0
    %5487 = vmatpush1.bf16.msra.mxu0 %v5331
    %5488 = vmatprep.subr.bf16.mxu0 0
    %5489 = vmatpush1.bf16.msra.mxu0 %v5332
    %5490 = vmatprep.subr.bf16.mxu0 0
    %5491 = vmatpush1.bf16.msra.mxu0 %v5333
    %5492 = vmatprep.subr.bf16.mxu0 0
    %5493 = vmatpush1.bf16.msra.mxu0 %v5334
    %5494 = vmatprep.subr.bf16.mxu0 0
    %5495 = vmatpush1.bf16.msra.mxu0 %v5335
    %5496 = vmatprep.mubr.bf16.mxu0 %v1295
    %5497 = vmatmul.mubr.bf16.gmra.mrb[0].mxu0 %v814
    %v5498 = vpop.f32.mrb[0].mxu0
    %v5499 = vadd.f32 0.0, %v5498
    %v5500 = vpop.f32.mrb[0].mxu0
    %v5501 = vpop.f32.mrb[0].mxu0
    %v5502 = vadd.f32 0.0, %v5501
    %v5503 = vpop.f32.mrb[0].mxu0
    %5504 = vmatprep.mubr.bf16.mxu0 %v1296
    %5505 = vmatmul.mubr.bf16.gmra.mrb[0].mxu0 %v815
    %v5506 = vpop.f32.mrb[0].mxu0
    %v5507 = vadd.f32 0.0, %v5506
    %v5508 = vpop.f32.mrb[0].mxu0
    %v5509 = vpop.f32.mrb[0].mxu0
    %v5510 = vadd.f32 0.0, %v5509
    %v5511 = vpop.f32.mrb[0].mxu0
    %5512 = vmatprep.mubr.bf16.mxu0 %v1297
    %5513 = vmatmul.mubr.bf16.gmra.mrb[0].mxu0 %v816
    %v5514 = vpop.f32.mrb[0].mxu0
    %v5515 = vadd.f32 0.0, %v5514
    %v5516 = vpop.f32.mrb[0].mxu0
    %v5517 = vpop.f32.mrb[0].mxu0
    %v5518 = vadd.f32 0.0, %v5517
    %v5519 = vpop.f32.mrb[0].mxu0
    %5520 = vmatprep.mubr.bf16.mxu0 %v1298
    %5521 = vmatmul.mubr.bf16.gmra.mrb[0].mxu0 %v817
    %v5522 = vpop.f32.mrb[0].mxu0
    %v5523 = vadd.f32 0.0, %v5522
    %v5524 = vpop.f32.mrb[0].mxu0
    %v5525 = vpop.f32.mrb[0].mxu0
    %v5526 = vadd.f32 0.0, %v5525
    %v5527 = vpop.f32.mrb[0].mxu0
    %5528 = vmatprep.mubr.bf16.mxu0 %v1299
    %5529 = vmatmul.mubr.bf16.gmra.mrb[0].mxu0 %v818
    %v5530 = vpop.f32.mrb[0].mxu0
    %v5531 = vadd.f32 0.0, %v5530
    %v5532 = vpop.f32.mrb[0].mxu0
    %v5533 = vpop.f32.mrb[0].mxu0
    %v5534 = vadd.f32 0.0, %v5533
    %v5535 = vpop.f32.mrb[0].mxu0
    %5536 = vmatprep.mubr.bf16.mxu0 %v1300
    %5537 = vmatmul.mubr.bf16.gmra.mrb[0].mxu0 %v819
    %v5538 = vpop.f32.mrb[0].mxu0
    %v5539 = vadd.f32 0.0, %v5538
    %v5540 = vpop.f32.mrb[0].mxu0
    %v5541 = vpop.f32.mrb[0].mxu0
    %v5542 = vadd.f32 0.0, %v5541
    %v5543 = vpop.f32.mrb[0].mxu0
    %5544 = vmatprep.mubr.bf16.mxu0 %v1301
    %5545 = vmatmul.mubr.bf16.gmra.mrb[0].mxu0 %v820
    %v5546 = vpop.f32.mrb[0].mxu0
    %v5547 = vadd.f32 0.0, %v5546
    %v5548 = vpop.f32.mrb[0].mxu0
    %v5549 = vpop.f32.mrb[0].mxu0
    %v5550 = vadd.f32 0.0, %v5549
    %v5551 = vpop.f32.mrb[0].mxu0
    %5552 = vmatprep.mubr.bf16.mxu0 %v1302
    %5553 = vmatmul.mubr.bf16.gmra.mrb[0].mxu0 %v821
    %v5554 = vpop.f32.mrb[0].mxu0
    %v5555 = vadd.f32 0.0, %v5554
    %v5556 = vpop.f32.mrb[0].mxu0
    %v5557 = vpop.f32.mrb[0].mxu0
    %v5558 = vadd.f32 0.0, %v5557
    %v5559 = vpop.f32.mrb[0].mxu0
    %5560 = vmatprep.mubr.bf16.mxu0 %v1303
    %5561 = vmatmul.mubr.bf16.gmra.mrb[0].mxu0 %v822
    %v5562 = vpop.f32.mrb[0].mxu0
    %v5563 = vadd.f32 0.0, %v5562
    %v5564 = vpop.f32.mrb[0].mxu0
    %v5565 = vpop.f32.mrb[0].mxu0
    %v5566 = vadd.f32 0.0, %v5565
    %v5567 = vpop.f32.mrb[0].mxu0
    %5568 = vmatprep.mubr.bf16.mxu0 %v1304
    %5569 = vmatmul.mubr.bf16.gmra.mrb[0].mxu0 %v823
    %v5570 = vpop.f32.mrb[0].mxu0
    %v5571 = vadd.f32 0.0, %v5570
    %v5572 = vpop.f32.mrb[0].mxu0
    %v5573 = vpop.f32.mrb[0].mxu0
    %v5574 = vadd.f32 0.0, %v5573
    %v5575 = vpop.f32.mrb[0].mxu0
    %5576 = vmatprep.mubr.bf16.mxu0 %v1305
    %5577 = vmatmul.mubr.bf16.gmra.mrb[0].mxu0 %v824
    %v5578 = vpop.f32.mrb[0].mxu0
    %v5579 = vadd.f32 0.0, %v5578
    %v5580 = vpop.f32.mrb[0].mxu0
    %v5581 = vpop.f32.mrb[0].mxu0
    %v5582 = vadd.f32 0.0, %v5581
    %v5583 = vpop.f32.mrb[0].mxu0
    %5584 = vmatprep.mubr.bf16.mxu0 %v1306
    %5585 = vmatmul.mubr.bf16.gmra.mrb[0].mxu0 %v825
    %v5586 = vpop.f32.mrb[0].mxu0
    %v5587 = vadd.f32 0.0, %v5586
    %v5588 = vpop.f32.mrb[0].mxu0
    %v5589 = vpop.f32.mrb[0].mxu0
    %v5590 = vadd.f32 0.0, %v5589
    %v5591 = vpop.f32.mrb[0].mxu0
    %5592 = vmatprep.mubr.bf16.mxu0 %v1307
    %5593 = vmatmul.mubr.bf16.gmra.mrb[0].mxu0 %v826
    %v5594 = vpop.f32.mrb[0].mxu0
    %v5595 = vadd.f32 0.0, %v5594
    %v5596 = vpop.f32.mrb[0].mxu0
    %v5597 = vpop.f32.mrb[0].mxu0
    %v5598 = vadd.f32 0.0, %v5597
    %v5599 = vpop.f32.mrb[0].mxu0
    %5600 = vmatprep.mubr.bf16.mxu0 %v1308
    %5601 = vmatmul.mubr.bf16.gmra.mrb[0].mxu0 %v827
    %v5602 = vpop.f32.mrb[0].mxu0
    %v5603 = vadd.f32 0.0, %v5602
    %v5604 = vpop.f32.mrb[0].mxu0
    %v5605 = vpop.f32.mrb[0].mxu0
    %v5606 = vadd.f32 0.0, %v5605
    %v5607 = vpop.f32.mrb[0].mxu0
    %5608 = vmatprep.mubr.bf16.mxu0 %v1309
    %5609 = vmatmul.mubr.bf16.gmra.mrb[0].mxu0 %v828
    %v5610 = vpop.f32.mrb[0].mxu0
    %v5611 = vadd.f32 0.0, %v5610
    %v5612 = vpop.f32.mrb[0].mxu0
    %v5613 = vpop.f32.mrb[0].mxu0
    %v5614 = vadd.f32 0.0, %v5613
    %v5615 = vpop.f32.mrb[0].mxu0
    %5616 = vmatprep.mubr.bf16.mxu0 %v1310
    %5617 = vmatmul.mubr.bf16.gmra.mrb[0].mxu0 %v829
    %v5618 = vpop.f32.mrb[0].mxu0
    %v5619 = vadd.f32 0.0, %v5618
    %v5620 = vpop.f32.mrb[0].mxu0
    %v5621 = vpop.f32.mrb[0].mxu0
    %v5622 = vadd.f32 0.0, %v5621
    %v5623 = vpop.f32.mrb[0].mxu0
    %5624 = vmatprep.mubr.bf16.mxu0 %v1311
    %5625 = vmatmul.mubr.bf16.gmra.mrb[0].mxu0 %v830
    %v5626 = vpop.f32.mrb[0].mxu0
    %v5627 = vadd.f32 0.0, %v5626
    %v5628 = vpop.f32.mrb[0].mxu0
    %v5629 = vpop.f32.mrb[0].mxu0
    %v5630 = vadd.f32 0.0, %v5629
    %v5631 = vpop.f32.mrb[0].mxu0
    %5632 = vmatprep.mubr.bf16.mxu0 %v1312
    %5633 = vmatmul.mubr.bf16.gmra.mrb[0].mxu0 %v831
    %v5634 = vpop.f32.mrb[0].mxu0
    %v5635 = vadd.f32 0.0, %v5634
    %v5636 = vpop.f32.mrb[0].mxu0
    %v5637 = vpop.f32.mrb[0].mxu0
    %v5638 = vadd.f32 0.0, %v5637
    %v5639 = vpop.f32.mrb[0].mxu0
    %5640 = vmatprep.mubr.bf16.mxu0 %v1313
    %5641 = vmatmul.mubr.bf16.gmra.mrb[0].mxu0 %v832
    %v5642 = vpop.f32.mrb[0].mxu0
    %v5643 = vadd.f32 0.0, %v5642
    %v5644 = vpop.f32.mrb[0].mxu0
    %v5645 = vpop.f32.mrb[0].mxu0
    %v5646 = vadd.f32 0.0, %v5645
    %v5647 = vpop.f32.mrb[0].mxu0
    %5648 = vmatprep.mubr.bf16.mxu0 %v1314
    %5649 = vmatmul.mubr.bf16.gmra.mrb[0].mxu0 %v833
    %v5650 = vpop.f32.mrb[0].mxu0
    %v5651 = vadd.f32 0.0, %v5650
    %v5652 = vpop.f32.mrb[0].mxu0
    %v5653 = vpop.f32.mrb[0].mxu0
    %v5654 = vadd.f32 0.0, %v5653
    %v5655 = vpop.f32.mrb[0].mxu0
    %5656 = vmatprep.mubr.bf16.mxu0 %v1315
    %5657 = vmatmul.mubr.bf16.gmra.mrb[0].mxu0 %v834
    %v5658 = vpop.f32.mrb[0].mxu0
    %v5659 = vadd.f32 0.0, %v5658
    %v5660 = vpop.f32.mrb[0].mxu0
    %v5661 = vpop.f32.mrb[0].mxu0
    %v5662 = vadd.f32 0.0, %v5661
    %v5663 = vpop.f32.mrb[0].mxu0
    %5664 = vmatprep.mubr.bf16.mxu0 %v1316
    %5665 = vmatmul.mubr.bf16.gmra.mrb[0].mxu0 %v835
    %v5666 = vpop.f32.mrb[0].mxu0
    %v5667 = vadd.f32 0.0, %v5666
    %v5668 = vpop.f32.mrb[0].mxu0
    %v5669 = vpop.f32.mrb[0].mxu0
    %v5670 = vadd.f32 0.0, %v5669
    %v5671 = vpop.f32.mrb[0].mxu0
    %5672 = vmatprep.mubr.bf16.mxu0 %v1317
    %5673 = vmatmul.mubr.bf16.gmra.mrb[0].mxu0 %v836
    %v5674 = vpop.f32.mrb[0].mxu0
    %v5675 = vadd.f32 0.0, %v5674
    %v5676 = vpop.f32.mrb[0].mxu0
    %v5677 = vpop.f32.mrb[0].mxu0
    %v5678 = vadd.f32 0.0, %v5677
    %v5679 = vpop.f32.mrb[0].mxu0
    %5680 = vmatprep.mubr.bf16.mxu0 %v1318
    %5681 = vmatmul.mubr.bf16.gmra.mrb[0].mxu0 %v837
    %v5682 = vpop.f32.mrb[0].mxu0
    %v5683 = vadd.f32 0.0, %v5682
    %v5684 = vpop.f32.mrb[0].mxu0
    %v5685 = vpop.f32.mrb[0].mxu0
    %v5686 = vadd.f32 0.0, %v5685
    %v5687 = vpop.f32.mrb[0].mxu0
    %5688 = vmatprep.mubr.bf16.mxu0 %v1319
    %5689 = vmatmul.mubr.bf16.gmra.mrb[0].mxu0 %v838
    %v5690 = vpop.f32.mrb[0].mxu0
    %v5691 = vadd.f32 0.0, %v5690
    %v5692 = vpop.f32.mrb[0].mxu0
    %v5693 = vpop.f32.mrb[0].mxu0
    %v5694 = vadd.f32 0.0, %v5693
    %v5695 = vpop.f32.mrb[0].mxu0
    %5696 = vmatprep.mubr.bf16.mxu0 %v1320
    %5697 = vmatmul.mubr.bf16.gmra.mrb[0].mxu0 %v839
    %v5698 = vpop.f32.mrb[0].mxu0
    %v5699 = vadd.f32 0.0, %v5698
    %v5700 = vpop.f32.mrb[0].mxu0
    %v5701 = vpop.f32.mrb[0].mxu0
    %v5702 = vadd.f32 0.0, %v5701
    %v5703 = vpop.f32.mrb[0].mxu0
    %5704 = vmatprep.mubr.bf16.mxu0 %v1321
    %5705 = vmatmul.mubr.bf16.gmra.mrb[0].mxu0 %v840
    %v5706 = vpop.f32.mrb[0].mxu0
    %v5707 = vadd.f32 0.0, %v5706
    %v5708 = vpop.f32.mrb[0].mxu0
    %v5709 = vpop.f32.mrb[0].mxu0
    %v5710 = vadd.f32 0.0, %v5709
    %v5711 = vpop.f32.mrb[0].mxu0
    %5712 = vmatprep.mubr.bf16.mxu0 %v1322
    %5713 = vmatmul.mubr.bf16.gmra.mrb[0].mxu0 %v841
    %v5714 = vpop.f32.mrb[0].mxu0
    %v5715 = vadd.f32 0.0, %v5714
    %v5716 = vpop.f32.mrb[0].mxu0
    %v5717 = vpop.f32.mrb[0].mxu0
    %v5718 = vadd.f32 0.0, %v5717
    %v5719 = vpop.f32.mrb[0].mxu0
    %5720 = vmatprep.mubr.bf16.mxu0 %v1323
    %5721 = vmatmul.mubr.bf16.gmra.mrb[0].mxu0 %v842
    %v5722 = vpop.f32.mrb[0].mxu0
    %v5723 = vadd.f32 0.0, %v5722
    %v5724 = vpop.f32.mrb[0].mxu0
    %v5725 = vpop.f32.mrb[0].mxu0
    %v5726 = vadd.f32 0.0, %v5725
    %v5727 = vpop.f32.mrb[0].mxu0
    %5728 = vmatprep.mubr.bf16.mxu0 %v1324
    %5729 = vmatmul.mubr.bf16.gmra.mrb[0].mxu0 %v843
    %v5730 = vpop.f32.mrb[0].mxu0
    %v5731 = vadd.f32 0.0, %v5730
    %v5732 = vpop.f32.mrb[0].mxu0
    %v5733 = vpop.f32.mrb[0].mxu0
    %v5734 = vadd.f32 0.0, %v5733
    %v5735 = vpop.f32.mrb[0].mxu0
    %5736 = vmatprep.mubr.bf16.mxu0 %v1325
    %5737 = vmatmul.mubr.bf16.gmra.mrb[0].mxu0 %v844
    %v5738 = vpop.f32.mrb[0].mxu0
    %v5739 = vadd.f32 0.0, %v5738
    %v5740 = vpop.f32.mrb[0].mxu0
    %v5741 = vpop.f32.mrb[0].mxu0
    %v5742 = vadd.f32 0.0, %v5741
    %v5743 = vpop.f32.mrb[0].mxu0
    %5744 = vmatprep.mubr.bf16.mxu0 %v1326
    %5745 = vmatmul.mubr.bf16.gmra.mrb[0].mxu0 %v845
    %v5746 = vpop.f32.mrb[0].mxu0
    %v5747 = vadd.f32 0.0, %v5746
    %v5748 = vpop.f32.mrb[0].mxu0
    %v5749 = vpop.f32.mrb[0].mxu0
    %v5750 = vadd.f32 0.0, %v5749
    %v5751 = vpop.f32.mrb[0].mxu0
    %5752 = vdwg.mxu0
    %5753 = vmatprep.subr.bf16.mxu0 0
    %5754 = vmatpush1.bf16.msra.mxu0 %v5336
    %5755 = vmatprep.subr.bf16.mxu0 0
    %5756 = vmatpush1.bf16.msra.mxu0 %v5337
    %5757 = vmatprep.subr.bf16.mxu0 0
    %5758 = vmatpush1.bf16.msra.mxu0 %v5338
    %5759 = vmatprep.subr.bf16.mxu0 0
    %5760 = vmatpush1.bf16.msra.mxu0 %v5339
    %5761 = vmatprep.subr.bf16.mxu0 0
    %5762 = vmatpush1.bf16.msra.mxu0 %v5340
    %5763 = vmatprep.subr.bf16.mxu0 0
    %5764 = vmatpush1.bf16.msra.mxu0 %v5341
    %5765 = vmatprep.subr.bf16.mxu0 0
    %5766 = vmatpush1.bf16.msra.mxu0 %v5342
    %5767 = vmatprep.subr.bf16.mxu0 0
    %5768 = vmatpush1.bf16.msra.mxu0 %v5343
    %5769 = vmatprep.subr.bf16.mxu0 0
    %5770 = vmatpush1.bf16.msra.mxu0 %v5344
    %5771 = vmatprep.subr.bf16.mxu0 0
    %5772 = vmatpush1.bf16.msra.mxu0 %v5345
    %5773 = vmatprep.subr.bf16.mxu0 0
    %5774 = vmatpush1.bf16.msra.mxu0 %v5346
    %5775 = vmatprep.subr.bf16.mxu0 0
    %5776 = vmatpush1.bf16.msra.mxu0 %v5347
    %5777 = vmatprep.subr.bf16.mxu0 0
    %5778 = vmatpush1.bf16.msra.mxu0 %v5348
    %5779 = vmatprep.subr.bf16.mxu0 0
    %5780 = vmatpush1.bf16.msra.mxu0 %v5349
    %5781 = vmatprep.subr.bf16.mxu0 0
    %5782 = vmatpush1.bf16.msra.mxu0 %v5350
    %5783 = vmatprep.subr.bf16.mxu0 0
    %5784 = vmatpush1.bf16.msra.mxu0 %v5351
    %5785 = vmatprep.mubr.bf16.mxu0 %v2451
    %5786 = vmatmul.mubr.bf16.gmra.mrb[0].mxu0 %v1970
    %v5787 = vpop.f32.mrb[0].mxu0
    %v5788 = vadd.f32 %v5499, %v5787
    %v5789 = vpop.f32.mrb[0].mxu0
    %v5790 = vpop.f32.mrb[0].mxu0
    %v5791 = vadd.f32 %v5502, %v5790
    %v5792 = vpop.f32.mrb[0].mxu0
    %5793 = vmatprep.mubr.bf16.mxu0 %v2452
    %5794 = vmatmul.mubr.bf16.gmra.mrb[0].mxu0 %v1971
    %v5795 = vpop.f32.mrb[0].mxu0
    %v5796 = vadd.f32 %v5507, %v5795
    %v5797 = vpop.f32.mrb[0].mxu0
    %v5798 = vpop.f32.mrb[0].mxu0
    %v5799 = vadd.f32 %v5510, %v5798
    %v5800 = vpop.f32.mrb[0].mxu0
    %5801 = vmatprep.mubr.bf16.mxu0 %v2453
    %5802 = vmatmul.mubr.bf16.gmra.mrb[0].mxu0 %v1972
    %v5803 = vpop.f32.mrb[0].mxu0
    %v5804 = vadd.f32 %v5515, %v5803
    %v5805 = vpop.f32.mrb[0].mxu0
    %v5806 = vpop.f32.mrb[0].mxu0
    %v5807 = vadd.f32 %v5518, %v5806
    %v5808 = vpop.f32.mrb[0].mxu0
    %5809 = vmatprep.mubr.bf16.mxu0 %v2454
    %5810 = vmatmul.mubr.bf16.gmra.mrb[0].mxu0 %v1973
    %v5811 = vpop.f32.mrb[0].mxu0
    %v5812 = vadd.f32 %v5523, %v5811
    %v5813 = vpop.f32.mrb[0].mxu0
    %v5814 = vpop.f32.mrb[0].mxu0
    %v5815 = vadd.f32 %v5526, %v5814
    %v5816 = vpop.f32.mrb[0].mxu0
    %5817 = vmatprep.mubr.bf16.mxu0 %v2455
    %5818 = vmatmul.mubr.bf16.gmra.mrb[0].mxu0 %v1974
    %v5819 = vpop.f32.mrb[0].mxu0
    %v5820 = vadd.f32 %v5531, %v5819
    %v5821 = vpop.f32.mrb[0].mxu0
    %v5822 = vpop.f32.mrb[0].mxu0
    %v5823 = vadd.f32 %v5534, %v5822
    %v5824 = vpop.f32.mrb[0].mxu0
    %5825 = vmatprep.mubr.bf16.mxu0 %v2456
    %5826 = vmatmul.mubr.bf16.gmra.mrb[0].mxu0 %v1975
    %v5827 = vpop.f32.mrb[0].mxu0
    %v5828 = vadd.f32 %v5539, %v5827
    %v5829 = vpop.f32.mrb[0].mxu0
    %v5830 = vpop.f32.mrb[0].mxu0
    %v5831 = vadd.f32 %v5542, %v5830
    %v5832 = vpop.f32.mrb[0].mxu0
    %5833 = vmatprep.mubr.bf16.mxu0 %v2457
    %5834 = vmatmul.mubr.bf16.gmra.mrb[0].mxu0 %v1976
    %v5835 = vpop.f32.mrb[0].mxu0
    %v5836 = vadd.f32 %v5547, %v5835
    %v5837 = vpop.f32.mrb[0].mxu0
    %v5838 = vpop.f32.mrb[0].mxu0
    %v5839 = vadd.f32 %v5550, %v5838
    %v5840 = vpop.f32.mrb[0].mxu0
    %5841 = vmatprep.mubr.bf16.mxu0 %v2458
    %5842 = vmatmul.mubr.bf16.gmra.mrb[0].mxu0 %v1977
    %v5843 = vpop.f32.mrb[0].mxu0
    %v5844 = vadd.f32 %v5555, %v5843
    %v5845 = vpop.f32.mrb[0].mxu0
    %v5846 = vpop.f32.mrb[0].mxu0
    %v5847 = vadd.f32 %v5558, %v5846
    %v5848 = vpop.f32.mrb[0].mxu0
    %5849 = vmatprep.mubr.bf16.mxu0 %v2459
    %5850 = vmatmul.mubr.bf16.gmra.mrb[0].mxu0 %v1978
    %v5851 = vpop.f32.mrb[0].mxu0
    %v5852 = vadd.f32 %v5563, %v5851
    %v5853 = vpop.f32.mrb[0].mxu0
    %v5854 = vpop.f32.mrb[0].mxu0
    %v5855 = vadd.f32 %v5566, %v5854
    %v5856 = vpop.f32.mrb[0].mxu0
    %5857 = vmatprep.mubr.bf16.mxu0 %v2460
    %5858 = vmatmul.mubr.bf16.gmra.mrb[0].mxu0 %v1979
    %v5859 = vpop.f32.mrb[0].mxu0
    %v5860 = vadd.f32 %v5571, %v5859
    %v5861 = vpop.f32.mrb[0].mxu0
    %v5862 = vpop.f32.mrb[0].mxu0
    %v5863 = vadd.f32 %v5574, %v5862
    %v5864 = vpop.f32.mrb[0].mxu0
    %5865 = vmatprep.mubr.bf16.mxu0 %v2461
    %5866 = vmatmul.mubr.bf16.gmra.mrb[0].mxu0 %v1980
    %v5867 = vpop.f32.mrb[0].mxu0
    %v5868 = vadd.f32 %v5579, %v5867
    %v5869 = vpop.f32.mrb[0].mxu0
    %v5870 = vpop.f32.mrb[0].mxu0
    %v5871 = vadd.f32 %v5582, %v5870
    %v5872 = vpop.f32.mrb[0].mxu0
    %5873 = vmatprep.mubr.bf16.mxu0 %v2462
    %5874 = vmatmul.mubr.bf16.gmra.mrb[0].mxu0 %v1981
    %v5875 = vpop.f32.mrb[0].mxu0
    %v5876 = vadd.f32 %v5587, %v5875
    %v5877 = vpop.f32.mrb[0].mxu0
    %v5878 = vpop.f32.mrb[0].mxu0
    %v5879 = vadd.f32 %v5590, %v5878
    %v5880 = vpop.f32.mrb[0].mxu0
    %5881 = vmatprep.mubr.bf16.mxu0 %v2463
    %5882 = vmatmul.mubr.bf16.gmra.mrb[0].mxu0 %v1982
    %v5883 = vpop.f32.mrb[0].mxu0
    %v5884 = vadd.f32 %v5595, %v5883
    %v5885 = vpop.f32.mrb[0].mxu0
    %v5886 = vpop.f32.mrb[0].mxu0
    %v5887 = vadd.f32 %v5598, %v5886
    %v5888 = vpop.f32.mrb[0].mxu0
    %5889 = vmatprep.mubr.bf16.mxu0 %v2464
    %5890 = vmatmul.mubr.bf16.gmra.mrb[0].mxu0 %v1983
    %v5891 = vpop.f32.mrb[0].mxu0
    %v5892 = vadd.f32 %v5603, %v5891
    %v5893 = vpop.f32.mrb[0].mxu0
    %v5894 = vpop.f32.mrb[0].mxu0
    %v5895 = vadd.f32 %v5606, %v5894
    %v5896 = vpop.f32.mrb[0].mxu0
    %5897 = vmatprep.mubr.bf16.mxu0 %v2465
    %5898 = vmatmul.mubr.bf16.gmra.mrb[0].mxu0 %v1984
    %v5899 = vpop.f32.mrb[0].mxu0
    %v5900 = vadd.f32 %v5611, %v5899
    %v5901 = vpop.f32.mrb[0].mxu0
    %v5902 = vpop.f32.mrb[0].mxu0
    %v5903 = vadd.f32 %v5614, %v5902
    %v5904 = vpop.f32.mrb[0].mxu0
    %5905 = vmatprep.mubr.bf16.mxu0 %v2466
    %5906 = vmatmul.mubr.bf16.gmra.mrb[0].mxu0 %v1985
    %v5907 = vpop.f32.mrb[0].mxu0
    %v5908 = vadd.f32 %v5619, %v5907
    %v5909 = vpop.f32.mrb[0].mxu0
    %v5910 = vpop.f32.mrb[0].mxu0
    %v5911 = vadd.f32 %v5622, %v5910
    %v5912 = vpop.f32.mrb[0].mxu0
    %5913 = vmatprep.mubr.bf16.mxu0 %v2467
    %5914 = vmatmul.mubr.bf16.gmra.mrb[0].mxu0 %v1986
    %v5915 = vpop.f32.mrb[0].mxu0
    %v5916 = vadd.f32 %v5627, %v5915
    %v5917 = vpop.f32.mrb[0].mxu0
    %v5918 = vpop.f32.mrb[0].mxu0
    %v5919 = vadd.f32 %v5630, %v5918
    %v5920 = vpop.f32.mrb[0].mxu0
    %5921 = vmatprep.mubr.bf16.mxu0 %v2468
    %5922 = vmatmul.mubr.bf16.gmra.mrb[0].mxu0 %v1987
    %v5923 = vpop.f32.mrb[0].mxu0
    %v5924 = vadd.f32 %v5635, %v5923
    %v5925 = vpop.f32.mrb[0].mxu0
    %v5926 = vpop.f32.mrb[0].mxu0
    %v5927 = vadd.f32 %v5638, %v5926
    %v5928 = vpop.f32.mrb[0].mxu0
    %5929 = vmatprep.mubr.bf16.mxu0 %v2469
    %5930 = vmatmul.mubr.bf16.gmra.mrb[0].mxu0 %v1988
    %v5931 = vpop.f32.mrb[0].mxu0
    %v5932 = vadd.f32 %v5643, %v5931
    %v5933 = vpop.f32.mrb[0].mxu0
    %v5934 = vpop.f32.mrb[0].mxu0
    %v5935 = vadd.f32 %v5646, %v5934
    %v5936 = vpop.f32.mrb[0].mxu0
    %5937 = vmatprep.mubr.bf16.mxu0 %v2470
    %5938 = vmatmul.mubr.bf16.gmra.mrb[0].mxu0 %v1989
    %v5939 = vpop.f32.mrb[0].mxu0
    %v5940 = vadd.f32 %v5651, %v5939
    %v5941 = vpop.f32.mrb[0].mxu0
    %v5942 = vpop.f32.mrb[0].mxu0
    %v5943 = vadd.f32 %v5654, %v5942
    %v5944 = vpop.f32.mrb[0].mxu0
    %5945 = vmatprep.mubr.bf16.mxu0 %v2471
    %5946 = vmatmul.mubr.bf16.gmra.mrb[0].mxu0 %v1990
    %v5947 = vpop.f32.mrb[0].mxu0
    %v5948 = vadd.f32 %v5659, %v5947
    %v5949 = vpop.f32.mrb[0].mxu0
    %v5950 = vpop.f32.mrb[0].mxu0
    %v5951 = vadd.f32 %v5662, %v5950
    %v5952 = vpop.f32.mrb[0].mxu0
    %5953 = vmatprep.mubr.bf16.mxu0 %v2472
    %5954 = vmatmul.mubr.bf16.gmra.mrb[0].mxu0 %v1991
    %v5955 = vpop.f32.mrb[0].mxu0
    %v5956 = vadd.f32 %v5667, %v5955
    %v5957 = vpop.f32.mrb[0].mxu0
    %v5958 = vpop.f32.mrb[0].mxu0
    %v5959 = vadd.f32 %v5670, %v5958
    %v5960 = vpop.f32.mrb[0].mxu0
    %5961 = vmatprep.mubr.bf16.mxu0 %v2473
    %5962 = vmatmul.mubr.bf16.gmra.mrb[0].mxu0 %v1992
    %v5963 = vpop.f32.mrb[0].mxu0
    %v5964 = vadd.f32 %v5675, %v5963
    %v5965 = vpop.f32.mrb[0].mxu0
    %v5966 = vpop.f32.mrb[0].mxu0
    %v5967 = vadd.f32 %v5678, %v5966
    %v5968 = vpop.f32.mrb[0].mxu0
    %5969 = vmatprep.mubr.bf16.mxu0 %v2474
    %5970 = vmatmul.mubr.bf16.gmra.mrb[0].mxu0 %v1993
    %v5971 = vpop.f32.mrb[0].mxu0
    %v5972 = vadd.f32 %v5683, %v5971
    %v5973 = vpop.f32.mrb[0].mxu0
    %v5974 = vpop.f32.mrb[0].mxu0
    %v5975 = vadd.f32 %v5686, %v5974
    %v5976 = vpop.f32.mrb[0].mxu0
    %5977 = vmatprep.mubr.bf16.mxu0 %v2475
    %5978 = vmatmul.mubr.bf16.gmra.mrb[0].mxu0 %v1994
    %v5979 = vpop.f32.mrb[0].mxu0
    %v5980 = vadd.f32 %v5691, %v5979
    %v5981 = vpop.f32.mrb[0].mxu0
    %v5982 = vpop.f32.mrb[0].mxu0
    %v5983 = vadd.f32 %v5694, %v5982
    %v5984 = vpop.f32.mrb[0].mxu0
    %5985 = vmatprep.mubr.bf16.mxu0 %v2476
    %5986 = vmatmul.mubr.bf16.gmra.mrb[0].mxu0 %v1995
    %v5987 = vpop.f32.mrb[0].mxu0
    %v5988 = vadd.f32 %v5699, %v5987
    %v5989 = vpop.f32.mrb[0].mxu0
    %v5990 = vpop.f32.mrb[0].mxu0
    %v5991 = vadd.f32 %v5702, %v5990
    %v5992 = vpop.f32.mrb[0].mxu0
    %5993 = vmatprep.mubr.bf16.mxu0 %v2477
    %5994 = vmatmul.mubr.bf16.gmra.mrb[0].mxu0 %v1996
    %v5995 = vpop.f32.mrb[0].mxu0
    %v5996 = vadd.f32 %v5707, %v5995
    %v5997 = vpop.f32.mrb[0].mxu0
    %v5998 = vpop.f32.mrb[0].mxu0
    %v5999 = vadd.f32 %v5710, %v5998
    %v6000 = vpop.f32.mrb[0].mxu0
    %6001 = vmatprep.mubr.bf16.mxu0 %v2478
    %6002 = vmatmul.mubr.bf16.gmra.mrb[0].mxu0 %v1997
    %v6003 = vpop.f32.mrb[0].mxu0
    %v6004 = vadd.f32 %v5715, %v6003
    %v6005 = vpop.f32.mrb[0].mxu0
    %v6006 = vpop.f32.mrb[0].mxu0
    %v6007 = vadd.f32 %v5718, %v6006
    %v6008 = vpop.f32.mrb[0].mxu0
    %6009 = vmatprep.mubr.bf16.mxu0 %v2479
    %6010 = vmatmul.mubr.bf16.gmra.mrb[0].mxu0 %v1998
    %v6011 = vpop.f32.mrb[0].mxu0
    %v6012 = vadd.f32 %v5723, %v6011
    %v6013 = vpop.f32.mrb[0].mxu0
    %v6014 = vpop.f32.mrb[0].mxu0
    %v6015 = vadd.f32 %v5726, %v6014
    %v6016 = vpop.f32.mrb[0].mxu0
    %6017 = vmatprep.mubr.bf16.mxu0 %v2480
    %6018 = vmatmul.mubr.bf16.gmra.mrb[0].mxu0 %v1999
    %v6019 = vpop.f32.mrb[0].mxu0
    %v6020 = vadd.f32 %v5731, %v6019
    %v6021 = vpop.f32.mrb[0].mxu0
    %v6022 = vpop.f32.mrb[0].mxu0
    %v6023 = vadd.f32 %v5734, %v6022
    %v6024 = vpop.f32.mrb[0].mxu0
    %6025 = vmatprep.mubr.bf16.mxu0 %v2481
    %6026 = vmatmul.mubr.bf16.gmra.mrb[0].mxu0 %v2000
    %v6027 = vpop.f32.mrb[0].mxu0
    %v6028 = vadd.f32 %v5739, %v6027
    %v6029 = vpop.f32.mrb[0].mxu0
    %v6030 = vpop.f32.mrb[0].mxu0
    %v6031 = vadd.f32 %v5742, %v6030
    %v6032 = vpop.f32.mrb[0].mxu0
    %6033 = vmatprep.mubr.bf16.mxu0 %v2482
    %6034 = vmatmul.mubr.bf16.gmra.mrb[0].mxu0 %v2001
    %v6035 = vpop.f32.mrb[0].mxu0
    %v6036 = vadd.f32 %v5747, %v6035
    %v6037 = vpop.f32.mrb[0].mxu0
    %v6038 = vpop.f32.mrb[0].mxu0
    %v6039 = vadd.f32 %v5750, %v6038
    %v6040 = vpop.f32.mrb[0].mxu0
    %6041 = vdwg.mxu0
    %6042 = vmatprep.subr.bf16.mxu0 0
    %6043 = vmatpush1.bf16.msra.mxu0 %v5352
    %6044 = vmatprep.subr.bf16.mxu0 0
    %6045 = vmatpush1.bf16.msra.mxu0 %v5353
    %6046 = vmatprep.subr.bf16.mxu0 0
    %6047 = vmatpush1.bf16.msra.mxu0 %v5354
    %6048 = vmatprep.subr.bf16.mxu0 0
    %6049 = vmatpush1.bf16.msra.mxu0 %v5355
    %6050 = vmatprep.subr.bf16.mxu0 0
    %6051 = vmatpush1.bf16.msra.mxu0 %v5356
    %6052 = vmatprep.subr.bf16.mxu0 0
    %6053 = vmatpush1.bf16.msra.mxu0 %v5357
    %6054 = vmatprep.subr.bf16.mxu0 0
    %6055 = vmatpush1.bf16.msra.mxu0 %v5358
    %6056 = vmatprep.subr.bf16.mxu0 0
    %6057 = vmatpush1.bf16.msra.mxu0 %v5359
    %6058 = vmatprep.subr.bf16.mxu0 0
    %6059 = vmatpush1.bf16.msra.mxu0 %v5360
    %6060 = vmatprep.subr.bf16.mxu0 0
    %6061 = vmatpush1.bf16.msra.mxu0 %v5361
    %6062 = vmatprep.subr.bf16.mxu0 0
    %6063 = vmatpush1.bf16.msra.mxu0 %v5362
    %6064 = vmatprep.subr.bf16.mxu0 0
    %6065 = vmatpush1.bf16.msra.mxu0 %v5363
    %6066 = vmatprep.subr.bf16.mxu0 0
    %6067 = vmatpush1.bf16.msra.mxu0 %v5364
    %6068 = vmatprep.subr.bf16.mxu0 0
    %6069 = vmatpush1.bf16.msra.mxu0 %v5365
    %6070 = vmatprep.subr.bf16.mxu0 0
    %6071 = vmatpush1.bf16.msra.mxu0 %v5366
    %6072 = vmatprep.subr.bf16.mxu0 0
    %6073 = vmatpush1.bf16.msra.mxu0 %v5367
    %6074 = vmatprep.mubr.bf16.mxu0 %v3413
    %6075 = vmatmul.mubr.bf16.gmra.mrb[0].mxu0 %v2932
    %v6076 = vpop.f32.mrb[0].mxu0
    %v6077 = vadd.f32 %v5788, %v6076
    %v6078 = vpop.f32.mrb[0].mxu0
    %v6079 = vpop.f32.mrb[0].mxu0
    %v6080 = vadd.f32 %v5791, %v6079
    %v6081 = vpop.f32.mrb[0].mxu0
    %6082 = vmatprep.mubr.bf16.mxu0 %v3414
    %6083 = vmatmul.mubr.bf16.gmra.mrb[0].mxu0 %v2933
    %v6084 = vpop.f32.mrb[0].mxu0
    %v6085 = vadd.f32 %v5796, %v6084
    %v6086 = vpop.f32.mrb[0].mxu0
    %v6087 = vpop.f32.mrb[0].mxu0
    %v6088 = vadd.f32 %v5799, %v6087
    %v6089 = vpop.f32.mrb[0].mxu0
    %6090 = vmatprep.mubr.bf16.mxu0 %v3415
    %6091 = vmatmul.mubr.bf16.gmra.mrb[0].mxu0 %v2934
    %v6092 = vpop.f32.mrb[0].mxu0
    %v6093 = vadd.f32 %v5804, %v6092
    %v6094 = vpop.f32.mrb[0].mxu0
    %v6095 = vpop.f32.mrb[0].mxu0
    %v6096 = vadd.f32 %v5807, %v6095
    %v6097 = vpop.f32.mrb[0].mxu0
    %6098 = vmatprep.mubr.bf16.mxu0 %v3416
    %6099 = vmatmul.mubr.bf16.gmra.mrb[0].mxu0 %v2935
    %v6100 = vpop.f32.mrb[0].mxu0
    %v6101 = vadd.f32 %v5812, %v6100
    %v6102 = vpop.f32.mrb[0].mxu0
    %v6103 = vpop.f32.mrb[0].mxu0
    %v6104 = vadd.f32 %v5815, %v6103
    %v6105 = vpop.f32.mrb[0].mxu0
    %6106 = vmatprep.mubr.bf16.mxu0 %v3417
    %6107 = vmatmul.mubr.bf16.gmra.mrb[0].mxu0 %v2936
    %v6108 = vpop.f32.mrb[0].mxu0
    %v6109 = vadd.f32 %v5820, %v6108
    %v6110 = vpop.f32.mrb[0].mxu0
    %v6111 = vpop.f32.mrb[0].mxu0
    %v6112 = vadd.f32 %v5823, %v6111
    %v6113 = vpop.f32.mrb[0].mxu0
    %6114 = vmatprep.mubr.bf16.mxu0 %v3418
    %6115 = vmatmul.mubr.bf16.gmra.mrb[0].mxu0 %v2937
    %v6116 = vpop.f32.mrb[0].mxu0
    %v6117 = vadd.f32 %v5828, %v6116
    %v6118 = vpop.f32.mrb[0].mxu0
    %v6119 = vpop.f32.mrb[0].mxu0
    %v6120 = vadd.f32 %v5831, %v6119
    %v6121 = vpop.f32.mrb[0].mxu0
    %6122 = vmatprep.mubr.bf16.mxu0 %v3419
    %6123 = vmatmul.mubr.bf16.gmra.mrb[0].mxu0 %v2938
    %v6124 = vpop.f32.mrb[0].mxu0
    %v6125 = vadd.f32 %v5836, %v6124
    %v6126 = vpop.f32.mrb[0].mxu0
    %v6127 = vpop.f32.mrb[0].mxu0
    %v6128 = vadd.f32 %v5839, %v6127
    %v6129 = vpop.f32.mrb[0].mxu0
    %6130 = vmatprep.mubr.bf16.mxu0 %v3420
    %6131 = vmatmul.mubr.bf16.gmra.mrb[0].mxu0 %v2939
    %v6132 = vpop.f32.mrb[0].mxu0
    %v6133 = vadd.f32 %v5844, %v6132
    %v6134 = vpop.f32.mrb[0].mxu0
    %v6135 = vpop.f32.mrb[0].mxu0
    %v6136 = vadd.f32 %v5847, %v6135
    %v6137 = vpop.f32.mrb[0].mxu0
    %6138 = vmatprep.mubr.bf16.mxu0 %v3421
    %6139 = vmatmul.mubr.bf16.gmra.mrb[0].mxu0 %v2940
    %v6140 = vpop.f32.mrb[0].mxu0
    %v6141 = vadd.f32 %v5852, %v6140
    %v6142 = vpop.f32.mrb[0].mxu0
    %v6143 = vpop.f32.mrb[0].mxu0
    %v6144 = vadd.f32 %v5855, %v6143
    %v6145 = vpop.f32.mrb[0].mxu0
    %6146 = vmatprep.mubr.bf16.mxu0 %v3422
    %6147 = vmatmul.mubr.bf16.gmra.mrb[0].mxu0 %v2941
    %v6148 = vpop.f32.mrb[0].mxu0
    %v6149 = vadd.f32 %v5860, %v6148
    %v6150 = vpop.f32.mrb[0].mxu0
    %v6151 = vpop.f32.mrb[0].mxu0
    %v6152 = vadd.f32 %v5863, %v6151
    %v6153 = vpop.f32.mrb[0].mxu0
    %6154 = vmatprep.mubr.bf16.mxu0 %v3423
    %6155 = vmatmul.mubr.bf16.gmra.mrb[0].mxu0 %v2942
    %v6156 = vpop.f32.mrb[0].mxu0
    %v6157 = vadd.f32 %v5868, %v6156
    %v6158 = vpop.f32.mrb[0].mxu0
    %v6159 = vpop.f32.mrb[0].mxu0
    %v6160 = vadd.f32 %v5871, %v6159
    %v6161 = vpop.f32.mrb[0].mxu0
    %6162 = vmatprep.mubr.bf16.mxu0 %v3424
    %6163 = vmatmul.mubr.bf16.gmra.mrb[0].mxu0 %v2943
    %v6164 = vpop.f32.mrb[0].mxu0
    %v6165 = vadd.f32 %v5876, %v6164
    %v6166 = vpop.f32.mrb[0].mxu0
    %v6167 = vpop.f32.mrb[0].mxu0
    %v6168 = vadd.f32 %v5879, %v6167
    %v6169 = vpop.f32.mrb[0].mxu0
    %6170 = vmatprep.mubr.bf16.mxu0 %v3425
    %6171 = vmatmul.mubr.bf16.gmra.mrb[0].mxu0 %v2944
    %v6172 = vpop.f32.mrb[0].mxu0
    %v6173 = vadd.f32 %v5884, %v6172
    %v6174 = vpop.f32.mrb[0].mxu0
    %v6175 = vpop.f32.mrb[0].mxu0
    %v6176 = vadd.f32 %v5887, %v6175
    %v6177 = vpop.f32.mrb[0].mxu0
    %6178 = vmatprep.mubr.bf16.mxu0 %v3426
    %6179 = vmatmul.mubr.bf16.gmra.mrb[0].mxu0 %v2945
    %v6180 = vpop.f32.mrb[0].mxu0
    %v6181 = vadd.f32 %v5892, %v6180
    %v6182 = vpop.f32.mrb[0].mxu0
    %v6183 = vpop.f32.mrb[0].mxu0
    %v6184 = vadd.f32 %v5895, %v6183
    %v6185 = vpop.f32.mrb[0].mxu0
    %6186 = vmatprep.mubr.bf16.mxu0 %v3427
    %6187 = vmatmul.mubr.bf16.gmra.mrb[0].mxu0 %v2946
    %v6188 = vpop.f32.mrb[0].mxu0
    %v6189 = vadd.f32 %v5900, %v6188
    %v6190 = vpop.f32.mrb[0].mxu0
    %v6191 = vpop.f32.mrb[0].mxu0
    %v6192 = vadd.f32 %v5903, %v6191
    %v6193 = vpop.f32.mrb[0].mxu0
    %6194 = vmatprep.mubr.bf16.mxu0 %v3428
    %6195 = vmatmul.mubr.bf16.gmra.mrb[0].mxu0 %v2947
    %v6196 = vpop.f32.mrb[0].mxu0
    %v6197 = vadd.f32 %v5908, %v6196
    %v6198 = vpop.f32.mrb[0].mxu0
    %v6199 = vpop.f32.mrb[0].mxu0
    %v6200 = vadd.f32 %v5911, %v6199
    %v6201 = vpop.f32.mrb[0].mxu0
    %6202 = vmatprep.mubr.bf16.mxu0 %v3429
    %6203 = vmatmul.mubr.bf16.gmra.mrb[0].mxu0 %v2948
    %v6204 = vpop.f32.mrb[0].mxu0
    %v6205 = vadd.f32 %v5916, %v6204
    %v6206 = vpop.f32.mrb[0].mxu0
    %v6207 = vpop.f32.mrb[0].mxu0
    %v6208 = vadd.f32 %v5919, %v6207
    %v6209 = vpop.f32.mrb[0].mxu0
    %6210 = vmatprep.mubr.bf16.mxu0 %v3430
    %6211 = vmatmul.mubr.bf16.gmra.mrb[0].mxu0 %v2949
    %v6212 = vpop.f32.mrb[0].mxu0
    %v6213 = vadd.f32 %v5924, %v6212
    %v6214 = vpop.f32.mrb[0].mxu0
    %v6215 = vpop.f32.mrb[0].mxu0
    %v6216 = vadd.f32 %v5927, %v6215
    %v6217 = vpop.f32.mrb[0].mxu0
    %6218 = vmatprep.mubr.bf16.mxu0 %v3431
    %6219 = vmatmul.mubr.bf16.gmra.mrb[0].mxu0 %v2950
    %v6220 = vpop.f32.mrb[0].mxu0
    %v6221 = vadd.f32 %v5932, %v6220
    %v6222 = vpop.f32.mrb[0].mxu0
    %v6223 = vpop.f32.mrb[0].mxu0
    %v6224 = vadd.f32 %v5935, %v6223
    %v6225 = vpop.f32.mrb[0].mxu0
    %6226 = vmatprep.mubr.bf16.mxu0 %v3432
    %6227 = vmatmul.mubr.bf16.gmra.mrb[0].mxu0 %v2951
    %v6228 = vpop.f32.mrb[0].mxu0
    %v6229 = vadd.f32 %v5940, %v6228
    %v6230 = vpop.f32.mrb[0].mxu0
    %v6231 = vpop.f32.mrb[0].mxu0
    %v6232 = vadd.f32 %v5943, %v6231
    %v6233 = vpop.f32.mrb[0].mxu0
    %6234 = vmatprep.mubr.bf16.mxu0 %v3433
    %6235 = vmatmul.mubr.bf16.gmra.mrb[0].mxu0 %v2952
    %v6236 = vpop.f32.mrb[0].mxu0
    %v6237 = vadd.f32 %v5948, %v6236
    %v6238 = vpop.f32.mrb[0].mxu0
    %v6239 = vpop.f32.mrb[0].mxu0
    %v6240 = vadd.f32 %v5951, %v6239
    %v6241 = vpop.f32.mrb[0].mxu0
    %6242 = vmatprep.mubr.bf16.mxu0 %v3434
    %6243 = vmatmul.mubr.bf16.gmra.mrb[0].mxu0 %v2953
    %v6244 = vpop.f32.mrb[0].mxu0
    %v6245 = vadd.f32 %v5956, %v6244
    %v6246 = vpop.f32.mrb[0].mxu0
    %v6247 = vpop.f32.mrb[0].mxu0
    %v6248 = vadd.f32 %v5959, %v6247
    %v6249 = vpop.f32.mrb[0].mxu0
    %6250 = vmatprep.mubr.bf16.mxu0 %v3435
    %6251 = vmatmul.mubr.bf16.gmra.mrb[0].mxu0 %v2954
    %v6252 = vpop.f32.mrb[0].mxu0
    %v6253 = vadd.f32 %v5964, %v6252
    %v6254 = vpop.f32.mrb[0].mxu0
    %v6255 = vpop.f32.mrb[0].mxu0
    %v6256 = vadd.f32 %v5967, %v6255
    %v6257 = vpop.f32.mrb[0].mxu0
    %6258 = vmatprep.mubr.bf16.mxu0 %v3436
    %6259 = vmatmul.mubr.bf16.gmra.mrb[0].mxu0 %v2955
    %v6260 = vpop.f32.mrb[0].mxu0
    %v6261 = vadd.f32 %v5972, %v6260
    %v6262 = vpop.f32.mrb[0].mxu0
    %v6263 = vpop.f32.mrb[0].mxu0
    %v6264 = vadd.f32 %v5975, %v6263
    %v6265 = vpop.f32.mrb[0].mxu0
    %6266 = vmatprep.mubr.bf16.mxu0 %v3437
    %6267 = vmatmul.mubr.bf16.gmra.mrb[0].mxu0 %v2956
    %v6268 = vpop.f32.mrb[0].mxu0
    %v6269 = vadd.f32 %v5980, %v6268
    %v6270 = vpop.f32.mrb[0].mxu0
    %v6271 = vpop.f32.mrb[0].mxu0
    %v6272 = vadd.f32 %v5983, %v6271
    %v6273 = vpop.f32.mrb[0].mxu0
    %6274 = vmatprep.mubr.bf16.mxu0 %v3438
    %6275 = vmatmul.mubr.bf16.gmra.mrb[0].mxu0 %v2957
    %v6276 = vpop.f32.mrb[0].mxu0
    %v6277 = vadd.f32 %v5988, %v6276
    %v6278 = vpop.f32.mrb[0].mxu0
    %v6279 = vpop.f32.mrb[0].mxu0
    %v6280 = vadd.f32 %v5991, %v6279
    %v6281 = vpop.f32.mrb[0].mxu0
    %6282 = vmatprep.mubr.bf16.mxu0 %v3439
    %6283 = vmatmul.mubr.bf16.gmra.mrb[0].mxu0 %v2958
    %v6284 = vpop.f32.mrb[0].mxu0
    %v6285 = vadd.f32 %v5996, %v6284
    %v6286 = vpop.f32.mrb[0].mxu0
    %v6287 = vpop.f32.mrb[0].mxu0
    %v6288 = vadd.f32 %v5999, %v6287
    %v6289 = vpop.f32.mrb[0].mxu0
    %6290 = vmatprep.mubr.bf16.mxu0 %v3440
    %6291 = vmatmul.mubr.bf16.gmra.mrb[0].mxu0 %v2959
    %v6292 = vpop.f32.mrb[0].mxu0
    %v6293 = vadd.f32 %v6004, %v6292
    %v6294 = vpop.f32.mrb[0].mxu0
    %v6295 = vpop.f32.mrb[0].mxu0
    %v6296 = vadd.f32 %v6007, %v6295
    %v6297 = vpop.f32.mrb[0].mxu0
    %6298 = vmatprep.mubr.bf16.mxu0 %v3441
    %6299 = vmatmul.mubr.bf16.gmra.mrb[0].mxu0 %v2960
    %v6300 = vpop.f32.mrb[0].mxu0
    %v6301 = vadd.f32 %v6012, %v6300
    %v6302 = vpop.f32.mrb[0].mxu0
    %v6303 = vpop.f32.mrb[0].mxu0
    %v6304 = vadd.f32 %v6015, %v6303
    %v6305 = vpop.f32.mrb[0].mxu0
    %6306 = vmatprep.mubr.bf16.mxu0 %v3442
    %6307 = vmatmul.mubr.bf16.gmra.mrb[0].mxu0 %v2961
    %v6308 = vpop.f32.mrb[0].mxu0
    %v6309 = vadd.f32 %v6020, %v6308
    %v6310 = vpop.f32.mrb[0].mxu0
    %v6311 = vpop.f32.mrb[0].mxu0
    %v6312 = vadd.f32 %v6023, %v6311
    %v6313 = vpop.f32.mrb[0].mxu0
    %6314 = vmatprep.mubr.bf16.mxu0 %v3443
    %6315 = vmatmul.mubr.bf16.gmra.mrb[0].mxu0 %v2962
    %v6316 = vpop.f32.mrb[0].mxu0
    %v6317 = vadd.f32 %v6028, %v6316
    %v6318 = vpop.f32.mrb[0].mxu0
    %v6319 = vpop.f32.mrb[0].mxu0
    %v6320 = vadd.f32 %v6031, %v6319
    %v6321 = vpop.f32.mrb[0].mxu0
    %6322 = vmatprep.mubr.bf16.mxu0 %v3444
    %6323 = vmatmul.mubr.bf16.gmra.mrb[0].mxu0 %v2963
    %v6324 = vpop.f32.mrb[0].mxu0
    %v6325 = vadd.f32 %v6036, %v6324
    %v6326 = vpop.f32.mrb[0].mxu0
    %v6327 = vpop.f32.mrb[0].mxu0
    %v6328 = vadd.f32 %v6039, %v6327
    %v6329 = vpop.f32.mrb[0].mxu0
    %6330 = vdwg.mxu0
    %6331 = vmatprep.subr.bf16.mxu0 0
    %6332 = vmatpush1.bf16.msra.mxu0 %v5368
    %6333 = vmatprep.subr.bf16.mxu0 0
    %6334 = vmatpush1.bf16.msra.mxu0 %v5369
    %6335 = vmatprep.subr.bf16.mxu0 0
    %6336 = vmatpush1.bf16.msra.mxu0 %v5370
    %6337 = vmatprep.subr.bf16.mxu0 0
    %6338 = vmatpush1.bf16.msra.mxu0 %v5371
    %6339 = vmatprep.subr.bf16.mxu0 0
    %6340 = vmatpush1.bf16.msra.mxu0 %v5372
    %6341 = vmatprep.subr.bf16.mxu0 0
    %6342 = vmatpush1.bf16.msra.mxu0 %v5373
    %6343 = vmatprep.subr.bf16.mxu0 0
    %6344 = vmatpush1.bf16.msra.mxu0 %v5374
    %6345 = vmatprep.subr.bf16.mxu0 0
    %6346 = vmatpush1.bf16.msra.mxu0 %v5375
    %6347 = vmatprep.subr.bf16.mxu0 0
    %6348 = vmatpush1.bf16.msra.mxu0 %v5376
    %6349 = vmatprep.subr.bf16.mxu0 0
    %6350 = vmatpush1.bf16.msra.mxu0 %v5377
    %6351 = vmatprep.subr.bf16.mxu0 0
    %6352 = vmatpush1.bf16.msra.mxu0 %v5378
    %6353 = vmatprep.subr.bf16.mxu0 0
    %6354 = vmatpush1.bf16.msra.mxu0 %v5379
    %6355 = vmatprep.subr.bf16.mxu0 0
    %6356 = vmatpush1.bf16.msra.mxu0 %v5380
    %6357 = vmatprep.subr.bf16.mxu0 0
    %6358 = vmatpush1.bf16.msra.mxu0 %v5381
    %6359 = vmatprep.subr.bf16.mxu0 0
    %6360 = vmatpush1.bf16.msra.mxu0 %v5382
    %6361 = vmatprep.subr.bf16.mxu0 0
    %6362 = vmatpush1.bf16.msra.mxu0 %v5383
    %6363 = vmatprep.mubr.bf16.mxu0 %v4375
    %6364 = vmatmul.mubr.bf16.gmra.mrb[0].mxu0 %v3894
    %v6365 = vpop.f32.mrb[0].mxu0
    %v6366 = vadd.f32 %v6077, %v6365
    %v6367 = vpop.f32.mrb[0].mxu0
    %v6368 = vpop.f32.mrb[0].mxu0
    %v6369 = vadd.f32 %v6080, %v6368
    %v6370 = vpop.f32.mrb[0].mxu0
    %6371 = vmatprep.mubr.bf16.mxu0 %v4376
    %6372 = vmatmul.mubr.bf16.gmra.mrb[0].mxu0 %v3895
    %v6373 = vpop.f32.mrb[0].mxu0
    %v6374 = vadd.f32 %v6085, %v6373
    %v6375 = vpop.f32.mrb[0].mxu0
    %v6376 = vpop.f32.mrb[0].mxu0
    %v6377 = vadd.f32 %v6088, %v6376
    %v6378 = vpop.f32.mrb[0].mxu0
    %6379 = vmatprep.mubr.bf16.mxu0 %v4377
    %6380 = vmatmul.mubr.bf16.gmra.mrb[0].mxu0 %v3896
    %v6381 = vpop.f32.mrb[0].mxu0
    %v6382 = vadd.f32 %v6093, %v6381
    %v6383 = vpop.f32.mrb[0].mxu0
    %v6384 = vpop.f32.mrb[0].mxu0
    %v6385 = vadd.f32 %v6096, %v6384
    %v6386 = vpop.f32.mrb[0].mxu0
    %6387 = vmatprep.mubr.bf16.mxu0 %v4378
    %6388 = vmatmul.mubr.bf16.gmra.mrb[0].mxu0 %v3897
    %v6389 = vpop.f32.mrb[0].mxu0
    %v6390 = vadd.f32 %v6101, %v6389
    %v6391 = vpop.f32.mrb[0].mxu0
    %v6392 = vpop.f32.mrb[0].mxu0
    %v6393 = vadd.f32 %v6104, %v6392
    %v6394 = vpop.f32.mrb[0].mxu0
    %6395 = vmatprep.mubr.bf16.mxu0 %v4379
    %6396 = vmatmul.mubr.bf16.gmra.mrb[0].mxu0 %v3898
    %v6397 = vpop.f32.mrb[0].mxu0
    %v6398 = vadd.f32 %v6109, %v6397
    %v6399 = vpop.f32.mrb[0].mxu0
    %v6400 = vpop.f32.mrb[0].mxu0
    %v6401 = vadd.f32 %v6112, %v6400
    %v6402 = vpop.f32.mrb[0].mxu0
    %6403 = vmatprep.mubr.bf16.mxu0 %v4380
    %6404 = vmatmul.mubr.bf16.gmra.mrb[0].mxu0 %v3899
    %v6405 = vpop.f32.mrb[0].mxu0
    %v6406 = vadd.f32 %v6117, %v6405
    %v6407 = vpop.f32.mrb[0].mxu0
    %v6408 = vpop.f32.mrb[0].mxu0
    %v6409 = vadd.f32 %v6120, %v6408
    %v6410 = vpop.f32.mrb[0].mxu0
    %6411 = vmatprep.mubr.bf16.mxu0 %v4381
    %6412 = vmatmul.mubr.bf16.gmra.mrb[0].mxu0 %v3900
    %v6413 = vpop.f32.mrb[0].mxu0
    %v6414 = vadd.f32 %v6125, %v6413
    %v6415 = vpop.f32.mrb[0].mxu0
    %v6416 = vpop.f32.mrb[0].mxu0
    %v6417 = vadd.f32 %v6128, %v6416
    %v6418 = vpop.f32.mrb[0].mxu0
    %6419 = vmatprep.mubr.bf16.mxu0 %v4382
    %6420 = vmatmul.mubr.bf16.gmra.mrb[0].mxu0 %v3901
    %v6421 = vpop.f32.mrb[0].mxu0
    %v6422 = vadd.f32 %v6133, %v6421
    %v6423 = vpop.f32.mrb[0].mxu0
    %v6424 = vpop.f32.mrb[0].mxu0
    %v6425 = vadd.f32 %v6136, %v6424
    %v6426 = vpop.f32.mrb[0].mxu0
    %6427 = vmatprep.mubr.bf16.mxu0 %v4383
    %6428 = vmatmul.mubr.bf16.gmra.mrb[0].mxu0 %v3902
    %v6429 = vpop.f32.mrb[0].mxu0
    %v6430 = vadd.f32 %v6141, %v6429
    %v6431 = vpop.f32.mrb[0].mxu0
    %v6432 = vpop.f32.mrb[0].mxu0
    %v6433 = vadd.f32 %v6144, %v6432
    %v6434 = vpop.f32.mrb[0].mxu0
    %6435 = vmatprep.mubr.bf16.mxu0 %v4384
    %6436 = vmatmul.mubr.bf16.gmra.mrb[0].mxu0 %v3903
    %v6437 = vpop.f32.mrb[0].mxu0
    %v6438 = vadd.f32 %v6149, %v6437
    %v6439 = vpop.f32.mrb[0].mxu0
    %v6440 = vpop.f32.mrb[0].mxu0
    %v6441 = vadd.f32 %v6152, %v6440
    %v6442 = vpop.f32.mrb[0].mxu0
    %6443 = vmatprep.mubr.bf16.mxu0 %v4385
    %6444 = vmatmul.mubr.bf16.gmra.mrb[0].mxu0 %v3904
    %v6445 = vpop.f32.mrb[0].mxu0
    %v6446 = vadd.f32 %v6157, %v6445
    %v6447 = vpop.f32.mrb[0].mxu0
    %v6448 = vpop.f32.mrb[0].mxu0
    %v6449 = vadd.f32 %v6160, %v6448
    %v6450 = vpop.f32.mrb[0].mxu0
    %6451 = vmatprep.mubr.bf16.mxu0 %v4386
    %6452 = vmatmul.mubr.bf16.gmra.mrb[0].mxu0 %v3905
    %v6453 = vpop.f32.mrb[0].mxu0
    %v6454 = vadd.f32 %v6165, %v6453
    %v6455 = vpop.f32.mrb[0].mxu0
    %v6456 = vpop.f32.mrb[0].mxu0
    %v6457 = vadd.f32 %v6168, %v6456
    %v6458 = vpop.f32.mrb[0].mxu0
    %6459 = vmatprep.mubr.bf16.mxu0 %v4387
    %6460 = vmatmul.mubr.bf16.gmra.mrb[0].mxu0 %v3906
    %v6461 = vpop.f32.mrb[0].mxu0
    %v6462 = vadd.f32 %v6173, %v6461
    %v6463 = vpop.f32.mrb[0].mxu0
    %v6464 = vpop.f32.mrb[0].mxu0
    %v6465 = vadd.f32 %v6176, %v6464
    %v6466 = vpop.f32.mrb[0].mxu0
    %6467 = vmatprep.mubr.bf16.mxu0 %v4388
    %6468 = vmatmul.mubr.bf16.gmra.mrb[0].mxu0 %v3907
    %v6469 = vpop.f32.mrb[0].mxu0
    %v6470 = vadd.f32 %v6181, %v6469
    %v6471 = vpop.f32.mrb[0].mxu0
    %v6472 = vpop.f32.mrb[0].mxu0
    %v6473 = vadd.f32 %v6184, %v6472
    %v6474 = vpop.f32.mrb[0].mxu0
    %6475 = vmatprep.mubr.bf16.mxu0 %v4389
    %6476 = vmatmul.mubr.bf16.gmra.mrb[0].mxu0 %v3908
    %v6477 = vpop.f32.mrb[0].mxu0
    %v6478 = vadd.f32 %v6189, %v6477
    %v6479 = vpop.f32.mrb[0].mxu0
    %v6480 = vpop.f32.mrb[0].mxu0
    %v6481 = vadd.f32 %v6192, %v6480
    %v6482 = vpop.f32.mrb[0].mxu0
    %6483 = vmatprep.mubr.bf16.mxu0 %v4390
    %6484 = vmatmul.mubr.bf16.gmra.mrb[0].mxu0 %v3909
    %v6485 = vpop.f32.mrb[0].mxu0
    %v6486 = vadd.f32 %v6197, %v6485
    %v6487 = vpop.f32.mrb[0].mxu0
    %v6488 = vpop.f32.mrb[0].mxu0
    %v6489 = vadd.f32 %v6200, %v6488
    %v6490 = vpop.f32.mrb[0].mxu0
    %6491 = vmatprep.mubr.bf16.mxu0 %v4391
    %6492 = vmatmul.mubr.bf16.gmra.mrb[0].mxu0 %v3910
    %v6493 = vpop.f32.mrb[0].mxu0
    %v6494 = vadd.f32 %v6205, %v6493
    %v6495 = vpop.f32.mrb[0].mxu0
    %v6496 = vpop.f32.mrb[0].mxu0
    %v6497 = vadd.f32 %v6208, %v6496
    %v6498 = vpop.f32.mrb[0].mxu0
    %6499 = vmatprep.mubr.bf16.mxu0 %v4392
    %6500 = vmatmul.mubr.bf16.gmra.mrb[0].mxu0 %v3911
    %v6501 = vpop.f32.mrb[0].mxu0
    %v6502 = vadd.f32 %v6213, %v6501
    %v6503 = vpop.f32.mrb[0].mxu0
    %v6504 = vpop.f32.mrb[0].mxu0
    %v6505 = vadd.f32 %v6216, %v6504
    %v6506 = vpop.f32.mrb[0].mxu0
    %6507 = vmatprep.mubr.bf16.mxu0 %v4393
    %6508 = vmatmul.mubr.bf16.gmra.mrb[0].mxu0 %v3912
    %v6509 = vpop.f32.mrb[0].mxu0
    %v6510 = vadd.f32 %v6221, %v6509
    %v6511 = vpop.f32.mrb[0].mxu0
    %v6512 = vpop.f32.mrb[0].mxu0
    %v6513 = vadd.f32 %v6224, %v6512
    %v6514 = vpop.f32.mrb[0].mxu0
    %6515 = vmatprep.mubr.bf16.mxu0 %v4394
    %6516 = vmatmul.mubr.bf16.gmra.mrb[0].mxu0 %v3913
    %v6517 = vpop.f32.mrb[0].mxu0
    %v6518 = vadd.f32 %v6229, %v6517
    %v6519 = vpop.f32.mrb[0].mxu0
    %v6520 = vpop.f32.mrb[0].mxu0
    %v6521 = vadd.f32 %v6232, %v6520
    %v6522 = vpop.f32.mrb[0].mxu0
    %6523 = vmatprep.mubr.bf16.mxu0 %v4395
    %6524 = vmatmul.mubr.bf16.gmra.mrb[0].mxu0 %v3914
    %v6525 = vpop.f32.mrb[0].mxu0
    %v6526 = vadd.f32 %v6237, %v6525
    %v6527 = vpop.f32.mrb[0].mxu0
    %v6528 = vpop.f32.mrb[0].mxu0
    %v6529 = vadd.f32 %v6240, %v6528
    %v6530 = vpop.f32.mrb[0].mxu0
    %6531 = vmatprep.mubr.bf16.mxu0 %v4396
    %6532 = vmatmul.mubr.bf16.gmra.mrb[0].mxu0 %v3915
    %v6533 = vpop.f32.mrb[0].mxu0
    %v6534 = vadd.f32 %v6245, %v6533
    %v6535 = vpop.f32.mrb[0].mxu0
    %v6536 = vpop.f32.mrb[0].mxu0
    %v6537 = vadd.f32 %v6248, %v6536
    %v6538 = vpop.f32.mrb[0].mxu0
    %6539 = vmatprep.mubr.bf16.mxu0 %v4397
    %6540 = vmatmul.mubr.bf16.gmra.mrb[0].mxu0 %v3916
    %v6541 = vpop.f32.mrb[0].mxu0
    %v6542 = vadd.f32 %v6253, %v6541
    %v6543 = vpop.f32.mrb[0].mxu0
    %v6544 = vpop.f32.mrb[0].mxu0
    %v6545 = vadd.f32 %v6256, %v6544
    %v6546 = vpop.f32.mrb[0].mxu0
    %6547 = vmatprep.mubr.bf16.mxu0 %v4398
    %6548 = vmatmul.mubr.bf16.gmra.mrb[0].mxu0 %v3917
    %v6549 = vpop.f32.mrb[0].mxu0
    %v6550 = vadd.f32 %v6261, %v6549
    %v6551 = vpop.f32.mrb[0].mxu0
    %v6552 = vpop.f32.mrb[0].mxu0
    %v6553 = vadd.f32 %v6264, %v6552
    %v6554 = vpop.f32.mrb[0].mxu0
    %6555 = vmatprep.mubr.bf16.mxu0 %v4399
    %6556 = vmatmul.mubr.bf16.gmra.mrb[0].mxu0 %v3918
    %v6557 = vpop.f32.mrb[0].mxu0
    %v6558 = vadd.f32 %v6269, %v6557
    %v6559 = vpop.f32.mrb[0].mxu0
    %v6560 = vpop.f32.mrb[0].mxu0
    %v6561 = vadd.f32 %v6272, %v6560
    %v6562 = vpop.f32.mrb[0].mxu0
    %6563 = vmatprep.mubr.bf16.mxu0 %v4400
    %6564 = vmatmul.mubr.bf16.gmra.mrb[0].mxu0 %v3919
    %v6565 = vpop.f32.mrb[0].mxu0
    %v6566 = vadd.f32 %v6277, %v6565
    %v6567 = vpop.f32.mrb[0].mxu0
    %v6568 = vpop.f32.mrb[0].mxu0
    %v6569 = vadd.f32 %v6280, %v6568
    %v6570 = vpop.f32.mrb[0].mxu0
    %6571 = vmatprep.mubr.bf16.mxu0 %v4401
    %6572 = vmatmul.mubr.bf16.gmra.mrb[0].mxu0 %v3920
    %v6573 = vpop.f32.mrb[0].mxu0
    %v6574 = vadd.f32 %v6285, %v6573
    %v6575 = vpop.f32.mrb[0].mxu0
    %v6576 = vpop.f32.mrb[0].mxu0
    %v6577 = vadd.f32 %v6288, %v6576
    %v6578 = vpop.f32.mrb[0].mxu0
    %6579 = vmatprep.mubr.bf16.mxu0 %v4402
    %6580 = vmatmul.mubr.bf16.gmra.mrb[0].mxu0 %v3921
    %v6581 = vpop.f32.mrb[0].mxu0
    %v6582 = vadd.f32 %v6293, %v6581
    %v6583 = vpop.f32.mrb[0].mxu0
    %v6584 = vpop.f32.mrb[0].mxu0
    %v6585 = vadd.f32 %v6296, %v6584
    %v6586 = vpop.f32.mrb[0].mxu0
    %6587 = vmatprep.mubr.bf16.mxu0 %v4403
    %6588 = vmatmul.mubr.bf16.gmra.mrb[0].mxu0 %v3922
    %v6589 = vpop.f32.mrb[0].mxu0
    %v6590 = vadd.f32 %v6301, %v6589
    %v6591 = vpop.f32.mrb[0].mxu0
    %v6592 = vpop.f32.mrb[0].mxu0
    %v6593 = vadd.f32 %v6304, %v6592
    %v6594 = vpop.f32.mrb[0].mxu0
    %6595 = vmatprep.mubr.bf16.mxu0 %v4404
    %6596 = vmatmul.mubr.bf16.gmra.mrb[0].mxu0 %v3923
    %v6597 = vpop.f32.mrb[0].mxu0
    %v6598 = vadd.f32 %v6309, %v6597
    %v6599 = vpop.f32.mrb[0].mxu0
    %v6600 = vpop.f32.mrb[0].mxu0
    %v6601 = vadd.f32 %v6312, %v6600
    %v6602 = vpop.f32.mrb[0].mxu0
    %6603 = vmatprep.mubr.bf16.mxu0 %v4405
    %6604 = vmatmul.mubr.bf16.gmra.mrb[0].mxu0 %v3924
    %v6605 = vpop.f32.mrb[0].mxu0
    %v6606 = vadd.f32 %v6317, %v6605
    %v6607 = vpop.f32.mrb[0].mxu0
    %v6608 = vpop.f32.mrb[0].mxu0
    %v6609 = vadd.f32 %v6320, %v6608
    %v6610 = vpop.f32.mrb[0].mxu0
    %6611 = vmatprep.mubr.bf16.mxu0 %v4406
    %6612 = vmatmul.mubr.bf16.gmra.mrb[0].mxu0 %v3925
    %v6613 = vpop.f32.mrb[0].mxu0
    %v6614 = vadd.f32 %v6325, %v6613
    %v6615 = vpop.f32.mrb[0].mxu0
    %v6616 = vpop.f32.mrb[0].mxu0
    %v6617 = vadd.f32 %v6328, %v6616
    %v6618 = vpop.f32.mrb[0].mxu0
    %6619 = vdwg.mxu0
    %6620 = vmatprep.subr.bf16.mxu0 0
    %6621 = vmatpush1.bf16.msra.mxu0 %v5384
    %6622 = vmatprep.subr.bf16.mxu0 0
    %6623 = vmatpush1.bf16.msra.mxu0 %v5385
    %6624 = vmatprep.subr.bf16.mxu0 0
    %6625 = vmatpush1.bf16.msra.mxu0 %v5386
    %6626 = vmatprep.subr.bf16.mxu0 0
    %6627 = vmatpush1.bf16.msra.mxu0 %v5387
    %6628 = vmatprep.subr.bf16.mxu0 0
    %6629 = vmatpush1.bf16.msra.mxu0 %v5388
    %6630 = vmatprep.subr.bf16.mxu0 0
    %6631 = vmatpush1.bf16.msra.mxu0 %v5389
    %6632 = vmatprep.subr.bf16.mxu0 0
    %6633 = vmatpush1.bf16.msra.mxu0 %v5390
    %6634 = vmatprep.subr.bf16.mxu0 0
    %6635 = vmatpush1.bf16.msra.mxu0 %v5391
    %6636 = vmatprep.subr.bf16.mxu0 0
    %6637 = vmatpush1.bf16.msra.mxu0 0
    %6638 = vmatprep.subr.bf16.mxu0 0
    %6639 = vmatpush1.bf16.msra.mxu0 0
    %6640 = vmatprep.subr.bf16.mxu0 0
    %6641 = vmatpush1.bf16.msra.mxu0 0
    %6642 = vmatprep.subr.bf16.mxu0 0
    %6643 = vmatpush1.bf16.msra.mxu0 0
    %6644 = vmatprep.subr.bf16.mxu0 0
    %6645 = vmatpush1.bf16.msra.mxu0 0
    %6646 = vmatprep.subr.bf16.mxu0 0
    %6647 = vmatpush1.bf16.msra.mxu0 0
    %6648 = vmatprep.subr.bf16.mxu0 0
    %6649 = vmatpush1.bf16.msra.mxu0 0
    %6650 = vmatprep.subr.bf16.mxu0 0
    %6651 = vmatpush1.bf16.msra.mxu0 0
    %6652 = vmatprep.mubr.bf16.mxu0 0
    %6653 = vmatmul.mubr.bf16.gmra.mrb[0].mxu0 %v4856
    %v6654 = vpop.f32.mrb[0].mxu0
    %v6655 = vadd.f32 %v6366, %v6654
    %v6656 = vpop.f32.mrb[0].mxu0
    %v6657 = vpop.f32.mrb[0].mxu0
    %v6658 = vadd.f32 %v6369, %v6657
    %v6659 = vpop.f32.mrb[0].mxu0
    %6660 = vmatprep.mubr.bf16.mxu0 0
    %6661 = vmatmul.mubr.bf16.gmra.mrb[0].mxu0 %v4857
    %v6662 = vpop.f32.mrb[0].mxu0
    %v6663 = vadd.f32 %v6374, %v6662
    %v6664 = vpop.f32.mrb[0].mxu0
    %v6665 = vpop.f32.mrb[0].mxu0
    %v6666 = vadd.f32 %v6377, %v6665
    %v6667 = vpop.f32.mrb[0].mxu0
    %6668 = vmatprep.mubr.bf16.mxu0 0
    %6669 = vmatmul.mubr.bf16.gmra.mrb[0].mxu0 %v4858
    %v6670 = vpop.f32.mrb[0].mxu0
    %v6671 = vadd.f32 %v6382, %v6670
    %v6672 = vpop.f32.mrb[0].mxu0
    %v6673 = vpop.f32.mrb[0].mxu0
    %v6674 = vadd.f32 %v6385, %v6673
    %v6675 = vpop.f32.mrb[0].mxu0
    %6676 = vmatprep.mubr.bf16.mxu0 0
    %6677 = vmatmul.mubr.bf16.gmra.mrb[0].mxu0 %v4859
    %v6678 = vpop.f32.mrb[0].mxu0
    %v6679 = vadd.f32 %v6390, %v6678
    %v6680 = vpop.f32.mrb[0].mxu0
    %v6681 = vpop.f32.mrb[0].mxu0
    %v6682 = vadd.f32 %v6393, %v6681
    %v6683 = vpop.f32.mrb[0].mxu0
    %6684 = vmatprep.mubr.bf16.mxu0 0
    %6685 = vmatmul.mubr.bf16.gmra.mrb[0].mxu0 %v4860
    %v6686 = vpop.f32.mrb[0].mxu0
    %v6687 = vadd.f32 %v6398, %v6686
    %v6688 = vpop.f32.mrb[0].mxu0
    %v6689 = vpop.f32.mrb[0].mxu0
    %v6690 = vadd.f32 %v6401, %v6689
    %v6691 = vpop.f32.mrb[0].mxu0
    %6692 = vmatprep.mubr.bf16.mxu0 0
    %6693 = vmatmul.mubr.bf16.gmra.mrb[0].mxu0 %v4861
    %v6694 = vpop.f32.mrb[0].mxu0
    %v6695 = vadd.f32 %v6406, %v6694
    %v6696 = vpop.f32.mrb[0].mxu0
    %v6697 = vpop.f32.mrb[0].mxu0
    %v6698 = vadd.f32 %v6409, %v6697
    %v6699 = vpop.f32.mrb[0].mxu0
    %6700 = vmatprep.mubr.bf16.mxu0 0
    %6701 = vmatmul.mubr.bf16.gmra.mrb[0].mxu0 %v4862
    %v6702 = vpop.f32.mrb[0].mxu0
    %v6703 = vadd.f32 %v6414, %v6702
    %v6704 = vpop.f32.mrb[0].mxu0
    %v6705 = vpop.f32.mrb[0].mxu0
    %v6706 = vadd.f32 %v6417, %v6705
    %v6707 = vpop.f32.mrb[0].mxu0
    %6708 = vmatprep.mubr.bf16.mxu0 0
    %6709 = vmatmul.mubr.bf16.gmra.mrb[0].mxu0 %v4863
    %v6710 = vpop.f32.mrb[0].mxu0
    %v6711 = vadd.f32 %v6422, %v6710
    %v6712 = vpop.f32.mrb[0].mxu0
    %v6713 = vpop.f32.mrb[0].mxu0
    %v6714 = vadd.f32 %v6425, %v6713
    %v6715 = vpop.f32.mrb[0].mxu0
    %6716 = vmatprep.mubr.bf16.mxu0 0
    %6717 = vmatmul.mubr.bf16.gmra.mrb[0].mxu0 %v4864
    %v6718 = vpop.f32.mrb[0].mxu0
    %v6719 = vadd.f32 %v6430, %v6718
    %v6720 = vpop.f32.mrb[0].mxu0
    %v6721 = vpop.f32.mrb[0].mxu0
    %v6722 = vadd.f32 %v6433, %v6721
    %v6723 = vpop.f32.mrb[0].mxu0
    %6724 = vmatprep.mubr.bf16.mxu0 0
    %6725 = vmatmul.mubr.bf16.gmra.mrb[0].mxu0 %v4865
    %v6726 = vpop.f32.mrb[0].mxu0
    %v6727 = vadd.f32 %v6438, %v6726
    %v6728 = vpop.f32.mrb[0].mxu0
    %v6729 = vpop.f32.mrb[0].mxu0
    %v6730 = vadd.f32 %v6441, %v6729
    %v6731 = vpop.f32.mrb[0].mxu0
    %6732 = vmatprep.mubr.bf16.mxu0 0
    %6733 = vmatmul.mubr.bf16.gmra.mrb[0].mxu0 %v4866
    %v6734 = vpop.f32.mrb[0].mxu0
    %v6735 = vadd.f32 %v6446, %v6734
    %v6736 = vpop.f32.mrb[0].mxu0
    %v6737 = vpop.f32.mrb[0].mxu0
    %v6738 = vadd.f32 %v6449, %v6737
    %v6739 = vpop.f32.mrb[0].mxu0
    %6740 = vmatprep.mubr.bf16.mxu0 0
    %6741 = vmatmul.mubr.bf16.gmra.mrb[0].mxu0 %v4867
    %v6742 = vpop.f32.mrb[0].mxu0
    %v6743 = vadd.f32 %v6454, %v6742
    %v6744 = vpop.f32.mrb[0].mxu0
    %v6745 = vpop.f32.mrb[0].mxu0
    %v6746 = vadd.f32 %v6457, %v6745
    %v6747 = vpop.f32.mrb[0].mxu0
    %6748 = vmatprep.mubr.bf16.mxu0 0
    %6749 = vmatmul.mubr.bf16.gmra.mrb[0].mxu0 %v4868
    %v6750 = vpop.f32.mrb[0].mxu0
    %v6751 = vadd.f32 %v6462, %v6750
    %v6752 = vpop.f32.mrb[0].mxu0
    %v6753 = vpop.f32.mrb[0].mxu0
    %v6754 = vadd.f32 %v6465, %v6753
    %v6755 = vpop.f32.mrb[0].mxu0
    %6756 = vmatprep.mubr.bf16.mxu0 0
    %6757 = vmatmul.mubr.bf16.gmra.mrb[0].mxu0 %v4869
    %v6758 = vpop.f32.mrb[0].mxu0
    %v6759 = vadd.f32 %v6470, %v6758
    %v6760 = vpop.f32.mrb[0].mxu0
    %v6761 = vpop.f32.mrb[0].mxu0
    %v6762 = vadd.f32 %v6473, %v6761
    %v6763 = vpop.f32.mrb[0].mxu0
    %6764 = vmatprep.mubr.bf16.mxu0 0
    %6765 = vmatmul.mubr.bf16.gmra.mrb[0].mxu0 %v4870
    %v6766 = vpop.f32.mrb[0].mxu0
    %v6767 = vadd.f32 %v6478, %v6766
    %v6768 = vpop.f32.mrb[0].mxu0
    %v6769 = vpop.f32.mrb[0].mxu0
    %v6770 = vadd.f32 %v6481, %v6769
    %v6771 = vpop.f32.mrb[0].mxu0
    %6772 = vmatprep.mubr.bf16.mxu0 0
    %6773 = vmatmul.mubr.bf16.gmra.mrb[0].mxu0 %v4871
    %v6774 = vpop.f32.mrb[0].mxu0
    %v6775 = vadd.f32 %v6486, %v6774
    %v6776 = vpop.f32.mrb[0].mxu0
    %v6777 = vpop.f32.mrb[0].mxu0
    %v6778 = vadd.f32 %v6489, %v6777
    %v6779 = vpop.f32.mrb[0].mxu0
    %6780 = vmatprep.mubr.bf16.mxu0 0
    %6781 = vmatmul.mubr.bf16.gmra.mrb[0].mxu0 %v4872
    %v6782 = vpop.f32.mrb[0].mxu0
    %v6783 = vadd.f32 %v6494, %v6782
    %v6784 = vpop.f32.mrb[0].mxu0
    %v6785 = vpop.f32.mrb[0].mxu0
    %v6786 = vadd.f32 %v6497, %v6785
    %v6787 = vpop.f32.mrb[0].mxu0
    %6788 = vmatprep.mubr.bf16.mxu0 0
    %6789 = vmatmul.mubr.bf16.gmra.mrb[0].mxu0 %v4873
    %v6790 = vpop.f32.mrb[0].mxu0
    %v6791 = vadd.f32 %v6502, %v6790
    %v6792 = vpop.f32.mrb[0].mxu0
    %v6793 = vpop.f32.mrb[0].mxu0
    %v6794 = vadd.f32 %v6505, %v6793
    %v6795 = vpop.f32.mrb[0].mxu0
    %6796 = vmatprep.mubr.bf16.mxu0 0
    %6797 = vmatmul.mubr.bf16.gmra.mrb[0].mxu0 %v4874
    %v6798 = vpop.f32.mrb[0].mxu0
    %v6799 = vadd.f32 %v6510, %v6798
    %v6800 = vpop.f32.mrb[0].mxu0
    %v6801 = vpop.f32.mrb[0].mxu0
    %v6802 = vadd.f32 %v6513, %v6801
    %v6803 = vpop.f32.mrb[0].mxu0
    %6804 = vmatprep.mubr.bf16.mxu0 0
    %6805 = vmatmul.mubr.bf16.gmra.mrb[0].mxu0 %v4875
    %v6806 = vpop.f32.mrb[0].mxu0
    %v6807 = vadd.f32 %v6518, %v6806
    %v6808 = vpop.f32.mrb[0].mxu0
    %v6809 = vpop.f32.mrb[0].mxu0
    %v6810 = vadd.f32 %v6521, %v6809
    %v6811 = vpop.f32.mrb[0].mxu0
    %6812 = vmatprep.mubr.bf16.mxu0 0
    %6813 = vmatmul.mubr.bf16.gmra.mrb[0].mxu0 %v4876
    %v6814 = vpop.f32.mrb[0].mxu0
    %v6815 = vadd.f32 %v6526, %v6814
    %v6816 = vpop.f32.mrb[0].mxu0
    %v6817 = vpop.f32.mrb[0].mxu0
    %v6818 = vadd.f32 %v6529, %v6817
    %v6819 = vpop.f32.mrb[0].mxu0
    %6820 = vmatprep.mubr.bf16.mxu0 0
    %6821 = vmatmul.mubr.bf16.gmra.mrb[0].mxu0 %v4877
    %v6822 = vpop.f32.mrb[0].mxu0
    %v6823 = vadd.f32 %v6534, %v6822
    %v6824 = vpop.f32.mrb[0].mxu0
    %v6825 = vpop.f32.mrb[0].mxu0
    %v6826 = vadd.f32 %v6537, %v6825
    %v6827 = vpop.f32.mrb[0].mxu0
    %6828 = vmatprep.mubr.bf16.mxu0 0
    %6829 = vmatmul.mubr.bf16.gmra.mrb[0].mxu0 %v4878
    %v6830 = vpop.f32.mrb[0].mxu0
    %v6831 = vadd.f32 %v6542, %v6830
    %v6832 = vpop.f32.mrb[0].mxu0
    %v6833 = vpop.f32.mrb[0].mxu0
    %v6834 = vadd.f32 %v6545, %v6833
    %v6835 = vpop.f32.mrb[0].mxu0
    %6836 = vmatprep.mubr.bf16.mxu0 0
    %6837 = vmatmul.mubr.bf16.gmra.mrb[0].mxu0 %v4879
    %v6838 = vpop.f32.mrb[0].mxu0
    %v6839 = vadd.f32 %v6550, %v6838
    %v6840 = vpop.f32.mrb[0].mxu0
    %v6841 = vpop.f32.mrb[0].mxu0
    %v6842 = vadd.f32 %v6553, %v6841
    %v6843 = vpop.f32.mrb[0].mxu0
    %6844 = vmatprep.mubr.bf16.mxu0 0
    %6845 = vmatmul.mubr.bf16.gmra.mrb[0].mxu0 %v4880
    %v6846 = vpop.f32.mrb[0].mxu0
    %v6847 = vadd.f32 %v6558, %v6846
    %v6848 = vpop.f32.mrb[0].mxu0
    %v6849 = vpop.f32.mrb[0].mxu0
    %v6850 = vadd.f32 %v6561, %v6849
    %v6851 = vpop.f32.mrb[0].mxu0
    %6852 = vmatprep.mubr.bf16.mxu0 0
    %6853 = vmatmul.mubr.bf16.gmra.mrb[0].mxu0 %v4881
    %v6854 = vpop.f32.mrb[0].mxu0
    %v6855 = vadd.f32 %v6566, %v6854
    %v6856 = vpop.f32.mrb[0].mxu0
    %v6857 = vpop.f32.mrb[0].mxu0
    %v6858 = vadd.f32 %v6569, %v6857
    %v6859 = vpop.f32.mrb[0].mxu0
    %6860 = vmatprep.mubr.bf16.mxu0 0
    %6861 = vmatmul.mubr.bf16.gmra.mrb[0].mxu0 %v4882
    %v6862 = vpop.f32.mrb[0].mxu0
    %v6863 = vadd.f32 %v6574, %v6862
    %v6864 = vpop.f32.mrb[0].mxu0
    %v6865 = vpop.f32.mrb[0].mxu0
    %v6866 = vadd.f32 %v6577, %v6865
    %v6867 = vpop.f32.mrb[0].mxu0
    %6868 = vmatprep.mubr.bf16.mxu0 0
    %6869 = vmatmul.mubr.bf16.gmra.mrb[0].mxu0 %v4883
    %v6870 = vpop.f32.mrb[0].mxu0
    %v6871 = vadd.f32 %v6582, %v6870
    %v6872 = vpop.f32.mrb[0].mxu0
    %v6873 = vpop.f32.mrb[0].mxu0
    %v6874 = vadd.f32 %v6585, %v6873
    %v6875 = vpop.f32.mrb[0].mxu0
    %6876 = vmatprep.mubr.bf16.mxu0 0
    %6877 = vmatmul.mubr.bf16.gmra.mrb[0].mxu0 %v4884
    %v6878 = vpop.f32.mrb[0].mxu0
    %v6879 = vadd.f32 %v6590, %v6878
    %v6880 = vpop.f32.mrb[0].mxu0
    %v6881 = vpop.f32.mrb[0].mxu0
    %v6882 = vadd.f32 %v6593, %v6881
    %v6883 = vpop.f32.mrb[0].mxu0
    %6884 = vmatprep.mubr.bf16.mxu0 0
    %6885 = vmatmul.mubr.bf16.gmra.mrb[0].mxu0 %v4885
    %v6886 = vpop.f32.mrb[0].mxu0
    %v6887 = vadd.f32 %v6598, %v6886
    %v6888 = vpop.f32.mrb[0].mxu0
    %v6889 = vpop.f32.mrb[0].mxu0
    %v6890 = vadd.f32 %v6601, %v6889
    %v6891 = vpop.f32.mrb[0].mxu0
    %6892 = vmatprep.mubr.bf16.mxu0 0
    %6893 = vmatmul.mubr.bf16.gmra.mrb[0].mxu0 %v4886
    %v6894 = vpop.f32.mrb[0].mxu0
    %v6895 = vadd.f32 %v6606, %v6894
    %v6896 = vpop.f32.mrb[0].mxu0
    %v6897 = vpop.f32.mrb[0].mxu0
    %v6898 = vadd.f32 %v6609, %v6897
    %v6899 = vpop.f32.mrb[0].mxu0
    %6900 = vmatprep.mubr.bf16.mxu0 0
    %6901 = vmatmul.mubr.bf16.gmra.mrb[0].mxu0 %v4887
    %v6902 = vpop.f32.mrb[0].mxu0
    %v6903 = vadd.f32 %v6614, %v6902
    %v6904 = vpop.f32.mrb[0].mxu0
    %v6905 = vpop.f32.mrb[0].mxu0
    %v6906 = vadd.f32 %v6617, %v6905
    %v6907 = vpop.f32.mrb[0].mxu0
    %6908 = vdwg.mxu0
    %v6909 = vadd.f32 %v6655, %v6658
    %v6910 = vadd.f32 %v6909, %v6663
    %v6911 = vadd.f32 %v6910, %v6666
    %v6912 = vadd.f32 %v6911, %v6671
    %v6913 = vadd.f32 %v6912, %v6674
    %v6914 = vadd.f32 %v6913, %v6679
    %v6915 = vadd.f32 %v6914, %v6682
    %v6916 = vadd.f32 %v6915, %v6687
    %v6917 = vadd.f32 %v6916, %v6690
    %v6918 = vadd.f32 %v6917, %v6695
    %v6919 = vadd.f32 %v6918, %v6698
    %v6920 = vadd.f32 %v6919, %v6703
    %v6921 = vadd.f32 %v6920, %v6706
    %v6922 = vadd.f32 %v6921, %v6711
    %v6923 = vadd.f32 %v6922, %v6714
    %v6924 = vadd.f32 %v6923, %v6719
    %v6925 = vadd.f32 %v6924, %v6722
    %v6926 = vadd.f32 %v6925, %v6727
    %v6927 = vadd.f32 %v6926, %v6730
    %v6928 = vadd.f32 %v6927, %v6735
    %v6929 = vadd.f32 %v6928, %v6738
    %v6930 = vadd.f32 %v6929, %v6743
    %v6931 = vadd.f32 %v6930, %v6746
    %v6932 = vadd.f32 %v6931, %v6751
    %v6933 = vadd.f32 %v6932, %v6754
    %v6934 = vadd.f32 %v6933, %v6759
    %v6935 = vadd.f32 %v6934, %v6762
    %v6936 = vadd.f32 %v6935, %v6767
    %v6937 = vadd.f32 %v6936, %v6770
    %v6938 = vadd.f32 %v6937, %v6775
    %v6939 = vadd.f32 %v6938, %v6778
    %v6940 = vadd.f32 %v6939, %v6783
    %v6941 = vadd.f32 %v6940, %v6786
    %v6942 = vadd.f32 %v6941, %v6791
    %v6943 = vadd.f32 %v6942, %v6794
    %v6944 = vadd.f32 %v6943, %v6799
    %v6945 = vadd.f32 %v6944, %v6802
    %v6946 = vadd.f32 %v6945, %v6807
    %v6947 = vadd.f32 %v6946, %v6810
    %v6948 = vadd.f32 %v6947, %v6815
    %v6949 = vadd.f32 %v6948, %v6818
    %v6950 = vadd.f32 %v6949, %v6823
    %v6951 = vadd.f32 %v6950, %v6826
    %v6952 = vadd.f32 %v6951, %v6831
    %v6953 = vadd.f32 %v6952, %v6834
    %v6954 = vadd.f32 %v6953, %v6839
    %v6955 = vadd.f32 %v6954, %v6842
    %v6956 = vadd.f32 %v6955, %v6847
    %v6957 = vadd.f32 %v6956, %v6850
    %v6958 = vadd.f32 %v6957, %v6855
    %v6959 = vadd.f32 %v6958, %v6858
    %v6960 = vadd.f32 %v6959, %v6863
    %v6961 = vadd.f32 %v6960, %v6866
    %v6962 = vadd.f32 %v6961, %v6871
    %v6963 = vadd.f32 %v6962, %v6874
    %v6964 = vadd.f32 %v6963, %v6879
    %v6965 = vadd.f32 %v6964, %v6882
    %v6966 = vadd.f32 %v6965, %v6887
    %v6967 = vadd.f32 %v6966, %v6890
    %v6968 = vadd.f32 %v6967, %v6895
    %v6969 = vadd.f32 %v6968, %v6898
    %v6970 = vadd.f32 %v6969, %v6903
    %v6971 = vadd.f32 %v6970, %v6906
    %v6972 = vrot.slane %v6971, 4
    %v6973 = vadd.f32 %v6971, %v6972
    %v6974 = vrot.slane %v6973, 2
    %v6975 = vadd.f32 %v6973, %v6974
    %v6976 = vrot.slane %v6975, 1
    %v6977 = vadd.f32 %v6975, %v6976
    %v6978 = vmul.f32 %v6655, %v6655
    %v6979 = vmul.f32 %v6658, %v6658
    %v6980 = vmul.f32 %v6663, %v6663
    %v6981 = vmul.f32 %v6666, %v6666
    %v6982 = vmul.f32 %v6671, %v6671
    %v6983 = vmul.f32 %v6674, %v6674
    %v6984 = vmul.f32 %v6679, %v6679
    %v6985 = vmul.f32 %v6682, %v6682
    %v6986 = vmul.f32 %v6687, %v6687
    %v6987 = vmul.f32 %v6690, %v6690
    %v6988 = vmul.f32 %v6695, %v6695
    %v6989 = vmul.f32 %v6698, %v6698
    %v6990 = vmul.f32 %v6703, %v6703
    %v6991 = vmul.f32 %v6706, %v6706
    %v6992 = vmul.f32 %v6711, %v6711
    %v6993 = vmul.f32 %v6714, %v6714
    %v6994 = vmul.f32 %v6719, %v6719
    %v6995 = vmul.f32 %v6722, %v6722
    %v6996 = vmul.f32 %v6727, %v6727
    %v6997 = vmul.f32 %v6730, %v6730
    %v6998 = vmul.f32 %v6735, %v6735
    %v6999 = vmul.f32 %v6738, %v6738
    %v7000 = vmul.f32 %v6743, %v6743
    %v7001 = vmul.f32 %v6746, %v6746
    %v7002 = vmul.f32 %v6751, %v6751
    %v7003 = vmul.f32 %v6754, %v6754
    %v7004 = vmul.f32 %v6759, %v6759
    %v7005 = vmul.f32 %v6762, %v6762
    %v7006 = vmul.f32 %v6767, %v6767
    %v7007 = vmul.f32 %v6770, %v6770
    %v7008 = vmul.f32 %v6775, %v6775
    %v7009 = vmul.f32 %v6778, %v6778
    %v7010 = vmul.f32 %v6783, %v6783
    %v7011 = vmul.f32 %v6786, %v6786
    %v7012 = vmul.f32 %v6791, %v6791
    %v7013 = vmul.f32 %v6794, %v6794
    %v7014 = vmul.f32 %v6799, %v6799
    %v7015 = vmul.f32 %v6802, %v6802
    %v7016 = vmul.f32 %v6807, %v6807
    %v7017 = vmul.f32 %v6810, %v6810
    %v7018 = vmul.f32 %v6815, %v6815
    %v7019 = vmul.f32 %v6818, %v6818
    %v7020 = vmul.f32 %v6823, %v6823
    %v7021 = vmul.f32 %v6826, %v6826
    %v7022 = vmul.f32 %v6831, %v6831
    %v7023 = vmul.f32 %v6834, %v6834
    %v7024 = vmul.f32 %v6839, %v6839
    %v7025 = vmul.f32 %v6842, %v6842
    %v7026 = vmul.f32 %v6847, %v6847
    %v7027 = vmul.f32 %v6850, %v6850
    %v7028 = vmul.f32 %v6855, %v6855
    %v7029 = vmul.f32 %v6858, %v6858
    %v7030 = vmul.f32 %v6863, %v6863
    %v7031 = vmul.f32 %v6866, %v6866
    %v7032 = vmul.f32 %v6871, %v6871
    %v7033 = vmul.f32 %v6874, %v6874
    %v7034 = vmul.f32 %v6879, %v6879
    %v7035 = vmul.f32 %v6882, %v6882
    %v7036 = vmul.f32 %v6887, %v6887
    %v7037 = vmul.f32 %v6890, %v6890
    %v7038 = vmul.f32 %v6895, %v6895
    %v7039 = vmul.f32 %v6898, %v6898
    %v7040 = vmul.f32 %v6903, %v6903
    %v7041 = vmul.f32 %v6906, %v6906
    %v7042 = vadd.f32 %v6978, %v6979
    %v7043 = vadd.f32 %v7042, %v6980
    %v7044 = vadd.f32 %v7043, %v6981
    %v7045 = vadd.f32 %v7044, %v6982
    %v7046 = vadd.f32 %v7045, %v6983
    %v7047 = vadd.f32 %v7046, %v6984
    %v7048 = vadd.f32 %v7047, %v6985
    %v7049 = vadd.f32 %v7048, %v6986
    %v7050 = vadd.f32 %v7049, %v6987
    %v7051 = vadd.f32 %v7050, %v6988
    %v7052 = vadd.f32 %v7051, %v6989
    %v7053 = vadd.f32 %v7052, %v6990
    %v7054 = vadd.f32 %v7053, %v6991
    %v7055 = vadd.f32 %v7054, %v6992
    %v7056 = vadd.f32 %v7055, %v6993
    %v7057 = vadd.f32 %v7056, %v6994
    %v7058 = vadd.f32 %v7057, %v6995
    %v7059 = vadd.f32 %v7058, %v6996
    %v7060 = vadd.f32 %v7059, %v6997
    %v7061 = vadd.f32 %v7060, %v6998
    %v7062 = vadd.f32 %v7061, %v6999
    %v7063 = vadd.f32 %v7062, %v7000
    %v7064 = vadd.f32 %v7063, %v7001
    %v7065 = vadd.f32 %v7064, %v7002
    %v7066 = vadd.f32 %v7065, %v7003
    %v7067 = vadd.f32 %v7066, %v7004
    %v7068 = vadd.f32 %v7067, %v7005
    %v7069 = vadd.f32 %v7068, %v7006
    %v7070 = vadd.f32 %v7069, %v7007
    %v7071 = vadd.f32 %v7070, %v7008
    %v7072 = vadd.f32 %v7071, %v7009
    %v7073 = vadd.f32 %v7072, %v7010
    %v7074 = vadd.f32 %v7073, %v7011
    %v7075 = vadd.f32 %v7074, %v7012
    %v7076 = vadd.f32 %v7075, %v7013
    %v7077 = vadd.f32 %v7076, %v7014
    %v7078 = vadd.f32 %v7077, %v7015
    %v7079 = vadd.f32 %v7078, %v7016
    %v7080 = vadd.f32 %v7079, %v7017
    %v7081 = vadd.f32 %v7080, %v7018
    %v7082 = vadd.f32 %v7081, %v7019
    %v7083 = vadd.f32 %v7082, %v7020
    %v7084 = vadd.f32 %v7083, %v7021
    %v7085 = vadd.f32 %v7084, %v7022
    %v7086 = vadd.f32 %v7085, %v7023
    %v7087 = vadd.f32 %v7086, %v7024
    %v7088 = vadd.f32 %v7087, %v7025
    %v7089 = vadd.f32 %v7088, %v7026
    %v7090 = vadd.f32 %v7089, %v7027
    %v7091 = vadd.f32 %v7090, %v7028
    %v7092 = vadd.f32 %v7091, %v7029
    %v7093 = vadd.f32 %v7092, %v7030
    %v7094 = vadd.f32 %v7093, %v7031
    %v7095 = vadd.f32 %v7094, %v7032
    %v7096 = vadd.f32 %v7095, %v7033
    %v7097 = vadd.f32 %v7096, %v7034
    %v7098 = vadd.f32 %v7097, %v7035
    %v7099 = vadd.f32 %v7098, %v7036
    %v7100 = vadd.f32 %v7099, %v7037
    %v7101 = vadd.f32 %v7100, %v7038
    %v7102 = vadd.f32 %v7101, %v7039
    %v7103 = vadd.f32 %v7102, %v7040
    %v7104 = vadd.f32 %v7103, %v7041
    %v7105 = vrot.slane %v7104, 4
    %v7106 = vadd.f32 %v7104, %v7105
    %v7107 = vrot.slane %v7106, 2
    %v7108 = vadd.f32 %v7106, %v7107
    %v7109 = vrot.slane %v7108, 1
    %v7110 = vadd.f32 %v7108, %v7109
    %v7111 = vmul.f32 %v6977, 0.001953125
    %v7112 = vmul.f32 %v7110, 0.001953125
    %v7113 = vmul.f32 %v7111, %v7111
    %v7114 = vsub.f32 %v7112, %v7113
    %v7115 = vsub.f32 %v6655, %v7111
    %v7116 = vsub.f32 %v6658, %v7111
    %v7117 = vsub.f32 %v6663, %v7111
    %v7118 = vsub.f32 %v6666, %v7111
    %v7119 = vsub.f32 %v6671, %v7111
    %v7120 = vsub.f32 %v6674, %v7111
    %v7121 = vsub.f32 %v6679, %v7111
    %v7122 = vsub.f32 %v6682, %v7111
    %v7123 = vsub.f32 %v6687, %v7111
    %v7124 = vsub.f32 %v6690, %v7111
    %v7125 = vsub.f32 %v6695, %v7111
    %v7126 = vsub.f32 %v6698, %v7111
    %v7127 = vsub.f32 %v6703, %v7111
    %v7128 = vsub.f32 %v6706, %v7111
    %v7129 = vsub.f32 %v6711, %v7111
    %v7130 = vsub.f32 %v6714, %v7111
    %v7131 = vsub.f32 %v6719, %v7111
    %v7132 = vsub.f32 %v6722, %v7111
    %v7133 = vsub.f32 %v6727, %v7111
    %v7134 = vsub.f32 %v6730, %v7111
    %v7135 = vsub.f32 %v6735, %v7111
    %v7136 = vsub.f32 %v6738, %v7111
    %v7137 = vsub.f32 %v6743, %v7111
    %v7138 = vsub.f32 %v6746, %v7111
    %v7139 = vsub.f32 %v6751, %v7111
    %v7140 = vsub.f32 %v6754, %v7111
    %v7141 = vsub.f32 %v6759, %v7111
    %v7142 = vsub.f32 %v6762, %v7111
    %v7143 = vsub.f32 %v6767, %v7111
    %v7144 = vsub.f32 %v6770, %v7111
    %v7145 = vsub.f32 %v6775, %v7111
    %v7146 = vsub.f32 %v6778, %v7111
    %v7147 = vsub.f32 %v6783, %v7111
    %v7148 = vsub.f32 %v6786, %v7111
    %v7149 = vsub.f32 %v6791, %v7111
    %v7150 = vsub.f32 %v6794, %v7111
    %v7151 = vsub.f32 %v6799, %v7111
    %v7152 = vsub.f32 %v6802, %v7111
    %v7153 = vsub.f32 %v6807, %v7111
    %v7154 = vsub.f32 %v6810, %v7111
    %v7155 = vsub.f32 %v6815, %v7111
    %v7156 = vsub.f32 %v6818, %v7111
    %v7157 = vsub.f32 %v6823, %v7111
    %v7158 = vsub.f32 %v6826, %v7111
    %v7159 = vsub.f32 %v6831, %v7111
    %v7160 = vsub.f32 %v6834, %v7111
    %v7161 = vsub.f32 %v6839, %v7111
    %v7162 = vsub.f32 %v6842, %v7111
    %v7163 = vsub.f32 %v6847, %v7111
    %v7164 = vsub.f32 %v6850, %v7111
    %v7165 = vsub.f32 %v6855, %v7111
    %v7166 = vsub.f32 %v6858, %v7111
    %v7167 = vsub.f32 %v6863, %v7111
    %v7168 = vsub.f32 %v6866, %v7111
    %v7169 = vsub.f32 %v6871, %v7111
    %v7170 = vsub.f32 %v6874, %v7111
    %v7171 = vsub.f32 %v6879, %v7111
    %v7172 = vsub.f32 %v6882, %v7111
    %v7173 = vsub.f32 %v6887, %v7111
    %v7174 = vsub.f32 %v6890, %v7111
    %v7175 = vsub.f32 %v6895, %v7111
    %v7176 = vsub.f32 %v6898, %v7111
    %v7177 = vsub.f32 %v6903, %v7111
    %v7178 = vsub.f32 %v6906, %v7111
    %v7179 = vadd.f32 %v7114, 1e-05
    %v7180 = vrsqrt.pop %v7179
    %v7181 = vmul.f32 %v7115, %v7180
    %v7182 = vmul.f32 %v7116, %v7180
    %v7183 = vmul.f32 %v7117, %v7180
    %v7184 = vmul.f32 %v7118, %v7180
    %v7185 = vmul.f32 %v7119, %v7180
    %v7186 = vmul.f32 %v7120, %v7180
    %v7187 = vmul.f32 %v7121, %v7180
    %v7188 = vmul.f32 %v7122, %v7180
    %v7189 = vmul.f32 %v7123, %v7180
    %v7190 = vmul.f32 %v7124, %v7180
    %v7191 = vmul.f32 %v7125, %v7180
    %v7192 = vmul.f32 %v7126, %v7180
    %v7193 = vmul.f32 %v7127, %v7180
    %v7194 = vmul.f32 %v7128, %v7180
    %v7195 = vmul.f32 %v7129, %v7180
    %v7196 = vmul.f32 %v7130, %v7180
    %v7197 = vmul.f32 %v7131, %v7180
    %v7198 = vmul.f32 %v7132, %v7180
    %v7199 = vmul.f32 %v7133, %v7180
    %v7200 = vmul.f32 %v7134, %v7180
    %v7201 = vmul.f32 %v7135, %v7180
    %v7202 = vmul.f32 %v7136, %v7180
    %v7203 = vmul.f32 %v7137, %v7180
    %v7204 = vmul.f32 %v7138, %v7180
    %v7205 = vmul.f32 %v7139, %v7180
    %v7206 = vmul.f32 %v7140, %v7180
    %v7207 = vmul.f32 %v7141, %v7180
    %v7208 = vmul.f32 %v7142, %v7180
    %v7209 = vmul.f32 %v7143, %v7180
    %v7210 = vmul.f32 %v7144, %v7180
    %v7211 = vmul.f32 %v7145, %v7180
    %v7212 = vmul.f32 %v7146, %v7180
    %v7213 = vmul.f32 %v7147, %v7180
    %v7214 = vmul.f32 %v7148, %v7180
    %v7215 = vmul.f32 %v7149, %v7180
    %v7216 = vmul.f32 %v7150, %v7180
    %v7217 = vmul.f32 %v7151, %v7180
    %v7218 = vmul.f32 %v7152, %v7180
    %v7219 = vmul.f32 %v7153, %v7180
    %v7220 = vmul.f32 %v7154, %v7180
    %v7221 = vmul.f32 %v7155, %v7180
    %v7222 = vmul.f32 %v7156, %v7180
    %v7223 = vmul.f32 %v7157, %v7180
    %v7224 = vmul.f32 %v7158, %v7180
    %v7225 = vmul.f32 %v7159, %v7180
    %v7226 = vmul.f32 %v7160, %v7180
    %v7227 = vmul.f32 %v7161, %v7180
    %v7228 = vmul.f32 %v7162, %v7180
    %v7229 = vmul.f32 %v7163, %v7180
    %v7230 = vmul.f32 %v7164, %v7180
    %v7231 = vmul.f32 %v7165, %v7180
    %v7232 = vmul.f32 %v7166, %v7180
    %v7233 = vmul.f32 %v7167, %v7180
    %v7234 = vmul.f32 %v7168, %v7180
    %v7235 = vmul.f32 %v7169, %v7180
    %v7236 = vmul.f32 %v7170, %v7180
    %v7237 = vmul.f32 %v7171, %v7180
    %v7238 = vmul.f32 %v7172, %v7180
    %v7239 = vmul.f32 %v7173, %v7180
    %v7240 = vmul.f32 %v7174, %v7180
    %v7241 = vmul.f32 %v7175, %v7180
    %v7242 = vmul.f32 %v7176, %v7180
    %v7243 = vmul.f32 %v7177, %v7180
    %v7244 = vmul.f32 %v7178, %v7180
    %v7245 = vld [vmem:[%s3] sm:$0x1]
    %v7247 = vlaneseq
    %v7248 = vshrl.u32 %v7247, 7
    %v7249 = vsub.s32 0, %v7248
    %v7250 = vrot.slane %v7245, %v7249
    %v7252 = vmul.f32 %v7181, %v7250
    %v7253 = vmul.f32 %v7182, %v7250
    %v7254 = vmul.f32 %v7183, %v7250
    %v7255 = vmul.f32 %v7184, %v7250
    %v7256 = vmul.f32 %v7185, %v7250
    %v7257 = vmul.f32 %v7186, %v7250
    %v7258 = vmul.f32 %v7187, %v7250
    %v7259 = vmul.f32 %v7188, %v7250
    %v7260 = vmul.f32 %v7189, %v7250
    %v7261 = vmul.f32 %v7190, %v7250
    %v7262 = vmul.f32 %v7191, %v7250
    %v7263 = vmul.f32 %v7192, %v7250
    %v7264 = vmul.f32 %v7193, %v7250
    %v7265 = vmul.f32 %v7194, %v7250
    %v7266 = vmul.f32 %v7195, %v7250
    %v7267 = vmul.f32 %v7196, %v7250
    %v7268 = vmul.f32 %v7197, %v7250
    %v7269 = vmul.f32 %v7198, %v7250
    %v7270 = vmul.f32 %v7199, %v7250
    %v7271 = vmul.f32 %v7200, %v7250
    %v7272 = vmul.f32 %v7201, %v7250
    %v7273 = vmul.f32 %v7202, %v7250
    %v7274 = vmul.f32 %v7203, %v7250
    %v7275 = vmul.f32 %v7204, %v7250
    %v7276 = vmul.f32 %v7205, %v7250
    %v7277 = vmul.f32 %v7206, %v7250
    %v7278 = vmul.f32 %v7207, %v7250
    %v7279 = vmul.f32 %v7208, %v7250
    %v7280 = vmul.f32 %v7209, %v7250
    %v7281 = vmul.f32 %v7210, %v7250
    %v7282 = vmul.f32 %v7211, %v7250
    %v7283 = vmul.f32 %v7212, %v7250
    %v7284 = vmul.f32 %v7213, %v7250
    %v7285 = vmul.f32 %v7214, %v7250
    %v7286 = vmul.f32 %v7215, %v7250
    %v7287 = vmul.f32 %v7216, %v7250
    %v7288 = vmul.f32 %v7217, %v7250
    %v7289 = vmul.f32 %v7218, %v7250
    %v7290 = vmul.f32 %v7219, %v7250
    %v7291 = vmul.f32 %v7220, %v7250
    %v7292 = vmul.f32 %v7221, %v7250
    %v7293 = vmul.f32 %v7222, %v7250
    %v7294 = vmul.f32 %v7223, %v7250
    %v7295 = vmul.f32 %v7224, %v7250
    %v7296 = vmul.f32 %v7225, %v7250
    %v7297 = vmul.f32 %v7226, %v7250
    %v7298 = vmul.f32 %v7227, %v7250
    %v7299 = vmul.f32 %v7228, %v7250
    %v7300 = vmul.f32 %v7229, %v7250
    %v7301 = vmul.f32 %v7230, %v7250
    %v7302 = vmul.f32 %v7231, %v7250
    %v7303 = vmul.f32 %v7232, %v7250
    %v7304 = vmul.f32 %v7233, %v7250
    %v7305 = vmul.f32 %v7234, %v7250
    %v7306 = vmul.f32 %v7235, %v7250
    %v7307 = vmul.f32 %v7236, %v7250
    %v7308 = vmul.f32 %v7237, %v7250
    %v7309 = vmul.f32 %v7238, %v7250
    %v7310 = vmul.f32 %v7239, %v7250
    %v7311 = vmul.f32 %v7240, %v7250
    %v7312 = vmul.f32 %v7241, %v7250
    %v7313 = vmul.f32 %v7242, %v7250
    %v7314 = vmul.f32 %v7243, %v7250
    %v7315 = vmul.f32 %v7244, %v7250
    %v7316 = vld [vmem:[%s4] sm:$0x1]
    %v7318 = vlaneseq
    %v7319 = vshrl.u32 %v7318, 7
    %v7320 = vsub.s32 0, %v7319
    %v7321 = vrot.slane %v7316, %v7320
    %v7323 = vadd.f32 %v7252, %v7321
    %v7324 = vadd.f32 %v7253, %v7321
    %v7325 = vadd.f32 %v7254, %v7321
    %v7326 = vadd.f32 %v7255, %v7321
    %v7327 = vadd.f32 %v7256, %v7321
    %v7328 = vadd.f32 %v7257, %v7321
    %v7329 = vadd.f32 %v7258, %v7321
    %v7330 = vadd.f32 %v7259, %v7321
    %v7331 = vadd.f32 %v7260, %v7321
    %v7332 = vadd.f32 %v7261, %v7321
    %v7333 = vadd.f32 %v7262, %v7321
    %v7334 = vadd.f32 %v7263, %v7321
    %v7335 = vadd.f32 %v7264, %v7321
    %v7336 = vadd.f32 %v7265, %v7321
    %v7337 = vadd.f32 %v7266, %v7321
    %v7338 = vadd.f32 %v7267, %v7321
    %v7339 = vadd.f32 %v7268, %v7321
    %v7340 = vadd.f32 %v7269, %v7321
    %v7341 = vadd.f32 %v7270, %v7321
    %v7342 = vadd.f32 %v7271, %v7321
    %v7343 = vadd.f32 %v7272, %v7321
    %v7344 = vadd.f32 %v7273, %v7321
    %v7345 = vadd.f32 %v7274, %v7321
    %v7346 = vadd.f32 %v7275, %v7321
    %v7347 = vadd.f32 %v7276, %v7321
    %v7348 = vadd.f32 %v7277, %v7321
    %v7349 = vadd.f32 %v7278, %v7321
    %v7350 = vadd.f32 %v7279, %v7321
    %v7351 = vadd.f32 %v7280, %v7321
    %v7352 = vadd.f32 %v7281, %v7321
    %v7353 = vadd.f32 %v7282, %v7321
    %v7354 = vadd.f32 %v7283, %v7321
    %v7355 = vadd.f32 %v7284, %v7321
    %v7356 = vadd.f32 %v7285, %v7321
    %v7357 = vadd.f32 %v7286, %v7321
    %v7358 = vadd.f32 %v7287, %v7321
    %v7359 = vadd.f32 %v7288, %v7321
    %v7360 = vadd.f32 %v7289, %v7321
    %v7361 = vadd.f32 %v7290, %v7321
    %v7362 = vadd.f32 %v7291, %v7321
    %v7363 = vadd.f32 %v7292, %v7321
    %v7364 = vadd.f32 %v7293, %v7321
    %v7365 = vadd.f32 %v7294, %v7321
    %v7366 = vadd.f32 %v7295, %v7321
    %v7367 = vadd.f32 %v7296, %v7321
    %v7368 = vadd.f32 %v7297, %v7321
    %v7369 = vadd.f32 %v7298, %v7321
    %v7370 = vadd.f32 %v7299, %v7321
    %v7371 = vadd.f32 %v7300, %v7321
    %v7372 = vadd.f32 %v7301, %v7321
    %v7373 = vadd.f32 %v7302, %v7321
    %v7374 = vadd.f32 %v7303, %v7321
    %v7375 = vadd.f32 %v7304, %v7321
    %v7376 = vadd.f32 %v7305, %v7321
    %v7377 = vadd.f32 %v7306, %v7321
    %v7378 = vadd.f32 %v7307, %v7321
    %v7379 = vadd.f32 %v7308, %v7321
    %v7380 = vadd.f32 %v7309, %v7321
    %v7381 = vadd.f32 %v7310, %v7321
    %v7382 = vadd.f32 %v7311, %v7321
    %v7383 = vadd.f32 %v7312, %v7321
    %v7384 = vadd.f32 %v7313, %v7321
    %v7385 = vadd.f32 %v7314, %v7321
    %v7386 = vadd.f32 %v7315, %v7321
    %v7387 = vmax.f32 %v7323, 0.0
    %v7388 = vmax.f32 %v7324, 0.0
    %v7389 = vmax.f32 %v7325, 0.0
    %v7390 = vmax.f32 %v7326, 0.0
    %v7391 = vmax.f32 %v7327, 0.0
    %v7392 = vmax.f32 %v7328, 0.0
    %v7393 = vmax.f32 %v7329, 0.0
    %v7394 = vmax.f32 %v7330, 0.0
    %v7395 = vmax.f32 %v7331, 0.0
    %v7396 = vmax.f32 %v7332, 0.0
    %v7397 = vmax.f32 %v7333, 0.0
    %v7398 = vmax.f32 %v7334, 0.0
    %v7399 = vmax.f32 %v7335, 0.0
    %v7400 = vmax.f32 %v7336, 0.0
    %v7401 = vmax.f32 %v7337, 0.0
    %v7402 = vmax.f32 %v7338, 0.0
    %v7403 = vmax.f32 %v7339, 0.0
    %v7404 = vmax.f32 %v7340, 0.0
    %v7405 = vmax.f32 %v7341, 0.0
    %v7406 = vmax.f32 %v7342, 0.0
    %v7407 = vmax.f32 %v7343, 0.0
    %v7408 = vmax.f32 %v7344, 0.0
    %v7409 = vmax.f32 %v7345, 0.0
    %v7410 = vmax.f32 %v7346, 0.0
    %v7411 = vmax.f32 %v7347, 0.0
    %v7412 = vmax.f32 %v7348, 0.0
    %v7413 = vmax.f32 %v7349, 0.0
    %v7414 = vmax.f32 %v7350, 0.0
    %v7415 = vmax.f32 %v7351, 0.0
    %v7416 = vmax.f32 %v7352, 0.0
    %v7417 = vmax.f32 %v7353, 0.0
    %v7418 = vmax.f32 %v7354, 0.0
    %v7419 = vmax.f32 %v7355, 0.0
    %v7420 = vmax.f32 %v7356, 0.0
    %v7421 = vmax.f32 %v7357, 0.0
    %v7422 = vmax.f32 %v7358, 0.0
    %v7423 = vmax.f32 %v7359, 0.0
    %v7424 = vmax.f32 %v7360, 0.0
    %v7425 = vmax.f32 %v7361, 0.0
    %v7426 = vmax.f32 %v7362, 0.0
    %v7427 = vmax.f32 %v7363, 0.0
    %v7428 = vmax.f32 %v7364, 0.0
    %v7429 = vmax.f32 %v7365, 0.0
    %v7430 = vmax.f32 %v7366, 0.0
    %v7431 = vmax.f32 %v7367, 0.0
    %v7432 = vmax.f32 %v7368, 0.0
    %v7433 = vmax.f32 %v7369, 0.0
    %v7434 = vmax.f32 %v7370, 0.0
    %v7435 = vmax.f32 %v7371, 0.0
    %v7436 = vmax.f32 %v7372, 0.0
    %v7437 = vmax.f32 %v7373, 0.0
    %v7438 = vmax.f32 %v7374, 0.0
    %v7439 = vmax.f32 %v7375, 0.0
    %v7440 = vmax.f32 %v7376, 0.0
    %v7441 = vmax.f32 %v7377, 0.0
    %v7442 = vmax.f32 %v7378, 0.0
    %v7443 = vmax.f32 %v7379, 0.0
    %v7444 = vmax.f32 %v7380, 0.0
    %v7445 = vmax.f32 %v7381, 0.0
    %v7446 = vmax.f32 %v7382, 0.0
    %v7447 = vmax.f32 %v7383, 0.0
    %v7448 = vmax.f32 %v7384, 0.0
    %v7449 = vmax.f32 %v7385, 0.0
    %v7450 = vmax.f32 %v7386, 0.0
    %v7454 = vrot.slane %v7448, 7
    %v7455 = vrot.slane %v7449, 7
    %v7456 = vsel %vm111, %v7454, %v7455
    %v7457 = vrot.slane %v7450, 7
    %v7458 = vsel %vm111, %v7455, %v7457
    %v7523 = vrot.slane %v7387, 7
    %v7524 = vrot.slane %v7388, 7
    %v7525 = vsel %vm111, %v7523, %v7524
    %v7526 = vrot.slane %v7389, 7
    %v7527 = vsel %vm111, %v7524, %v7526
    %v7528 = vrot.slane %v7390, 7
    %v7529 = vsel %vm111, %v7526, %v7528
    %v7530 = vrot.slane %v7391, 7
    %v7531 = vsel %vm111, %v7528, %v7530
    %v7532 = vrot.slane %v7392, 7
    %v7533 = vsel %vm111, %v7530, %v7532
    %v7534 = vrot.slane %v7393, 7
    %v7535 = vsel %vm111, %v7532, %v7534
    %v7536 = vrot.slane %v7394, 7
    %v7537 = vsel %vm111, %v7534, %v7536
    %v7538 = vrot.slane %v7395, 7
    %v7539 = vsel %vm111, %v7536, %v7538
    %v7540 = vrot.slane %v7396, 7
    %v7541 = vsel %vm111, %v7538, %v7540
    %v7542 = vrot.slane %v7397, 7
    %v7543 = vsel %vm111, %v7540, %v7542
    %v7544 = vrot.slane %v7398, 7
    %v7545 = vsel %vm111, %v7542, %v7544
    %v7546 = vrot.slane %v7399, 7
    %v7547 = vsel %vm111, %v7544, %v7546
    %v7548 = vrot.slane %v7400, 7
    %v7549 = vsel %vm111, %v7546, %v7548
    %v7550 = vrot.slane %v7401, 7
    %v7551 = vsel %vm111, %v7548, %v7550
    %v7552 = vrot.slane %v7402, 7
    %v7553 = vsel %vm111, %v7550, %v7552
    %v7554 = vrot.slane %v7403, 7
    %v7555 = vsel %vm111, %v7552, %v7554
    %v7556 = vrot.slane %v7404, 7
    %v7557 = vsel %vm111, %v7554, %v7556
    %v7558 = vrot.slane %v7405, 7
    %v7559 = vsel %vm111, %v7556, %v7558
    %v7560 = vrot.slane %v7406, 7
    %v7561 = vsel %vm111, %v7558, %v7560
    %v7562 = vrot.slane %v7407, 7
    %v7563 = vsel %vm111, %v7560, %v7562
    %v7564 = vrot.slane %v7408, 7
    %v7565 = vsel %vm111, %v7562, %v7564
    %v7566 = vrot.slane %v7409, 7
    %v7567 = vsel %vm111, %v7564, %v7566
    %v7568 = vrot.slane %v7410, 7
    %v7569 = vsel %vm111, %v7566, %v7568
    %v7570 = vrot.slane %v7411, 7
    %v7571 = vsel %vm111, %v7568, %v7570
    %v7572 = vrot.slane %v7412, 7
    %v7573 = vsel %vm111, %v7570, %v7572
    %v7574 = vrot.slane %v7413, 7
    %v7575 = vsel %vm111, %v7572, %v7574
    %v7576 = vrot.slane %v7414, 7
    %v7577 = vsel %vm111, %v7574, %v7576
    %v7578 = vrot.slane %v7415, 7
    %v7579 = vsel %vm111, %v7576, %v7578
    %v7580 = vrot.slane %v7416, 7
    %v7581 = vsel %vm111, %v7578, %v7580
    %v7582 = vrot.slane %v7417, 7
    %v7583 = vsel %vm111, %v7580, %v7582
    %v7584 = vrot.slane %v7418, 7
    %v7585 = vsel %vm111, %v7582, %v7584
    %v7586 = vrot.slane %v7419, 7
    %v7587 = vsel %vm111, %v7584, %v7586
    %v7588 = vrot.slane %v7420, 7
    %v7589 = vsel %vm111, %v7586, %v7588
    %v7590 = vrot.slane %v7421, 7
    %v7591 = vsel %vm111, %v7588, %v7590
    %v7592 = vrot.slane %v7422, 7
    %v7593 = vsel %vm111, %v7590, %v7592
    %v7594 = vrot.slane %v7423, 7
    %v7595 = vsel %vm111, %v7592, %v7594
    %v7596 = vrot.slane %v7424, 7
    %v7597 = vsel %vm111, %v7594, %v7596
    %v7598 = vrot.slane %v7425, 7
    %v7599 = vsel %vm111, %v7596, %v7598
    %v7600 = vrot.slane %v7426, 7
    %v7601 = vsel %vm111, %v7598, %v7600
    %v7602 = vrot.slane %v7427, 7
    %v7603 = vsel %vm111, %v7600, %v7602
    %v7604 = vrot.slane %v7428, 7
    %v7605 = vsel %vm111, %v7602, %v7604
    %v7606 = vrot.slane %v7429, 7
    %v7607 = vsel %vm111, %v7604, %v7606
    %v7608 = vrot.slane %v7430, 7
    %v7609 = vsel %vm111, %v7606, %v7608
    %v7610 = vrot.slane %v7431, 7
    %v7611 = vsel %vm111, %v7608, %v7610
    %v7612 = vrot.slane %v7432, 7
    %v7613 = vsel %vm111, %v7610, %v7612
    %v7614 = vrot.slane %v7433, 7
    %v7615 = vsel %vm111, %v7612, %v7614
    %v7616 = vrot.slane %v7434, 7
    %v7617 = vsel %vm111, %v7614, %v7616
    %v7618 = vrot.slane %v7435, 7
    %v7619 = vsel %vm111, %v7616, %v7618
    %v7620 = vrot.slane %v7436, 7
    %v7621 = vsel %vm111, %v7618, %v7620
    %v7622 = vrot.slane %v7437, 7
    %v7623 = vsel %vm111, %v7620, %v7622
    %v7624 = vrot.slane %v7438, 7
    %v7625 = vsel %vm111, %v7622, %v7624
    %v7626 = vrot.slane %v7439, 7
    %v7627 = vsel %vm111, %v7624, %v7626
    %v7628 = vrot.slane %v7440, 7
    %v7629 = vsel %vm111, %v7626, %v7628
    %v7630 = vrot.slane %v7441, 7
    %v7631 = vsel %vm111, %v7628, %v7630
    %v7632 = vrot.slane %v7442, 7
    %v7633 = vsel %vm111, %v7630, %v7632
    %v7634 = vrot.slane %v7443, 7
    %v7635 = vsel %vm111, %v7632, %v7634
    %v7636 = vrot.slane %v7444, 7
    %v7637 = vsel %vm111, %v7634, %v7636
    %v7638 = vrot.slane %v7445, 7
    %v7639 = vsel %vm111, %v7636, %v7638
    %v7640 = vrot.slane %v7446, 7
    %v7641 = vsel %vm111, %v7638, %v7640
    %v7642 = vrot.slane %v7447, 7
    %v7643 = vsel %vm111, %v7640, %v7642
    %v7644 = vsel %vm111, %v7642, %v7454
    %v7707 = vsel %vm111, %v7457, %v7523
    %v7708 = vmul.f32 %v7456, %v433
    %v7709 = vmul.f32 %v7458, %v438
    %v7710 = vmul.f32 %v7707, %v443
    %v7711 = vmul.f32 %v7525, %v448
    %v7712 = vmul.f32 %v7527, %v453
    %v7713 = vmul.f32 %v7529, %v458
    %v7714 = vmul.f32 %v7531, %v463
    %v7715 = vmul.f32 %v7533, %v468
    %v7716 = vmul.f32 %v7535, %v473
    %v7717 = vmul.f32 %v7537, %v478
    %v7718 = vmul.f32 %v7539, %v483
    %v7719 = vmul.f32 %v7541, %v488
    %v7720 = vmul.f32 %v7543, %v493
    %v7721 = vmul.f32 %v7545, %v498
    %v7722 = vmul.f32 %v7547, %v503
    %v7723 = vmul.f32 %v7549, %v508
    %v7724 = vmul.f32 %v7551, %v513
    %v7725 = vmul.f32 %v7553, %v518
    %v7726 = vmul.f32 %v7555, %v523
    %v7727 = vmul.f32 %v7557, %v528
    %v7728 = vmul.f32 %v7559, %v533
    %v7729 = vmul.f32 %v7561, %v538
    %v7730 = vmul.f32 %v7563, %v543
    %v7731 = vmul.f32 %v7565, %v548
    %v7732 = vmul.f32 %v7567, %v553
    %v7733 = vmul.f32 %v7569, %v558
    %v7734 = vmul.f32 %v7571, %v563
    %v7735 = vmul.f32 %v7573, %v568
    %v7736 = vmul.f32 %v7575, %v573
    %v7737 = vmul.f32 %v7577, %v578
    %v7738 = vmul.f32 %v7579, %v583
    %v7739 = vmul.f32 %v7581, %v588
    %v7740 = vmul.f32 %v7583, %v593
    %v7741 = vmul.f32 %v7585, %v598
    %v7742 = vmul.f32 %v7587, %v603
    %v7743 = vmul.f32 %v7589, %v608
    %v7744 = vmul.f32 %v7591, %v613
    %v7745 = vmul.f32 %v7593, %v618
    %v7746 = vmul.f32 %v7595, %v623
    %v7747 = vmul.f32 %v7597, %v628
    %v7748 = vmul.f32 %v7599, %v633
    %v7749 = vmul.f32 %v7601, %v638
    %v7750 = vmul.f32 %v7603, %v643
    %v7751 = vmul.f32 %v7605, %v648
    %v7752 = vmul.f32 %v7607, %v653
    %v7753 = vmul.f32 %v7609, %v658
    %v7754 = vmul.f32 %v7611, %v663
    %v7755 = vmul.f32 %v7613, %v668
    %v7756 = vmul.f32 %v7615, %v673
    %v7757 = vmul.f32 %v7617, %v678
    %v7758 = vmul.f32 %v7619, %v683
    %v7759 = vmul.f32 %v7621, %v688
    %v7760 = vmul.f32 %v7623, %v693
    %v7761 = vmul.f32 %v7625, %v698
    %v7762 = vmul.f32 %v7627, %v703
    %v7763 = vmul.f32 %v7629, %v708
    %v7764 = vmul.f32 %v7631, %v713
    %v7765 = vmul.f32 %v7633, %v718
    %v7766 = vmul.f32 %v7635, %v723
    %v7767 = vmul.f32 %v7637, %v728
    %v7768 = vmul.f32 %v7639, %v733
    %v7769 = vmul.f32 %v7641, %v738
    %v7770 = vmul.f32 %v7643, %v743
    %v7771 = vmul.f32 %v7644, %v748
    %v7772 = vpack.c.bf16 %v7709, %v7708
    %v7773 = vpack.c.bf16 %v7711, %v7710
    %v7774 = vpack.c.bf16 %v7713, %v7712
    %v7775 = vpack.c.bf16 %v7715, %v7714
    %v7776 = vpack.c.bf16 %v7717, %v7716
    %v7777 = vpack.c.bf16 %v7719, %v7718
    %v7778 = vpack.c.bf16 %v7721, %v7720
    %v7779 = vpack.c.bf16 %v7723, %v7722
    %v7780 = vpack.c.bf16 %v7725, %v7724
    %v7781 = vpack.c.bf16 %v7727, %v7726
    %v7782 = vpack.c.bf16 %v7729, %v7728
    %v7783 = vpack.c.bf16 %v7731, %v7730
    %v7784 = vpack.c.bf16 %v7733, %v7732
    %v7785 = vpack.c.bf16 %v7735, %v7734
    %v7786 = vpack.c.bf16 %v7737, %v7736
    %v7787 = vpack.c.bf16 %v7739, %v7738
    %v7788 = vpack.c.bf16 %v7741, %v7740
    %v7789 = vpack.c.bf16 %v7743, %v7742
    %v7790 = vpack.c.bf16 %v7745, %v7744
    %v7791 = vpack.c.bf16 %v7747, %v7746
    %v7792 = vpack.c.bf16 %v7749, %v7748
    %v7793 = vpack.c.bf16 %v7751, %v7750
    %v7794 = vpack.c.bf16 %v7753, %v7752
    %v7795 = vpack.c.bf16 %v7755, %v7754
    %v7796 = vpack.c.bf16 %v7757, %v7756
    %v7797 = vpack.c.bf16 %v7759, %v7758
    %v7798 = vpack.c.bf16 %v7761, %v7760
    %v7799 = vpack.c.bf16 %v7763, %v7762
    %v7800 = vpack.c.bf16 %v7765, %v7764
    %v7801 = vpack.c.bf16 %v7767, %v7766
    %v7802 = vpack.c.bf16 %v7769, %v7768
    %v7803 = vpack.c.bf16 %v7771, %v7770
    %v7804 = vmul.f32 %v7449, %v914
    %v7805 = vmul.f32 %v7450, %v919
    %v7806 = vmul.f32 %v7387, %v924
    %v7807 = vmul.f32 %v7388, %v929
    %v7808 = vmul.f32 %v7389, %v934
    %v7809 = vmul.f32 %v7390, %v939
    %v7810 = vmul.f32 %v7391, %v944
    %v7811 = vmul.f32 %v7392, %v949
    %v7812 = vmul.f32 %v7393, %v954
    %v7813 = vmul.f32 %v7394, %v959
    %v7814 = vmul.f32 %v7395, %v964
    %v7815 = vmul.f32 %v7396, %v969
    %v7816 = vmul.f32 %v7397, %v974
    %v7817 = vmul.f32 %v7398, %v979
    %v7818 = vmul.f32 %v7399, %v984
    %v7819 = vmul.f32 %v7400, %v989
    %v7820 = vmul.f32 %v7401, %v994
    %v7821 = vmul.f32 %v7402, %v999
    %v7822 = vmul.f32 %v7403, %v1004
    %v7823 = vmul.f32 %v7404, %v1009
    %v7824 = vmul.f32 %v7405, %v1014
    %v7825 = vmul.f32 %v7406, %v1019
    %v7826 = vmul.f32 %v7407, %v1024
    %v7827 = vmul.f32 %v7408, %v1029
    %v7828 = vmul.f32 %v7409, %v1034
    %v7829 = vmul.f32 %v7410, %v1039
    %v7830 = vmul.f32 %v7411, %v1044
    %v7831 = vmul.f32 %v7412, %v1049
    %v7832 = vmul.f32 %v7413, %v1054
    %v7833 = vmul.f32 %v7414, %v1059
    %v7834 = vmul.f32 %v7415, %v1064
    %v7835 = vmul.f32 %v7416, %v1069
    %v7836 = vmul.f32 %v7417, %v1074
    %v7837 = vmul.f32 %v7418, %v1079
    %v7838 = vmul.f32 %v7419, %v1084
    %v7839 = vmul.f32 %v7420, %v1089
    %v7840 = vmul.f32 %v7421, %v1094
    %v7841 = vmul.f32 %v7422, %v1099
    %v7842 = vmul.f32 %v7423, %v1104
    %v7843 = vmul.f32 %v7424, %v1109
    %v7844 = vmul.f32 %v7425, %v1114
    %v7845 = vmul.f32 %v7426, %v1119
    %v7846 = vmul.f32 %v7427, %v1124
    %v7847 = vmul.f32 %v7428, %v1129
    %v7848 = vmul.f32 %v7429, %v1134
    %v7849 = vmul.f32 %v7430, %v1139
    %v7850 = vmul.f32 %v7431, %v1144
    %v7851 = vmul.f32 %v7432, %v1149
    %v7852 = vmul.f32 %v7433, %v1154
    %v7853 = vmul.f32 %v7434, %v1159
    %v7854 = vmul.f32 %v7435, %v1164
    %v7855 = vmul.f32 %v7436, %v1169
    %v7856 = vmul.f32 %v7437, %v1174
    %v7857 = vmul.f32 %v7438, %v1179
    %v7858 = vmul.f32 %v7439, %v1184
    %v7859 = vmul.f32 %v7440, %v1189
    %v7860 = vmul.f32 %v7441, %v1194
    %v7861 = vmul.f32 %v7442, %v1199
    %v7862 = vmul.f32 %v7443, %v1204
    %v7863 = vmul.f32 %v7444, %v1209
    %v7864 = vmul.f32 %v7445, %v1214
    %v7865 = vmul.f32 %v7446, %v1219
    %v7866 = vmul.f32 %v7447, %v1224
    %v7867 = vmul.f32 %v7448, %v1229
    %v7868 = vpack.c.bf16 %v7805, %v7804
    %v7869 = vpack.c.bf16 %v7807, %v7806
    %v7870 = vpack.c.bf16 %v7809, %v7808
    %v7871 = vpack.c.bf16 %v7811, %v7810
    %v7872 = vpack.c.bf16 %v7813, %v7812
    %v7873 = vpack.c.bf16 %v7815, %v7814
    %v7874 = vpack.c.bf16 %v7817, %v7816
    %v7875 = vpack.c.bf16 %v7819, %v7818
    %v7876 = vpack.c.bf16 %v7821, %v7820
    %v7877 = vpack.c.bf16 %v7823, %v7822
    %v7878 = vpack.c.bf16 %v7825, %v7824
    %v7879 = vpack.c.bf16 %v7827, %v7826
    %v7880 = vpack.c.bf16 %v7829, %v7828
    %v7881 = vpack.c.bf16 %v7831, %v7830
    %v7882 = vpack.c.bf16 %v7833, %v7832
    %v7883 = vpack.c.bf16 %v7835, %v7834
    %v7884 = vpack.c.bf16 %v7837, %v7836
    %v7885 = vpack.c.bf16 %v7839, %v7838
    %v7886 = vpack.c.bf16 %v7841, %v7840
    %v7887 = vpack.c.bf16 %v7843, %v7842
    %v7888 = vpack.c.bf16 %v7845, %v7844
    %v7889 = vpack.c.bf16 %v7847, %v7846
    %v7890 = vpack.c.bf16 %v7849, %v7848
    %v7891 = vpack.c.bf16 %v7851, %v7850
    %v7892 = vpack.c.bf16 %v7853, %v7852
    %v7893 = vpack.c.bf16 %v7855, %v7854
    %v7894 = vpack.c.bf16 %v7857, %v7856
    %v7895 = vpack.c.bf16 %v7859, %v7858
    %v7896 = vpack.c.bf16 %v7861, %v7860
    %v7897 = vpack.c.bf16 %v7863, %v7862
    %v7898 = vpack.c.bf16 %v7865, %v7864
    %v7899 = vpack.c.bf16 %v7867, %v7866
    %v7900 = vrot.slane %v7449, 1
    %v7901 = vrot.slane %v7450, 1
    %v7902 = vsel %vm1327, %v7900, %v7901
    %v7905 = vrot.slane %v7387, 1
    %v7906 = vrot.slane %v7388, 1
    %v7907 = vsel %vm1327, %v7905, %v7906
    %v7908 = vrot.slane %v7389, 1
    %v7909 = vsel %vm1327, %v7906, %v7908
    %v7910 = vrot.slane %v7390, 1
    %v7911 = vsel %vm1327, %v7908, %v7910
    %v7912 = vrot.slane %v7391, 1
    %v7913 = vsel %vm1327, %v7910, %v7912
    %v7914 = vrot.slane %v7392, 1
    %v7915 = vsel %vm1327, %v7912, %v7914
    %v7916 = vrot.slane %v7393, 1
    %v7917 = vsel %vm1327, %v7914, %v7916
    %v7918 = vrot.slane %v7394, 1
    %v7919 = vsel %vm1327, %v7916, %v7918
    %v7920 = vrot.slane %v7395, 1
    %v7921 = vsel %vm1327, %v7918, %v7920
    %v7922 = vrot.slane %v7396, 1
    %v7923 = vsel %vm1327, %v7920, %v7922
    %v7924 = vrot.slane %v7397, 1
    %v7925 = vsel %vm1327, %v7922, %v7924
    %v7926 = vrot.slane %v7398, 1
    %v7927 = vsel %vm1327, %v7924, %v7926
    %v7928 = vrot.slane %v7399, 1
    %v7929 = vsel %vm1327, %v7926, %v7928
    %v7930 = vrot.slane %v7400, 1
    %v7931 = vsel %vm1327, %v7928, %v7930
    %v7932 = vrot.slane %v7401, 1
    %v7933 = vsel %vm1327, %v7930, %v7932
    %v7934 = vrot.slane %v7402, 1
    %v7935 = vsel %vm1327, %v7932, %v7934
    %v7936 = vrot.slane %v7403, 1
    %v7937 = vsel %vm1327, %v7934, %v7936
    %v7938 = vrot.slane %v7404, 1
    %v7939 = vsel %vm1327, %v7936, %v7938
    %v7940 = vrot.slane %v7405, 1
    %v7941 = vsel %vm1327, %v7938, %v7940
    %v7942 = vrot.slane %v7406, 1
    %v7943 = vsel %vm1327, %v7940, %v7942
    %v7944 = vrot.slane %v7407, 1
    %v7945 = vsel %vm1327, %v7942, %v7944
    %v7946 = vrot.slane %v7408, 1
    %v7947 = vsel %vm1327, %v7944, %v7946
    %v7948 = vrot.slane %v7409, 1
    %v7949 = vsel %vm1327, %v7946, %v7948
    %v7950 = vrot.slane %v7410, 1
    %v7951 = vsel %vm1327, %v7948, %v7950
    %v7952 = vrot.slane %v7411, 1
    %v7953 = vsel %vm1327, %v7950, %v7952
    %v7954 = vrot.slane %v7412, 1
    %v7955 = vsel %vm1327, %v7952, %v7954
    %v7956 = vrot.slane %v7413, 1
    %v7957 = vsel %vm1327, %v7954, %v7956
    %v7958 = vrot.slane %v7414, 1
    %v7959 = vsel %vm1327, %v7956, %v7958
    %v7960 = vrot.slane %v7415, 1
    %v7961 = vsel %vm1327, %v7958, %v7960
    %v7962 = vrot.slane %v7416, 1
    %v7963 = vsel %vm1327, %v7960, %v7962
    %v7964 = vrot.slane %v7417, 1
    %v7965 = vsel %vm1327, %v7962, %v7964
    %v7966 = vrot.slane %v7418, 1
    %v7967 = vsel %vm1327, %v7964, %v7966
    %v7968 = vrot.slane %v7419, 1
    %v7969 = vsel %vm1327, %v7966, %v7968
    %v7970 = vrot.slane %v7420, 1
    %v7971 = vsel %vm1327, %v7968, %v7970
    %v7972 = vrot.slane %v7421, 1
    %v7973 = vsel %vm1327, %v7970, %v7972
    %v7974 = vrot.slane %v7422, 1
    %v7975 = vsel %vm1327, %v7972, %v7974
    %v7976 = vrot.slane %v7423, 1
    %v7977 = vsel %vm1327, %v7974, %v7976
    %v7978 = vrot.slane %v7424, 1
    %v7979 = vsel %vm1327, %v7976, %v7978
    %v7980 = vrot.slane %v7425, 1
    %v7981 = vsel %vm1327, %v7978, %v7980
    %v7982 = vrot.slane %v7426, 1
    %v7983 = vsel %vm1327, %v7980, %v7982
    %v7984 = vrot.slane %v7427, 1
    %v7985 = vsel %vm1327, %v7982, %v7984
    %v7986 = vrot.slane %v7428, 1
    %v7987 = vsel %vm1327, %v7984, %v7986
    %v7988 = vrot.slane %v7429, 1
    %v7989 = vsel %vm1327, %v7986, %v7988
    %v7990 = vrot.slane %v7430, 1
    %v7991 = vsel %vm1327, %v7988, %v7990
    %v7992 = vrot.slane %v7431, 1
    %v7993 = vsel %vm1327, %v7990, %v7992
    %v7994 = vrot.slane %v7432, 1
    %v7995 = vsel %vm1327, %v7992, %v7994
    %v7996 = vrot.slane %v7433, 1
    %v7997 = vsel %vm1327, %v7994, %v7996
    %v7998 = vrot.slane %v7434, 1
    %v7999 = vsel %vm1327, %v7996, %v7998
    %v8000 = vrot.slane %v7435, 1
    %v8001 = vsel %vm1327, %v7998, %v8000
    %v8002 = vrot.slane %v7436, 1
    %v8003 = vsel %vm1327, %v8000, %v8002
    %v8004 = vrot.slane %v7437, 1
    %v8005 = vsel %vm1327, %v8002, %v8004
    %v8006 = vrot.slane %v7438, 1
    %v8007 = vsel %vm1327, %v8004, %v8006
    %v8008 = vrot.slane %v7439, 1
    %v8009 = vsel %vm1327, %v8006, %v8008
    %v8010 = vrot.slane %v7440, 1
    %v8011 = vsel %vm1327, %v8008, %v8010
    %v8012 = vrot.slane %v7441, 1
    %v8013 = vsel %vm1327, %v8010, %v8012
    %v8014 = vrot.slane %v7442, 1
    %v8015 = vsel %vm1327, %v8012, %v8014
    %v8016 = vrot.slane %v7443, 1
    %v8017 = vsel %vm1327, %v8014, %v8016
    %v8018 = vrot.slane %v7444, 1
    %v8019 = vsel %vm1327, %v8016, %v8018
    %v8020 = vrot.slane %v7445, 1
    %v8021 = vsel %vm1327, %v8018, %v8020
    %v8022 = vrot.slane %v7446, 1
    %v8023 = vsel %vm1327, %v8020, %v8022
    %v8024 = vrot.slane %v7447, 1
    %v8025 = vsel %vm1327, %v8022, %v8024
    %v8026 = vrot.slane %v7448, 1
    %v8027 = vsel %vm1327, %v8024, %v8026
    %v8028 = vsel %vm1327, %v8026, %v7900
    %v8092 = vsel %vm1327, %v7901, %v7905
    %v8093 = vmul.f32 %v7902, %v1589
    %v8094 = vmul.f32 %v8092, %v1594
    %v8095 = vmul.f32 %v7907, %v1599
    %v8096 = vmul.f32 %v7909, %v1604
    %v8097 = vmul.f32 %v7911, %v1609
    %v8098 = vmul.f32 %v7913, %v1614
    %v8099 = vmul.f32 %v7915, %v1619
    %v8100 = vmul.f32 %v7917, %v1624
    %v8101 = vmul.f32 %v7919, %v1629
    %v8102 = vmul.f32 %v7921, %v1634
    %v8103 = vmul.f32 %v7923, %v1639
    %v8104 = vmul.f32 %v7925, %v1644
    %v8105 = vmul.f32 %v7927, %v1649
    %v8106 = vmul.f32 %v7929, %v1654
    %v8107 = vmul.f32 %v7931, %v1659
    %v8108 = vmul.f32 %v7933, %v1664
    %v8109 = vmul.f32 %v7935, %v1669
    %v8110 = vmul.f32 %v7937, %v1674
    %v8111 = vmul.f32 %v7939, %v1679
    %v8112 = vmul.f32 %v7941, %v1684
    %v8113 = vmul.f32 %v7943, %v1689
    %v8114 = vmul.f32 %v7945, %v1694
    %v8115 = vmul.f32 %v7947, %v1699
    %v8116 = vmul.f32 %v7949, %v1704
    %v8117 = vmul.f32 %v7951, %v1709
    %v8118 = vmul.f32 %v7953, %v1714
    %v8119 = vmul.f32 %v7955, %v1719
    %v8120 = vmul.f32 %v7957, %v1724
    %v8121 = vmul.f32 %v7959, %v1729
    %v8122 = vmul.f32 %v7961, %v1734
    %v8123 = vmul.f32 %v7963, %v1739
    %v8124 = vmul.f32 %v7965, %v1744
    %v8125 = vmul.f32 %v7967, %v1749
    %v8126 = vmul.f32 %v7969, %v1754
    %v8127 = vmul.f32 %v7971, %v1759
    %v8128 = vmul.f32 %v7973, %v1764
    %v8129 = vmul.f32 %v7975, %v1769
    %v8130 = vmul.f32 %v7977, %v1774
    %v8131 = vmul.f32 %v7979, %v1779
    %v8132 = vmul.f32 %v7981, %v1784
    %v8133 = vmul.f32 %v7983, %v1789
    %v8134 = vmul.f32 %v7985, %v1794
    %v8135 = vmul.f32 %v7987, %v1799
    %v8136 = vmul.f32 %v7989, %v1804
    %v8137 = vmul.f32 %v7991, %v1809
    %v8138 = vmul.f32 %v7993, %v1814
    %v8139 = vmul.f32 %v7995, %v1819
    %v8140 = vmul.f32 %v7997, %v1824
    %v8141 = vmul.f32 %v7999, %v1829
    %v8142 = vmul.f32 %v8001, %v1834
    %v8143 = vmul.f32 %v8003, %v1839
    %v8144 = vmul.f32 %v8005, %v1844
    %v8145 = vmul.f32 %v8007, %v1849
    %v8146 = vmul.f32 %v8009, %v1854
    %v8147 = vmul.f32 %v8011, %v1859
    %v8148 = vmul.f32 %v8013, %v1864
    %v8149 = vmul.f32 %v8015, %v1869
    %v8150 = vmul.f32 %v8017, %v1874
    %v8151 = vmul.f32 %v8019, %v1879
    %v8152 = vmul.f32 %v8021, %v1884
    %v8153 = vmul.f32 %v8023, %v1889
    %v8154 = vmul.f32 %v8025, %v1894
    %v8155 = vmul.f32 %v8027, %v1899
    %v8156 = vmul.f32 %v8028, %v1904
    %v8157 = vpack.c.bf16 %v8094, %v8093
    %v8158 = vpack.c.bf16 %v8096, %v8095
    %v8159 = vpack.c.bf16 %v8098, %v8097
    %v8160 = vpack.c.bf16 %v8100, %v8099
    %v8161 = vpack.c.bf16 %v8102, %v8101
    %v8162 = vpack.c.bf16 %v8104, %v8103
    %v8163 = vpack.c.bf16 %v8106, %v8105
    %v8164 = vpack.c.bf16 %v8108, %v8107
    %v8165 = vpack.c.bf16 %v8110, %v8109
    %v8166 = vpack.c.bf16 %v8112, %v8111
    %v8167 = vpack.c.bf16 %v8114, %v8113
    %v8168 = vpack.c.bf16 %v8116, %v8115
    %v8169 = vpack.c.bf16 %v8118, %v8117
    %v8170 = vpack.c.bf16 %v8120, %v8119
    %v8171 = vpack.c.bf16 %v8122, %v8121
    %v8172 = vpack.c.bf16 %v8124, %v8123
    %v8173 = vpack.c.bf16 %v8126, %v8125
    %v8174 = vpack.c.bf16 %v8128, %v8127
    %v8175 = vpack.c.bf16 %v8130, %v8129
    %v8176 = vpack.c.bf16 %v8132, %v8131
    %v8177 = vpack.c.bf16 %v8134, %v8133
    %v8178 = vpack.c.bf16 %v8136, %v8135
    %v8179 = vpack.c.bf16 %v8138, %v8137
    %v8180 = vpack.c.bf16 %v8140, %v8139
    %v8181 = vpack.c.bf16 %v8142, %v8141
    %v8182 = vpack.c.bf16 %v8144, %v8143
    %v8183 = vpack.c.bf16 %v8146, %v8145
    %v8184 = vpack.c.bf16 %v8148, %v8147
    %v8185 = vpack.c.bf16 %v8150, %v8149
    %v8186 = vpack.c.bf16 %v8152, %v8151
    %v8187 = vpack.c.bf16 %v8154, %v8153
    %v8188 = vpack.c.bf16 %v8156, %v8155
    %v8189 = vmul.f32 %v7707, %v2070
    %v8190 = vmul.f32 %v7525, %v2075
    %v8191 = vmul.f32 %v7527, %v2080
    %v8192 = vmul.f32 %v7529, %v2085
    %v8193 = vmul.f32 %v7531, %v2090
    %v8194 = vmul.f32 %v7533, %v2095
    %v8195 = vmul.f32 %v7535, %v2100
    %v8196 = vmul.f32 %v7537, %v2105
    %v8197 = vmul.f32 %v7539, %v2110
    %v8198 = vmul.f32 %v7541, %v2115
    %v8199 = vmul.f32 %v7543, %v2120
    %v8200 = vmul.f32 %v7545, %v2125
    %v8201 = vmul.f32 %v7547, %v2130
    %v8202 = vmul.f32 %v7549, %v2135
    %v8203 = vmul.f32 %v7551, %v2140
    %v8204 = vmul.f32 %v7553, %v2145
    %v8205 = vmul.f32 %v7555, %v2150
    %v8206 = vmul.f32 %v7557, %v2155
    %v8207 = vmul.f32 %v7559, %v2160
    %v8208 = vmul.f32 %v7561, %v2165
    %v8209 = vmul.f32 %v7563, %v2170
    %v8210 = vmul.f32 %v7565, %v2175
    %v8211 = vmul.f32 %v7567, %v2180
    %v8212 = vmul.f32 %v7569, %v2185
    %v8213 = vmul.f32 %v7571, %v2190
    %v8214 = vmul.f32 %v7573, %v2195
    %v8215 = vmul.f32 %v7575, %v2200
    %v8216 = vmul.f32 %v7577, %v2205
    %v8217 = vmul.f32 %v7579, %v2210
    %v8218 = vmul.f32 %v7581, %v2215
    %v8219 = vmul.f32 %v7583, %v2220
    %v8220 = vmul.f32 %v7585, %v2225
    %v8221 = vmul.f32 %v7587, %v2230
    %v8222 = vmul.f32 %v7589, %v2235
    %v8223 = vmul.f32 %v7591, %v2240
    %v8224 = vmul.f32 %v7593, %v2245
    %v8225 = vmul.f32 %v7595, %v2250
    %v8226 = vmul.f32 %v7597, %v2255
    %v8227 = vmul.f32 %v7599, %v2260
    %v8228 = vmul.f32 %v7601, %v2265
    %v8229 = vmul.f32 %v7603, %v2270
    %v8230 = vmul.f32 %v7605, %v2275
    %v8231 = vmul.f32 %v7607, %v2280
    %v8232 = vmul.f32 %v7609, %v2285
    %v8233 = vmul.f32 %v7611, %v2290
    %v8234 = vmul.f32 %v7613, %v2295
    %v8235 = vmul.f32 %v7615, %v2300
    %v8236 = vmul.f32 %v7617, %v2305
    %v8237 = vmul.f32 %v7619, %v2310
    %v8238 = vmul.f32 %v7621, %v2315
    %v8239 = vmul.f32 %v7623, %v2320
    %v8240 = vmul.f32 %v7625, %v2325
    %v8241 = vmul.f32 %v7627, %v2330
    %v8242 = vmul.f32 %v7629, %v2335
    %v8243 = vmul.f32 %v7631, %v2340
    %v8244 = vmul.f32 %v7633, %v2345
    %v8245 = vmul.f32 %v7635, %v2350
    %v8246 = vmul.f32 %v7637, %v2355
    %v8247 = vmul.f32 %v7639, %v2360
    %v8248 = vmul.f32 %v7641, %v2365
    %v8249 = vmul.f32 %v7643, %v2370
    %v8250 = vmul.f32 %v7644, %v2375
    %v8251 = vmul.f32 %v7456, %v2380
    %v8252 = vmul.f32 %v7458, %v2385
    %v8253 = vpack.c.bf16 %v8190, %v8189
    %v8254 = vpack.c.bf16 %v8192, %v8191
    %v8255 = vpack.c.bf16 %v8194, %v8193
    %v8256 = vpack.c.bf16 %v8196, %v8195
    %v8257 = vpack.c.bf16 %v8198, %v8197
    %v8258 = vpack.c.bf16 %v8200, %v8199
    %v8259 = vpack.c.bf16 %v8202, %v8201
    %v8260 = vpack.c.bf16 %v8204, %v8203
    %v8261 = vpack.c.bf16 %v8206, %v8205
    %v8262 = vpack.c.bf16 %v8208, %v8207
    %v8263 = vpack.c.bf16 %v8210, %v8209
    %v8264 = vpack.c.bf16 %v8212, %v8211
    %v8265 = vpack.c.bf16 %v8214, %v8213
    %v8266 = vpack.c.bf16 %v8216, %v8215
    %v8267 = vpack.c.bf16 %v8218, %v8217
    %v8268 = vpack.c.bf16 %v8220, %v8219
    %v8269 = vpack.c.bf16 %v8222, %v8221
    %v8270 = vpack.c.bf16 %v8224, %v8223
    %v8271 = vpack.c.bf16 %v8226, %v8225
    %v8272 = vpack.c.bf16 %v8228, %v8227
    %v8273 = vpack.c.bf16 %v8230, %v8229
    %v8274 = vpack.c.bf16 %v8232, %v8231
    %v8275 = vpack.c.bf16 %v8234, %v8233
    %v8276 = vpack.c.bf16 %v8236, %v8235
    %v8277 = vpack.c.bf16 %v8238, %v8237
    %v8278 = vpack.c.bf16 %v8240, %v8239
    %v8279 = vpack.c.bf16 %v8242, %v8241
    %v8280 = vpack.c.bf16 %v8244, %v8243
    %v8281 = vpack.c.bf16 %v8246, %v8245
    %v8282 = vpack.c.bf16 %v8248, %v8247
    %v8283 = vpack.c.bf16 %v8250, %v8249
    %v8284 = vpack.c.bf16 %v8252, %v8251
    %v8285 = vmul.f32 %v7387, %v2551
    %v8286 = vmul.f32 %v7388, %v2556
    %v8287 = vmul.f32 %v7389, %v2561
    %v8288 = vmul.f32 %v7390, %v2566
    %v8289 = vmul.f32 %v7391, %v2571
    %v8290 = vmul.f32 %v7392, %v2576
    %v8291 = vmul.f32 %v7393, %v2581
    %v8292 = vmul.f32 %v7394, %v2586
    %v8293 = vmul.f32 %v7395, %v2591
    %v8294 = vmul.f32 %v7396, %v2596
    %v8295 = vmul.f32 %v7397, %v2601
    %v8296 = vmul.f32 %v7398, %v2606
    %v8297 = vmul.f32 %v7399, %v2611
    %v8298 = vmul.f32 %v7400, %v2616
    %v8299 = vmul.f32 %v7401, %v2621
    %v8300 = vmul.f32 %v7402, %v2626
    %v8301 = vmul.f32 %v7403, %v2631
    %v8302 = vmul.f32 %v7404, %v2636
    %v8303 = vmul.f32 %v7405, %v2641
    %v8304 = vmul.f32 %v7406, %v2646
    %v8305 = vmul.f32 %v7407, %v2651
    %v8306 = vmul.f32 %v7408, %v2656
    %v8307 = vmul.f32 %v7409, %v2661
    %v8308 = vmul.f32 %v7410, %v2666
    %v8309 = vmul.f32 %v7411, %v2671
    %v8310 = vmul.f32 %v7412, %v2676
    %v8311 = vmul.f32 %v7413, %v2681
    %v8312 = vmul.f32 %v7414, %v2686
    %v8313 = vmul.f32 %v7415, %v2691
    %v8314 = vmul.f32 %v7416, %v2696
    %v8315 = vmul.f32 %v7417, %v2701
    %v8316 = vmul.f32 %v7418, %v2706
    %v8317 = vmul.f32 %v7419, %v2711
    %v8318 = vmul.f32 %v7420, %v2716
    %v8319 = vmul.f32 %v7421, %v2721
    %v8320 = vmul.f32 %v7422, %v2726
    %v8321 = vmul.f32 %v7423, %v2731
    %v8322 = vmul.f32 %v7424, %v2736
    %v8323 = vmul.f32 %v7425, %v2741
    %v8324 = vmul.f32 %v7426, %v2746
    %v8325 = vmul.f32 %v7427, %v2751
    %v8326 = vmul.f32 %v7428, %v2756
    %v8327 = vmul.f32 %v7429, %v2761
    %v8328 = vmul.f32 %v7430, %v2766
    %v8329 = vmul.f32 %v7431, %v2771
    %v8330 = vmul.f32 %v7432, %v2776
    %v8331 = vmul.f32 %v7433, %v2781
    %v8332 = vmul.f32 %v7434, %v2786
    %v8333 = vmul.f32 %v7435, %v2791
    %v8334 = vmul.f32 %v7436, %v2796
    %v8335 = vmul.f32 %v7437, %v2801
    %v8336 = vmul.f32 %v7438, %v2806
    %v8337 = vmul.f32 %v7439, %v2811
    %v8338 = vmul.f32 %v7440, %v2816
    %v8339 = vmul.f32 %v7441, %v2821
    %v8340 = vmul.f32 %v7442, %v2826
    %v8341 = vmul.f32 %v7443, %v2831
    %v8342 = vmul.f32 %v7444, %v2836
    %v8343 = vmul.f32 %v7445, %v2841
    %v8344 = vmul.f32 %v7446, %v2846
    %v8345 = vmul.f32 %v7447, %v2851
    %v8346 = vmul.f32 %v7448, %v2856
    %v8347 = vmul.f32 %v7449, %v2861
    %v8348 = vmul.f32 %v7450, %v2866
    %v8349 = vpack.c.bf16 %v8286, %v8285
    %v8350 = vpack.c.bf16 %v8288, %v8287
    %v8351 = vpack.c.bf16 %v8290, %v8289
    %v8352 = vpack.c.bf16 %v8292, %v8291
    %v8353 = vpack.c.bf16 %v8294, %v8293
    %v8354 = vpack.c.bf16 %v8296, %v8295
    %v8355 = vpack.c.bf16 %v8298, %v8297
    %v8356 = vpack.c.bf16 %v8300, %v8299
    %v8357 = vpack.c.bf16 %v8302, %v8301
    %v8358 = vpack.c.bf16 %v8304, %v8303
    %v8359 = vpack.c.bf16 %v8306, %v8305
    %v8360 = vpack.c.bf16 %v8308, %v8307
    %v8361 = vpack.c.bf16 %v8310, %v8309
    %v8362 = vpack.c.bf16 %v8312, %v8311
    %v8363 = vpack.c.bf16 %v8314, %v8313
    %v8364 = vpack.c.bf16 %v8316, %v8315
    %v8365 = vpack.c.bf16 %v8318, %v8317
    %v8366 = vpack.c.bf16 %v8320, %v8319
    %v8367 = vpack.c.bf16 %v8322, %v8321
    %v8368 = vpack.c.bf16 %v8324, %v8323
    %v8369 = vpack.c.bf16 %v8326, %v8325
    %v8370 = vpack.c.bf16 %v8328, %v8327
    %v8371 = vpack.c.bf16 %v8330, %v8329
    %v8372 = vpack.c.bf16 %v8332, %v8331
    %v8373 = vpack.c.bf16 %v8334, %v8333
    %v8374 = vpack.c.bf16 %v8336, %v8335
    %v8375 = vpack.c.bf16 %v8338, %v8337
    %v8376 = vpack.c.bf16 %v8340, %v8339
    %v8377 = vpack.c.bf16 %v8342, %v8341
    %v8378 = vpack.c.bf16 %v8344, %v8343
    %v8379 = vpack.c.bf16 %v8346, %v8345
    %v8380 = vpack.c.bf16 %v8348, %v8347
    %v8381 = vmul.f32 %v7907, %v3032
    %v8382 = vmul.f32 %v7909, %v3037
    %v8383 = vmul.f32 %v7911, %v3042
    %v8384 = vmul.f32 %v7913, %v3047
    %v8385 = vmul.f32 %v7915, %v3052
    %v8386 = vmul.f32 %v7917, %v3057
    %v8387 = vmul.f32 %v7919, %v3062
    %v8388 = vmul.f32 %v7921, %v3067
    %v8389 = vmul.f32 %v7923, %v3072
    %v8390 = vmul.f32 %v7925, %v3077
    %v8391 = vmul.f32 %v7927, %v3082
    %v8392 = vmul.f32 %v7929, %v3087
    %v8393 = vmul.f32 %v7931, %v3092
    %v8394 = vmul.f32 %v7933, %v3097
    %v8395 = vmul.f32 %v7935, %v3102
    %v8396 = vmul.f32 %v7937, %v3107
    %v8397 = vmul.f32 %v7939, %v3112
    %v8398 = vmul.f32 %v7941, %v3117
    %v8399 = vmul.f32 %v7943, %v3122
    %v8400 = vmul.f32 %v7945, %v3127
    %v8401 = vmul.f32 %v7947, %v3132
    %v8402 = vmul.f32 %v7949, %v3137
    %v8403 = vmul.f32 %v7951, %v3142
    %v8404 = vmul.f32 %v7953, %v3147
    %v8405 = vmul.f32 %v7955, %v3152
    %v8406 = vmul.f32 %v7957, %v3157
    %v8407 = vmul.f32 %v7959, %v3162
    %v8408 = vmul.f32 %v7961, %v3167
    %v8409 = vmul.f32 %v7963, %v3172
    %v8410 = vmul.f32 %v7965, %v3177
    %v8411 = vmul.f32 %v7967, %v3182
    %v8412 = vmul.f32 %v7969, %v3187
    %v8413 = vmul.f32 %v7971, %v3192
    %v8414 = vmul.f32 %v7973, %v3197
    %v8415 = vmul.f32 %v7975, %v3202
    %v8416 = vmul.f32 %v7977, %v3207
    %v8417 = vmul.f32 %v7979, %v3212
    %v8418 = vmul.f32 %v7981, %v3217
    %v8419 = vmul.f32 %v7983, %v3222
    %v8420 = vmul.f32 %v7985, %v3227
    %v8421 = vmul.f32 %v7987, %v3232
    %v8422 = vmul.f32 %v7989, %v3237
    %v8423 = vmul.f32 %v7991, %v3242
    %v8424 = vmul.f32 %v7993, %v3247
    %v8425 = vmul.f32 %v7995, %v3252
    %v8426 = vmul.f32 %v7997, %v3257
    %v8427 = vmul.f32 %v7999, %v3262
    %v8428 = vmul.f32 %v8001, %v3267
    %v8429 = vmul.f32 %v8003, %v3272
    %v8430 = vmul.f32 %v8005, %v3277
    %v8431 = vmul.f32 %v8007, %v3282
    %v8432 = vmul.f32 %v8009, %v3287
    %v8433 = vmul.f32 %v8011, %v3292
    %v8434 = vmul.f32 %v8013, %v3297
    %v8435 = vmul.f32 %v8015, %v3302
    %v8436 = vmul.f32 %v8017, %v3307
    %v8437 = vmul.f32 %v8019, %v3312
    %v8438 = vmul.f32 %v8021, %v3317
    %v8439 = vmul.f32 %v8023, %v3322
    %v8440 = vmul.f32 %v8025, %v3327
    %v8441 = vmul.f32 %v8027, %v3332
    %v8442 = vmul.f32 %v8028, %v3337
    %v8443 = vmul.f32 %v7902, %v3342
    %v8444 = vmul.f32 %v8092, %v3347
    %v8445 = vpack.c.bf16 %v8382, %v8381
    %v8446 = vpack.c.bf16 %v8384, %v8383
    %v8447 = vpack.c.bf16 %v8386, %v8385
    %v8448 = vpack.c.bf16 %v8388, %v8387
    %v8449 = vpack.c.bf16 %v8390, %v8389
    %v8450 = vpack.c.bf16 %v8392, %v8391
    %v8451 = vpack.c.bf16 %v8394, %v8393
    %v8452 = vpack.c.bf16 %v8396, %v8395
    %v8453 = vpack.c.bf16 %v8398, %v8397
    %v8454 = vpack.c.bf16 %v8400, %v8399
    %v8455 = vpack.c.bf16 %v8402, %v8401
    %v8456 = vpack.c.bf16 %v8404, %v8403
    %v8457 = vpack.c.bf16 %v8406, %v8405
    %v8458 = vpack.c.bf16 %v8408, %v8407
    %v8459 = vpack.c.bf16 %v8410, %v8409
    %v8460 = vpack.c.bf16 %v8412, %v8411
    %v8461 = vpack.c.bf16 %v8414, %v8413
    %v8462 = vpack.c.bf16 %v8416, %v8415
    %v8463 = vpack.c.bf16 %v8418, %v8417
    %v8464 = vpack.c.bf16 %v8420, %v8419
    %v8465 = vpack.c.bf16 %v8422, %v8421
    %v8466 = vpack.c.bf16 %v8424, %v8423
    %v8467 = vpack.c.bf16 %v8426, %v8425
    %v8468 = vpack.c.bf16 %v8428, %v8427
    %v8469 = vpack.c.bf16 %v8430, %v8429
    %v8470 = vpack.c.bf16 %v8432, %v8431
    %v8471 = vpack.c.bf16 %v8434, %v8433
    %v8472 = vpack.c.bf16 %v8436, %v8435
    %v8473 = vpack.c.bf16 %v8438, %v8437
    %v8474 = vpack.c.bf16 %v8440, %v8439
    %v8475 = vpack.c.bf16 %v8442, %v8441
    %v8476 = vpack.c.bf16 %v8444, %v8443
    %v8477 = vmul.f32 %v7527, %v3513
    %v8478 = vmul.f32 %v7529, %v3518
    %v8479 = vmul.f32 %v7531, %v3523
    %v8480 = vmul.f32 %v7533, %v3528
    %v8481 = vmul.f32 %v7535, %v3533
    %v8482 = vmul.f32 %v7537, %v3538
    %v8483 = vmul.f32 %v7539, %v3543
    %v8484 = vmul.f32 %v7541, %v3548
    %v8485 = vmul.f32 %v7543, %v3553
    %v8486 = vmul.f32 %v7545, %v3558
    %v8487 = vmul.f32 %v7547, %v3563
    %v8488 = vmul.f32 %v7549, %v3568
    %v8489 = vmul.f32 %v7551, %v3573
    %v8490 = vmul.f32 %v7553, %v3578
    %v8491 = vmul.f32 %v7555, %v3583
    %v8492 = vmul.f32 %v7557, %v3588
    %v8493 = vmul.f32 %v7559, %v3593
    %v8494 = vmul.f32 %v7561, %v3598
    %v8495 = vmul.f32 %v7563, %v3603
    %v8496 = vmul.f32 %v7565, %v3608
    %v8497 = vmul.f32 %v7567, %v3613
    %v8498 = vmul.f32 %v7569, %v3618
    %v8499 = vmul.f32 %v7571, %v3623
    %v8500 = vmul.f32 %v7573, %v3628
    %v8501 = vmul.f32 %v7575, %v3633
    %v8502 = vmul.f32 %v7577, %v3638
    %v8503 = vmul.f32 %v7579, %v3643
    %v8504 = vmul.f32 %v7581, %v3648
    %v8505 = vmul.f32 %v7583, %v3653
    %v8506 = vmul.f32 %v7585, %v3658
    %v8507 = vmul.f32 %v7587, %v3663
    %v8508 = vmul.f32 %v7589, %v3668
    %v8509 = vmul.f32 %v7591, %v3673
    %v8510 = vmul.f32 %v7593, %v3678
    %v8511 = vmul.f32 %v7595, %v3683
    %v8512 = vmul.f32 %v7597, %v3688
    %v8513 = vmul.f32 %v7599, %v3693
    %v8514 = vmul.f32 %v7601, %v3698
    %v8515 = vmul.f32 %v7603, %v3703
    %v8516 = vmul.f32 %v7605, %v3708
    %v8517 = vmul.f32 %v7607, %v3713
    %v8518 = vmul.f32 %v7609, %v3718
    %v8519 = vmul.f32 %v7611, %v3723
    %v8520 = vmul.f32 %v7613, %v3728
    %v8521 = vmul.f32 %v7615, %v3733
    %v8522 = vmul.f32 %v7617, %v3738
    %v8523 = vmul.f32 %v7619, %v3743
    %v8524 = vmul.f32 %v7621, %v3748
    %v8525 = vmul.f32 %v7623, %v3753
    %v8526 = vmul.f32 %v7625, %v3758
    %v8527 = vmul.f32 %v7627, %v3763
    %v8528 = vmul.f32 %v7629, %v3768
    %v8529 = vmul.f32 %v7631, %v3773
    %v8530 = vmul.f32 %v7633, %v3778
    %v8531 = vmul.f32 %v7635, %v3783
    %v8532 = vmul.f32 %v7637, %v3788
    %v8533 = vmul.f32 %v7639, %v3793
    %v8534 = vmul.f32 %v7641, %v3798
    %v8535 = vmul.f32 %v7643, %v3803
    %v8536 = vmul.f32 %v7644, %v3808
    %v8537 = vmul.f32 %v7456, %v3813
    %v8538 = vmul.f32 %v7458, %v3818
    %v8539 = vmul.f32 %v7707, %v3823
    %v8540 = vmul.f32 %v7525, %v3828
    %v8541 = vpack.c.bf16 %v8478, %v8477
    %v8542 = vpack.c.bf16 %v8480, %v8479
    %v8543 = vpack.c.bf16 %v8482, %v8481
    %v8544 = vpack.c.bf16 %v8484, %v8483
    %v8545 = vpack.c.bf16 %v8486, %v8485
    %v8546 = vpack.c.bf16 %v8488, %v8487
    %v8547 = vpack.c.bf16 %v8490, %v8489
    %v8548 = vpack.c.bf16 %v8492, %v8491
    %v8549 = vpack.c.bf16 %v8494, %v8493
    %v8550 = vpack.c.bf16 %v8496, %v8495
    %v8551 = vpack.c.bf16 %v8498, %v8497
    %v8552 = vpack.c.bf16 %v8500, %v8499
    %v8553 = vpack.c.bf16 %v8502, %v8501
    %v8554 = vpack.c.bf16 %v8504, %v8503
    %v8555 = vpack.c.bf16 %v8506, %v8505
    %v8556 = vpack.c.bf16 %v8508, %v8507
    %v8557 = vpack.c.bf16 %v8510, %v8509
    %v8558 = vpack.c.bf16 %v8512, %v8511
    %v8559 = vpack.c.bf16 %v8514, %v8513
    %v8560 = vpack.c.bf16 %v8516, %v8515
    %v8561 = vpack.c.bf16 %v8518, %v8517
    %v8562 = vpack.c.bf16 %v8520, %v8519
    %v8563 = vpack.c.bf16 %v8522, %v8521
    %v8564 = vpack.c.bf16 %v8524, %v8523
    %v8565 = vpack.c.bf16 %v8526, %v8525
    %v8566 = vpack.c.bf16 %v8528, %v8527
    %v8567 = vpack.c.bf16 %v8530, %v8529
    %v8568 = vpack.c.bf16 %v8532, %v8531
    %v8569 = vpack.c.bf16 %v8534, %v8533
    %v8570 = vpack.c.bf16 %v8536, %v8535
    %v8571 = vpack.c.bf16 %v8538, %v8537
    %v8572 = vpack.c.bf16 %v8540, %v8539
    %v8573 = vmul.f32 %v7389, %v3994
    %v8574 = vmul.f32 %v7390, %v3999
    %v8575 = vmul.f32 %v7391, %v4004
    %v8576 = vmul.f32 %v7392, %v4009
    %v8577 = vmul.f32 %v7393, %v4014
    %v8578 = vmul.f32 %v7394, %v4019
    %v8579 = vmul.f32 %v7395, %v4024
    %v8580 = vmul.f32 %v7396, %v4029
    %v8581 = vmul.f32 %v7397, %v4034
    %v8582 = vmul.f32 %v7398, %v4039
    %v8583 = vmul.f32 %v7399, %v4044
    %v8584 = vmul.f32 %v7400, %v4049
    %v8585 = vmul.f32 %v7401, %v4054
    %v8586 = vmul.f32 %v7402, %v4059
    %v8587 = vmul.f32 %v7403, %v4064
    %v8588 = vmul.f32 %v7404, %v4069
    %v8589 = vmul.f32 %v7405, %v4074
    %v8590 = vmul.f32 %v7406, %v4079
    %v8591 = vmul.f32 %v7407, %v4084
    %v8592 = vmul.f32 %v7408, %v4089
    %v8593 = vmul.f32 %v7409, %v4094
    %v8594 = vmul.f32 %v7410, %v4099
    %v8595 = vmul.f32 %v7411, %v4104
    %v8596 = vmul.f32 %v7412, %v4109
    %v8597 = vmul.f32 %v7413, %v4114
    %v8598 = vmul.f32 %v7414, %v4119
    %v8599 = vmul.f32 %v7415, %v4124
    %v8600 = vmul.f32 %v7416, %v4129
    %v8601 = vmul.f32 %v7417, %v4134
    %v8602 = vmul.f32 %v7418, %v4139
    %v8603 = vmul.f32 %v7419, %v4144
    %v8604 = vmul.f32 %v7420, %v4149
    %v8605 = vmul.f32 %v7421, %v4154
    %v8606 = vmul.f32 %v7422, %v4159
    %v8607 = vmul.f32 %v7423, %v4164
    %v8608 = vmul.f32 %v7424, %v4169
    %v8609 = vmul.f32 %v7425, %v4174
    %v8610 = vmul.f32 %v7426, %v4179
    %v8611 = vmul.f32 %v7427, %v4184
    %v8612 = vmul.f32 %v7428, %v4189
    %v8613 = vmul.f32 %v7429, %v4194
    %v8614 = vmul.f32 %v7430, %v4199
    %v8615 = vmul.f32 %v7431, %v4204
    %v8616 = vmul.f32 %v7432, %v4209
    %v8617 = vmul.f32 %v7433, %v4214
    %v8618 = vmul.f32 %v7434, %v4219
    %v8619 = vmul.f32 %v7435, %v4224
    %v8620 = vmul.f32 %v7436, %v4229
    %v8621 = vmul.f32 %v7437, %v4234
    %v8622 = vmul.f32 %v7438, %v4239
    %v8623 = vmul.f32 %v7439, %v4244
    %v8624 = vmul.f32 %v7440, %v4249
    %v8625 = vmul.f32 %v7441, %v4254
    %v8626 = vmul.f32 %v7442, %v4259
    %v8627 = vmul.f32 %v7443, %v4264
    %v8628 = vmul.f32 %v7444, %v4269
    %v8629 = vmul.f32 %v7445, %v4274
    %v8630 = vmul.f32 %v7446, %v4279
    %v8631 = vmul.f32 %v7447, %v4284
    %v8632 = vmul.f32 %v7448, %v4289
    %v8633 = vmul.f32 %v7449, %v4294
    %v8634 = vmul.f32 %v7450, %v4299
    %v8635 = vmul.f32 %v7387, %v4304
    %v8636 = vmul.f32 %v7388, %v4309
    %v8637 = vpack.c.bf16 %v8574, %v8573
    %v8638 = vpack.c.bf16 %v8576, %v8575
    %v8639 = vpack.c.bf16 %v8578, %v8577
    %v8640 = vpack.c.bf16 %v8580, %v8579
    %v8641 = vpack.c.bf16 %v8582, %v8581
    %v8642 = vpack.c.bf16 %v8584, %v8583
    %v8643 = vpack.c.bf16 %v8586, %v8585
    %v8644 = vpack.c.bf16 %v8588, %v8587
    %v8645 = vpack.c.bf16 %v8590, %v8589
    %v8646 = vpack.c.bf16 %v8592, %v8591
    %v8647 = vpack.c.bf16 %v8594, %v8593
    %v8648 = vpack.c.bf16 %v8596, %v8595
    %v8649 = vpack.c.bf16 %v8598, %v8597
    %v8650 = vpack.c.bf16 %v8600, %v8599
    %v8651 = vpack.c.bf16 %v8602, %v8601
    %v8652 = vpack.c.bf16 %v8604, %v8603
    %v8653 = vpack.c.bf16 %v8606, %v8605
    %v8654 = vpack.c.bf16 %v8608, %v8607
    %v8655 = vpack.c.bf16 %v8610, %v8609
    %v8656 = vpack.c.bf16 %v8612, %v8611
    %v8657 = vpack.c.bf16 %v8614, %v8613
    %v8658 = vpack.c.bf16 %v8616, %v8615
    %v8659 = vpack.c.bf16 %v8618, %v8617
    %v8660 = vpack.c.bf16 %v8620, %v8619
    %v8661 = vpack.c.bf16 %v8622, %v8621
    %v8662 = vpack.c.bf16 %v8624, %v8623
    %v8663 = vpack.c.bf16 %v8626, %v8625
    %v8664 = vpack.c.bf16 %v8628, %v8627
    %v8665 = vpack.c.bf16 %v8630, %v8629
    %v8666 = vpack.c.bf16 %v8632, %v8631
    %v8667 = vpack.c.bf16 %v8634, %v8633
    %v8668 = vpack.c.bf16 %v8636, %v8635
    %v8669 = vmul.f32 %v7911, %v4475
    %v8670 = vmul.f32 %v7913, %v4480
    %v8671 = vmul.f32 %v7915, %v4485
    %v8672 = vmul.f32 %v7917, %v4490
    %v8673 = vmul.f32 %v7919, %v4495
    %v8674 = vmul.f32 %v7921, %v4500
    %v8675 = vmul.f32 %v7923, %v4505
    %v8676 = vmul.f32 %v7925, %v4510
    %v8677 = vmul.f32 %v7927, %v4515
    %v8678 = vmul.f32 %v7929, %v4520
    %v8679 = vmul.f32 %v7931, %v4525
    %v8680 = vmul.f32 %v7933, %v4530
    %v8681 = vmul.f32 %v7935, %v4535
    %v8682 = vmul.f32 %v7937, %v4540
    %v8683 = vmul.f32 %v7939, %v4545
    %v8684 = vmul.f32 %v7941, %v4550
    %v8685 = vmul.f32 %v7943, %v4555
    %v8686 = vmul.f32 %v7945, %v4560
    %v8687 = vmul.f32 %v7947, %v4565
    %v8688 = vmul.f32 %v7949, %v4570
    %v8689 = vmul.f32 %v7951, %v4575
    %v8690 = vmul.f32 %v7953, %v4580
    %v8691 = vmul.f32 %v7955, %v4585
    %v8692 = vmul.f32 %v7957, %v4590
    %v8693 = vmul.f32 %v7959, %v4595
    %v8694 = vmul.f32 %v7961, %v4600
    %v8695 = vmul.f32 %v7963, %v4605
    %v8696 = vmul.f32 %v7965, %v4610
    %v8697 = vmul.f32 %v7967, %v4615
    %v8698 = vmul.f32 %v7969, %v4620
    %v8699 = vmul.f32 %v7971, %v4625
    %v8700 = vmul.f32 %v7973, %v4630
    %v8701 = vmul.f32 %v7975, %v4635
    %v8702 = vmul.f32 %v7977, %v4640
    %v8703 = vmul.f32 %v7979, %v4645
    %v8704 = vmul.f32 %v7981, %v4650
    %v8705 = vmul.f32 %v7983, %v4655
    %v8706 = vmul.f32 %v7985, %v4660
    %v8707 = vmul.f32 %v7987, %v4665
    %v8708 = vmul.f32 %v7989, %v4670
    %v8709 = vmul.f32 %v7991, %v4675
    %v8710 = vmul.f32 %v7993, %v4680
    %v8711 = vmul.f32 %v7995, %v4685
    %v8712 = vmul.f32 %v7997, %v4690
    %v8713 = vmul.f32 %v7999, %v4695
    %v8714 = vmul.f32 %v8001, %v4700
    %v8715 = vmul.f32 %v8003, %v4705
    %v8716 = vmul.f32 %v8005, %v4710
    %v8717 = vmul.f32 %v8007, %v4715
    %v8718 = vmul.f32 %v8009, %v4720
    %v8719 = vmul.f32 %v8011, %v4725
    %v8720 = vmul.f32 %v8013, %v4730
    %v8721 = vmul.f32 %v8015, %v4735
    %v8722 = vmul.f32 %v8017, %v4740
    %v8723 = vmul.f32 %v8019, %v4745
    %v8724 = vmul.f32 %v8021, %v4750
    %v8725 = vmul.f32 %v8023, %v4755
    %v8726 = vmul.f32 %v8025, %v4760
    %v8727 = vmul.f32 %v8027, %v4765
    %v8728 = vmul.f32 %v8028, %v4770
    %v8729 = vmul.f32 %v7902, %v4775
    %v8730 = vmul.f32 %v8092, %v4780
    %v8731 = vmul.f32 %v7907, %v4785
    %v8732 = vmul.f32 %v7909, %v4790
    %v8733 = vpack.c.bf16 %v8670, %v8669
    %v8734 = vpack.c.bf16 %v8672, %v8671
    %v8735 = vpack.c.bf16 %v8674, %v8673
    %v8736 = vpack.c.bf16 %v8676, %v8675
    %v8737 = vpack.c.bf16 %v8678, %v8677
    %v8738 = vpack.c.bf16 %v8680, %v8679
    %v8739 = vpack.c.bf16 %v8682, %v8681
    %v8740 = vpack.c.bf16 %v8684, %v8683
    %v8741 = vpack.c.bf16 %v8686, %v8685
    %v8742 = vpack.c.bf16 %v8688, %v8687
    %v8743 = vpack.c.bf16 %v8690, %v8689
    %v8744 = vpack.c.bf16 %v8692, %v8691
    %v8745 = vpack.c.bf16 %v8694, %v8693
    %v8746 = vpack.c.bf16 %v8696, %v8695
    %v8747 = vpack.c.bf16 %v8698, %v8697
    %v8748 = vpack.c.bf16 %v8700, %v8699
    %v8749 = vpack.c.bf16 %v8702, %v8701
    %v8750 = vpack.c.bf16 %v8704, %v8703
    %v8751 = vpack.c.bf16 %v8706, %v8705
    %v8752 = vpack.c.bf16 %v8708, %v8707
    %v8753 = vpack.c.bf16 %v8710, %v8709
    %v8754 = vpack.c.bf16 %v8712, %v8711
    %v8755 = vpack.c.bf16 %v8714, %v8713
    %v8756 = vpack.c.bf16 %v8716, %v8715
    %v8757 = vpack.c.bf16 %v8718, %v8717
    %v8758 = vpack.c.bf16 %v8720, %v8719
    %v8759 = vpack.c.bf16 %v8722, %v8721
    %v8760 = vpack.c.bf16 %v8724, %v8723
    %v8761 = vpack.c.bf16 %v8726, %v8725
    %v8762 = vpack.c.bf16 %v8728, %v8727
    %v8763 = vpack.c.bf16 %v8730, %v8729
    %v8764 = vpack.c.bf16 %v8732, %v8731
    %v8765 = vld [vmem:[%s5] sm:$0xf]
    %v8766 = vld [vmem:[%s5 + $0x4] sm:$0xf]
    %v8767 = vld [vmem:[%s5 + $0x8] sm:$0xf]
    %v8768 = vld [vmem:[%s5 + $0xc] sm:$0xf]
    %v8769 = vld [vmem:[%s5 + $0x10] sm:$0xf]
    %v8770 = vld [vmem:[%s5 + $0x14] sm:$0xf]
    %v8771 = vld [vmem:[%s5 + $0x18] sm:$0xf]
    %v8772 = vld [vmem:[%s5 + $0x1c] sm:$0xf]
    %v8773 = vld [vmem:[%s5 + $0x20] sm:$0xf]
    %v8774 = vld [vmem:[%s5 + $0x24] sm:$0xf]
    %v8775 = vld [vmem:[%s5 + $0x28] sm:$0xf]
    %v8776 = vld [vmem:[%s5 + $0x2c] sm:$0xf]
    %v8777 = vld [vmem:[%s5 + $0x30] sm:$0xf]
    %v8778 = vld [vmem:[%s5 + $0x34] sm:$0xf]
    %v8779 = vld [vmem:[%s5 + $0x38] sm:$0xf]
    %v8780 = vld [vmem:[%s5 + $0x3c] sm:$0xf]
    %v8781 = vld [vmem:[%s5 + $0x40] sm:$0xf]
    %v8782 = vld [vmem:[%s5 + $0x44] sm:$0xf]
    %v8783 = vld [vmem:[%s5 + $0x48] sm:$0xf]
    %v8784 = vld [vmem:[%s5 + $0x4c] sm:$0xf]
    %v8785 = vld [vmem:[%s5 + $0x50] sm:$0xf]
    %v8786 = vld [vmem:[%s5 + $0x54] sm:$0xf]
    %v8787 = vld [vmem:[%s5 + $0x58] sm:$0xf]
    %v8788 = vld [vmem:[%s5 + $0x5c] sm:$0xf]
    %v8789 = vld [vmem:[%s5 + $0x60] sm:$0xf]
    %v8790 = vld [vmem:[%s5 + $0x64] sm:$0xf]
    %v8791 = vld [vmem:[%s5 + $0x68] sm:$0xf]
    %v8792 = vld [vmem:[%s5 + $0x6c] sm:$0xf]
    %v8793 = vld [vmem:[%s5 + $0x70] sm:$0xf]
    %v8794 = vld [vmem:[%s5 + $0x74] sm:$0xf]
    %v8795 = vld [vmem:[%s5 + $0x78] sm:$0xf]
    %v8796 = vld [vmem:[%s5 + $0x7c] sm:$0xf]
    %v8797 = vld [vmem:[%s5 + $0x80] sm:$0xf]
    %v8798 = vld [vmem:[%s5 + $0x84] sm:$0xf]
    %v8799 = vld [vmem:[%s5 + $0x88] sm:$0xf]
    %v8800 = vld [vmem:[%s5 + $0x8c] sm:$0xf]
    %v8801 = vld [vmem:[%s5 + $0x90] sm:$0xf]
    %v8802 = vld [vmem:[%s5 + $0x94] sm:$0xf]
    %v8803 = vld [vmem:[%s5 + $0x98] sm:$0xf]
    %v8804 = vld [vmem:[%s5 + $0x9c] sm:$0xf]
    %v8805 = vld [vmem:[%s5 + $0xa0] sm:$0xf]
    %v8806 = vld [vmem:[%s5 + $0xa4] sm:$0xf]
    %v8807 = vld [vmem:[%s5 + $0xa8] sm:$0xf]
    %v8808 = vld [vmem:[%s5 + $0xac] sm:$0xf]
    %v8809 = vld [vmem:[%s5 + $0xb0] sm:$0xf]
    %v8810 = vld [vmem:[%s5 + $0xb4] sm:$0xf]
    %v8811 = vld [vmem:[%s5 + $0xb8] sm:$0xf]
    %v8812 = vld [vmem:[%s5 + $0xbc] sm:$0xf]
    %v8813 = vld [vmem:[%s5 + $0xc0] sm:$0xf]
    %v8814 = vld [vmem:[%s5 + $0xc4] sm:$0xf]
    %v8815 = vld [vmem:[%s5 + $0xc8] sm:$0xf]
    %v8816 = vld [vmem:[%s5 + $0xcc] sm:$0xf]
    %v8817 = vld [vmem:[%s5 + $0xd0] sm:$0xf]
    %v8818 = vld [vmem:[%s5 + $0xd4] sm:$0xf]
    %v8819 = vld [vmem:[%s5 + $0xd8] sm:$0xf]
    %v8820 = vld [vmem:[%s5 + $0xdc] sm:$0xf]
    %v8821 = vld [vmem:[%s5 + $0xe0] sm:$0xf]
    %v8822 = vld [vmem:[%s5 + $0xe4] sm:$0xf]
    %v8823 = vld [vmem:[%s5 + $0xe8] sm:$0xf]
    %v8824 = vld [vmem:[%s5 + $0xec] sm:$0xf]
    %v8825 = vld [vmem:[%s5 + $0xf0] sm:$0xf]
    %v8826 = vld [vmem:[%s5 + $0xf4] sm:$0xf]
    %v8827 = vld [vmem:[%s5 + $0xf8] sm:$0xf]
    %v8828 = vld [vmem:[%s5 + $0xfc] sm:$0xf]
    %v8829 = vld [vmem:[%s5 + $0x100] sm:$0xf]
    %v8830 = vld [vmem:[%s5 + $0x104] sm:$0xf]
    %v8831 = vld [vmem:[%s5 + $0x108] sm:$0xf]
    %v8832 = vld [vmem:[%s5 + $0x10c] sm:$0xf]
    %v8833 = vld [vmem:[%s5 + $0x110] sm:$0xf]
    %v8834 = vld [vmem:[%s5 + $0x114] sm:$0xf]
    %v8835 = vld [vmem:[%s5 + $0x118] sm:$0xf]
    %v8836 = vld [vmem:[%s5 + $0x11c] sm:$0xf]
    %v8837 = vld [vmem:[%s5 + $0x120] sm:$0xf]
    %v8838 = vld [vmem:[%s5 + $0x124] sm:$0xf]
    %v8839 = vld [vmem:[%s5 + $0x128] sm:$0xf]
    %v8840 = vld [vmem:[%s5 + $0x12c] sm:$0xf]
    %v8841 = vld [vmem:[%s5 + $0x130] sm:$0xf]
    %v8842 = vld [vmem:[%s5 + $0x134] sm:$0xf]
    %v8843 = vld [vmem:[%s5 + $0x138] sm:$0xf]
    %v8844 = vld [vmem:[%s5 + $0x13c] sm:$0xf]
    %v8845 = vld [vmem:[%s5 + $0x140] sm:$0xf]
    %v8846 = vld [vmem:[%s5 + $0x144] sm:$0xf]
    %v8847 = vld [vmem:[%s5 + $0x148] sm:$0xf]
    %v8848 = vld [vmem:[%s5 + $0x14c] sm:$0xf]
    %v8849 = vld [vmem:[%s5 + $0x150] sm:$0xf]
    %v8850 = vld [vmem:[%s5 + $0x154] sm:$0xf]
    %v8851 = vld [vmem:[%s5 + $0x158] sm:$0xf]
    %v8852 = vld [vmem:[%s5 + $0x15c] sm:$0xf]
    %v8853 = vld [vmem:[%s5 + $0x160] sm:$0xf]
    %v8854 = vld [vmem:[%s5 + $0x164] sm:$0xf]
    %v8855 = vld [vmem:[%s5 + $0x168] sm:$0xf]
    %v8856 = vld [vmem:[%s5 + $0x16c] sm:$0xf]
    %v8857 = vld [vmem:[%s5 + $0x170] sm:$0xf]
    %v8858 = vld [vmem:[%s5 + $0x174] sm:$0xf]
    %v8859 = vld [vmem:[%s5 + $0x178] sm:$0xf]
    %v8860 = vld [vmem:[%s5 + $0x17c] sm:$0xf]
    %v8861 = vld [vmem:[%s5 + $0x180] sm:$0xf]
    %v8862 = vld [vmem:[%s5 + $0x184] sm:$0xf]
    %v8863 = vld [vmem:[%s5 + $0x188] sm:$0xf]
    %v8864 = vld [vmem:[%s5 + $0x18c] sm:$0xf]
    %v8865 = vld [vmem:[%s5 + $0x190] sm:$0xf]
    %v8866 = vld [vmem:[%s5 + $0x194] sm:$0xf]
    %v8867 = vld [vmem:[%s5 + $0x198] sm:$0xf]
    %v8868 = vld [vmem:[%s5 + $0x19c] sm:$0xf]
    %v8869 = vld [vmem:[%s5 + $0x1a0] sm:$0xf]
    %v8870 = vld [vmem:[%s5 + $0x1a4] sm:$0xf]
    %v8871 = vld [vmem:[%s5 + $0x1a8] sm:$0xf]
    %v8872 = vld [vmem:[%s5 + $0x1ac] sm:$0xf]
    %v8873 = vld [vmem:[%s5 + $0x1b0] sm:$0xf]
    %v8874 = vld [vmem:[%s5 + $0x1b4] sm:$0xf]
    %v8875 = vld [vmem:[%s5 + $0x1b8] sm:$0xf]
    %v8876 = vld [vmem:[%s5 + $0x1bc] sm:$0xf]
    %v8877 = vld [vmem:[%s5 + $0x1c0] sm:$0xf]
    %v8878 = vld [vmem:[%s5 + $0x1c4] sm:$0xf]
    %v8879 = vld [vmem:[%s5 + $0x1c8] sm:$0xf]
    %v8880 = vld [vmem:[%s5 + $0x1cc] sm:$0xf]
    %v8881 = vld [vmem:[%s5 + $0x1d0] sm:$0xf]
    %v8882 = vld [vmem:[%s5 + $0x1d4] sm:$0xf]
    %v8883 = vld [vmem:[%s5 + $0x1d8] sm:$0xf]
    %v8884 = vld [vmem:[%s5 + $0x1dc] sm:$0xf]
    %v8885 = vld [vmem:[%s5 + $0x1e0] sm:$0xf]
    %v8886 = vld [vmem:[%s5 + $0x1e4] sm:$0xf]
    %v8887 = vld [vmem:[%s5 + $0x1e8] sm:$0xf]
    %v8888 = vld [vmem:[%s5 + $0x1ec] sm:$0xf]
    %v8889 = vld [vmem:[%s5 + $0x1f0] sm:$0xf]
    %v8890 = vld [vmem:[%s5 + $0x1f4] sm:$0xf]
    %v8891 = vld [vmem:[%s5 + $0x1f8] sm:$0xf]
    %v8892 = vld [vmem:[%s5 + $0x1fc] sm:$0xf]
    %v8893 = vld [vmem:[%s5 + $0x200] sm:$0xf]
    %v8894 = vld [vmem:[%s5 + $0x204] sm:$0xf]
    %v8895 = vld [vmem:[%s5 + $0x208] sm:$0xf]
    %v8896 = vld [vmem:[%s5 + $0x20c] sm:$0xf]
    %v8897 = vld [vmem:[%s5 + $0x210] sm:$0xf]
    %v8898 = vld [vmem:[%s5 + $0x214] sm:$0xf]
    %v8899 = vld [vmem:[%s5 + $0x218] sm:$0xf]
    %v8900 = vld [vmem:[%s5 + $0x21c] sm:$0xf]
    %v8901 = vld [vmem:[%s5 + $0x220] sm:$0xf]
    %v8902 = vld [vmem:[%s5 + $0x224] sm:$0xf]
    %v8903 = vld [vmem:[%s5 + $0x228] sm:$0xf]
    %v8904 = vld [vmem:[%s5 + $0x22c] sm:$0xf]
    %v8905 = vld [vmem:[%s5 + $0x230] sm:$0xf]
    %v8906 = vld [vmem:[%s5 + $0x234] sm:$0xf]
    %v8907 = vld [vmem:[%s5 + $0x238] sm:$0xf]
    %v8908 = vld [vmem:[%s5 + $0x23c] sm:$0xf]
    %v9053 = vunpack.c.l.b16 %v8765
    %v9054 = vunpack.c.l.b16 %v8766
    %v9055 = vunpack.c.l.b16 %v8767
    %v9056 = vunpack.c.l.b16 %v8768
    %v9057 = vunpack.c.l.b16 %v8769
    %v9058 = vunpack.c.l.b16 %v8770
    %v9059 = vunpack.c.l.b16 %v8771
    %v9060 = vunpack.c.l.b16 %v8772
    %v9061 = vunpack.c.l.b16 %v8773
    %v9062 = vunpack.c.l.b16 %v8774
    %v9063 = vunpack.c.l.b16 %v8775
    %v9064 = vunpack.c.l.b16 %v8776
    %v9065 = vunpack.c.l.b16 %v8777
    %v9066 = vunpack.c.l.b16 %v8778
    %v9067 = vunpack.c.l.b16 %v8779
    %v9068 = vunpack.c.l.b16 %v8780
    %v9069 = vunpack.c.l.b16 %v8781
    %v9070 = vunpack.c.l.b16 %v8782
    %v9071 = vunpack.c.l.b16 %v8783
    %v9072 = vunpack.c.l.b16 %v8784
    %v9073 = vunpack.c.l.b16 %v8785
    %v9074 = vunpack.c.l.b16 %v8786
    %v9075 = vunpack.c.l.b16 %v8787
    %v9076 = vunpack.c.l.b16 %v8788
    %v9077 = vunpack.c.l.b16 %v8789
    %v9078 = vunpack.c.l.b16 %v8790
    %v9079 = vunpack.c.l.b16 %v8791
    %v9080 = vunpack.c.l.b16 %v8792
    %v9081 = vunpack.c.l.b16 %v8793
    %v9082 = vunpack.c.l.b16 %v8794
    %v9083 = vunpack.c.l.b16 %v8795
    %v9084 = vunpack.c.l.b16 %v8796
    %v9085 = vunpack.c.l.b16 %v8797
    %v9086 = vunpack.c.l.b16 %v8798
    %v9087 = vunpack.c.l.b16 %v8799
    %v9088 = vunpack.c.l.b16 %v8800
    %v9089 = vunpack.c.l.b16 %v8801
    %v9090 = vunpack.c.l.b16 %v8802
    %v9091 = vunpack.c.l.b16 %v8803
    %v9092 = vunpack.c.l.b16 %v8804
    %v9093 = vunpack.c.l.b16 %v8805
    %v9094 = vunpack.c.l.b16 %v8806
    %v9095 = vunpack.c.l.b16 %v8807
    %v9096 = vunpack.c.l.b16 %v8808
    %v9097 = vunpack.c.l.b16 %v8809
    %v9098 = vunpack.c.l.b16 %v8810
    %v9099 = vunpack.c.l.b16 %v8811
    %v9100 = vunpack.c.l.b16 %v8812
    %v9101 = vunpack.c.l.b16 %v8813
    %v9102 = vunpack.c.l.b16 %v8814
    %v9103 = vunpack.c.l.b16 %v8815
    %v9104 = vunpack.c.l.b16 %v8816
    %v9105 = vunpack.c.l.b16 %v8817
    %v9106 = vunpack.c.l.b16 %v8818
    %v9107 = vunpack.c.l.b16 %v8819
    %v9108 = vunpack.c.l.b16 %v8820
    %v9109 = vunpack.c.l.b16 %v8821
    %v9110 = vunpack.c.l.b16 %v8822
    %v9111 = vunpack.c.l.b16 %v8823
    %v9112 = vunpack.c.l.b16 %v8824
    %v9113 = vunpack.c.l.b16 %v8825
    %v9114 = vunpack.c.l.b16 %v8826
    %v9115 = vunpack.c.l.b16 %v8827
    %v9116 = vunpack.c.l.b16 %v8828
    %v9117 = vunpack.c.l.b16 %v8829
    %v9118 = vunpack.c.l.b16 %v8830
    %v9119 = vunpack.c.l.b16 %v8831
    %v9120 = vunpack.c.l.b16 %v8832
    %v9121 = vunpack.c.l.b16 %v8833
    %v9122 = vunpack.c.l.b16 %v8834
    %v9123 = vunpack.c.l.b16 %v8835
    %v9124 = vunpack.c.l.b16 %v8836
    %v9125 = vunpack.c.l.b16 %v8837
    %v9126 = vunpack.c.l.b16 %v8838
    %v9127 = vunpack.c.l.b16 %v8839
    %v9128 = vunpack.c.l.b16 %v8840
    %v9129 = vunpack.c.l.b16 %v8841
    %v9130 = vunpack.c.l.b16 %v8842
    %v9131 = vunpack.c.l.b16 %v8843
    %v9132 = vunpack.c.l.b16 %v8844
    %v9133 = vunpack.c.l.b16 %v8845
    %v9134 = vunpack.c.l.b16 %v8846
    %v9135 = vunpack.c.l.b16 %v8847
    %v9136 = vunpack.c.l.b16 %v8848
    %v9137 = vunpack.c.l.b16 %v8849
    %v9138 = vunpack.c.l.b16 %v8850
    %v9139 = vunpack.c.l.b16 %v8851
    %v9140 = vunpack.c.l.b16 %v8852
    %v9141 = vunpack.c.l.b16 %v8853
    %v9142 = vunpack.c.l.b16 %v8854
    %v9143 = vunpack.c.l.b16 %v8855
    %v9144 = vunpack.c.l.b16 %v8856
    %v9145 = vunpack.c.l.b16 %v8857
    %v9146 = vunpack.c.l.b16 %v8858
    %v9147 = vunpack.c.l.b16 %v8859
    %v9148 = vunpack.c.l.b16 %v8860
    %v9149 = vunpack.c.l.b16 %v8861
    %v9150 = vunpack.c.l.b16 %v8862
    %v9151 = vunpack.c.l.b16 %v8863
    %v9152 = vunpack.c.l.b16 %v8864
    %v9153 = vunpack.c.l.b16 %v8865
    %v9154 = vunpack.c.l.b16 %v8866
    %v9155 = vunpack.c.l.b16 %v8867
    %v9156 = vunpack.c.l.b16 %v8868
    %v9157 = vunpack.c.l.b16 %v8869
    %v9158 = vunpack.c.l.b16 %v8870
    %v9159 = vunpack.c.l.b16 %v8871
    %v9160 = vunpack.c.l.b16 %v8872
    %v9161 = vunpack.c.l.b16 %v8873
    %v9162 = vunpack.c.l.b16 %v8874
    %v9163 = vunpack.c.l.b16 %v8875
    %v9164 = vunpack.c.l.b16 %v8876
    %v9165 = vunpack.c.l.b16 %v8877
    %v9166 = vunpack.c.l.b16 %v8878
    %v9167 = vunpack.c.l.b16 %v8879
    %v9168 = vunpack.c.l.b16 %v8880
    %v9169 = vunpack.c.l.b16 %v8881
    %v9170 = vunpack.c.l.b16 %v8882
    %v9171 = vunpack.c.l.b16 %v8883
    %v9172 = vunpack.c.l.b16 %v8884
    %v9173 = vunpack.c.l.b16 %v8885
    %v9174 = vunpack.c.l.b16 %v8886
    %v9175 = vunpack.c.l.b16 %v8887
    %v9176 = vunpack.c.l.b16 %v8888
    %v9177 = vunpack.c.l.b16 %v8889
    %v9178 = vunpack.c.l.b16 %v8890
    %v9179 = vunpack.c.l.b16 %v8891
    %v9180 = vunpack.c.l.b16 %v8892
    %v9181 = vunpack.c.l.b16 %v8893
    %v9182 = vunpack.c.l.b16 %v8894
    %v9183 = vunpack.c.l.b16 %v8895
    %v9184 = vunpack.c.l.b16 %v8896
    %v9185 = vunpack.c.l.b16 %v8897
    %v9186 = vunpack.c.l.b16 %v8898
    %v9187 = vunpack.c.l.b16 %v8899
    %v9188 = vunpack.c.l.b16 %v8900
    %v9189 = vunpack.c.l.b16 %v8901
    %v9190 = vunpack.c.l.b16 %v8902
    %v9191 = vunpack.c.l.b16 %v8903
    %v9192 = vunpack.c.l.b16 %v8904
    %v9193 = vunpack.c.l.b16 %v8905
    %v9194 = vunpack.c.l.b16 %v8906
    %v9195 = vunpack.c.l.b16 %v8907
    %v9196 = vunpack.c.l.b16 %v8908
    %v9197 = vpack.c.b16 %v9054, %v9053
    %v9198 = vpack.c.b16 %v9056, %v9055
    %v9199 = vpack.c.b16 %v9058, %v9057
    %v9200 = vpack.c.b16 %v9060, %v9059
    %v9201 = vpack.c.b16 %v9062, %v9061
    %v9202 = vpack.c.b16 %v9064, %v9063
    %v9203 = vpack.c.b16 %v9066, %v9065
    %v9204 = vpack.c.b16 %v9068, %v9067
    %v9205 = vpack.c.b16 %v9070, %v9069
    %v9206 = vpack.c.b16 %v9072, %v9071
    %v9207 = vpack.c.b16 %v9074, %v9073
    %v9208 = vpack.c.b16 %v9076, %v9075
    %v9209 = vpack.c.b16 %v9078, %v9077
    %v9210 = vpack.c.b16 %v9080, %v9079
    %v9211 = vpack.c.b16 %v9082, %v9081
    %v9212 = vpack.c.b16 %v9084, %v9083
    %v9213 = vpack.c.b16 %v9086, %v9085
    %v9214 = vpack.c.b16 %v9088, %v9087
    %v9215 = vpack.c.b16 %v9090, %v9089
    %v9216 = vpack.c.b16 %v9092, %v9091
    %v9217 = vpack.c.b16 %v9094, %v9093
    %v9218 = vpack.c.b16 %v9096, %v9095
    %v9219 = vpack.c.b16 %v9098, %v9097
    %v9220 = vpack.c.b16 %v9100, %v9099
    %v9221 = vpack.c.b16 %v9102, %v9101
    %v9222 = vpack.c.b16 %v9104, %v9103
    %v9223 = vpack.c.b16 %v9106, %v9105
    %v9224 = vpack.c.b16 %v9108, %v9107
    %v9225 = vpack.c.b16 %v9110, %v9109
    %v9226 = vpack.c.b16 %v9112, %v9111
    %v9227 = vpack.c.b16 %v9114, %v9113
    %v9228 = vpack.c.b16 %v9116, %v9115
    %v9229 = vpack.c.b16 %v9118, %v9117
    %v9230 = vpack.c.b16 %v9120, %v9119
    %v9231 = vpack.c.b16 %v9122, %v9121
    %v9232 = vpack.c.b16 %v9124, %v9123
    %v9233 = vpack.c.b16 %v9126, %v9125
    %v9234 = vpack.c.b16 %v9128, %v9127
    %v9235 = vpack.c.b16 %v9130, %v9129
    %v9236 = vpack.c.b16 %v9132, %v9131
    %v9237 = vpack.c.b16 %v9134, %v9133
    %v9238 = vpack.c.b16 %v9136, %v9135
    %v9239 = vpack.c.b16 %v9138, %v9137
    %v9240 = vpack.c.b16 %v9140, %v9139
    %v9241 = vpack.c.b16 %v9142, %v9141
    %v9242 = vpack.c.b16 %v9144, %v9143
    %v9243 = vpack.c.b16 %v9146, %v9145
    %v9244 = vpack.c.b16 %v9148, %v9147
    %v9245 = vpack.c.b16 %v9150, %v9149
    %v9246 = vpack.c.b16 %v9152, %v9151
    %v9247 = vpack.c.b16 %v9154, %v9153
    %v9248 = vpack.c.b16 %v9156, %v9155
    %v9249 = vpack.c.b16 %v9158, %v9157
    %v9250 = vpack.c.b16 %v9160, %v9159
    %v9251 = vpack.c.b16 %v9162, %v9161
    %v9252 = vpack.c.b16 %v9164, %v9163
    %v9253 = vpack.c.b16 %v9166, %v9165
    %v9254 = vpack.c.b16 %v9168, %v9167
    %v9255 = vpack.c.b16 %v9170, %v9169
    %v9256 = vpack.c.b16 %v9172, %v9171
    %v9257 = vpack.c.b16 %v9174, %v9173
    %v9258 = vpack.c.b16 %v9176, %v9175
    %v9259 = vpack.c.b16 %v9178, %v9177
    %v9260 = vpack.c.b16 %v9180, %v9179
    %v9261 = vpack.c.b16 %v9182, %v9181
    %v9262 = vpack.c.b16 %v9184, %v9183
    %v9263 = vpack.c.b16 %v9186, %v9185
    %v9264 = vpack.c.b16 %v9188, %v9187
    %v9265 = vpack.c.b16 %v9190, %v9189
    %v9266 = vpack.c.b16 %v9192, %v9191
    %v9267 = vpack.c.b16 %v9194, %v9193
    %v9268 = vpack.c.b16 %v9196, %v9195
    %9341 = vmatprep.subr.bf16.mxu0 0
    %9342 = vmatpush1.bf16.msra.mxu0 %v9197
    %9343 = vmatprep.subr.bf16.mxu0 0
    %9344 = vmatpush1.bf16.msra.mxu0 %v9198
    %9345 = vmatprep.subr.bf16.mxu0 0
    %9346 = vmatpush1.bf16.msra.mxu0 %v9199
    %9347 = vmatprep.subr.bf16.mxu0 0
    %9348 = vmatpush1.bf16.msra.mxu0 %v9200
    %9349 = vmatprep.subr.bf16.mxu0 0
    %9350 = vmatpush1.bf16.msra.mxu0 %v9201
    %9351 = vmatprep.subr.bf16.mxu0 0
    %9352 = vmatpush1.bf16.msra.mxu0 %v9202
    %9353 = vmatprep.subr.bf16.mxu0 0
    %9354 = vmatpush1.bf16.msra.mxu0 %v9203
    %9355 = vmatprep.subr.bf16.mxu0 0
    %9356 = vmatpush1.bf16.msra.mxu0 %v9204
    %9357 = vmatprep.subr.bf16.mxu0 0
    %9358 = vmatpush1.bf16.msra.mxu0 %v9205
    %9359 = vmatprep.subr.bf16.mxu0 0
    %9360 = vmatpush1.bf16.msra.mxu0 %v9206
    %9361 = vmatprep.subr.bf16.mxu0 0
    %9362 = vmatpush1.bf16.msra.mxu0 %v9207
    %9363 = vmatprep.subr.bf16.mxu0 0
    %9364 = vmatpush1.bf16.msra.mxu0 %v9208
    %9365 = vmatprep.subr.bf16.mxu0 0
    %9366 = vmatpush1.bf16.msra.mxu0 %v9209
    %9367 = vmatprep.subr.bf16.mxu0 0
    %9368 = vmatpush1.bf16.msra.mxu0 %v9210
    %9369 = vmatprep.subr.bf16.mxu0 0
    %9370 = vmatpush1.bf16.msra.mxu0 %v9211
    %9371 = vmatprep.subr.bf16.mxu0 0
    %9372 = vmatpush1.bf16.msra.mxu0 %v9212
    %9373 = vmatprep.mubr.bf16.mxu0 %v7868
    %9374 = vmatmul.mubr.bf16.gmra.mrb[0].mxu0 %v7772
    %v9375 = vpop.f32.mrb[0].mxu0
    %v9376 = vadd.f32 0.0, %v9375
    %v9377 = vpop.f32.mrb[0].mxu0
    %v9378 = vpop.f32.mrb[0].mxu0
    %v9379 = vadd.f32 0.0, %v9378
    %v9380 = vpop.f32.mrb[0].mxu0
    %9381 = vmatprep.mubr.bf16.mxu0 %v7869
    %9382 = vmatmul.mubr.bf16.gmra.mrb[0].mxu0 %v7773
    %v9383 = vpop.f32.mrb[0].mxu0
    %v9384 = vadd.f32 0.0, %v9383
    %v9385 = vpop.f32.mrb[0].mxu0
    %v9386 = vpop.f32.mrb[0].mxu0
    %v9387 = vadd.f32 0.0, %v9386
    %v9388 = vpop.f32.mrb[0].mxu0
    %9389 = vmatprep.mubr.bf16.mxu0 %v7870
    %9390 = vmatmul.mubr.bf16.gmra.mrb[0].mxu0 %v7774
    %v9391 = vpop.f32.mrb[0].mxu0
    %v9392 = vadd.f32 0.0, %v9391
    %v9393 = vpop.f32.mrb[0].mxu0
    %v9394 = vpop.f32.mrb[0].mxu0
    %v9395 = vadd.f32 0.0, %v9394
    %v9396 = vpop.f32.mrb[0].mxu0
    %9397 = vmatprep.mubr.bf16.mxu0 %v7871
    %9398 = vmatmul.mubr.bf16.gmra.mrb[0].mxu0 %v7775
    %v9399 = vpop.f32.mrb[0].mxu0
    %v9400 = vadd.f32 0.0, %v9399
    %v9401 = vpop.f32.mrb[0].mxu0
    %v9402 = vpop.f32.mrb[0].mxu0
    %v9403 = vadd.f32 0.0, %v9402
    %v9404 = vpop.f32.mrb[0].mxu0
    %9405 = vmatprep.mubr.bf16.mxu0 %v7872
    %9406 = vmatmul.mubr.bf16.gmra.mrb[0].mxu0 %v7776
    %v9407 = vpop.f32.mrb[0].mxu0
    %v9408 = vadd.f32 0.0, %v9407
    %v9409 = vpop.f32.mrb[0].mxu0
    %v9410 = vpop.f32.mrb[0].mxu0
    %v9411 = vadd.f32 0.0, %v9410
    %v9412 = vpop.f32.mrb[0].mxu0
    %9413 = vmatprep.mubr.bf16.mxu0 %v7873
    %9414 = vmatmul.mubr.bf16.gmra.mrb[0].mxu0 %v7777
    %v9415 = vpop.f32.mrb[0].mxu0
    %v9416 = vadd.f32 0.0, %v9415
    %v9417 = vpop.f32.mrb[0].mxu0
    %v9418 = vpop.f32.mrb[0].mxu0
    %v9419 = vadd.f32 0.0, %v9418
    %v9420 = vpop.f32.mrb[0].mxu0
    %9421 = vmatprep.mubr.bf16.mxu0 %v7874
    %9422 = vmatmul.mubr.bf16.gmra.mrb[0].mxu0 %v7778
    %v9423 = vpop.f32.mrb[0].mxu0
    %v9424 = vadd.f32 0.0, %v9423
    %v9425 = vpop.f32.mrb[0].mxu0
    %v9426 = vpop.f32.mrb[0].mxu0
    %v9427 = vadd.f32 0.0, %v9426
    %v9428 = vpop.f32.mrb[0].mxu0
    %9429 = vmatprep.mubr.bf16.mxu0 %v7875
    %9430 = vmatmul.mubr.bf16.gmra.mrb[0].mxu0 %v7779
    %v9431 = vpop.f32.mrb[0].mxu0
    %v9432 = vadd.f32 0.0, %v9431
    %v9433 = vpop.f32.mrb[0].mxu0
    %v9434 = vpop.f32.mrb[0].mxu0
    %v9435 = vadd.f32 0.0, %v9434
    %v9436 = vpop.f32.mrb[0].mxu0
    %9437 = vmatprep.mubr.bf16.mxu0 %v7876
    %9438 = vmatmul.mubr.bf16.gmra.mrb[0].mxu0 %v7780
    %v9439 = vpop.f32.mrb[0].mxu0
    %v9440 = vadd.f32 0.0, %v9439
    %v9441 = vpop.f32.mrb[0].mxu0
    %v9442 = vpop.f32.mrb[0].mxu0
    %v9443 = vadd.f32 0.0, %v9442
    %v9444 = vpop.f32.mrb[0].mxu0
    %9445 = vmatprep.mubr.bf16.mxu0 %v7877
    %9446 = vmatmul.mubr.bf16.gmra.mrb[0].mxu0 %v7781
    %v9447 = vpop.f32.mrb[0].mxu0
    %v9448 = vadd.f32 0.0, %v9447
    %v9449 = vpop.f32.mrb[0].mxu0
    %v9450 = vpop.f32.mrb[0].mxu0
    %v9451 = vadd.f32 0.0, %v9450
    %v9452 = vpop.f32.mrb[0].mxu0
    %9453 = vmatprep.mubr.bf16.mxu0 %v7878
    %9454 = vmatmul.mubr.bf16.gmra.mrb[0].mxu0 %v7782
    %v9455 = vpop.f32.mrb[0].mxu0
    %v9456 = vadd.f32 0.0, %v9455
    %v9457 = vpop.f32.mrb[0].mxu0
    %v9458 = vpop.f32.mrb[0].mxu0
    %v9459 = vadd.f32 0.0, %v9458
    %v9460 = vpop.f32.mrb[0].mxu0
    %9461 = vmatprep.mubr.bf16.mxu0 %v7879
    %9462 = vmatmul.mubr.bf16.gmra.mrb[0].mxu0 %v7783
    %v9463 = vpop.f32.mrb[0].mxu0
    %v9464 = vadd.f32 0.0, %v9463
    %v9465 = vpop.f32.mrb[0].mxu0
    %v9466 = vpop.f32.mrb[0].mxu0
    %v9467 = vadd.f32 0.0, %v9466
    %v9468 = vpop.f32.mrb[0].mxu0
    %9469 = vmatprep.mubr.bf16.mxu0 %v7880
    %9470 = vmatmul.mubr.bf16.gmra.mrb[0].mxu0 %v7784
    %v9471 = vpop.f32.mrb[0].mxu0
    %v9472 = vadd.f32 0.0, %v9471
    %v9473 = vpop.f32.mrb[0].mxu0
    %v9474 = vpop.f32.mrb[0].mxu0
    %v9475 = vadd.f32 0.0, %v9474
    %v9476 = vpop.f32.mrb[0].mxu0
    %9477 = vmatprep.mubr.bf16.mxu0 %v7881
    %9478 = vmatmul.mubr.bf16.gmra.mrb[0].mxu0 %v7785
    %v9479 = vpop.f32.mrb[0].mxu0
    %v9480 = vadd.f32 0.0, %v9479
    %v9481 = vpop.f32.mrb[0].mxu0
    %v9482 = vpop.f32.mrb[0].mxu0
    %v9483 = vadd.f32 0.0, %v9482
    %v9484 = vpop.f32.mrb[0].mxu0
    %9485 = vmatprep.mubr.bf16.mxu0 %v7882
    %9486 = vmatmul.mubr.bf16.gmra.mrb[0].mxu0 %v7786
    %v9487 = vpop.f32.mrb[0].mxu0
    %v9488 = vadd.f32 0.0, %v9487
    %v9489 = vpop.f32.mrb[0].mxu0
    %v9490 = vpop.f32.mrb[0].mxu0
    %v9491 = vadd.f32 0.0, %v9490
    %v9492 = vpop.f32.mrb[0].mxu0
    %9493 = vmatprep.mubr.bf16.mxu0 %v7883
    %9494 = vmatmul.mubr.bf16.gmra.mrb[0].mxu0 %v7787
    %v9495 = vpop.f32.mrb[0].mxu0
    %v9496 = vadd.f32 0.0, %v9495
    %v9497 = vpop.f32.mrb[0].mxu0
    %v9498 = vpop.f32.mrb[0].mxu0
    %v9499 = vadd.f32 0.0, %v9498
    %v9500 = vpop.f32.mrb[0].mxu0
    %9501 = vmatprep.mubr.bf16.mxu0 %v7884
    %9502 = vmatmul.mubr.bf16.gmra.mrb[0].mxu0 %v7788
    %v9503 = vpop.f32.mrb[0].mxu0
    %v9504 = vadd.f32 0.0, %v9503
    %v9505 = vpop.f32.mrb[0].mxu0
    %v9506 = vpop.f32.mrb[0].mxu0
    %v9507 = vadd.f32 0.0, %v9506
    %v9508 = vpop.f32.mrb[0].mxu0
    %9509 = vmatprep.mubr.bf16.mxu0 %v7885
    %9510 = vmatmul.mubr.bf16.gmra.mrb[0].mxu0 %v7789
    %v9511 = vpop.f32.mrb[0].mxu0
    %v9512 = vadd.f32 0.0, %v9511
    %v9513 = vpop.f32.mrb[0].mxu0
    %v9514 = vpop.f32.mrb[0].mxu0
    %v9515 = vadd.f32 0.0, %v9514
    %v9516 = vpop.f32.mrb[0].mxu0
    %9517 = vmatprep.mubr.bf16.mxu0 %v7886
    %9518 = vmatmul.mubr.bf16.gmra.mrb[0].mxu0 %v7790
    %v9519 = vpop.f32.mrb[0].mxu0
    %v9520 = vadd.f32 0.0, %v9519
    %v9521 = vpop.f32.mrb[0].mxu0
    %v9522 = vpop.f32.mrb[0].mxu0
    %v9523 = vadd.f32 0.0, %v9522
    %v9524 = vpop.f32.mrb[0].mxu0
    %9525 = vmatprep.mubr.bf16.mxu0 %v7887
    %9526 = vmatmul.mubr.bf16.gmra.mrb[0].mxu0 %v7791
    %v9527 = vpop.f32.mrb[0].mxu0
    %v9528 = vadd.f32 0.0, %v9527
    %v9529 = vpop.f32.mrb[0].mxu0
    %v9530 = vpop.f32.mrb[0].mxu0
    %v9531 = vadd.f32 0.0, %v9530
    %v9532 = vpop.f32.mrb[0].mxu0
    %9533 = vmatprep.mubr.bf16.mxu0 %v7888
    %9534 = vmatmul.mubr.bf16.gmra.mrb[0].mxu0 %v7792
    %v9535 = vpop.f32.mrb[0].mxu0
    %v9536 = vadd.f32 0.0, %v9535
    %v9537 = vpop.f32.mrb[0].mxu0
    %v9538 = vpop.f32.mrb[0].mxu0
    %v9539 = vadd.f32 0.0, %v9538
    %v9540 = vpop.f32.mrb[0].mxu0
    %9541 = vmatprep.mubr.bf16.mxu0 %v7889
    %9542 = vmatmul.mubr.bf16.gmra.mrb[0].mxu0 %v7793
    %v9543 = vpop.f32.mrb[0].mxu0
    %v9544 = vadd.f32 0.0, %v9543
    %v9545 = vpop.f32.mrb[0].mxu0
    %v9546 = vpop.f32.mrb[0].mxu0
    %v9547 = vadd.f32 0.0, %v9546
    %v9548 = vpop.f32.mrb[0].mxu0
    %9549 = vmatprep.mubr.bf16.mxu0 %v7890
    %9550 = vmatmul.mubr.bf16.gmra.mrb[0].mxu0 %v7794
    %v9551 = vpop.f32.mrb[0].mxu0
    %v9552 = vadd.f32 0.0, %v9551
    %v9553 = vpop.f32.mrb[0].mxu0
    %v9554 = vpop.f32.mrb[0].mxu0
    %v9555 = vadd.f32 0.0, %v9554
    %v9556 = vpop.f32.mrb[0].mxu0
    %9557 = vmatprep.mubr.bf16.mxu0 %v7891
    %9558 = vmatmul.mubr.bf16.gmra.mrb[0].mxu0 %v7795
    %v9559 = vpop.f32.mrb[0].mxu0
    %v9560 = vadd.f32 0.0, %v9559
    %v9561 = vpop.f32.mrb[0].mxu0
    %v9562 = vpop.f32.mrb[0].mxu0
    %v9563 = vadd.f32 0.0, %v9562
    %v9564 = vpop.f32.mrb[0].mxu0
    %9565 = vmatprep.mubr.bf16.mxu0 %v7892
    %9566 = vmatmul.mubr.bf16.gmra.mrb[0].mxu0 %v7796
    %v9567 = vpop.f32.mrb[0].mxu0
    %v9568 = vadd.f32 0.0, %v9567
    %v9569 = vpop.f32.mrb[0].mxu0
    %v9570 = vpop.f32.mrb[0].mxu0
    %v9571 = vadd.f32 0.0, %v9570
    %v9572 = vpop.f32.mrb[0].mxu0
    %9573 = vmatprep.mubr.bf16.mxu0 %v7893
    %9574 = vmatmul.mubr.bf16.gmra.mrb[0].mxu0 %v7797
    %v9575 = vpop.f32.mrb[0].mxu0
    %v9576 = vadd.f32 0.0, %v9575
    %v9577 = vpop.f32.mrb[0].mxu0
    %v9578 = vpop.f32.mrb[0].mxu0
    %v9579 = vadd.f32 0.0, %v9578
    %v9580 = vpop.f32.mrb[0].mxu0
    %9581 = vmatprep.mubr.bf16.mxu0 %v7894
    %9582 = vmatmul.mubr.bf16.gmra.mrb[0].mxu0 %v7798
    %v9583 = vpop.f32.mrb[0].mxu0
    %v9584 = vadd.f32 0.0, %v9583
    %v9585 = vpop.f32.mrb[0].mxu0
    %v9586 = vpop.f32.mrb[0].mxu0
    %v9587 = vadd.f32 0.0, %v9586
    %v9588 = vpop.f32.mrb[0].mxu0
    %9589 = vmatprep.mubr.bf16.mxu0 %v7895
    %9590 = vmatmul.mubr.bf16.gmra.mrb[0].mxu0 %v7799
    %v9591 = vpop.f32.mrb[0].mxu0
    %v9592 = vadd.f32 0.0, %v9591
    %v9593 = vpop.f32.mrb[0].mxu0
    %v9594 = vpop.f32.mrb[0].mxu0
    %v9595 = vadd.f32 0.0, %v9594
    %v9596 = vpop.f32.mrb[0].mxu0
    %9597 = vmatprep.mubr.bf16.mxu0 %v7896
    %9598 = vmatmul.mubr.bf16.gmra.mrb[0].mxu0 %v7800
    %v9599 = vpop.f32.mrb[0].mxu0
    %v9600 = vadd.f32 0.0, %v9599
    %v9601 = vpop.f32.mrb[0].mxu0
    %v9602 = vpop.f32.mrb[0].mxu0
    %v9603 = vadd.f32 0.0, %v9602
    %v9604 = vpop.f32.mrb[0].mxu0
    %9605 = vmatprep.mubr.bf16.mxu0 %v7897
    %9606 = vmatmul.mubr.bf16.gmra.mrb[0].mxu0 %v7801
    %v9607 = vpop.f32.mrb[0].mxu0
    %v9608 = vadd.f32 0.0, %v9607
    %v9609 = vpop.f32.mrb[0].mxu0
    %v9610 = vpop.f32.mrb[0].mxu0
    %v9611 = vadd.f32 0.0, %v9610
    %v9612 = vpop.f32.mrb[0].mxu0
    %9613 = vmatprep.mubr.bf16.mxu0 %v7898
    %9614 = vmatmul.mubr.bf16.gmra.mrb[0].mxu0 %v7802
    %v9615 = vpop.f32.mrb[0].mxu0
    %v9616 = vadd.f32 0.0, %v9615
    %v9617 = vpop.f32.mrb[0].mxu0
    %v9618 = vpop.f32.mrb[0].mxu0
    %v9619 = vadd.f32 0.0, %v9618
    %v9620 = vpop.f32.mrb[0].mxu0
    %9621 = vmatprep.mubr.bf16.mxu0 %v7899
    %9622 = vmatmul.mubr.bf16.gmra.mrb[0].mxu0 %v7803
    %v9623 = vpop.f32.mrb[0].mxu0
    %v9624 = vadd.f32 0.0, %v9623
    %v9625 = vpop.f32.mrb[0].mxu0
    %v9626 = vpop.f32.mrb[0].mxu0
    %v9627 = vadd.f32 0.0, %v9626
    %v9628 = vpop.f32.mrb[0].mxu0
    %9629 = vdwg.mxu0
    %9630 = vmatprep.subr.bf16.mxu0 0
    %9631 = vmatpush1.bf16.msra.mxu0 %v9213
    %9632 = vmatprep.subr.bf16.mxu0 0
    %9633 = vmatpush1.bf16.msra.mxu0 %v9214
    %9634 = vmatprep.subr.bf16.mxu0 0
    %9635 = vmatpush1.bf16.msra.mxu0 %v9215
    %9636 = vmatprep.subr.bf16.mxu0 0
    %9637 = vmatpush1.bf16.msra.mxu0 %v9216
    %9638 = vmatprep.subr.bf16.mxu0 0
    %9639 = vmatpush1.bf16.msra.mxu0 %v9217
    %9640 = vmatprep.subr.bf16.mxu0 0
    %9641 = vmatpush1.bf16.msra.mxu0 %v9218
    %9642 = vmatprep.subr.bf16.mxu0 0
    %9643 = vmatpush1.bf16.msra.mxu0 %v9219
    %9644 = vmatprep.subr.bf16.mxu0 0
    %9645 = vmatpush1.bf16.msra.mxu0 %v9220
    %9646 = vmatprep.subr.bf16.mxu0 0
    %9647 = vmatpush1.bf16.msra.mxu0 %v9221
    %9648 = vmatprep.subr.bf16.mxu0 0
    %9649 = vmatpush1.bf16.msra.mxu0 %v9222
    %9650 = vmatprep.subr.bf16.mxu0 0
    %9651 = vmatpush1.bf16.msra.mxu0 %v9223
    %9652 = vmatprep.subr.bf16.mxu0 0
    %9653 = vmatpush1.bf16.msra.mxu0 %v9224
    %9654 = vmatprep.subr.bf16.mxu0 0
    %9655 = vmatpush1.bf16.msra.mxu0 %v9225
    %9656 = vmatprep.subr.bf16.mxu0 0
    %9657 = vmatpush1.bf16.msra.mxu0 %v9226
    %9658 = vmatprep.subr.bf16.mxu0 0
    %9659 = vmatpush1.bf16.msra.mxu0 %v9227
    %9660 = vmatprep.subr.bf16.mxu0 0
    %9661 = vmatpush1.bf16.msra.mxu0 %v9228
    %9662 = vmatprep.mubr.bf16.mxu0 %v8253
    %9663 = vmatmul.mubr.bf16.gmra.mrb[0].mxu0 %v8157
    %v9664 = vpop.f32.mrb[0].mxu0
    %v9665 = vadd.f32 %v9376, %v9664
    %v9666 = vpop.f32.mrb[0].mxu0
    %v9667 = vpop.f32.mrb[0].mxu0
    %v9668 = vadd.f32 %v9379, %v9667
    %v9669 = vpop.f32.mrb[0].mxu0
    %9670 = vmatprep.mubr.bf16.mxu0 %v8254
    %9671 = vmatmul.mubr.bf16.gmra.mrb[0].mxu0 %v8158
    %v9672 = vpop.f32.mrb[0].mxu0
    %v9673 = vadd.f32 %v9384, %v9672
    %v9674 = vpop.f32.mrb[0].mxu0
    %v9675 = vpop.f32.mrb[0].mxu0
    %v9676 = vadd.f32 %v9387, %v9675
    %v9677 = vpop.f32.mrb[0].mxu0
    %9678 = vmatprep.mubr.bf16.mxu0 %v8255
    %9679 = vmatmul.mubr.bf16.gmra.mrb[0].mxu0 %v8159
    %v9680 = vpop.f32.mrb[0].mxu0
    %v9681 = vadd.f32 %v9392, %v9680
    %v9682 = vpop.f32.mrb[0].mxu0
    %v9683 = vpop.f32.mrb[0].mxu0
    %v9684 = vadd.f32 %v9395, %v9683
    %v9685 = vpop.f32.mrb[0].mxu0
    %9686 = vmatprep.mubr.bf16.mxu0 %v8256
    %9687 = vmatmul.mubr.bf16.gmra.mrb[0].mxu0 %v8160
    %v9688 = vpop.f32.mrb[0].mxu0
    %v9689 = vadd.f32 %v9400, %v9688
    %v9690 = vpop.f32.mrb[0].mxu0
    %v9691 = vpop.f32.mrb[0].mxu0
    %v9692 = vadd.f32 %v9403, %v9691
    %v9693 = vpop.f32.mrb[0].mxu0
    %9694 = vmatprep.mubr.bf16.mxu0 %v8257
    %9695 = vmatmul.mubr.bf16.gmra.mrb[0].mxu0 %v8161
    %v9696 = vpop.f32.mrb[0].mxu0
    %v9697 = vadd.f32 %v9408, %v9696
    %v9698 = vpop.f32.mrb[0].mxu0
    %v9699 = vpop.f32.mrb[0].mxu0
    %v9700 = vadd.f32 %v9411, %v9699
    %v9701 = vpop.f32.mrb[0].mxu0
    %9702 = vmatprep.mubr.bf16.mxu0 %v8258
    %9703 = vmatmul.mubr.bf16.gmra.mrb[0].mxu0 %v8162
    %v9704 = vpop.f32.mrb[0].mxu0
    %v9705 = vadd.f32 %v9416, %v9704
    %v9706 = vpop.f32.mrb[0].mxu0
    %v9707 = vpop.f32.mrb[0].mxu0
    %v9708 = vadd.f32 %v9419, %v9707
    %v9709 = vpop.f32.mrb[0].mxu0
    %9710 = vmatprep.mubr.bf16.mxu0 %v8259
    %9711 = vmatmul.mubr.bf16.gmra.mrb[0].mxu0 %v8163
    %v9712 = vpop.f32.mrb[0].mxu0
    %v9713 = vadd.f32 %v9424, %v9712
    %v9714 = vpop.f32.mrb[0].mxu0
    %v9715 = vpop.f32.mrb[0].mxu0
    %v9716 = vadd.f32 %v9427, %v9715
    %v9717 = vpop.f32.mrb[0].mxu0
    %9718 = vmatprep.mubr.bf16.mxu0 %v8260
    %9719 = vmatmul.mubr.bf16.gmra.mrb[0].mxu0 %v8164
    %v9720 = vpop.f32.mrb[0].mxu0
    %v9721 = vadd.f32 %v9432, %v9720
    %v9722 = vpop.f32.mrb[0].mxu0
    %v9723 = vpop.f32.mrb[0].mxu0
    %v9724 = vadd.f32 %v9435, %v9723
    %v9725 = vpop.f32.mrb[0].mxu0
    %9726 = vmatprep.mubr.bf16.mxu0 %v8261
    %9727 = vmatmul.mubr.bf16.gmra.mrb[0].mxu0 %v8165
    %v9728 = vpop.f32.mrb[0].mxu0
    %v9729 = vadd.f32 %v9440, %v9728
    %v9730 = vpop.f32.mrb[0].mxu0
    %v9731 = vpop.f32.mrb[0].mxu0
    %v9732 = vadd.f32 %v9443, %v9731
    %v9733 = vpop.f32.mrb[0].mxu0
    %9734 = vmatprep.mubr.bf16.mxu0 %v8262
    %9735 = vmatmul.mubr.bf16.gmra.mrb[0].mxu0 %v8166
    %v9736 = vpop.f32.mrb[0].mxu0
    %v9737 = vadd.f32 %v9448, %v9736
    %v9738 = vpop.f32.mrb[0].mxu0
    %v9739 = vpop.f32.mrb[0].mxu0
    %v9740 = vadd.f32 %v9451, %v9739
    %v9741 = vpop.f32.mrb[0].mxu0
    %9742 = vmatprep.mubr.bf16.mxu0 %v8263
    %9743 = vmatmul.mubr.bf16.gmra.mrb[0].mxu0 %v8167
    %v9744 = vpop.f32.mrb[0].mxu0
    %v9745 = vadd.f32 %v9456, %v9744
    %v9746 = vpop.f32.mrb[0].mxu0
    %v9747 = vpop.f32.mrb[0].mxu0
    %v9748 = vadd.f32 %v9459, %v9747
    %v9749 = vpop.f32.mrb[0].mxu0
    %9750 = vmatprep.mubr.bf16.mxu0 %v8264
    %9751 = vmatmul.mubr.bf16.gmra.mrb[0].mxu0 %v8168
    %v9752 = vpop.f32.mrb[0].mxu0
    %v9753 = vadd.f32 %v9464, %v9752
    %v9754 = vpop.f32.mrb[0].mxu0
    %v9755 = vpop.f32.mrb[0].mxu0
    %v9756 = vadd.f32 %v9467, %v9755
    %v9757 = vpop.f32.mrb[0].mxu0
    %9758 = vmatprep.mubr.bf16.mxu0 %v8265
    %9759 = vmatmul.mubr.bf16.gmra.mrb[0].mxu0 %v8169
    %v9760 = vpop.f32.mrb[0].mxu0
    %v9761 = vadd.f32 %v9472, %v9760
    %v9762 = vpop.f32.mrb[0].mxu0
    %v9763 = vpop.f32.mrb[0].mxu0
    %v9764 = vadd.f32 %v9475, %v9763
    %v9765 = vpop.f32.mrb[0].mxu0
    %9766 = vmatprep.mubr.bf16.mxu0 %v8266
    %9767 = vmatmul.mubr.bf16.gmra.mrb[0].mxu0 %v8170
    %v9768 = vpop.f32.mrb[0].mxu0
    %v9769 = vadd.f32 %v9480, %v9768
    %v9770 = vpop.f32.mrb[0].mxu0
    %v9771 = vpop.f32.mrb[0].mxu0
    %v9772 = vadd.f32 %v9483, %v9771
    %v9773 = vpop.f32.mrb[0].mxu0
    %9774 = vmatprep.mubr.bf16.mxu0 %v8267
    %9775 = vmatmul.mubr.bf16.gmra.mrb[0].mxu0 %v8171
    %v9776 = vpop.f32.mrb[0].mxu0
    %v9777 = vadd.f32 %v9488, %v9776
    %v9778 = vpop.f32.mrb[0].mxu0
    %v9779 = vpop.f32.mrb[0].mxu0
    %v9780 = vadd.f32 %v9491, %v9779
    %v9781 = vpop.f32.mrb[0].mxu0
    %9782 = vmatprep.mubr.bf16.mxu0 %v8268
    %9783 = vmatmul.mubr.bf16.gmra.mrb[0].mxu0 %v8172
    %v9784 = vpop.f32.mrb[0].mxu0
    %v9785 = vadd.f32 %v9496, %v9784
    %v9786 = vpop.f32.mrb[0].mxu0
    %v9787 = vpop.f32.mrb[0].mxu0
    %v9788 = vadd.f32 %v9499, %v9787
    %v9789 = vpop.f32.mrb[0].mxu0
    %9790 = vmatprep.mubr.bf16.mxu0 %v8269
    %9791 = vmatmul.mubr.bf16.gmra.mrb[0].mxu0 %v8173
    %v9792 = vpop.f32.mrb[0].mxu0
    %v9793 = vadd.f32 %v9504, %v9792
    %v9794 = vpop.f32.mrb[0].mxu0
    %v9795 = vpop.f32.mrb[0].mxu0
    %v9796 = vadd.f32 %v9507, %v9795
    %v9797 = vpop.f32.mrb[0].mxu0
    %9798 = vmatprep.mubr.bf16.mxu0 %v8270
    %9799 = vmatmul.mubr.bf16.gmra.mrb[0].mxu0 %v8174
    %v9800 = vpop.f32.mrb[0].mxu0
    %v9801 = vadd.f32 %v9512, %v9800
    %v9802 = vpop.f32.mrb[0].mxu0
    %v9803 = vpop.f32.mrb[0].mxu0
    %v9804 = vadd.f32 %v9515, %v9803
    %v9805 = vpop.f32.mrb[0].mxu0
    %9806 = vmatprep.mubr.bf16.mxu0 %v8271
    %9807 = vmatmul.mubr.bf16.gmra.mrb[0].mxu0 %v8175
    %v9808 = vpop.f32.mrb[0].mxu0
    %v9809 = vadd.f32 %v9520, %v9808
    %v9810 = vpop.f32.mrb[0].mxu0
    %v9811 = vpop.f32.mrb[0].mxu0
    %v9812 = vadd.f32 %v9523, %v9811
    %v9813 = vpop.f32.mrb[0].mxu0
    %9814 = vmatprep.mubr.bf16.mxu0 %v8272
    %9815 = vmatmul.mubr.bf16.gmra.mrb[0].mxu0 %v8176
    %v9816 = vpop.f32.mrb[0].mxu0
    %v9817 = vadd.f32 %v9528, %v9816
    %v9818 = vpop.f32.mrb[0].mxu0
    %v9819 = vpop.f32.mrb[0].mxu0
    %v9820 = vadd.f32 %v9531, %v9819
    %v9821 = vpop.f32.mrb[0].mxu0
    %9822 = vmatprep.mubr.bf16.mxu0 %v8273
    %9823 = vmatmul.mubr.bf16.gmra.mrb[0].mxu0 %v8177
    %v9824 = vpop.f32.mrb[0].mxu0
    %v9825 = vadd.f32 %v9536, %v9824
    %v9826 = vpop.f32.mrb[0].mxu0
    %v9827 = vpop.f32.mrb[0].mxu0
    %v9828 = vadd.f32 %v9539, %v9827
    %v9829 = vpop.f32.mrb[0].mxu0
    %9830 = vmatprep.mubr.bf16.mxu0 %v8274
    %9831 = vmatmul.mubr.bf16.gmra.mrb[0].mxu0 %v8178
    %v9832 = vpop.f32.mrb[0].mxu0
    %v9833 = vadd.f32 %v9544, %v9832
    %v9834 = vpop.f32.mrb[0].mxu0
    %v9835 = vpop.f32.mrb[0].mxu0
    %v9836 = vadd.f32 %v9547, %v9835
    %v9837 = vpop.f32.mrb[0].mxu0
    %9838 = vmatprep.mubr.bf16.mxu0 %v8275
    %9839 = vmatmul.mubr.bf16.gmra.mrb[0].mxu0 %v8179
    %v9840 = vpop.f32.mrb[0].mxu0
    %v9841 = vadd.f32 %v9552, %v9840
    %v9842 = vpop.f32.mrb[0].mxu0
    %v9843 = vpop.f32.mrb[0].mxu0
    %v9844 = vadd.f32 %v9555, %v9843
    %v9845 = vpop.f32.mrb[0].mxu0
    %9846 = vmatprep.mubr.bf16.mxu0 %v8276
    %9847 = vmatmul.mubr.bf16.gmra.mrb[0].mxu0 %v8180
    %v9848 = vpop.f32.mrb[0].mxu0
    %v9849 = vadd.f32 %v9560, %v9848
    %v9850 = vpop.f32.mrb[0].mxu0
    %v9851 = vpop.f32.mrb[0].mxu0
    %v9852 = vadd.f32 %v9563, %v9851
    %v9853 = vpop.f32.mrb[0].mxu0
    %9854 = vmatprep.mubr.bf16.mxu0 %v8277
    %9855 = vmatmul.mubr.bf16.gmra.mrb[0].mxu0 %v8181
    %v9856 = vpop.f32.mrb[0].mxu0
    %v9857 = vadd.f32 %v9568, %v9856
    %v9858 = vpop.f32.mrb[0].mxu0
    %v9859 = vpop.f32.mrb[0].mxu0
    %v9860 = vadd.f32 %v9571, %v9859
    %v9861 = vpop.f32.mrb[0].mxu0
    %9862 = vmatprep.mubr.bf16.mxu0 %v8278
    %9863 = vmatmul.mubr.bf16.gmra.mrb[0].mxu0 %v8182
    %v9864 = vpop.f32.mrb[0].mxu0
    %v9865 = vadd.f32 %v9576, %v9864
    %v9866 = vpop.f32.mrb[0].mxu0
    %v9867 = vpop.f32.mrb[0].mxu0
    %v9868 = vadd.f32 %v9579, %v9867
    %v9869 = vpop.f32.mrb[0].mxu0
    %9870 = vmatprep.mubr.bf16.mxu0 %v8279
    %9871 = vmatmul.mubr.bf16.gmra.mrb[0].mxu0 %v8183
    %v9872 = vpop.f32.mrb[0].mxu0
    %v9873 = vadd.f32 %v9584, %v9872
    %v9874 = vpop.f32.mrb[0].mxu0
    %v9875 = vpop.f32.mrb[0].mxu0
    %v9876 = vadd.f32 %v9587, %v9875
    %v9877 = vpop.f32.mrb[0].mxu0
    %9878 = vmatprep.mubr.bf16.mxu0 %v8280
    %9879 = vmatmul.mubr.bf16.gmra.mrb[0].mxu0 %v8184
    %v9880 = vpop.f32.mrb[0].mxu0
    %v9881 = vadd.f32 %v9592, %v9880
    %v9882 = vpop.f32.mrb[0].mxu0
    %v9883 = vpop.f32.mrb[0].mxu0
    %v9884 = vadd.f32 %v9595, %v9883
    %v9885 = vpop.f32.mrb[0].mxu0
    %9886 = vmatprep.mubr.bf16.mxu0 %v8281
    %9887 = vmatmul.mubr.bf16.gmra.mrb[0].mxu0 %v8185
    %v9888 = vpop.f32.mrb[0].mxu0
    %v9889 = vadd.f32 %v9600, %v9888
    %v9890 = vpop.f32.mrb[0].mxu0
    %v9891 = vpop.f32.mrb[0].mxu0
    %v9892 = vadd.f32 %v9603, %v9891
    %v9893 = vpop.f32.mrb[0].mxu0
    %9894 = vmatprep.mubr.bf16.mxu0 %v8282
    %9895 = vmatmul.mubr.bf16.gmra.mrb[0].mxu0 %v8186
    %v9896 = vpop.f32.mrb[0].mxu0
    %v9897 = vadd.f32 %v9608, %v9896
    %v9898 = vpop.f32.mrb[0].mxu0
    %v9899 = vpop.f32.mrb[0].mxu0
    %v9900 = vadd.f32 %v9611, %v9899
    %v9901 = vpop.f32.mrb[0].mxu0
    %9902 = vmatprep.mubr.bf16.mxu0 %v8283
    %9903 = vmatmul.mubr.bf16.gmra.mrb[0].mxu0 %v8187
    %v9904 = vpop.f32.mrb[0].mxu0
    %v9905 = vadd.f32 %v9616, %v9904
    %v9906 = vpop.f32.mrb[0].mxu0
    %v9907 = vpop.f32.mrb[0].mxu0
    %v9908 = vadd.f32 %v9619, %v9907
    %v9909 = vpop.f32.mrb[0].mxu0
    %9910 = vmatprep.mubr.bf16.mxu0 %v8284
    %9911 = vmatmul.mubr.bf16.gmra.mrb[0].mxu0 %v8188
    %v9912 = vpop.f32.mrb[0].mxu0
    %v9913 = vadd.f32 %v9624, %v9912
    %v9914 = vpop.f32.mrb[0].mxu0
    %v9915 = vpop.f32.mrb[0].mxu0
    %v9916 = vadd.f32 %v9627, %v9915
    %v9917 = vpop.f32.mrb[0].mxu0
    %9918 = vdwg.mxu0
    %9919 = vmatprep.subr.bf16.mxu0 0
    %9920 = vmatpush1.bf16.msra.mxu0 %v9229
    %9921 = vmatprep.subr.bf16.mxu0 0
    %9922 = vmatpush1.bf16.msra.mxu0 %v9230
    %9923 = vmatprep.subr.bf16.mxu0 0
    %9924 = vmatpush1.bf16.msra.mxu0 %v9231
    %9925 = vmatprep.subr.bf16.mxu0 0
    %9926 = vmatpush1.bf16.msra.mxu0 %v9232
    %9927 = vmatprep.subr.bf16.mxu0 0
    %9928 = vmatpush1.bf16.msra.mxu0 %v9233
    %9929 = vmatprep.subr.bf16.mxu0 0
    %9930 = vmatpush1.bf16.msra.mxu0 %v9234
    %9931 = vmatprep.subr.bf16.mxu0 0
    %9932 = vmatpush1.bf16.msra.mxu0 %v9235
    %9933 = vmatprep.subr.bf16.mxu0 0
    %9934 = vmatpush1.bf16.msra.mxu0 %v9236
    %9935 = vmatprep.subr.bf16.mxu0 0
    %9936 = vmatpush1.bf16.msra.mxu0 %v9237
    %9937 = vmatprep.subr.bf16.mxu0 0
    %9938 = vmatpush1.bf16.msra.mxu0 %v9238
    %9939 = vmatprep.subr.bf16.mxu0 0
    %9940 = vmatpush1.bf16.msra.mxu0 %v9239
    %9941 = vmatprep.subr.bf16.mxu0 0
    %9942 = vmatpush1.bf16.msra.mxu0 %v9240
    %9943 = vmatprep.subr.bf16.mxu0 0
    %9944 = vmatpush1.bf16.msra.mxu0 %v9241
    %9945 = vmatprep.subr.bf16.mxu0 0
    %9946 = vmatpush1.bf16.msra.mxu0 %v9242
    %9947 = vmatprep.subr.bf16.mxu0 0
    %9948 = vmatpush1.bf16.msra.mxu0 %v9243
    %9949 = vmatprep.subr.bf16.mxu0 0
    %9950 = vmatpush1.bf16.msra.mxu0 %v9244
    %9951 = vmatprep.mubr.bf16.mxu0 %v8445
    %9952 = vmatmul.mubr.bf16.gmra.mrb[0].mxu0 %v8349
    %v9953 = vpop.f32.mrb[0].mxu0
    %v9954 = vadd.f32 %v9665, %v9953
    %v9955 = vpop.f32.mrb[0].mxu0
    %v9956 = vpop.f32.mrb[0].mxu0
    %v9957 = vadd.f32 %v9668, %v9956
    %v9958 = vpop.f32.mrb[0].mxu0
    %9959 = vmatprep.mubr.bf16.mxu0 %v8446
    %9960 = vmatmul.mubr.bf16.gmra.mrb[0].mxu0 %v8350
    %v9961 = vpop.f32.mrb[0].mxu0
    %v9962 = vadd.f32 %v9673, %v9961
    %v9963 = vpop.f32.mrb[0].mxu0
    %v9964 = vpop.f32.mrb[0].mxu0
    %v9965 = vadd.f32 %v9676, %v9964
    %v9966 = vpop.f32.mrb[0].mxu0
    %9967 = vmatprep.mubr.bf16.mxu0 %v8447
    %9968 = vmatmul.mubr.bf16.gmra.mrb[0].mxu0 %v8351
    %v9969 = vpop.f32.mrb[0].mxu0
    %v9970 = vadd.f32 %v9681, %v9969
    %v9971 = vpop.f32.mrb[0].mxu0
    %v9972 = vpop.f32.mrb[0].mxu0
    %v9973 = vadd.f32 %v9684, %v9972
    %v9974 = vpop.f32.mrb[0].mxu0
    %9975 = vmatprep.mubr.bf16.mxu0 %v8448
    %9976 = vmatmul.mubr.bf16.gmra.mrb[0].mxu0 %v8352
    %v9977 = vpop.f32.mrb[0].mxu0
    %v9978 = vadd.f32 %v9689, %v9977
    %v9979 = vpop.f32.mrb[0].mxu0
    %v9980 = vpop.f32.mrb[0].mxu0
    %v9981 = vadd.f32 %v9692, %v9980
    %v9982 = vpop.f32.mrb[0].mxu0
    %9983 = vmatprep.mubr.bf16.mxu0 %v8449
    %9984 = vmatmul.mubr.bf16.gmra.mrb[0].mxu0 %v8353
    %v9985 = vpop.f32.mrb[0].mxu0
    %v9986 = vadd.f32 %v9697, %v9985
    %v9987 = vpop.f32.mrb[0].mxu0
    %v9988 = vpop.f32.mrb[0].mxu0
    %v9989 = vadd.f32 %v9700, %v9988
    %v9990 = vpop.f32.mrb[0].mxu0
    %9991 = vmatprep.mubr.bf16.mxu0 %v8450
    %9992 = vmatmul.mubr.bf16.gmra.mrb[0].mxu0 %v8354
    %v9993 = vpop.f32.mrb[0].mxu0
    %v9994 = vadd.f32 %v9705, %v9993
    %v9995 = vpop.f32.mrb[0].mxu0
    %v9996 = vpop.f32.mrb[0].mxu0
    %v9997 = vadd.f32 %v9708, %v9996
    %v9998 = vpop.f32.mrb[0].mxu0
    %9999 = vmatprep.mubr.bf16.mxu0 %v8451
    %10000 = vmatmul.mubr.bf16.gmra.mrb[0].mxu0 %v8355
    %v10001 = vpop.f32.mrb[0].mxu0
    %v10002 = vadd.f32 %v9713, %v10001
    %v10003 = vpop.f32.mrb[0].mxu0
    %v10004 = vpop.f32.mrb[0].mxu0
    %v10005 = vadd.f32 %v9716, %v10004
    %v10006 = vpop.f32.mrb[0].mxu0
    %10007 = vmatprep.mubr.bf16.mxu0 %v8452
    %10008 = vmatmul.mubr.bf16.gmra.mrb[0].mxu0 %v8356
    %v10009 = vpop.f32.mrb[0].mxu0
    %v10010 = vadd.f32 %v9721, %v10009
    %v10011 = vpop.f32.mrb[0].mxu0
    %v10012 = vpop.f32.mrb[0].mxu0
    %v10013 = vadd.f32 %v9724, %v10012
    %v10014 = vpop.f32.mrb[0].mxu0
    %10015 = vmatprep.mubr.bf16.mxu0 %v8453
    %10016 = vmatmul.mubr.bf16.gmra.mrb[0].mxu0 %v8357
    %v10017 = vpop.f32.mrb[0].mxu0
    %v10018 = vadd.f32 %v9729, %v10017
    %v10019 = vpop.f32.mrb[0].mxu0
    %v10020 = vpop.f32.mrb[0].mxu0
    %v10021 = vadd.f32 %v9732, %v10020
    %v10022 = vpop.f32.mrb[0].mxu0
    %10023 = vmatprep.mubr.bf16.mxu0 %v8454
    %10024 = vmatmul.mubr.bf16.gmra.mrb[0].mxu0 %v8358
    %v10025 = vpop.f32.mrb[0].mxu0
    %v10026 = vadd.f32 %v9737, %v10025
    %v10027 = vpop.f32.mrb[0].mxu0
    %v10028 = vpop.f32.mrb[0].mxu0
    %v10029 = vadd.f32 %v9740, %v10028
    %v10030 = vpop.f32.mrb[0].mxu0
    %10031 = vmatprep.mubr.bf16.mxu0 %v8455
    %10032 = vmatmul.mubr.bf16.gmra.mrb[0].mxu0 %v8359
    %v10033 = vpop.f32.mrb[0].mxu0
    %v10034 = vadd.f32 %v9745, %v10033
    %v10035 = vpop.f32.mrb[0].mxu0
    %v10036 = vpop.f32.mrb[0].mxu0
    %v10037 = vadd.f32 %v9748, %v10036
    %v10038 = vpop.f32.mrb[0].mxu0
    %10039 = vmatprep.mubr.bf16.mxu0 %v8456
    %10040 = vmatmul.mubr.bf16.gmra.mrb[0].mxu0 %v8360
    %v10041 = vpop.f32.mrb[0].mxu0
    %v10042 = vadd.f32 %v9753, %v10041
    %v10043 = vpop.f32.mrb[0].mxu0
    %v10044 = vpop.f32.mrb[0].mxu0
    %v10045 = vadd.f32 %v9756, %v10044
    %v10046 = vpop.f32.mrb[0].mxu0
    %10047 = vmatprep.mubr.bf16.mxu0 %v8457
    %10048 = vmatmul.mubr.bf16.gmra.mrb[0].mxu0 %v8361
    %v10049 = vpop.f32.mrb[0].mxu0
    %v10050 = vadd.f32 %v9761, %v10049
    %v10051 = vpop.f32.mrb[0].mxu0
    %v10052 = vpop.f32.mrb[0].mxu0
    %v10053 = vadd.f32 %v9764, %v10052
    %v10054 = vpop.f32.mrb[0].mxu0
    %10055 = vmatprep.mubr.bf16.mxu0 %v8458
    %10056 = vmatmul.mubr.bf16.gmra.mrb[0].mxu0 %v8362
    %v10057 = vpop.f32.mrb[0].mxu0
    %v10058 = vadd.f32 %v9769, %v10057
    %v10059 = vpop.f32.mrb[0].mxu0
    %v10060 = vpop.f32.mrb[0].mxu0
    %v10061 = vadd.f32 %v9772, %v10060
    %v10062 = vpop.f32.mrb[0].mxu0
    %10063 = vmatprep.mubr.bf16.mxu0 %v8459
    %10064 = vmatmul.mubr.bf16.gmra.mrb[0].mxu0 %v8363
    %v10065 = vpop.f32.mrb[0].mxu0
    %v10066 = vadd.f32 %v9777, %v10065
    %v10067 = vpop.f32.mrb[0].mxu0
    %v10068 = vpop.f32.mrb[0].mxu0
    %v10069 = vadd.f32 %v9780, %v10068
    %v10070 = vpop.f32.mrb[0].mxu0
    %10071 = vmatprep.mubr.bf16.mxu0 %v8460
    %10072 = vmatmul.mubr.bf16.gmra.mrb[0].mxu0 %v8364
    %v10073 = vpop.f32.mrb[0].mxu0
    %v10074 = vadd.f32 %v9785, %v10073
    %v10075 = vpop.f32.mrb[0].mxu0
    %v10076 = vpop.f32.mrb[0].mxu0
    %v10077 = vadd.f32 %v9788, %v10076
    %v10078 = vpop.f32.mrb[0].mxu0
    %10079 = vmatprep.mubr.bf16.mxu0 %v8461
    %10080 = vmatmul.mubr.bf16.gmra.mrb[0].mxu0 %v8365
    %v10081 = vpop.f32.mrb[0].mxu0
    %v10082 = vadd.f32 %v9793, %v10081
    %v10083 = vpop.f32.mrb[0].mxu0
    %v10084 = vpop.f32.mrb[0].mxu0
    %v10085 = vadd.f32 %v9796, %v10084
    %v10086 = vpop.f32.mrb[0].mxu0
    %10087 = vmatprep.mubr.bf16.mxu0 %v8462
    %10088 = vmatmul.mubr.bf16.gmra.mrb[0].mxu0 %v8366
    %v10089 = vpop.f32.mrb[0].mxu0
    %v10090 = vadd.f32 %v9801, %v10089
    %v10091 = vpop.f32.mrb[0].mxu0
    %v10092 = vpop.f32.mrb[0].mxu0
    %v10093 = vadd.f32 %v9804, %v10092
    %v10094 = vpop.f32.mrb[0].mxu0
    %10095 = vmatprep.mubr.bf16.mxu0 %v8463
    %10096 = vmatmul.mubr.bf16.gmra.mrb[0].mxu0 %v8367
    %v10097 = vpop.f32.mrb[0].mxu0
    %v10098 = vadd.f32 %v9809, %v10097
    %v10099 = vpop.f32.mrb[0].mxu0
    %v10100 = vpop.f32.mrb[0].mxu0
    %v10101 = vadd.f32 %v9812, %v10100
    %v10102 = vpop.f32.mrb[0].mxu0
    %10103 = vmatprep.mubr.bf16.mxu0 %v8464
    %10104 = vmatmul.mubr.bf16.gmra.mrb[0].mxu0 %v8368
    %v10105 = vpop.f32.mrb[0].mxu0
    %v10106 = vadd.f32 %v9817, %v10105
    %v10107 = vpop.f32.mrb[0].mxu0
    %v10108 = vpop.f32.mrb[0].mxu0
    %v10109 = vadd.f32 %v9820, %v10108
    %v10110 = vpop.f32.mrb[0].mxu0
    %10111 = vmatprep.mubr.bf16.mxu0 %v8465
    %10112 = vmatmul.mubr.bf16.gmra.mrb[0].mxu0 %v8369
    %v10113 = vpop.f32.mrb[0].mxu0
    %v10114 = vadd.f32 %v9825, %v10113
    %v10115 = vpop.f32.mrb[0].mxu0
    %v10116 = vpop.f32.mrb[0].mxu0
    %v10117 = vadd.f32 %v9828, %v10116
    %v10118 = vpop.f32.mrb[0].mxu0
    %10119 = vmatprep.mubr.bf16.mxu0 %v8466
    %10120 = vmatmul.mubr.bf16.gmra.mrb[0].mxu0 %v8370
    %v10121 = vpop.f32.mrb[0].mxu0
    %v10122 = vadd.f32 %v9833, %v10121
    %v10123 = vpop.f32.mrb[0].mxu0
    %v10124 = vpop.f32.mrb[0].mxu0
    %v10125 = vadd.f32 %v9836, %v10124
    %v10126 = vpop.f32.mrb[0].mxu0
    %10127 = vmatprep.mubr.bf16.mxu0 %v8467
    %10128 = vmatmul.mubr.bf16.gmra.mrb[0].mxu0 %v8371
    %v10129 = vpop.f32.mrb[0].mxu0
    %v10130 = vadd.f32 %v9841, %v10129
    %v10131 = vpop.f32.mrb[0].mxu0
    %v10132 = vpop.f32.mrb[0].mxu0
    %v10133 = vadd.f32 %v9844, %v10132
    %v10134 = vpop.f32.mrb[0].mxu0
    %10135 = vmatprep.mubr.bf16.mxu0 %v8468
    %10136 = vmatmul.mubr.bf16.gmra.mrb[0].mxu0 %v8372
    %v10137 = vpop.f32.mrb[0].mxu0
    %v10138 = vadd.f32 %v9849, %v10137
    %v10139 = vpop.f32.mrb[0].mxu0
    %v10140 = vpop.f32.mrb[0].mxu0
    %v10141 = vadd.f32 %v9852, %v10140
    %v10142 = vpop.f32.mrb[0].mxu0
    %10143 = vmatprep.mubr.bf16.mxu0 %v8469
    %10144 = vmatmul.mubr.bf16.gmra.mrb[0].mxu0 %v8373
    %v10145 = vpop.f32.mrb[0].mxu0
    %v10146 = vadd.f32 %v9857, %v10145
    %v10147 = vpop.f32.mrb[0].mxu0
    %v10148 = vpop.f32.mrb[0].mxu0
    %v10149 = vadd.f32 %v9860, %v10148
    %v10150 = vpop.f32.mrb[0].mxu0
    %10151 = vmatprep.mubr.bf16.mxu0 %v8470
    %10152 = vmatmul.mubr.bf16.gmra.mrb[0].mxu0 %v8374
    %v10153 = vpop.f32.mrb[0].mxu0
    %v10154 = vadd.f32 %v9865, %v10153
    %v10155 = vpop.f32.mrb[0].mxu0
    %v10156 = vpop.f32.mrb[0].mxu0
    %v10157 = vadd.f32 %v9868, %v10156
    %v10158 = vpop.f32.mrb[0].mxu0
    %10159 = vmatprep.mubr.bf16.mxu0 %v8471
    %10160 = vmatmul.mubr.bf16.gmra.mrb[0].mxu0 %v8375
    %v10161 = vpop.f32.mrb[0].mxu0
    %v10162 = vadd.f32 %v9873, %v10161
    %v10163 = vpop.f32.mrb[0].mxu0
    %v10164 = vpop.f32.mrb[0].mxu0
    %v10165 = vadd.f32 %v9876, %v10164
    %v10166 = vpop.f32.mrb[0].mxu0
    %10167 = vmatprep.mubr.bf16.mxu0 %v8472
    %10168 = vmatmul.mubr.bf16.gmra.mrb[0].mxu0 %v8376
    %v10169 = vpop.f32.mrb[0].mxu0
    %v10170 = vadd.f32 %v9881, %v10169
    %v10171 = vpop.f32.mrb[0].mxu0
    %v10172 = vpop.f32.mrb[0].mxu0
    %v10173 = vadd.f32 %v9884, %v10172
    %v10174 = vpop.f32.mrb[0].mxu0
    %10175 = vmatprep.mubr.bf16.mxu0 %v8473
    %10176 = vmatmul.mubr.bf16.gmra.mrb[0].mxu0 %v8377
    %v10177 = vpop.f32.mrb[0].mxu0
    %v10178 = vadd.f32 %v9889, %v10177
    %v10179 = vpop.f32.mrb[0].mxu0
    %v10180 = vpop.f32.mrb[0].mxu0
    %v10181 = vadd.f32 %v9892, %v10180
    %v10182 = vpop.f32.mrb[0].mxu0
    %10183 = vmatprep.mubr.bf16.mxu0 %v8474
    %10184 = vmatmul.mubr.bf16.gmra.mrb[0].mxu0 %v8378
    %v10185 = vpop.f32.mrb[0].mxu0
    %v10186 = vadd.f32 %v9897, %v10185
    %v10187 = vpop.f32.mrb[0].mxu0
    %v10188 = vpop.f32.mrb[0].mxu0
    %v10189 = vadd.f32 %v9900, %v10188
    %v10190 = vpop.f32.mrb[0].mxu0
    %10191 = vmatprep.mubr.bf16.mxu0 %v8475
    %10192 = vmatmul.mubr.bf16.gmra.mrb[0].mxu0 %v8379
    %v10193 = vpop.f32.mrb[0].mxu0
    %v10194 = vadd.f32 %v9905, %v10193
    %v10195 = vpop.f32.mrb[0].mxu0
    %v10196 = vpop.f32.mrb[0].mxu0
    %v10197 = vadd.f32 %v9908, %v10196
    %v10198 = vpop.f32.mrb[0].mxu0
    %10199 = vmatprep.mubr.bf16.mxu0 %v8476
    %10200 = vmatmul.mubr.bf16.gmra.mrb[0].mxu0 %v8380
    %v10201 = vpop.f32.mrb[0].mxu0
    %v10202 = vadd.f32 %v9913, %v10201
    %v10203 = vpop.f32.mrb[0].mxu0
    %v10204 = vpop.f32.mrb[0].mxu0
    %v10205 = vadd.f32 %v9916, %v10204
    %v10206 = vpop.f32.mrb[0].mxu0
    %10207 = vdwg.mxu0
    %10208 = vmatprep.subr.bf16.mxu0 0
    %10209 = vmatpush1.bf16.msra.mxu0 %v9245
    %10210 = vmatprep.subr.bf16.mxu0 0
    %10211 = vmatpush1.bf16.msra.mxu0 %v9246
    %10212 = vmatprep.subr.bf16.mxu0 0
    %10213 = vmatpush1.bf16.msra.mxu0 %v9247
    %10214 = vmatprep.subr.bf16.mxu0 0
    %10215 = vmatpush1.bf16.msra.mxu0 %v9248
    %10216 = vmatprep.subr.bf16.mxu0 0
    %10217 = vmatpush1.bf16.msra.mxu0 %v9249
    %10218 = vmatprep.subr.bf16.mxu0 0
    %10219 = vmatpush1.bf16.msra.mxu0 %v9250
    %10220 = vmatprep.subr.bf16.mxu0 0
    %10221 = vmatpush1.bf16.msra.mxu0 %v9251
    %10222 = vmatprep.subr.bf16.mxu0 0
    %10223 = vmatpush1.bf16.msra.mxu0 %v9252
    %10224 = vmatprep.subr.bf16.mxu0 0
    %10225 = vmatpush1.bf16.msra.mxu0 %v9253
    %10226 = vmatprep.subr.bf16.mxu0 0
    %10227 = vmatpush1.bf16.msra.mxu0 %v9254
    %10228 = vmatprep.subr.bf16.mxu0 0
    %10229 = vmatpush1.bf16.msra.mxu0 %v9255
    %10230 = vmatprep.subr.bf16.mxu0 0
    %10231 = vmatpush1.bf16.msra.mxu0 %v9256
    %10232 = vmatprep.subr.bf16.mxu0 0
    %10233 = vmatpush1.bf16.msra.mxu0 %v9257
    %10234 = vmatprep.subr.bf16.mxu0 0
    %10235 = vmatpush1.bf16.msra.mxu0 %v9258
    %10236 = vmatprep.subr.bf16.mxu0 0
    %10237 = vmatpush1.bf16.msra.mxu0 %v9259
    %10238 = vmatprep.subr.bf16.mxu0 0
    %10239 = vmatpush1.bf16.msra.mxu0 %v9260
    %10240 = vmatprep.mubr.bf16.mxu0 %v8637
    %10241 = vmatmul.mubr.bf16.gmra.mrb[0].mxu0 %v8541
    %v10242 = vpop.f32.mrb[0].mxu0
    %v10243 = vadd.f32 %v9954, %v10242
    %v10244 = vpop.f32.mrb[0].mxu0
    %v10245 = vpop.f32.mrb[0].mxu0
    %v10246 = vadd.f32 %v9957, %v10245
    %v10247 = vpop.f32.mrb[0].mxu0
    %10248 = vmatprep.mubr.bf16.mxu0 %v8638
    %10249 = vmatmul.mubr.bf16.gmra.mrb[0].mxu0 %v8542
    %v10250 = vpop.f32.mrb[0].mxu0
    %v10251 = vadd.f32 %v9962, %v10250
    %v10252 = vpop.f32.mrb[0].mxu0
    %v10253 = vpop.f32.mrb[0].mxu0
    %v10254 = vadd.f32 %v9965, %v10253
    %v10255 = vpop.f32.mrb[0].mxu0
    %10256 = vmatprep.mubr.bf16.mxu0 %v8639
    %10257 = vmatmul.mubr.bf16.gmra.mrb[0].mxu0 %v8543
    %v10258 = vpop.f32.mrb[0].mxu0
    %v10259 = vadd.f32 %v9970, %v10258
    %v10260 = vpop.f32.mrb[0].mxu0
    %v10261 = vpop.f32.mrb[0].mxu0
    %v10262 = vadd.f32 %v9973, %v10261
    %v10263 = vpop.f32.mrb[0].mxu0
    %10264 = vmatprep.mubr.bf16.mxu0 %v8640
    %10265 = vmatmul.mubr.bf16.gmra.mrb[0].mxu0 %v8544
    %v10266 = vpop.f32.mrb[0].mxu0
    %v10267 = vadd.f32 %v9978, %v10266
    %v10268 = vpop.f32.mrb[0].mxu0
    %v10269 = vpop.f32.mrb[0].mxu0
    %v10270 = vadd.f32 %v9981, %v10269
    %v10271 = vpop.f32.mrb[0].mxu0
    %10272 = vmatprep.mubr.bf16.mxu0 %v8641
    %10273 = vmatmul.mubr.bf16.gmra.mrb[0].mxu0 %v8545
    %v10274 = vpop.f32.mrb[0].mxu0
    %v10275 = vadd.f32 %v9986, %v10274
    %v10276 = vpop.f32.mrb[0].mxu0
    %v10277 = vpop.f32.mrb[0].mxu0
    %v10278 = vadd.f32 %v9989, %v10277
    %v10279 = vpop.f32.mrb[0].mxu0
    %10280 = vmatprep.mubr.bf16.mxu0 %v8642
    %10281 = vmatmul.mubr.bf16.gmra.mrb[0].mxu0 %v8546
    %v10282 = vpop.f32.mrb[0].mxu0
    %v10283 = vadd.f32 %v9994, %v10282
    %v10284 = vpop.f32.mrb[0].mxu0
    %v10285 = vpop.f32.mrb[0].mxu0
    %v10286 = vadd.f32 %v9997, %v10285
    %v10287 = vpop.f32.mrb[0].mxu0
    %10288 = vmatprep.mubr.bf16.mxu0 %v8643
    %10289 = vmatmul.mubr.bf16.gmra.mrb[0].mxu0 %v8547
    %v10290 = vpop.f32.mrb[0].mxu0
    %v10291 = vadd.f32 %v10002, %v10290
    %v10292 = vpop.f32.mrb[0].mxu0
    %v10293 = vpop.f32.mrb[0].mxu0
    %v10294 = vadd.f32 %v10005, %v10293
    %v10295 = vpop.f32.mrb[0].mxu0
    %10296 = vmatprep.mubr.bf16.mxu0 %v8644
    %10297 = vmatmul.mubr.bf16.gmra.mrb[0].mxu0 %v8548
    %v10298 = vpop.f32.mrb[0].mxu0
    %v10299 = vadd.f32 %v10010, %v10298
    %v10300 = vpop.f32.mrb[0].mxu0
    %v10301 = vpop.f32.mrb[0].mxu0
    %v10302 = vadd.f32 %v10013, %v10301
    %v10303 = vpop.f32.mrb[0].mxu0
    %10304 = vmatprep.mubr.bf16.mxu0 %v8645
    %10305 = vmatmul.mubr.bf16.gmra.mrb[0].mxu0 %v8549
    %v10306 = vpop.f32.mrb[0].mxu0
    %v10307 = vadd.f32 %v10018, %v10306
    %v10308 = vpop.f32.mrb[0].mxu0
    %v10309 = vpop.f32.mrb[0].mxu0
    %v10310 = vadd.f32 %v10021, %v10309
    %v10311 = vpop.f32.mrb[0].mxu0
    %10312 = vmatprep.mubr.bf16.mxu0 %v8646
    %10313 = vmatmul.mubr.bf16.gmra.mrb[0].mxu0 %v8550
    %v10314 = vpop.f32.mrb[0].mxu0
    %v10315 = vadd.f32 %v10026, %v10314
    %v10316 = vpop.f32.mrb[0].mxu0
    %v10317 = vpop.f32.mrb[0].mxu0
    %v10318 = vadd.f32 %v10029, %v10317
    %v10319 = vpop.f32.mrb[0].mxu0
    %10320 = vmatprep.mubr.bf16.mxu0 %v8647
    %10321 = vmatmul.mubr.bf16.gmra.mrb[0].mxu0 %v8551
    %v10322 = vpop.f32.mrb[0].mxu0
    %v10323 = vadd.f32 %v10034, %v10322
    %v10324 = vpop.f32.mrb[0].mxu0
    %v10325 = vpop.f32.mrb[0].mxu0
    %v10326 = vadd.f32 %v10037, %v10325
    %v10327 = vpop.f32.mrb[0].mxu0
    %10328 = vmatprep.mubr.bf16.mxu0 %v8648
    %10329 = vmatmul.mubr.bf16.gmra.mrb[0].mxu0 %v8552
    %v10330 = vpop.f32.mrb[0].mxu0
    %v10331 = vadd.f32 %v10042, %v10330
    %v10332 = vpop.f32.mrb[0].mxu0
    %v10333 = vpop.f32.mrb[0].mxu0
    %v10334 = vadd.f32 %v10045, %v10333
    %v10335 = vpop.f32.mrb[0].mxu0
    %10336 = vmatprep.mubr.bf16.mxu0 %v8649
    %10337 = vmatmul.mubr.bf16.gmra.mrb[0].mxu0 %v8553
    %v10338 = vpop.f32.mrb[0].mxu0
    %v10339 = vadd.f32 %v10050, %v10338
    %v10340 = vpop.f32.mrb[0].mxu0
    %v10341 = vpop.f32.mrb[0].mxu0
    %v10342 = vadd.f32 %v10053, %v10341
    %v10343 = vpop.f32.mrb[0].mxu0
    %10344 = vmatprep.mubr.bf16.mxu0 %v8650
    %10345 = vmatmul.mubr.bf16.gmra.mrb[0].mxu0 %v8554
    %v10346 = vpop.f32.mrb[0].mxu0
    %v10347 = vadd.f32 %v10058, %v10346
    %v10348 = vpop.f32.mrb[0].mxu0
    %v10349 = vpop.f32.mrb[0].mxu0
    %v10350 = vadd.f32 %v10061, %v10349
    %v10351 = vpop.f32.mrb[0].mxu0
    %10352 = vmatprep.mubr.bf16.mxu0 %v8651
    %10353 = vmatmul.mubr.bf16.gmra.mrb[0].mxu0 %v8555
    %v10354 = vpop.f32.mrb[0].mxu0
    %v10355 = vadd.f32 %v10066, %v10354
    %v10356 = vpop.f32.mrb[0].mxu0
    %v10357 = vpop.f32.mrb[0].mxu0
    %v10358 = vadd.f32 %v10069, %v10357
    %v10359 = vpop.f32.mrb[0].mxu0
    %10360 = vmatprep.mubr.bf16.mxu0 %v8652
    %10361 = vmatmul.mubr.bf16.gmra.mrb[0].mxu0 %v8556
    %v10362 = vpop.f32.mrb[0].mxu0
    %v10363 = vadd.f32 %v10074, %v10362
    %v10364 = vpop.f32.mrb[0].mxu0
    %v10365 = vpop.f32.mrb[0].mxu0
    %v10366 = vadd.f32 %v10077, %v10365
    %v10367 = vpop.f32.mrb[0].mxu0
    %10368 = vmatprep.mubr.bf16.mxu0 %v8653
    %10369 = vmatmul.mubr.bf16.gmra.mrb[0].mxu0 %v8557
    %v10370 = vpop.f32.mrb[0].mxu0
    %v10371 = vadd.f32 %v10082, %v10370
    %v10372 = vpop.f32.mrb[0].mxu0
    %v10373 = vpop.f32.mrb[0].mxu0
    %v10374 = vadd.f32 %v10085, %v10373
    %v10375 = vpop.f32.mrb[0].mxu0
    %10376 = vmatprep.mubr.bf16.mxu0 %v8654
    %10377 = vmatmul.mubr.bf16.gmra.mrb[0].mxu0 %v8558
    %v10378 = vpop.f32.mrb[0].mxu0
    %v10379 = vadd.f32 %v10090, %v10378
    %v10380 = vpop.f32.mrb[0].mxu0
    %v10381 = vpop.f32.mrb[0].mxu0
    %v10382 = vadd.f32 %v10093, %v10381
    %v10383 = vpop.f32.mrb[0].mxu0
    %10384 = vmatprep.mubr.bf16.mxu0 %v8655
    %10385 = vmatmul.mubr.bf16.gmra.mrb[0].mxu0 %v8559
    %v10386 = vpop.f32.mrb[0].mxu0
    %v10387 = vadd.f32 %v10098, %v10386
    %v10388 = vpop.f32.mrb[0].mxu0
    %v10389 = vpop.f32.mrb[0].mxu0
    %v10390 = vadd.f32 %v10101, %v10389
    %v10391 = vpop.f32.mrb[0].mxu0
    %10392 = vmatprep.mubr.bf16.mxu0 %v8656
    %10393 = vmatmul.mubr.bf16.gmra.mrb[0].mxu0 %v8560
    %v10394 = vpop.f32.mrb[0].mxu0
    %v10395 = vadd.f32 %v10106, %v10394
    %v10396 = vpop.f32.mrb[0].mxu0
    %v10397 = vpop.f32.mrb[0].mxu0
    %v10398 = vadd.f32 %v10109, %v10397
    %v10399 = vpop.f32.mrb[0].mxu0
    %10400 = vmatprep.mubr.bf16.mxu0 %v8657
    %10401 = vmatmul.mubr.bf16.gmra.mrb[0].mxu0 %v8561
    %v10402 = vpop.f32.mrb[0].mxu0
    %v10403 = vadd.f32 %v10114, %v10402
    %v10404 = vpop.f32.mrb[0].mxu0
    %v10405 = vpop.f32.mrb[0].mxu0
    %v10406 = vadd.f32 %v10117, %v10405
    %v10407 = vpop.f32.mrb[0].mxu0
    %10408 = vmatprep.mubr.bf16.mxu0 %v8658
    %10409 = vmatmul.mubr.bf16.gmra.mrb[0].mxu0 %v8562
    %v10410 = vpop.f32.mrb[0].mxu0
    %v10411 = vadd.f32 %v10122, %v10410
    %v10412 = vpop.f32.mrb[0].mxu0
    %v10413 = vpop.f32.mrb[0].mxu0
    %v10414 = vadd.f32 %v10125, %v10413
    %v10415 = vpop.f32.mrb[0].mxu0
    %10416 = vmatprep.mubr.bf16.mxu0 %v8659
    %10417 = vmatmul.mubr.bf16.gmra.mrb[0].mxu0 %v8563
    %v10418 = vpop.f32.mrb[0].mxu0
    %v10419 = vadd.f32 %v10130, %v10418
    %v10420 = vpop.f32.mrb[0].mxu0
    %v10421 = vpop.f32.mrb[0].mxu0
    %v10422 = vadd.f32 %v10133, %v10421
    %v10423 = vpop.f32.mrb[0].mxu0
    %10424 = vmatprep.mubr.bf16.mxu0 %v8660
    %10425 = vmatmul.mubr.bf16.gmra.mrb[0].mxu0 %v8564
    %v10426 = vpop.f32.mrb[0].mxu0
    %v10427 = vadd.f32 %v10138, %v10426
    %v10428 = vpop.f32.mrb[0].mxu0
    %v10429 = vpop.f32.mrb[0].mxu0
    %v10430 = vadd.f32 %v10141, %v10429
    %v10431 = vpop.f32.mrb[0].mxu0
    %10432 = vmatprep.mubr.bf16.mxu0 %v8661
    %10433 = vmatmul.mubr.bf16.gmra.mrb[0].mxu0 %v8565
    %v10434 = vpop.f32.mrb[0].mxu0
    %v10435 = vadd.f32 %v10146, %v10434
    %v10436 = vpop.f32.mrb[0].mxu0
    %v10437 = vpop.f32.mrb[0].mxu0
    %v10438 = vadd.f32 %v10149, %v10437
    %v10439 = vpop.f32.mrb[0].mxu0
    %10440 = vmatprep.mubr.bf16.mxu0 %v8662
    %10441 = vmatmul.mubr.bf16.gmra.mrb[0].mxu0 %v8566
    %v10442 = vpop.f32.mrb[0].mxu0
    %v10443 = vadd.f32 %v10154, %v10442
    %v10444 = vpop.f32.mrb[0].mxu0
    %v10445 = vpop.f32.mrb[0].mxu0
    %v10446 = vadd.f32 %v10157, %v10445
    %v10447 = vpop.f32.mrb[0].mxu0
    %10448 = vmatprep.mubr.bf16.mxu0 %v8663
    %10449 = vmatmul.mubr.bf16.gmra.mrb[0].mxu0 %v8567
    %v10450 = vpop.f32.mrb[0].mxu0
    %v10451 = vadd.f32 %v10162, %v10450
    %v10452 = vpop.f32.mrb[0].mxu0
    %v10453 = vpop.f32.mrb[0].mxu0
    %v10454 = vadd.f32 %v10165, %v10453
    %v10455 = vpop.f32.mrb[0].mxu0
    %10456 = vmatprep.mubr.bf16.mxu0 %v8664
    %10457 = vmatmul.mubr.bf16.gmra.mrb[0].mxu0 %v8568
    %v10458 = vpop.f32.mrb[0].mxu0
    %v10459 = vadd.f32 %v10170, %v10458
    %v10460 = vpop.f32.mrb[0].mxu0
    %v10461 = vpop.f32.mrb[0].mxu0
    %v10462 = vadd.f32 %v10173, %v10461
    %v10463 = vpop.f32.mrb[0].mxu0
    %10464 = vmatprep.mubr.bf16.mxu0 %v8665
    %10465 = vmatmul.mubr.bf16.gmra.mrb[0].mxu0 %v8569
    %v10466 = vpop.f32.mrb[0].mxu0
    %v10467 = vadd.f32 %v10178, %v10466
    %v10468 = vpop.f32.mrb[0].mxu0
    %v10469 = vpop.f32.mrb[0].mxu0
    %v10470 = vadd.f32 %v10181, %v10469
    %v10471 = vpop.f32.mrb[0].mxu0
    %10472 = vmatprep.mubr.bf16.mxu0 %v8666
    %10473 = vmatmul.mubr.bf16.gmra.mrb[0].mxu0 %v8570
    %v10474 = vpop.f32.mrb[0].mxu0
    %v10475 = vadd.f32 %v10186, %v10474
    %v10476 = vpop.f32.mrb[0].mxu0
    %v10477 = vpop.f32.mrb[0].mxu0
    %v10478 = vadd.f32 %v10189, %v10477
    %v10479 = vpop.f32.mrb[0].mxu0
    %10480 = vmatprep.mubr.bf16.mxu0 %v8667
    %10481 = vmatmul.mubr.bf16.gmra.mrb[0].mxu0 %v8571
    %v10482 = vpop.f32.mrb[0].mxu0
    %v10483 = vadd.f32 %v10194, %v10482
    %v10484 = vpop.f32.mrb[0].mxu0
    %v10485 = vpop.f32.mrb[0].mxu0
    %v10486 = vadd.f32 %v10197, %v10485
    %v10487 = vpop.f32.mrb[0].mxu0
    %10488 = vmatprep.mubr.bf16.mxu0 %v8668
    %10489 = vmatmul.mubr.bf16.gmra.mrb[0].mxu0 %v8572
    %v10490 = vpop.f32.mrb[0].mxu0
    %v10491 = vadd.f32 %v10202, %v10490
    %v10492 = vpop.f32.mrb[0].mxu0
    %v10493 = vpop.f32.mrb[0].mxu0
    %v10494 = vadd.f32 %v10205, %v10493
    %v10495 = vpop.f32.mrb[0].mxu0
    %10496 = vdwg.mxu0
    %10497 = vmatprep.subr.bf16.mxu0 0
    %10498 = vmatpush1.bf16.msra.mxu0 %v9261
    %10499 = vmatprep.subr.bf16.mxu0 0
    %10500 = vmatpush1.bf16.msra.mxu0 %v9262
    %10501 = vmatprep.subr.bf16.mxu0 0
    %10502 = vmatpush1.bf16.msra.mxu0 %v9263
    %10503 = vmatprep.subr.bf16.mxu0 0
    %10504 = vmatpush1.bf16.msra.mxu0 %v9264
    %10505 = vmatprep.subr.bf16.mxu0 0
    %10506 = vmatpush1.bf16.msra.mxu0 %v9265
    %10507 = vmatprep.subr.bf16.mxu0 0
    %10508 = vmatpush1.bf16.msra.mxu0 %v9266
    %10509 = vmatprep.subr.bf16.mxu0 0
    %10510 = vmatpush1.bf16.msra.mxu0 %v9267
    %10511 = vmatprep.subr.bf16.mxu0 0
    %10512 = vmatpush1.bf16.msra.mxu0 %v9268
    %10513 = vmatprep.subr.bf16.mxu0 0
    %10514 = vmatpush1.bf16.msra.mxu0 0
    %10515 = vmatprep.subr.bf16.mxu0 0
    %10516 = vmatpush1.bf16.msra.mxu0 0
    %10517 = vmatprep.subr.bf16.mxu0 0
    %10518 = vmatpush1.bf16.msra.mxu0 0
    %10519 = vmatprep.subr.bf16.mxu0 0
    %10520 = vmatpush1.bf16.msra.mxu0 0
    %10521 = vmatprep.subr.bf16.mxu0 0
    %10522 = vmatpush1.bf16.msra.mxu0 0
    %10523 = vmatprep.subr.bf16.mxu0 0
    %10524 = vmatpush1.bf16.msra.mxu0 0
    %10525 = vmatprep.subr.bf16.mxu0 0
    %10526 = vmatpush1.bf16.msra.mxu0 0
    %10527 = vmatprep.subr.bf16.mxu0 0
    %10528 = vmatpush1.bf16.msra.mxu0 0
    %10529 = vmatprep.mubr.bf16.mxu0 0
    %10530 = vmatmul.mubr.bf16.gmra.mrb[0].mxu0 %v8733
    %v10531 = vpop.f32.mrb[0].mxu0
    %v10532 = vadd.f32 %v10243, %v10531
    %v10533 = vpop.f32.mrb[0].mxu0
    %v10534 = vpop.f32.mrb[0].mxu0
    %v10535 = vadd.f32 %v10246, %v10534
    %v10536 = vpop.f32.mrb[0].mxu0
    %10537 = vmatprep.mubr.bf16.mxu0 0
    %10538 = vmatmul.mubr.bf16.gmra.mrb[0].mxu0 %v8734
    %v10539 = vpop.f32.mrb[0].mxu0
    %v10540 = vadd.f32 %v10251, %v10539
    %v10541 = vpop.f32.mrb[0].mxu0
    %v10542 = vpop.f32.mrb[0].mxu0
    %v10543 = vadd.f32 %v10254, %v10542
    %v10544 = vpop.f32.mrb[0].mxu0
    %10545 = vmatprep.mubr.bf16.mxu0 0
    %10546 = vmatmul.mubr.bf16.gmra.mrb[0].mxu0 %v8735
    %v10547 = vpop.f32.mrb[0].mxu0
    %v10548 = vadd.f32 %v10259, %v10547
    %v10549 = vpop.f32.mrb[0].mxu0
    %v10550 = vpop.f32.mrb[0].mxu0
    %v10551 = vadd.f32 %v10262, %v10550
    %v10552 = vpop.f32.mrb[0].mxu0
    %10553 = vmatprep.mubr.bf16.mxu0 0
    %10554 = vmatmul.mubr.bf16.gmra.mrb[0].mxu0 %v8736
    %v10555 = vpop.f32.mrb[0].mxu0
    %v10556 = vadd.f32 %v10267, %v10555
    %v10557 = vpop.f32.mrb[0].mxu0
    %v10558 = vpop.f32.mrb[0].mxu0
    %v10559 = vadd.f32 %v10270, %v10558
    %v10560 = vpop.f32.mrb[0].mxu0
    %10561 = vmatprep.mubr.bf16.mxu0 0
    %10562 = vmatmul.mubr.bf16.gmra.mrb[0].mxu0 %v8737
    %v10563 = vpop.f32.mrb[0].mxu0
    %v10564 = vadd.f32 %v10275, %v10563
    %v10565 = vpop.f32.mrb[0].mxu0
    %v10566 = vpop.f32.mrb[0].mxu0
    %v10567 = vadd.f32 %v10278, %v10566
    %v10568 = vpop.f32.mrb[0].mxu0
    %10569 = vmatprep.mubr.bf16.mxu0 0
    %10570 = vmatmul.mubr.bf16.gmra.mrb[0].mxu0 %v8738
    %v10571 = vpop.f32.mrb[0].mxu0
    %v10572 = vadd.f32 %v10283, %v10571
    %v10573 = vpop.f32.mrb[0].mxu0
    %v10574 = vpop.f32.mrb[0].mxu0
    %v10575 = vadd.f32 %v10286, %v10574
    %v10576 = vpop.f32.mrb[0].mxu0
    %10577 = vmatprep.mubr.bf16.mxu0 0
    %10578 = vmatmul.mubr.bf16.gmra.mrb[0].mxu0 %v8739
    %v10579 = vpop.f32.mrb[0].mxu0
    %v10580 = vadd.f32 %v10291, %v10579
    %v10581 = vpop.f32.mrb[0].mxu0
    %v10582 = vpop.f32.mrb[0].mxu0
    %v10583 = vadd.f32 %v10294, %v10582
    %v10584 = vpop.f32.mrb[0].mxu0
    %10585 = vmatprep.mubr.bf16.mxu0 0
    %10586 = vmatmul.mubr.bf16.gmra.mrb[0].mxu0 %v8740
    %v10587 = vpop.f32.mrb[0].mxu0
    %v10588 = vadd.f32 %v10299, %v10587
    %v10589 = vpop.f32.mrb[0].mxu0
    %v10590 = vpop.f32.mrb[0].mxu0
    %v10591 = vadd.f32 %v10302, %v10590
    %v10592 = vpop.f32.mrb[0].mxu0
    %10593 = vmatprep.mubr.bf16.mxu0 0
    %10594 = vmatmul.mubr.bf16.gmra.mrb[0].mxu0 %v8741
    %v10595 = vpop.f32.mrb[0].mxu0
    %v10596 = vadd.f32 %v10307, %v10595
    %v10597 = vpop.f32.mrb[0].mxu0
    %v10598 = vpop.f32.mrb[0].mxu0
    %v10599 = vadd.f32 %v10310, %v10598
    %v10600 = vpop.f32.mrb[0].mxu0
    %10601 = vmatprep.mubr.bf16.mxu0 0
    %10602 = vmatmul.mubr.bf16.gmra.mrb[0].mxu0 %v8742
    %v10603 = vpop.f32.mrb[0].mxu0
    %v10604 = vadd.f32 %v10315, %v10603
    %v10605 = vpop.f32.mrb[0].mxu0
    %v10606 = vpop.f32.mrb[0].mxu0
    %v10607 = vadd.f32 %v10318, %v10606
    %v10608 = vpop.f32.mrb[0].mxu0
    %10609 = vmatprep.mubr.bf16.mxu0 0
    %10610 = vmatmul.mubr.bf16.gmra.mrb[0].mxu0 %v8743
    %v10611 = vpop.f32.mrb[0].mxu0
    %v10612 = vadd.f32 %v10323, %v10611
    %v10613 = vpop.f32.mrb[0].mxu0
    %v10614 = vpop.f32.mrb[0].mxu0
    %v10615 = vadd.f32 %v10326, %v10614
    %v10616 = vpop.f32.mrb[0].mxu0
    %10617 = vmatprep.mubr.bf16.mxu0 0
    %10618 = vmatmul.mubr.bf16.gmra.mrb[0].mxu0 %v8744
    %v10619 = vpop.f32.mrb[0].mxu0
    %v10620 = vadd.f32 %v10331, %v10619
    %v10621 = vpop.f32.mrb[0].mxu0
    %v10622 = vpop.f32.mrb[0].mxu0
    %v10623 = vadd.f32 %v10334, %v10622
    %v10624 = vpop.f32.mrb[0].mxu0
    %10625 = vmatprep.mubr.bf16.mxu0 0
    %10626 = vmatmul.mubr.bf16.gmra.mrb[0].mxu0 %v8745
    %v10627 = vpop.f32.mrb[0].mxu0
    %v10628 = vadd.f32 %v10339, %v10627
    %v10629 = vpop.f32.mrb[0].mxu0
    %v10630 = vpop.f32.mrb[0].mxu0
    %v10631 = vadd.f32 %v10342, %v10630
    %v10632 = vpop.f32.mrb[0].mxu0
    %10633 = vmatprep.mubr.bf16.mxu0 0
    %10634 = vmatmul.mubr.bf16.gmra.mrb[0].mxu0 %v8746
    %v10635 = vpop.f32.mrb[0].mxu0
    %v10636 = vadd.f32 %v10347, %v10635
    %v10637 = vpop.f32.mrb[0].mxu0
    %v10638 = vpop.f32.mrb[0].mxu0
    %v10639 = vadd.f32 %v10350, %v10638
    %v10640 = vpop.f32.mrb[0].mxu0
    %10641 = vmatprep.mubr.bf16.mxu0 0
    %10642 = vmatmul.mubr.bf16.gmra.mrb[0].mxu0 %v8747
    %v10643 = vpop.f32.mrb[0].mxu0
    %v10644 = vadd.f32 %v10355, %v10643
    %v10645 = vpop.f32.mrb[0].mxu0
    %v10646 = vpop.f32.mrb[0].mxu0
    %v10647 = vadd.f32 %v10358, %v10646
    %v10648 = vpop.f32.mrb[0].mxu0
    %10649 = vmatprep.mubr.bf16.mxu0 0
    %10650 = vmatmul.mubr.bf16.gmra.mrb[0].mxu0 %v8748
    %v10651 = vpop.f32.mrb[0].mxu0
    %v10652 = vadd.f32 %v10363, %v10651
    %v10653 = vpop.f32.mrb[0].mxu0
    %v10654 = vpop.f32.mrb[0].mxu0
    %v10655 = vadd.f32 %v10366, %v10654
    %v10656 = vpop.f32.mrb[0].mxu0
    %10657 = vmatprep.mubr.bf16.mxu0 0
    %10658 = vmatmul.mubr.bf16.gmra.mrb[0].mxu0 %v8749
    %v10659 = vpop.f32.mrb[0].mxu0
    %v10660 = vadd.f32 %v10371, %v10659
    %v10661 = vpop.f32.mrb[0].mxu0
    %v10662 = vpop.f32.mrb[0].mxu0
    %v10663 = vadd.f32 %v10374, %v10662
    %v10664 = vpop.f32.mrb[0].mxu0
    %10665 = vmatprep.mubr.bf16.mxu0 0
    %10666 = vmatmul.mubr.bf16.gmra.mrb[0].mxu0 %v8750
    %v10667 = vpop.f32.mrb[0].mxu0
    %v10668 = vadd.f32 %v10379, %v10667
    %v10669 = vpop.f32.mrb[0].mxu0
    %v10670 = vpop.f32.mrb[0].mxu0
    %v10671 = vadd.f32 %v10382, %v10670
    %v10672 = vpop.f32.mrb[0].mxu0
    %10673 = vmatprep.mubr.bf16.mxu0 0
    %10674 = vmatmul.mubr.bf16.gmra.mrb[0].mxu0 %v8751
    %v10675 = vpop.f32.mrb[0].mxu0
    %v10676 = vadd.f32 %v10387, %v10675
    %v10677 = vpop.f32.mrb[0].mxu0
    %v10678 = vpop.f32.mrb[0].mxu0
    %v10679 = vadd.f32 %v10390, %v10678
    %v10680 = vpop.f32.mrb[0].mxu0
    %10681 = vmatprep.mubr.bf16.mxu0 0
    %10682 = vmatmul.mubr.bf16.gmra.mrb[0].mxu0 %v8752
    %v10683 = vpop.f32.mrb[0].mxu0
    %v10684 = vadd.f32 %v10395, %v10683
    %v10685 = vpop.f32.mrb[0].mxu0
    %v10686 = vpop.f32.mrb[0].mxu0
    %v10687 = vadd.f32 %v10398, %v10686
    %v10688 = vpop.f32.mrb[0].mxu0
    %10689 = vmatprep.mubr.bf16.mxu0 0
    %10690 = vmatmul.mubr.bf16.gmra.mrb[0].mxu0 %v8753
    %v10691 = vpop.f32.mrb[0].mxu0
    %v10692 = vadd.f32 %v10403, %v10691
    %v10693 = vpop.f32.mrb[0].mxu0
    %v10694 = vpop.f32.mrb[0].mxu0
    %v10695 = vadd.f32 %v10406, %v10694
    %v10696 = vpop.f32.mrb[0].mxu0
    %10697 = vmatprep.mubr.bf16.mxu0 0
    %10698 = vmatmul.mubr.bf16.gmra.mrb[0].mxu0 %v8754
    %v10699 = vpop.f32.mrb[0].mxu0
    %v10700 = vadd.f32 %v10411, %v10699
    %v10701 = vpop.f32.mrb[0].mxu0
    %v10702 = vpop.f32.mrb[0].mxu0
    %v10703 = vadd.f32 %v10414, %v10702
    %v10704 = vpop.f32.mrb[0].mxu0
    %10705 = vmatprep.mubr.bf16.mxu0 0
    %10706 = vmatmul.mubr.bf16.gmra.mrb[0].mxu0 %v8755
    %v10707 = vpop.f32.mrb[0].mxu0
    %v10708 = vadd.f32 %v10419, %v10707
    %v10709 = vpop.f32.mrb[0].mxu0
    %v10710 = vpop.f32.mrb[0].mxu0
    %v10711 = vadd.f32 %v10422, %v10710
    %v10712 = vpop.f32.mrb[0].mxu0
    %10713 = vmatprep.mubr.bf16.mxu0 0
    %10714 = vmatmul.mubr.bf16.gmra.mrb[0].mxu0 %v8756
    %v10715 = vpop.f32.mrb[0].mxu0
    %v10716 = vadd.f32 %v10427, %v10715
    %v10717 = vpop.f32.mrb[0].mxu0
    %v10718 = vpop.f32.mrb[0].mxu0
    %v10719 = vadd.f32 %v10430, %v10718
    %v10720 = vpop.f32.mrb[0].mxu0
    %10721 = vmatprep.mubr.bf16.mxu0 0
    %10722 = vmatmul.mubr.bf16.gmra.mrb[0].mxu0 %v8757
    %v10723 = vpop.f32.mrb[0].mxu0
    %v10724 = vadd.f32 %v10435, %v10723
    %v10725 = vpop.f32.mrb[0].mxu0
    %v10726 = vpop.f32.mrb[0].mxu0
    %v10727 = vadd.f32 %v10438, %v10726
    %v10728 = vpop.f32.mrb[0].mxu0
    %10729 = vmatprep.mubr.bf16.mxu0 0
    %10730 = vmatmul.mubr.bf16.gmra.mrb[0].mxu0 %v8758
    %v10731 = vpop.f32.mrb[0].mxu0
    %v10732 = vadd.f32 %v10443, %v10731
    %v10733 = vpop.f32.mrb[0].mxu0
    %v10734 = vpop.f32.mrb[0].mxu0
    %v10735 = vadd.f32 %v10446, %v10734
    %v10736 = vpop.f32.mrb[0].mxu0
    %10737 = vmatprep.mubr.bf16.mxu0 0
    %10738 = vmatmul.mubr.bf16.gmra.mrb[0].mxu0 %v8759
    %v10739 = vpop.f32.mrb[0].mxu0
    %v10740 = vadd.f32 %v10451, %v10739
    %v10741 = vpop.f32.mrb[0].mxu0
    %v10742 = vpop.f32.mrb[0].mxu0
    %v10743 = vadd.f32 %v10454, %v10742
    %v10744 = vpop.f32.mrb[0].mxu0
    %10745 = vmatprep.mubr.bf16.mxu0 0
    %10746 = vmatmul.mubr.bf16.gmra.mrb[0].mxu0 %v8760
    %v10747 = vpop.f32.mrb[0].mxu0
    %v10748 = vadd.f32 %v10459, %v10747
    %v10749 = vpop.f32.mrb[0].mxu0
    %v10750 = vpop.f32.mrb[0].mxu0
    %v10751 = vadd.f32 %v10462, %v10750
    %v10752 = vpop.f32.mrb[0].mxu0
    %10753 = vmatprep.mubr.bf16.mxu0 0
    %10754 = vmatmul.mubr.bf16.gmra.mrb[0].mxu0 %v8761
    %v10755 = vpop.f32.mrb[0].mxu0
    %v10756 = vadd.f32 %v10467, %v10755
    %v10757 = vpop.f32.mrb[0].mxu0
    %v10758 = vpop.f32.mrb[0].mxu0
    %v10759 = vadd.f32 %v10470, %v10758
    %v10760 = vpop.f32.mrb[0].mxu0
    %10761 = vmatprep.mubr.bf16.mxu0 0
    %10762 = vmatmul.mubr.bf16.gmra.mrb[0].mxu0 %v8762
    %v10763 = vpop.f32.mrb[0].mxu0
    %v10764 = vadd.f32 %v10475, %v10763
    %v10765 = vpop.f32.mrb[0].mxu0
    %v10766 = vpop.f32.mrb[0].mxu0
    %v10767 = vadd.f32 %v10478, %v10766
    %v10768 = vpop.f32.mrb[0].mxu0
    %10769 = vmatprep.mubr.bf16.mxu0 0
    %10770 = vmatmul.mubr.bf16.gmra.mrb[0].mxu0 %v8763
    %v10771 = vpop.f32.mrb[0].mxu0
    %v10772 = vadd.f32 %v10483, %v10771
    %v10773 = vpop.f32.mrb[0].mxu0
    %v10774 = vpop.f32.mrb[0].mxu0
    %v10775 = vadd.f32 %v10486, %v10774
    %v10776 = vpop.f32.mrb[0].mxu0
    %10777 = vmatprep.mubr.bf16.mxu0 0
    %10778 = vmatmul.mubr.bf16.gmra.mrb[0].mxu0 %v8764
    %v10779 = vpop.f32.mrb[0].mxu0
    %v10780 = vadd.f32 %v10491, %v10779
    %v10781 = vpop.f32.mrb[0].mxu0
    %v10782 = vpop.f32.mrb[0].mxu0
    %v10783 = vadd.f32 %v10494, %v10782
    %v10784 = vpop.f32.mrb[0].mxu0
    %10785 = vdwg.mxu0
    %v10786 = vadd.f32 %v10532, %v10535
    %v10787 = vadd.f32 %v10786, %v10540
    %v10788 = vadd.f32 %v10787, %v10543
    %v10789 = vadd.f32 %v10788, %v10548
    %v10790 = vadd.f32 %v10789, %v10551
    %v10791 = vadd.f32 %v10790, %v10556
    %v10792 = vadd.f32 %v10791, %v10559
    %v10793 = vadd.f32 %v10792, %v10564
    %v10794 = vadd.f32 %v10793, %v10567
    %v10795 = vadd.f32 %v10794, %v10572
    %v10796 = vadd.f32 %v10795, %v10575
    %v10797 = vadd.f32 %v10796, %v10580
    %v10798 = vadd.f32 %v10797, %v10583
    %v10799 = vadd.f32 %v10798, %v10588
    %v10800 = vadd.f32 %v10799, %v10591
    %v10801 = vadd.f32 %v10800, %v10596
    %v10802 = vadd.f32 %v10801, %v10599
    %v10803 = vadd.f32 %v10802, %v10604
    %v10804 = vadd.f32 %v10803, %v10607
    %v10805 = vadd.f32 %v10804, %v10612
    %v10806 = vadd.f32 %v10805, %v10615
    %v10807 = vadd.f32 %v10806, %v10620
    %v10808 = vadd.f32 %v10807, %v10623
    %v10809 = vadd.f32 %v10808, %v10628
    %v10810 = vadd.f32 %v10809, %v10631
    %v10811 = vadd.f32 %v10810, %v10636
    %v10812 = vadd.f32 %v10811, %v10639
    %v10813 = vadd.f32 %v10812, %v10644
    %v10814 = vadd.f32 %v10813, %v10647
    %v10815 = vadd.f32 %v10814, %v10652
    %v10816 = vadd.f32 %v10815, %v10655
    %v10817 = vadd.f32 %v10816, %v10660
    %v10818 = vadd.f32 %v10817, %v10663
    %v10819 = vadd.f32 %v10818, %v10668
    %v10820 = vadd.f32 %v10819, %v10671
    %v10821 = vadd.f32 %v10820, %v10676
    %v10822 = vadd.f32 %v10821, %v10679
    %v10823 = vadd.f32 %v10822, %v10684
    %v10824 = vadd.f32 %v10823, %v10687
    %v10825 = vadd.f32 %v10824, %v10692
    %v10826 = vadd.f32 %v10825, %v10695
    %v10827 = vadd.f32 %v10826, %v10700
    %v10828 = vadd.f32 %v10827, %v10703
    %v10829 = vadd.f32 %v10828, %v10708
    %v10830 = vadd.f32 %v10829, %v10711
    %v10831 = vadd.f32 %v10830, %v10716
    %v10832 = vadd.f32 %v10831, %v10719
    %v10833 = vadd.f32 %v10832, %v10724
    %v10834 = vadd.f32 %v10833, %v10727
    %v10835 = vadd.f32 %v10834, %v10732
    %v10836 = vadd.f32 %v10835, %v10735
    %v10837 = vadd.f32 %v10836, %v10740
    %v10838 = vadd.f32 %v10837, %v10743
    %v10839 = vadd.f32 %v10838, %v10748
    %v10840 = vadd.f32 %v10839, %v10751
    %v10841 = vadd.f32 %v10840, %v10756
    %v10842 = vadd.f32 %v10841, %v10759
    %v10843 = vadd.f32 %v10842, %v10764
    %v10844 = vadd.f32 %v10843, %v10767
    %v10845 = vadd.f32 %v10844, %v10772
    %v10846 = vadd.f32 %v10845, %v10775
    %v10847 = vadd.f32 %v10846, %v10780
    %v10848 = vadd.f32 %v10847, %v10783
    %v10849 = vrot.slane %v10848, 4
    %v10850 = vadd.f32 %v10848, %v10849
    %v10851 = vrot.slane %v10850, 2
    %v10852 = vadd.f32 %v10850, %v10851
    %v10853 = vrot.slane %v10852, 1
    %v10854 = vadd.f32 %v10852, %v10853
    %v10855 = vmul.f32 %v10532, %v10532
    %v10856 = vmul.f32 %v10535, %v10535
    %v10857 = vmul.f32 %v10540, %v10540
    %v10858 = vmul.f32 %v10543, %v10543
    %v10859 = vmul.f32 %v10548, %v10548
    %v10860 = vmul.f32 %v10551, %v10551
    %v10861 = vmul.f32 %v10556, %v10556
    %v10862 = vmul.f32 %v10559, %v10559
    %v10863 = vmul.f32 %v10564, %v10564
    %v10864 = vmul.f32 %v10567, %v10567
    %v10865 = vmul.f32 %v10572, %v10572
    %v10866 = vmul.f32 %v10575, %v10575
    %v10867 = vmul.f32 %v10580, %v10580
    %v10868 = vmul.f32 %v10583, %v10583
    %v10869 = vmul.f32 %v10588, %v10588
    %v10870 = vmul.f32 %v10591, %v10591
    %v10871 = vmul.f32 %v10596, %v10596
    %v10872 = vmul.f32 %v10599, %v10599
    %v10873 = vmul.f32 %v10604, %v10604
    %v10874 = vmul.f32 %v10607, %v10607
    %v10875 = vmul.f32 %v10612, %v10612
    %v10876 = vmul.f32 %v10615, %v10615
    %v10877 = vmul.f32 %v10620, %v10620
    %v10878 = vmul.f32 %v10623, %v10623
    %v10879 = vmul.f32 %v10628, %v10628
    %v10880 = vmul.f32 %v10631, %v10631
    %v10881 = vmul.f32 %v10636, %v10636
    %v10882 = vmul.f32 %v10639, %v10639
    %v10883 = vmul.f32 %v10644, %v10644
    %v10884 = vmul.f32 %v10647, %v10647
    %v10885 = vmul.f32 %v10652, %v10652
    %v10886 = vmul.f32 %v10655, %v10655
    %v10887 = vmul.f32 %v10660, %v10660
    %v10888 = vmul.f32 %v10663, %v10663
    %v10889 = vmul.f32 %v10668, %v10668
    %v10890 = vmul.f32 %v10671, %v10671
    %v10891 = vmul.f32 %v10676, %v10676
    %v10892 = vmul.f32 %v10679, %v10679
    %v10893 = vmul.f32 %v10684, %v10684
    %v10894 = vmul.f32 %v10687, %v10687
    %v10895 = vmul.f32 %v10692, %v10692
    %v10896 = vmul.f32 %v10695, %v10695
    %v10897 = vmul.f32 %v10700, %v10700
    %v10898 = vmul.f32 %v10703, %v10703
    %v10899 = vmul.f32 %v10708, %v10708
    %v10900 = vmul.f32 %v10711, %v10711
    %v10901 = vmul.f32 %v10716, %v10716
    %v10902 = vmul.f32 %v10719, %v10719
    %v10903 = vmul.f32 %v10724, %v10724
    %v10904 = vmul.f32 %v10727, %v10727
    %v10905 = vmul.f32 %v10732, %v10732
    %v10906 = vmul.f32 %v10735, %v10735
    %v10907 = vmul.f32 %v10740, %v10740
    %v10908 = vmul.f32 %v10743, %v10743
    %v10909 = vmul.f32 %v10748, %v10748
    %v10910 = vmul.f32 %v10751, %v10751
    %v10911 = vmul.f32 %v10756, %v10756
    %v10912 = vmul.f32 %v10759, %v10759
    %v10913 = vmul.f32 %v10764, %v10764
    %v10914 = vmul.f32 %v10767, %v10767
    %v10915 = vmul.f32 %v10772, %v10772
    %v10916 = vmul.f32 %v10775, %v10775
    %v10917 = vmul.f32 %v10780, %v10780
    %v10918 = vmul.f32 %v10783, %v10783
    %v10919 = vadd.f32 %v10855, %v10856
    %v10920 = vadd.f32 %v10919, %v10857
    %v10921 = vadd.f32 %v10920, %v10858
    %v10922 = vadd.f32 %v10921, %v10859
    %v10923 = vadd.f32 %v10922, %v10860
    %v10924 = vadd.f32 %v10923, %v10861
    %v10925 = vadd.f32 %v10924, %v10862
    %v10926 = vadd.f32 %v10925, %v10863
    %v10927 = vadd.f32 %v10926, %v10864
    %v10928 = vadd.f32 %v10927, %v10865
    %v10929 = vadd.f32 %v10928, %v10866
    %v10930 = vadd.f32 %v10929, %v10867
    %v10931 = vadd.f32 %v10930, %v10868
    %v10932 = vadd.f32 %v10931, %v10869
    %v10933 = vadd.f32 %v10932, %v10870
    %v10934 = vadd.f32 %v10933, %v10871
    %v10935 = vadd.f32 %v10934, %v10872
    %v10936 = vadd.f32 %v10935, %v10873
    %v10937 = vadd.f32 %v10936, %v10874
    %v10938 = vadd.f32 %v10937, %v10875
    %v10939 = vadd.f32 %v10938, %v10876
    %v10940 = vadd.f32 %v10939, %v10877
    %v10941 = vadd.f32 %v10940, %v10878
    %v10942 = vadd.f32 %v10941, %v10879
    %v10943 = vadd.f32 %v10942, %v10880
    %v10944 = vadd.f32 %v10943, %v10881
    %v10945 = vadd.f32 %v10944, %v10882
    %v10946 = vadd.f32 %v10945, %v10883
    %v10947 = vadd.f32 %v10946, %v10884
    %v10948 = vadd.f32 %v10947, %v10885
    %v10949 = vadd.f32 %v10948, %v10886
    %v10950 = vadd.f32 %v10949, %v10887
    %v10951 = vadd.f32 %v10950, %v10888
    %v10952 = vadd.f32 %v10951, %v10889
    %v10953 = vadd.f32 %v10952, %v10890
    %v10954 = vadd.f32 %v10953, %v10891
    %v10955 = vadd.f32 %v10954, %v10892
    %v10956 = vadd.f32 %v10955, %v10893
    %v10957 = vadd.f32 %v10956, %v10894
    %v10958 = vadd.f32 %v10957, %v10895
    %v10959 = vadd.f32 %v10958, %v10896
    %v10960 = vadd.f32 %v10959, %v10897
    %v10961 = vadd.f32 %v10960, %v10898
    %v10962 = vadd.f32 %v10961, %v10899
    %v10963 = vadd.f32 %v10962, %v10900
    %v10964 = vadd.f32 %v10963, %v10901
    %v10965 = vadd.f32 %v10964, %v10902
    %v10966 = vadd.f32 %v10965, %v10903
    %v10967 = vadd.f32 %v10966, %v10904
    %v10968 = vadd.f32 %v10967, %v10905
    %v10969 = vadd.f32 %v10968, %v10906
    %v10970 = vadd.f32 %v10969, %v10907
    %v10971 = vadd.f32 %v10970, %v10908
    %v10972 = vadd.f32 %v10971, %v10909
    %v10973 = vadd.f32 %v10972, %v10910
    %v10974 = vadd.f32 %v10973, %v10911
    %v10975 = vadd.f32 %v10974, %v10912
    %v10976 = vadd.f32 %v10975, %v10913
    %v10977 = vadd.f32 %v10976, %v10914
    %v10978 = vadd.f32 %v10977, %v10915
    %v10979 = vadd.f32 %v10978, %v10916
    %v10980 = vadd.f32 %v10979, %v10917
    %v10981 = vadd.f32 %v10980, %v10918
    %v10982 = vrot.slane %v10981, 4
    %v10983 = vadd.f32 %v10981, %v10982
    %v10984 = vrot.slane %v10983, 2
    %v10985 = vadd.f32 %v10983, %v10984
    %v10986 = vrot.slane %v10985, 1
    %v10987 = vadd.f32 %v10985, %v10986
    %v10988 = vmul.f32 %v10854, 0.001953125
    %v10989 = vmul.f32 %v10987, 0.001953125
    %v10990 = vmul.f32 %v10988, %v10988
    %v10991 = vsub.f32 %v10989, %v10990
    %v10992 = vsub.f32 %v10532, %v10988
    %v10993 = vsub.f32 %v10535, %v10988
    %v10994 = vsub.f32 %v10540, %v10988
    %v10995 = vsub.f32 %v10543, %v10988
    %v10996 = vsub.f32 %v10548, %v10988
    %v10997 = vsub.f32 %v10551, %v10988
    %v10998 = vsub.f32 %v10556, %v10988
    %v10999 = vsub.f32 %v10559, %v10988
    %v11000 = vsub.f32 %v10564, %v10988
    %v11001 = vsub.f32 %v10567, %v10988
    %v11002 = vsub.f32 %v10572, %v10988
    %v11003 = vsub.f32 %v10575, %v10988
    %v11004 = vsub.f32 %v10580, %v10988
    %v11005 = vsub.f32 %v10583, %v10988
    %v11006 = vsub.f32 %v10588, %v10988
    %v11007 = vsub.f32 %v10591, %v10988
    %v11008 = vsub.f32 %v10596, %v10988
    %v11009 = vsub.f32 %v10599, %v10988
    %v11010 = vsub.f32 %v10604, %v10988
    %v11011 = vsub.f32 %v10607, %v10988
    %v11012 = vsub.f32 %v10612, %v10988
    %v11013 = vsub.f32 %v10615, %v10988
    %v11014 = vsub.f32 %v10620, %v10988
    %v11015 = vsub.f32 %v10623, %v10988
    %v11016 = vsub.f32 %v10628, %v10988
    %v11017 = vsub.f32 %v10631, %v10988
    %v11018 = vsub.f32 %v10636, %v10988
    %v11019 = vsub.f32 %v10639, %v10988
    %v11020 = vsub.f32 %v10644, %v10988
    %v11021 = vsub.f32 %v10647, %v10988
    %v11022 = vsub.f32 %v10652, %v10988
    %v11023 = vsub.f32 %v10655, %v10988
    %v11024 = vsub.f32 %v10660, %v10988
    %v11025 = vsub.f32 %v10663, %v10988
    %v11026 = vsub.f32 %v10668, %v10988
    %v11027 = vsub.f32 %v10671, %v10988
    %v11028 = vsub.f32 %v10676, %v10988
    %v11029 = vsub.f32 %v10679, %v10988
    %v11030 = vsub.f32 %v10684, %v10988
    %v11031 = vsub.f32 %v10687, %v10988
    %v11032 = vsub.f32 %v10692, %v10988
    %v11033 = vsub.f32 %v10695, %v10988
    %v11034 = vsub.f32 %v10700, %v10988
    %v11035 = vsub.f32 %v10703, %v10988
    %v11036 = vsub.f32 %v10708, %v10988
    %v11037 = vsub.f32 %v10711, %v10988
    %v11038 = vsub.f32 %v10716, %v10988
    %v11039 = vsub.f32 %v10719, %v10988
    %v11040 = vsub.f32 %v10724, %v10988
    %v11041 = vsub.f32 %v10727, %v10988
    %v11042 = vsub.f32 %v10732, %v10988
    %v11043 = vsub.f32 %v10735, %v10988
    %v11044 = vsub.f32 %v10740, %v10988
    %v11045 = vsub.f32 %v10743, %v10988
    %v11046 = vsub.f32 %v10748, %v10988
    %v11047 = vsub.f32 %v10751, %v10988
    %v11048 = vsub.f32 %v10756, %v10988
    %v11049 = vsub.f32 %v10759, %v10988
    %v11050 = vsub.f32 %v10764, %v10988
    %v11051 = vsub.f32 %v10767, %v10988
    %v11052 = vsub.f32 %v10772, %v10988
    %v11053 = vsub.f32 %v10775, %v10988
    %v11054 = vsub.f32 %v10780, %v10988
    %v11055 = vsub.f32 %v10783, %v10988
    %v11056 = vadd.f32 %v10991, 1e-05
    %v11057 = vrsqrt.pop %v11056
    %v11058 = vmul.f32 %v10992, %v11057
    %v11059 = vmul.f32 %v10993, %v11057
    %v11060 = vmul.f32 %v10994, %v11057
    %v11061 = vmul.f32 %v10995, %v11057
    %v11062 = vmul.f32 %v10996, %v11057
    %v11063 = vmul.f32 %v10997, %v11057
    %v11064 = vmul.f32 %v10998, %v11057
    %v11065 = vmul.f32 %v10999, %v11057
    %v11066 = vmul.f32 %v11000, %v11057
    %v11067 = vmul.f32 %v11001, %v11057
    %v11068 = vmul.f32 %v11002, %v11057
    %v11069 = vmul.f32 %v11003, %v11057
    %v11070 = vmul.f32 %v11004, %v11057
    %v11071 = vmul.f32 %v11005, %v11057
    %v11072 = vmul.f32 %v11006, %v11057
    %v11073 = vmul.f32 %v11007, %v11057
    %v11074 = vmul.f32 %v11008, %v11057
    %v11075 = vmul.f32 %v11009, %v11057
    %v11076 = vmul.f32 %v11010, %v11057
    %v11077 = vmul.f32 %v11011, %v11057
    %v11078 = vmul.f32 %v11012, %v11057
    %v11079 = vmul.f32 %v11013, %v11057
    %v11080 = vmul.f32 %v11014, %v11057
    %v11081 = vmul.f32 %v11015, %v11057
    %v11082 = vmul.f32 %v11016, %v11057
    %v11083 = vmul.f32 %v11017, %v11057
    %v11084 = vmul.f32 %v11018, %v11057
    %v11085 = vmul.f32 %v11019, %v11057
    %v11086 = vmul.f32 %v11020, %v11057
    %v11087 = vmul.f32 %v11021, %v11057
    %v11088 = vmul.f32 %v11022, %v11057
    %v11089 = vmul.f32 %v11023, %v11057
    %v11090 = vmul.f32 %v11024, %v11057
    %v11091 = vmul.f32 %v11025, %v11057
    %v11092 = vmul.f32 %v11026, %v11057
    %v11093 = vmul.f32 %v11027, %v11057
    %v11094 = vmul.f32 %v11028, %v11057
    %v11095 = vmul.f32 %v11029, %v11057
    %v11096 = vmul.f32 %v11030, %v11057
    %v11097 = vmul.f32 %v11031, %v11057
    %v11098 = vmul.f32 %v11032, %v11057
    %v11099 = vmul.f32 %v11033, %v11057
    %v11100 = vmul.f32 %v11034, %v11057
    %v11101 = vmul.f32 %v11035, %v11057
    %v11102 = vmul.f32 %v11036, %v11057
    %v11103 = vmul.f32 %v11037, %v11057
    %v11104 = vmul.f32 %v11038, %v11057
    %v11105 = vmul.f32 %v11039, %v11057
    %v11106 = vmul.f32 %v11040, %v11057
    %v11107 = vmul.f32 %v11041, %v11057
    %v11108 = vmul.f32 %v11042, %v11057
    %v11109 = vmul.f32 %v11043, %v11057
    %v11110 = vmul.f32 %v11044, %v11057
    %v11111 = vmul.f32 %v11045, %v11057
    %v11112 = vmul.f32 %v11046, %v11057
    %v11113 = vmul.f32 %v11047, %v11057
    %v11114 = vmul.f32 %v11048, %v11057
    %v11115 = vmul.f32 %v11049, %v11057
    %v11116 = vmul.f32 %v11050, %v11057
    %v11117 = vmul.f32 %v11051, %v11057
    %v11118 = vmul.f32 %v11052, %v11057
    %v11119 = vmul.f32 %v11053, %v11057
    %v11120 = vmul.f32 %v11054, %v11057
    %v11121 = vmul.f32 %v11055, %v11057
    %v11122 = vld [vmem:[%s6] sm:$0x1]
    %v11124 = vlaneseq
    %v11125 = vshrl.u32 %v11124, 7
    %v11126 = vsub.s32 0, %v11125
    %v11127 = vrot.slane %v11122, %v11126
    %v11129 = vmul.f32 %v11058, %v11127
    %v11130 = vmul.f32 %v11059, %v11127
    %v11131 = vmul.f32 %v11060, %v11127
    %v11132 = vmul.f32 %v11061, %v11127
    %v11133 = vmul.f32 %v11062, %v11127
    %v11134 = vmul.f32 %v11063, %v11127
    %v11135 = vmul.f32 %v11064, %v11127
    %v11136 = vmul.f32 %v11065, %v11127
    %v11137 = vmul.f32 %v11066, %v11127
    %v11138 = vmul.f32 %v11067, %v11127
    %v11139 = vmul.f32 %v11068, %v11127
    %v11140 = vmul.f32 %v11069, %v11127
    %v11141 = vmul.f32 %v11070, %v11127
    %v11142 = vmul.f32 %v11071, %v11127
    %v11143 = vmul.f32 %v11072, %v11127
    %v11144 = vmul.f32 %v11073, %v11127
    %v11145 = vmul.f32 %v11074, %v11127
    %v11146 = vmul.f32 %v11075, %v11127
    %v11147 = vmul.f32 %v11076, %v11127
    %v11148 = vmul.f32 %v11077, %v11127
    %v11149 = vmul.f32 %v11078, %v11127
    %v11150 = vmul.f32 %v11079, %v11127
    %v11151 = vmul.f32 %v11080, %v11127
    %v11152 = vmul.f32 %v11081, %v11127
    %v11153 = vmul.f32 %v11082, %v11127
    %v11154 = vmul.f32 %v11083, %v11127
    %v11155 = vmul.f32 %v11084, %v11127
    %v11156 = vmul.f32 %v11085, %v11127
    %v11157 = vmul.f32 %v11086, %v11127
    %v11158 = vmul.f32 %v11087, %v11127
    %v11159 = vmul.f32 %v11088, %v11127
    %v11160 = vmul.f32 %v11089, %v11127
    %v11161 = vmul.f32 %v11090, %v11127
    %v11162 = vmul.f32 %v11091, %v11127
    %v11163 = vmul.f32 %v11092, %v11127
    %v11164 = vmul.f32 %v11093, %v11127
    %v11165 = vmul.f32 %v11094, %v11127
    %v11166 = vmul.f32 %v11095, %v11127
    %v11167 = vmul.f32 %v11096, %v11127
    %v11168 = vmul.f32 %v11097, %v11127
    %v11169 = vmul.f32 %v11098, %v11127
    %v11170 = vmul.f32 %v11099, %v11127
    %v11171 = vmul.f32 %v11100, %v11127
    %v11172 = vmul.f32 %v11101, %v11127
    %v11173 = vmul.f32 %v11102, %v11127
    %v11174 = vmul.f32 %v11103, %v11127
    %v11175 = vmul.f32 %v11104, %v11127
    %v11176 = vmul.f32 %v11105, %v11127
    %v11177 = vmul.f32 %v11106, %v11127
    %v11178 = vmul.f32 %v11107, %v11127
    %v11179 = vmul.f32 %v11108, %v11127
    %v11180 = vmul.f32 %v11109, %v11127
    %v11181 = vmul.f32 %v11110, %v11127
    %v11182 = vmul.f32 %v11111, %v11127
    %v11183 = vmul.f32 %v11112, %v11127
    %v11184 = vmul.f32 %v11113, %v11127
    %v11185 = vmul.f32 %v11114, %v11127
    %v11186 = vmul.f32 %v11115, %v11127
    %v11187 = vmul.f32 %v11116, %v11127
    %v11188 = vmul.f32 %v11117, %v11127
    %v11189 = vmul.f32 %v11118, %v11127
    %v11190 = vmul.f32 %v11119, %v11127
    %v11191 = vmul.f32 %v11120, %v11127
    %v11192 = vmul.f32 %v11121, %v11127
    %v11193 = vld [vmem:[%s7] sm:$0x1]
    %v11195 = vlaneseq
    %v11196 = vshrl.u32 %v11195, 7
    %v11197 = vsub.s32 0, %v11196
    %v11198 = vrot.slane %v11193, %v11197
    %v11200 = vadd.f32 %v11129, %v11198
    %v11201 = vadd.f32 %v11130, %v11198
    %v11202 = vadd.f32 %v11131, %v11198
    %v11203 = vadd.f32 %v11132, %v11198
    %v11204 = vadd.f32 %v11133, %v11198
    %v11205 = vadd.f32 %v11134, %v11198
    %v11206 = vadd.f32 %v11135, %v11198
    %v11207 = vadd.f32 %v11136, %v11198
    %v11208 = vadd.f32 %v11137, %v11198
    %v11209 = vadd.f32 %v11138, %v11198
    %v11210 = vadd.f32 %v11139, %v11198
    %v11211 = vadd.f32 %v11140, %v11198
    %v11212 = vadd.f32 %v11141, %v11198
    %v11213 = vadd.f32 %v11142, %v11198
    %v11214 = vadd.f32 %v11143, %v11198
    %v11215 = vadd.f32 %v11144, %v11198
    %v11216 = vadd.f32 %v11145, %v11198
    %v11217 = vadd.f32 %v11146, %v11198
    %v11218 = vadd.f32 %v11147, %v11198
    %v11219 = vadd.f32 %v11148, %v11198
    %v11220 = vadd.f32 %v11149, %v11198
    %v11221 = vadd.f32 %v11150, %v11198
    %v11222 = vadd.f32 %v11151, %v11198
    %v11223 = vadd.f32 %v11152, %v11198
    %v11224 = vadd.f32 %v11153, %v11198
    %v11225 = vadd.f32 %v11154, %v11198
    %v11226 = vadd.f32 %v11155, %v11198
    %v11227 = vadd.f32 %v11156, %v11198
    %v11228 = vadd.f32 %v11157, %v11198
    %v11229 = vadd.f32 %v11158, %v11198
    %v11230 = vadd.f32 %v11159, %v11198
    %v11231 = vadd.f32 %v11160, %v11198
    %v11232 = vadd.f32 %v11161, %v11198
    %v11233 = vadd.f32 %v11162, %v11198
    %v11234 = vadd.f32 %v11163, %v11198
    %v11235 = vadd.f32 %v11164, %v11198
    %v11236 = vadd.f32 %v11165, %v11198
    %v11237 = vadd.f32 %v11166, %v11198
    %v11238 = vadd.f32 %v11167, %v11198
    %v11239 = vadd.f32 %v11168, %v11198
    %v11240 = vadd.f32 %v11169, %v11198
    %v11241 = vadd.f32 %v11170, %v11198
    %v11242 = vadd.f32 %v11171, %v11198
    %v11243 = vadd.f32 %v11172, %v11198
    %v11244 = vadd.f32 %v11173, %v11198
    %v11245 = vadd.f32 %v11174, %v11198
    %v11246 = vadd.f32 %v11175, %v11198
    %v11247 = vadd.f32 %v11176, %v11198
    %v11248 = vadd.f32 %v11177, %v11198
    %v11249 = vadd.f32 %v11178, %v11198
    %v11250 = vadd.f32 %v11179, %v11198
    %v11251 = vadd.f32 %v11180, %v11198
    %v11252 = vadd.f32 %v11181, %v11198
    %v11253 = vadd.f32 %v11182, %v11198
    %v11254 = vadd.f32 %v11183, %v11198
    %v11255 = vadd.f32 %v11184, %v11198
    %v11256 = vadd.f32 %v11185, %v11198
    %v11257 = vadd.f32 %v11186, %v11198
    %v11258 = vadd.f32 %v11187, %v11198
    %v11259 = vadd.f32 %v11188, %v11198
    %v11260 = vadd.f32 %v11189, %v11198
    %v11261 = vadd.f32 %v11190, %v11198
    %v11262 = vadd.f32 %v11191, %v11198
    %v11263 = vadd.f32 %v11192, %v11198
    %v11264 = vadd.f32 %v11200, %v44
    %v11265 = vadd.f32 %v11201, %v45
    %v11266 = vadd.f32 %v11202, %v46
    %v11267 = vadd.f32 %v11203, %v47
    %v11268 = vadd.f32 %v11204, %v48
    %v11269 = vadd.f32 %v11205, %v49
    %v11270 = vadd.f32 %v11206, %v50
    %v11271 = vadd.f32 %v11207, %v51
    %v11272 = vadd.f32 %v11208, %v52
    %v11273 = vadd.f32 %v11209, %v53
    %v11274 = vadd.f32 %v11210, %v54
    %v11275 = vadd.f32 %v11211, %v55
    %v11276 = vadd.f32 %v11212, %v56
    %v11277 = vadd.f32 %v11213, %v57
    %v11278 = vadd.f32 %v11214, %v58
    %v11279 = vadd.f32 %v11215, %v59
    %v11280 = vadd.f32 %v11216, %v60
    %v11281 = vadd.f32 %v11217, %v61
    %v11282 = vadd.f32 %v11218, %v62
    %v11283 = vadd.f32 %v11219, %v63
    %v11284 = vadd.f32 %v11220, %v64
    %v11285 = vadd.f32 %v11221, %v65
    %v11286 = vadd.f32 %v11222, %v66
    %v11287 = vadd.f32 %v11223, %v67
    %v11288 = vadd.f32 %v11224, %v68
    %v11289 = vadd.f32 %v11225, %v69
    %v11290 = vadd.f32 %v11226, %v70
    %v11291 = vadd.f32 %v11227, %v71
    %v11292 = vadd.f32 %v11228, %v72
    %v11293 = vadd.f32 %v11229, %v73
    %v11294 = vadd.f32 %v11230, %v74
    %v11295 = vadd.f32 %v11231, %v75
    %v11296 = vadd.f32 %v11232, %v76
    %v11297 = vadd.f32 %v11233, %v77
    %v11298 = vadd.f32 %v11234, %v78
    %v11299 = vadd.f32 %v11235, %v79
    %v11300 = vadd.f32 %v11236, %v80
    %v11301 = vadd.f32 %v11237, %v81
    %v11302 = vadd.f32 %v11238, %v82
    %v11303 = vadd.f32 %v11239, %v83
    %v11304 = vadd.f32 %v11240, %v84
    %v11305 = vadd.f32 %v11241, %v85
    %v11306 = vadd.f32 %v11242, %v86
    %v11307 = vadd.f32 %v11243, %v87
    %v11308 = vadd.f32 %v11244, %v88
    %v11309 = vadd.f32 %v11245, %v89
    %v11310 = vadd.f32 %v11246, %v90
    %v11311 = vadd.f32 %v11247, %v91
    %v11312 = vadd.f32 %v11248, %v92
    %v11313 = vadd.f32 %v11249, %v93
    %v11314 = vadd.f32 %v11250, %v94
    %v11315 = vadd.f32 %v11251, %v95
    %v11316 = vadd.f32 %v11252, %v96
    %v11317 = vadd.f32 %v11253, %v97
    %v11318 = vadd.f32 %v11254, %v98
    %v11319 = vadd.f32 %v11255, %v99
    %v11320 = vadd.f32 %v11256, %v100
    %v11321 = vadd.f32 %v11257, %v101
    %v11322 = vadd.f32 %v11258, %v102
    %v11323 = vadd.f32 %v11259, %v103
    %v11324 = vadd.f32 %v11260, %v104
    %v11325 = vadd.f32 %v11261, %v105
    %v11326 = vadd.f32 %v11262, %v106
    %v11327 = vadd.f32 %v11263, %v107
    %v11328 = vmax.f32 %v11264, 0.0
    %v11329 = vmax.f32 %v11265, 0.0
    %v11330 = vmax.f32 %v11266, 0.0
    %v11331 = vmax.f32 %v11267, 0.0
    %v11332 = vmax.f32 %v11268, 0.0
    %v11333 = vmax.f32 %v11269, 0.0
    %v11334 = vmax.f32 %v11270, 0.0
    %v11335 = vmax.f32 %v11271, 0.0
    %v11336 = vmax.f32 %v11272, 0.0
    %v11337 = vmax.f32 %v11273, 0.0
    %v11338 = vmax.f32 %v11274, 0.0
    %v11339 = vmax.f32 %v11275, 0.0
    %v11340 = vmax.f32 %v11276, 0.0
    %v11341 = vmax.f32 %v11277, 0.0
    %v11342 = vmax.f32 %v11278, 0.0
    %v11343 = vmax.f32 %v11279, 0.0
    %v11344 = vmax.f32 %v11280, 0.0
    %v11345 = vmax.f32 %v11281, 0.0
    %v11346 = vmax.f32 %v11282, 0.0
    %v11347 = vmax.f32 %v11283, 0.0
    %v11348 = vmax.f32 %v11284, 0.0
    %v11349 = vmax.f32 %v11285, 0.0
    %v11350 = vmax.f32 %v11286, 0.0
    %v11351 = vmax.f32 %v11287, 0.0
    %v11352 = vmax.f32 %v11288, 0.0
    %v11353 = vmax.f32 %v11289, 0.0
    %v11354 = vmax.f32 %v11290, 0.0
    %v11355 = vmax.f32 %v11291, 0.0
    %v11356 = vmax.f32 %v11292, 0.0
    %v11357 = vmax.f32 %v11293, 0.0
    %v11358 = vmax.f32 %v11294, 0.0
    %v11359 = vmax.f32 %v11295, 0.0
    %v11360 = vmax.f32 %v11296, 0.0
    %v11361 = vmax.f32 %v11297, 0.0
    %v11362 = vmax.f32 %v11298, 0.0
    %v11363 = vmax.f32 %v11299, 0.0
    %v11364 = vmax.f32 %v11300, 0.0
    %v11365 = vmax.f32 %v11301, 0.0
    %v11366 = vmax.f32 %v11302, 0.0
    %v11367 = vmax.f32 %v11303, 0.0
    %v11368 = vmax.f32 %v11304, 0.0
    %v11369 = vmax.f32 %v11305, 0.0
    %v11370 = vmax.f32 %v11306, 0.0
    %v11371 = vmax.f32 %v11307, 0.0
    %v11372 = vmax.f32 %v11308, 0.0
    %v11373 = vmax.f32 %v11309, 0.0
    %v11374 = vmax.f32 %v11310, 0.0
    %v11375 = vmax.f32 %v11311, 0.0
    %v11376 = vmax.f32 %v11312, 0.0
    %v11377 = vmax.f32 %v11313, 0.0
    %v11378 = vmax.f32 %v11314, 0.0
    %v11379 = vmax.f32 %v11315, 0.0
    %v11380 = vmax.f32 %v11316, 0.0
    %v11381 = vmax.f32 %v11317, 0.0
    %v11382 = vmax.f32 %v11318, 0.0
    %v11383 = vmax.f32 %v11319, 0.0
    %v11384 = vmax.f32 %v11320, 0.0
    %v11385 = vmax.f32 %v11321, 0.0
    %v11386 = vmax.f32 %v11322, 0.0
    %v11387 = vmax.f32 %v11323, 0.0
    %v11388 = vmax.f32 %v11324, 0.0
    %v11389 = vmax.f32 %v11325, 0.0
    %v11390 = vmax.f32 %v11326, 0.0
    %v11391 = vmax.f32 %v11327, 0.0
    %11392 = vst [vmem:[%s8] sm:$0xff] %v11328
    %11393 = vst [vmem:[%s8 + $0x8] sm:$0xff] %v11329
    %11394 = vst [vmem:[%s8 + $0x10] sm:$0xff] %v11330
    %11395 = vst [vmem:[%s8 + $0x18] sm:$0xff] %v11331
    %11396 = vst [vmem:[%s8 + $0x20] sm:$0xff] %v11332
    %11397 = vst [vmem:[%s8 + $0x28] sm:$0xff] %v11333
    %11398 = vst [vmem:[%s8 + $0x30] sm:$0xff] %v11334
    %11399 = vst [vmem:[%s8 + $0x38] sm:$0xff] %v11335
    %11400 = vst [vmem:[%s8 + $0x40] sm:$0xff] %v11336
    %11401 = vst [vmem:[%s8 + $0x48] sm:$0xff] %v11337
    %11402 = vst [vmem:[%s8 + $0x50] sm:$0xff] %v11338
    %11403 = vst [vmem:[%s8 + $0x58] sm:$0xff] %v11339
    %11404 = vst [vmem:[%s8 + $0x60] sm:$0xff] %v11340
    %11405 = vst [vmem:[%s8 + $0x68] sm:$0xff] %v11341
    %11406 = vst [vmem:[%s8 + $0x70] sm:$0xff] %v11342
    %11407 = vst [vmem:[%s8 + $0x78] sm:$0xff] %v11343
    %11408 = vst [vmem:[%s8 + $0x80] sm:$0xff] %v11344
    %11409 = vst [vmem:[%s8 + $0x88] sm:$0xff] %v11345
    %11410 = vst [vmem:[%s8 + $0x90] sm:$0xff] %v11346
    %11411 = vst [vmem:[%s8 + $0x98] sm:$0xff] %v11347
    %11412 = vst [vmem:[%s8 + $0xa0] sm:$0xff] %v11348
    %11413 = vst [vmem:[%s8 + $0xa8] sm:$0xff] %v11349
    %11414 = vst [vmem:[%s8 + $0xb0] sm:$0xff] %v11350
    %11415 = vst [vmem:[%s8 + $0xb8] sm:$0xff] %v11351
    %11416 = vst [vmem:[%s8 + $0xc0] sm:$0xff] %v11352
    %11417 = vst [vmem:[%s8 + $0xc8] sm:$0xff] %v11353
    %11418 = vst [vmem:[%s8 + $0xd0] sm:$0xff] %v11354
    %11419 = vst [vmem:[%s8 + $0xd8] sm:$0xff] %v11355
    %11420 = vst [vmem:[%s8 + $0xe0] sm:$0xff] %v11356
    %11421 = vst [vmem:[%s8 + $0xe8] sm:$0xff] %v11357
    %11422 = vst [vmem:[%s8 + $0xf0] sm:$0xff] %v11358
    %11423 = vst [vmem:[%s8 + $0xf8] sm:$0xff] %v11359
    %11424 = vst [vmem:[%s8 + $0x100] sm:$0xff] %v11360
    %11425 = vst [vmem:[%s8 + $0x108] sm:$0xff] %v11361
    %11426 = vst [vmem:[%s8 + $0x110] sm:$0xff] %v11362
    %11427 = vst [vmem:[%s8 + $0x118] sm:$0xff] %v11363
    %11428 = vst [vmem:[%s8 + $0x120] sm:$0xff] %v11364
    %11429 = vst [vmem:[%s8 + $0x128] sm:$0xff] %v11365
    %11430 = vst [vmem:[%s8 + $0x130] sm:$0xff] %v11366
    %11431 = vst [vmem:[%s8 + $0x138] sm:$0xff] %v11367
    %11432 = vst [vmem:[%s8 + $0x140] sm:$0xff] %v11368
    %11433 = vst [vmem:[%s8 + $0x148] sm:$0xff] %v11369
    %11434 = vst [vmem:[%s8 + $0x150] sm:$0xff] %v11370
    %11435 = vst [vmem:[%s8 + $0x158] sm:$0xff] %v11371
    %11436 = vst [vmem:[%s8 + $0x160] sm:$0xff] %v11372
    %11437 = vst [vmem:[%s8 + $0x168] sm:$0xff] %v11373
    %11438 = vst [vmem:[%s8 + $0x170] sm:$0xff] %v11374
    %11439 = vst [vmem:[%s8 + $0x178] sm:$0xff] %v11375
    %11440 = vst [vmem:[%s8 + $0x180] sm:$0xff] %v11376
    %11441 = vst [vmem:[%s8 + $0x188] sm:$0xff] %v11377
    %11442 = vst [vmem:[%s8 + $0x190] sm:$0xff] %v11378
    %11443 = vst [vmem:[%s8 + $0x198] sm:$0xff] %v11379
    %11444 = vst [vmem:[%s8 + $0x1a0] sm:$0xff] %v11380
    %11445 = vst [vmem:[%s8 + $0x1a8] sm:$0xff] %v11381
    %11446 = vst [vmem:[%s8 + $0x1b0] sm:$0xff] %v11382
    %11447 = vst [vmem:[%s8 + $0x1b8] sm:$0xff] %v11383
    %11448 = vst [vmem:[%s8 + $0x1c0] sm:$0xff] %v11384
    %11449 = vst [vmem:[%s8 + $0x1c8] sm:$0xff] %v11385
    %11450 = vst [vmem:[%s8 + $0x1d0] sm:$0xff] %v11386
    %11451 = vst [vmem:[%s8 + $0x1d8] sm:$0xff] %v11387
    %11452 = vst [vmem:[%s8 + $0x1e0] sm:$0xff] %v11388
    %11453 = vst [vmem:[%s8 + $0x1e8] sm:$0xff] %v11389
    %11454 = vst [vmem:[%s8 + $0x1f0] sm:$0xff] %v11390
    %11455 = vst [vmem:[%s8 + $0x1f8] sm:$0xff] %v11391
    // Predicated region
    $region38: #{basic_block_forward.1} parent=1 // pred_check
      _
    $region39: #{basic_block_forward.1} parent=1 // pred_check_branch
      %11457 = sbr.rel (0) target = $region41
    $region40: #{basic_block_forward.1} parent=1 // pred_region
      _
    $region41: #{basic_block_forward.1} parent=1 // pred_fallthru
      _
    // Predicated region
    $region42: #{basic_block_forward.1} parent=1 // pred_check
      _
    $region43: #{basic_block_forward.1} parent=1 // pred_check_branch
      %11459 = sbr.rel (0) target = $region45
    $region44: #{basic_block_forward.1} parent=1 // pred_region
      _
    $region45: #{basic_block_forward.1} parent=1 // pred_fallthru
      _
    %11460 = vsyncpa [#allocation3], 1

</llo_original>
